<compile_context>
chip_gen: v5e
topology: v5e:2x2
jax: 0.10.0
libtpu: 0.0.40
codegen_flags: <defaults>
</compile_context>

<pallas_src>
import jax
import jax.numpy as jnp
from jax.experimental import pallas as pl
from jax.experimental.pallas import tpu as pltpu

# ----------------------- synthetic configuration -----------------------
D = 4                                    # cfg.depth
W = 32                                   # cfg.hidden_channels
SKIPS = (2,)                             # cfg.skips
F_POS = 4                                # pos_pe n_freqs
F_DIR = 2                                # dir_pe n_freqs
PE_POS = 3 * (2 * F_POS + 1)             # 27
PE_DIR = 3 * (2 * F_DIR + 1)             # 15
FREQS_POS = tuple(float(2.0 ** j) for j in range(F_POS))
FREQS_DIR = tuple(float(2.0 ** j) for j in range(F_DIR))

N = 4096                                 # number of samples (flattened ray pts)
TN = 512                                 # samples per tile (lane axis)


# ----------------------------- kernel ----------------------------------
def _write_pe(pe_ref, v, freqs):
    """Materialize PE into VMEM scratch.

    Kernel PE row order (weights are column-permuted to match):
        [v, sin(f0 v)..sin(f_{F-1} v), cos(f0 v)..cos(f_{F-1} v)]
    """
    nf = len(freqs)
    pe_ref[0:3, :] = v
    for j, f in enumerate(freqs):
        a = f * v
        pe_ref[3 + 3 * j:6 + 3 * j, :] = jnp.sin(a)
        pe_ref[3 + 3 * nf + 3 * j:6 + 3 * nf + 3 * j, :] = jnp.cos(a)


def nerf_kernel(x_ref, p_ref, out_ref, pe_pos_ref, pe_dir_ref):
    pos = x_ref[0:3, :]                    # (3, TN), lane-dense sample tile
    dirs = x_ref[3:6, :]                   # (3, TN)

    # PE blocks built once; pe_pos is reused at the skip layer.
    _write_pe(pe_pos_ref, pos, FREQS_POS)
    _write_pe(pe_dir_ref, dirs, FREQS_DIR)
    pe_pos = pe_pos_ref[...]               # (27, TN)
    pe_dir = pe_dir_ref[...]               # (15, TN)

    ofs = [0]

    def slot(k):                           # static lane slice of packed params
        a = ofs[0]
        ofs[0] = a + k
        return p_ref[:, a:a + k]           # (W, k)

    def dot(w, h):
        return jnp.dot(w, h, preferred_element_type=jnp.float32)

    # encoding1 : Linear(PE_POS, W) + ReLU            (single fused K=27 dot)
    w1 = slot(PE_POS)
    b1 = slot(1)
    h = jax.nn.relu(dot(w1, pe_pos) + b1)

    # encoding2 .. encodingD
    for i in range(1, D):
        if i in SKIPS:
            w_pe = slot(PE_POS)            # Linear(W + PE_POS, W), split
            w_h = slot(W)
            b = slot(1)
            h = jax.nn.relu(dot(w_pe, pe_pos) + dot(w_h, h) + b)
        else:
            w = slot(W)
            b = slot(1)
            h = jax.nn.relu(dot(w, h) + b)

    # encoding_final : Linear(W, W)
    wf = slot(W)
    bf = slot(1)
    feat = dot(wf, h) + bf

    # encoding_dir : Linear(W + PE_DIR, W//2) + ReLU  (rows W//2.. stay zero)
    wd_feat = slot(W)
    wd_pe = slot(PE_DIR)
    bd = slot(1)
    hd = jax.nn.relu(dot(wd_feat, feat) + dot(wd_pe, pe_dir) + bd)

    # Fused heads: rows 0:3 = rgb = sigmoid(Wr @ hd + br)
    #              row  3   = sigma = sigmoid(Ws @ feat + bs)
    w_rgb = slot(W)
    w_sig = slot(W)
    b_head = slot(1)
    pre = dot(w_rgb, hd) + dot(w_sig, feat) + b_head     # (W, TN)
    out_ref[...] = jax.nn.sigmoid(pre[0:4, :])           # (4, TN) lane-dense


# --------------------------- wrapper ------------------------------------
def nerf_forward(x, packed):
    """x: (n, 6) = [pos | dir].  Returns (n, 4) = [rgb, sigma]."""
    n = x.shape[0]
    n_pad = pl.cdiv(n, TN) * TN
    xt = x.T                                              # layout plumbing
    if n_pad != n:
        xt = jnp.pad(xt, ((0, 0), (0, n_pad - n)))
    grid = (n_pad // TN,)

    out_t = pl.pallas_call(
        nerf_kernel,
        out_shape=jax.ShapeDtypeStruct((4, n_pad), jnp.float32),
        grid=grid,
        in_specs=[
            pl.BlockSpec((6, TN), lambda i: (0, i)),       # lane-dense samples
            pl.BlockSpec(packed.shape, lambda i: (0, 0)),  # packed params
        ],
        out_specs=pl.BlockSpec((4, TN), lambda i: (0, i)),
        scratch_shapes=[
            pltpu.VMEM((PE_POS, TN), jnp.float32),
            pltpu.VMEM((PE_DIR, TN), jnp.float32),
        ],
        compiler_params=pltpu.CompilerParams(
            dimension_semantics=("parallel",)),
    )(xt, packed)
    return out_t[:, :n].T


# ----------------------- parameters & packing ---------------------------
def init_params(key):
    """Canonical flat param list: weights (cin, cout), biases (1, cout)."""
    def dense(k, cin, cout):
        kw, kb = jax.random.split(k)
        w = jax.random.normal(kw, (cin, cout), jnp.float32) / jnp.sqrt(cin)
        b = jax.random.normal(kb, (1, cout), jnp.float32) * 0.01
        return w, b

    keys = jax.random.split(key, D + 4)
    params = []
    params += dense(keys[0], PE_POS, W)                    # encoding1
    for i in range(1, D):                                  # encoding2..D
        cin = PE_POS + W if i in SKIPS else W
        params += dense(keys[i], cin, W)
    params += dense(keys[D], W, W)                         # encoding_final
    params += dense(keys[D + 1], W, 1)                     # sigma head
    params += dense(keys[D + 2], W + PE_DIR, W // 2)       # encoding_dir
    params += dense(keys[D + 3], W // 2, 3)                # rgb head
    return params


def _pe_col_perm(nf):
    """kernel-PE-row -> canonical-PE-row index map."""
    perm = list(range(3))
    perm += [3 + 6 * j + k for j in range(nf) for k in range(3)]   # sin blocks
    perm += [6 + 6 * j + k for j in range(nf) for k in range(3)]   # cos blocks
    return perm


def _packed_cols():
    c = PE_POS + 1                                 # encoding1
    for i in range(1, D):
        c += (PE_POS + W + 1) if i in SKIPS else (W + 1)
    c += W + 1                                     # encoding_final
    c += W + PE_DIR + 1                            # encoding_dir
    c += W + W + 1                                 # fused rgb/sigma head
    return c


def pack_params(params):
    """Pack canonical params into one (W, cols) array in kernel order:
    weights transposed to (out, in), PE columns permuted to the kernel PE
    row order, output rows zero-padded to W."""
    perm_pos = _pe_col_perm(F_POS)
    perm_dir = _pe_col_perm(F_DIR)

    def pad_rows(m):
        if m.shape[0] == W:
            return m
        return jnp.concatenate(
            [m, jnp.zeros((W - m.shape[0], m.shape[1]), jnp.float32)], axis=0)

    def as_w(w, perm=None):                # (cin, cout) -> padded (W, cin)
        wk = w.T
        if perm is not None:
            wk = wk[:, jnp.array(perm)]
        return pad_rows(wk)

    def as_b(b):                           # (1, cout) -> padded (W, 1)
        return pad_rows(b.T)

    it = iter(params)
    nxt = lambda: next(it)

    cols = []
    w, b = nxt(), nxt()                                    # encoding1
    cols += [as_w(w, perm_pos), as_b(b)]
    for i in range(1, D):                                  # encoding2..D
        w, b = nxt(), nxt()
        if i in SKIPS:
            cols += [as_w(w[:PE_POS], perm_pos), as_w(w[PE_POS:]), as_b(b)]
        else:
            cols += [as_w(w), as_b(b)]
    wf, bf = nxt(), nxt()                                  # encoding_final
    wsig, bsig = nxt(), nxt()                              # sigma head
    wd, bd = nxt(), nxt()                                  # encoding_dir
    wr, br = nxt(), nxt()                                  # rgb head

    cols += [as_w(wf), as_b(bf)]
    cols += [as_w(wd[:W]), as_w(wd[W:], perm_dir), as_b(bd)]

    # Fused head: out rows 0:3 = rgb (reads hd rows 0:16), row 3 = sigma (feat).
    w_rgb = jnp.zeros((W, W), jnp.float32).at[0:3, 0:W // 2].set(wr.T)
    w_sig = jnp.zeros((W, W), jnp.float32).at[3, :].set(wsig[:, 0])
    b_head = (jnp.zeros((W, 1), jnp.float32)
              .at[0:3, 0].set(br[0])
              .at[3, 0].set(bsig[0, 0]))
    cols += [w_rgb, w_sig, b_head]

    packed = jnp.concatenate(cols, axis=1)
    assert packed.shape == (W, _packed_cols()), packed.shape
    return packed


# --------------------------- pure-JAX reference --------------------------
def windowed_pe(v, freqs):
    outs = [v]
    for f in freqs:
        outs.append(jnp.sin(f * v))
        outs.append(jnp.cos(f * v))
    return jnp.concatenate(outs, axis=-1)


def nerf_ref(x, params):
    pos, dirs = x[:, 0:3], x[:, 3:6]
    pe_pos = windowed_pe(pos, FREQS_POS)
    pe_dir = windowed_pe(dirs, FREQS_DIR)
    it = iter(params)
    nxt = lambda: next(it)

    w, b = nxt(), nxt()
    h = jax.nn.relu(pe_pos @ w + b)
    for i in range(1, D):
        w, b = nxt(), nxt()
        if i in SKIPS:
            h = jax.nn.relu(jnp.concatenate([pe_pos, h], -1) @ w + b)
        else:
            h = jax.nn.relu(h @ w + b)
    wf, bf = nxt(), nxt()
    feat = h @ wf + bf
    wsig, bsig = nxt(), nxt()
    sigma = jax.nn.sigmoid(feat @ wsig + bsig)
    wd, bd = nxt(), nxt()
    hd = jax.nn.relu(jnp.concatenate([feat, pe_dir], -1) @ wd + bd)
    wr, br = nxt(), nxt()
    rgb = jax.nn.sigmoid(hd @ wr + br)
    return jnp.concatenate([rgb, sigma], axis=-1)


# ------------------------------- main ------------------------------------
if __name__ == "__main__":
    key = jax.random.PRNGKey(0)
    kx, kp = jax.random.split(key)
    x = jax.random.uniform(kx, (N, 6), jnp.float32, minval=-1.0, maxval=1.0)
    params = init_params(kp)
    packed = pack_params(params)

    out = jax.jit(nerf_forward)(x, packed)
    out = jax.block_until_ready(out)

    ref = nerf_ref(x, params)
    assert out.shape == (N, 4), out.shape
    err = float(jnp.max(jnp.abs(out - ref)))
    assert jnp.allclose(out, ref, rtol=1e-4, atol=1e-4), err
    print("KERNEL_OK")
</pallas_src>

<mosaic_0001>
module attributes {stable_mosaic.version = 11 : i64} {
  func.func @nerf_kernel(%arg0: i32, %arg1: memref<6x512xf32, #tpu.memory_space<vmem>>, %arg2: memref<32x300xf32, #tpu.memory_space<vmem>>, %arg3: memref<4x512xf32, #tpu.memory_space<vmem>>, %arg4: memref<27x512xf32, #tpu.memory_space<vmem>>, %arg5: memref<15x512xf32, #tpu.memory_space<vmem>>) attributes {dimension_semantics = [#tpu.dimension_semantics<parallel>], iteration_bounds = array<i64: 8>, scalar_prefetch = 0 : i64, scratch_operands = 2 : i64, tpu.core_type = #tpu.core_type<tc>, window_params = [{transform_indices = @transform_0, window_bounds = array<i64: 6, 512>}, {pipeline_mode = #tpu.pipeline_mode<synchronous>, transform_indices = @transform_1, window_bounds = array<i64: 32, 300>}, {transform_indices = @transform_2, window_bounds = array<i64: 4, 512>}]} {
    %c0 = arith.constant 0 : index
    %c0_0 = arith.constant 0 : index
    %0 = vector.load %arg1[%c0, %c0_0] : memref<6x512xf32, #tpu.memory_space<vmem>>, vector<3x512xf32>
    %c3 = arith.constant 3 : index
    %c0_1 = arith.constant 0 : index
    %1 = vector.load %arg1[%c3, %c0_1] : memref<6x512xf32, #tpu.memory_space<vmem>>, vector<3x512xf32>
    %c0_2 = arith.constant 0 : index
    %c0_3 = arith.constant 0 : index
    %2 = vector.load %arg4[%c0_2, %c0_3] : memref<27x512xf32, #tpu.memory_space<vmem>>, vector<3x512xf32>
    tpu.vector_store %arg4[%c0_2, %c0_3], %0 {strides = array<i32>} : memref<27x512xf32, #tpu.memory_space<vmem>>, vector<3x512xf32>,
    %cst = arith.constant 1.000000e+00 : f32
    %3 = vector.broadcast %cst : f32 to vector<3x512xf32>
    %4 = arith.mulf %3, %0 : vector<3x512xf32>
    %5 = math.sin %4 : vector<3x512xf32>
    %c3_4 = arith.constant 3 : index
    %c0_5 = arith.constant 0 : index
    %6 = vector.load %arg4[%c3_4, %c0_5] : memref<27x512xf32, #tpu.memory_space<vmem>>, vector<3x512xf32>
    tpu.vector_store %arg4[%c3_4, %c0_5], %5 {strides = array<i32>} : memref<27x512xf32, #tpu.memory_space<vmem>>, vector<3x512xf32>,
    %7 = math.cos %4 : vector<3x512xf32>
    %c15 = arith.constant 15 : index
    %c0_6 = arith.constant 0 : index
    %8 = vector.load %arg4[%c15, %c0_6] : memref<27x512xf32, #tpu.memory_space<vmem>>, vector<3x512xf32>
    tpu.vector_store %arg4[%c15, %c0_6], %7 {strides = array<i32>} : memref<27x512xf32, #tpu.memory_space<vmem>>, vector<3x512xf32>,
    %cst_7 = arith.constant 2.000000e+00 : f32
    %9 = vector.broadcast %cst_7 : f32 to vector<3x512xf32>
    %10 = arith.mulf %9, %0 : vector<3x512xf32>
    %11 = math.sin %10 : vector<3x512xf32>
    %c6 = arith.constant 6 : index
    %c0_8 = arith.constant 0 : index
    %12 = vector.load %arg4[%c6, %c0_8] : memref<27x512xf32, #tpu.memory_space<vmem>>, vector<3x512xf32>
    tpu.vector_store %arg4[%c6, %c0_8], %11 {strides = array<i32>} : memref<27x512xf32, #tpu.memory_space<vmem>>, vector<3x512xf32>,
    %13 = math.cos %10 : vector<3x512xf32>
    %c18 = arith.constant 18 : index
    %c0_9 = arith.constant 0 : index
    %14 = vector.load %arg4[%c18, %c0_9] : memref<27x512xf32, #tpu.memory_space<vmem>>, vector<3x512xf32>
    tpu.vector_store %arg4[%c18, %c0_9], %13 {strides = array<i32>} : memref<27x512xf32, #tpu.memory_space<vmem>>, vector<3x512xf32>,
    %cst_10 = arith.constant 4.000000e+00 : f32
    %15 = vector.broadcast %cst_10 : f32 to vector<3x512xf32>
    %16 = arith.mulf %15, %0 : vector<3x512xf32>
    %17 = math.sin %16 : vector<3x512xf32>
    %c9 = arith.constant 9 : index
    %c0_11 = arith.constant 0 : index
    %18 = vector.load %arg4[%c9, %c0_11] : memref<27x512xf32, #tpu.memory_space<vmem>>, vector<3x512xf32>
    tpu.vector_store %arg4[%c9, %c0_11], %17 {strides = array<i32>} : memref<27x512xf32, #tpu.memory_space<vmem>>, vector<3x512xf32>,
    %19 = math.cos %16 : vector<3x512xf32>
    %c21 = arith.constant 21 : index
    %c0_12 = arith.constant 0 : index
    %20 = vector.load %arg4[%c21, %c0_12] : memref<27x512xf32, #tpu.memory_space<vmem>>, vector<3x512xf32>
    tpu.vector_store %arg4[%c21, %c0_12], %19 {strides = array<i32>} : memref<27x512xf32, #tpu.memory_space<vmem>>, vector<3x512xf32>,
    %cst_13 = arith.constant 8.000000e+00 : f32
    %21 = vector.broadcast %cst_13 : f32 to vector<3x512xf32>
    %22 = arith.mulf %21, %0 : vector<3x512xf32>
    %23 = math.sin %22 : vector<3x512xf32>
    %c12 = arith.constant 12 : index
    %c0_14 = arith.constant 0 : index
    %24 = vector.load %arg4[%c12, %c0_14] : memref<27x512xf32, #tpu.memory_space<vmem>>, vector<3x512xf32>
    tpu.vector_store %arg4[%c12, %c0_14], %23 {strides = array<i32>} : memref<27x512xf32, #tpu.memory_space<vmem>>, vector<3x512xf32>,
    %25 = math.cos %22 : vector<3x512xf32>
    %c24 = arith.constant 24 : index
    %c0_15 = arith.constant 0 : index
    %26 = vector.load %arg4[%c24, %c0_15] : memref<27x512xf32, #tpu.memory_space<vmem>>, vector<3x512xf32>
    tpu.vector_store %arg4[%c24, %c0_15], %25 {strides = array<i32>} : memref<27x512xf32, #tpu.memory_space<vmem>>, vector<3x512xf32>,
    %c0_16 = arith.constant 0 : index
    %c0_17 = arith.constant 0 : index
    %27 = vector.load %arg5[%c0_16, %c0_17] : memref<15x512xf32, #tpu.memory_space<vmem>>, vector<3x512xf32>
    tpu.vector_store %arg5[%c0_16, %c0_17], %1 {strides = array<i32>} : memref<15x512xf32, #tpu.memory_space<vmem>>, vector<3x512xf32>,
    %cst_18 = arith.constant 1.000000e+00 : f32
    %28 = vector.broadcast %cst_18 : f32 to vector<3x512xf32>
    %29 = arith.mulf %28, %1 : vector<3x512xf32>
    %30 = math.sin %29 : vector<3x512xf32>
    %c3_19 = arith.constant 3 : index
    %c0_20 = arith.constant 0 : index
    %31 = vector.load %arg5[%c3_19, %c0_20] : memref<15x512xf32, #tpu.memory_space<vmem>>, vector<3x512xf32>
    tpu.vector_store %arg5[%c3_19, %c0_20], %30 {strides = array<i32>} : memref<15x512xf32, #tpu.memory_space<vmem>>, vector<3x512xf32>,
    %32 = math.cos %29 : vector<3x512xf32>
    %c9_21 = arith.constant 9 : index
    %c0_22 = arith.constant 0 : index
    %33 = vector.load %arg5[%c9_21, %c0_22] : memref<15x512xf32, #tpu.memory_space<vmem>>, vector<3x512xf32>
    tpu.vector_store %arg5[%c9_21, %c0_22], %32 {strides = array<i32>} : memref<15x512xf32, #tpu.memory_space<vmem>>, vector<3x512xf32>,
    %cst_23 = arith.constant 2.000000e+00 : f32
    %34 = vector.broadcast %cst_23 : f32 to vector<3x512xf32>
    %35 = arith.mulf %34, %1 : vector<3x512xf32>
    %36 = math.sin %35 : vector<3x512xf32>
    %c6_24 = arith.constant 6 : index
    %c0_25 = arith.constant 0 : index
    %37 = vector.load %arg5[%c6_24, %c0_25] : memref<15x512xf32, #tpu.memory_space<vmem>>, vector<3x512xf32>
    tpu.vector_store %arg5[%c6_24, %c0_25], %36 {strides = array<i32>} : memref<15x512xf32, #tpu.memory_space<vmem>>, vector<3x512xf32>,
    %38 = math.cos %35 : vector<3x512xf32>
    %c12_26 = arith.constant 12 : index
    %c0_27 = arith.constant 0 : index
    %39 = vector.load %arg5[%c12_26, %c0_27] : memref<15x512xf32, #tpu.memory_space<vmem>>, vector<3x512xf32>
    tpu.vector_store %arg5[%c12_26, %c0_27], %38 {strides = array<i32>} : memref<15x512xf32, #tpu.memory_space<vmem>>, vector<3x512xf32>,
    %c0_28 = arith.constant 0 : index
    %c0_29 = arith.constant 0 : index
    %40 = vector.load %arg4[%c0_28, %c0_29] : memref<27x512xf32, #tpu.memory_space<vmem>>, vector<27x512xf32>
    %c0_30 = arith.constant 0 : index
    %c0_31 = arith.constant 0 : index
    %41 = vector.load %arg5[%c0_30, %c0_31] : memref<15x512xf32, #tpu.memory_space<vmem>>, vector<15x512xf32>
    %c0_32 = arith.constant 0 : index
    %c0_33 = arith.constant 0 : index
    %42 = vector.load %arg2[%c0_32, %c0_33] : memref<32x300xf32, #tpu.memory_space<vmem>>, vector<32x27xf32>
    %c0_34 = arith.constant 0 : index
    %c27 = arith.constant 27 : index
    %43 = vector.load %arg2[%c0_34, %c27] : memref<32x300xf32, #tpu.memory_space<vmem>>, vector<32x1xf32>
    %cst_35 = arith.constant dense<0.000000e+00> : vector<32x512xf32>
    %44 = tpu.matmul %42, %40, %cst_35 {dimension_numbers = #tpu.dot_dimension_numbers<[1], [0], [0], [1], [0, 0, 1, 1], [], []>} : vector<32x27xf32>, vector<27x512xf32>, vector<32x512xf32> -> vector<32x512xf32>
    %45 = vector.broadcast %43 : vector<32x1xf32> to vector<32x512xf32>
    %46 = arith.addf %44, %45 : vector<32x512xf32>
    %cst_36 = arith.constant 0.000000e+00 : f32
    %47 = vector.broadcast %cst_36 : f32 to vector<32x512xf32>
    %48 = arith.maximumf %46, %47 : vector<32x512xf32>
    %c0_37 = arith.constant 0 : index
    %c28 = arith.constant 28 : index
    %49 = vector.load %arg2[%c0_37, %c28] : memref<32x300xf32, #tpu.memory_space<vmem>>, vector<32x32xf32>
    %c0_38 = arith.constant 0 : index
    %c60 = arith.constant 60 : index
    %50 = vector.load %arg2[%c0_38, %c60] : memref<32x300xf32, #tpu.memory_space<vmem>>, vector<32x1xf32>
    %cst_39 = arith.constant dense<0.000000e+00> : vector<32x512xf32>
    %51 = tpu.matmul %49, %48, %cst_39 {dimension_numbers = #tpu.dot_dimension_numbers<[1], [0], [0], [1], [0, 0, 1, 1], [], []>} : vector<32x32xf32>, vector<32x512xf32>, vector<32x512xf32> -> vector<32x512xf32>
    %52 = vector.broadcast %50 : vector<32x1xf32> to vector<32x512xf32>
    %53 = arith.addf %51, %52 : vector<32x512xf32>
    %cst_40 = arith.constant 0.000000e+00 : f32
    %54 = vector.broadcast %cst_40 : f32 to vector<32x512xf32>
    %55 = arith.maximumf %53, %54 : vector<32x512xf32>
    %c0_41 = arith.constant 0 : index
    %c61 = arith.constant 61 : index
    %56 = vector.load %arg2[%c0_41, %c61] : memref<32x300xf32, #tpu.memory_space<vmem>>, vector<32x27xf32>
    %c0_42 = arith.constant 0 : index
    %c88 = arith.constant 88 : index
    %57 = vector.load %arg2[%c0_42, %c88] : memref<32x300xf32, #tpu.memory_space<vmem>>, vector<32x32xf32>
    %c0_43 = arith.constant 0 : index
    %c120 = arith.constant 120 : index
    %58 = vector.load %arg2[%c0_43, %c120] : memref<32x300xf32, #tpu.memory_space<vmem>>, vector<32x1xf32>
    %cst_44 = arith.constant dense<0.000000e+00> : vector<32x512xf32>
    %59 = tpu.matmul %56, %40, %cst_44 {dimension_numbers = #tpu.dot_dimension_numbers<[1], [0], [0], [1], [0, 0, 1, 1], [], []>} : vector<32x27xf32>, vector<27x512xf32>, vector<32x512xf32> -> vector<32x512xf32>
    %cst_45 = arith.constant dense<0.000000e+00> : vector<32x512xf32>
    %60 = tpu.matmul %57, %55, %cst_45 {dimension_numbers = #tpu.dot_dimension_numbers<[1], [0], [0], [1], [0, 0, 1, 1], [], []>} : vector<32x32xf32>, vector<32x512xf32>, vector<32x512xf32> -> vector<32x512xf32>
    %61 = arith.addf %59, %60 : vector<32x512xf32>
    %62 = vector.broadcast %58 : vector<32x1xf32> to vector<32x512xf32>
    %63 = arith.addf %61, %62 : vector<32x512xf32>
    %cst_46 = arith.constant 0.000000e+00 : f32
    %64 = vector.broadcast %cst_46 : f32 to vector<32x512xf32>
    %65 = arith.maximumf %63, %64 : vector<32x512xf32>
    %c0_47 = arith.constant 0 : index
    %c121 = arith.constant 121 : index
    %66 = vector.load %arg2[%c0_47, %c121] : memref<32x300xf32, #tpu.memory_space<vmem>>, vector<32x32xf32>
    %c0_48 = arith.constant 0 : index
    %c153 = arith.constant 153 : index
    %67 = vector.load %arg2[%c0_48, %c153] : memref<32x300xf32, #tpu.memory_space<vmem>>, vector<32x1xf32>
    %cst_49 = arith.constant dense<0.000000e+00> : vector<32x512xf32>
    %68 = tpu.matmul %66, %65, %cst_49 {dimension_numbers = #tpu.dot_dimension_numbers<[1], [0], [0], [1], [0, 0, 1, 1], [], []>} : vector<32x32xf32>, vector<32x512xf32>, vector<32x512xf32> -> vector<32x512xf32>
    %69 = vector.broadcast %67 : vector<32x1xf32> to vector<32x512xf32>
    %70 = arith.addf %68, %69 : vector<32x512xf32>
    %cst_50 = arith.constant 0.000000e+00 : f32
    %71 = vector.broadcast %cst_50 : f32 to vector<32x512xf32>
    %72 = arith.maximumf %70, %71 : vector<32x512xf32>
    %c0_51 = arith.constant 0 : index
    %c154 = arith.constant 154 : index
    %73 = vector.load %arg2[%c0_51, %c154] : memref<32x300xf32, #tpu.memory_space<vmem>>, vector<32x32xf32>
    %c0_52 = arith.constant 0 : index
    %c186 = arith.constant 186 : index
    %74 = vector.load %arg2[%c0_52, %c186] : memref<32x300xf32, #tpu.memory_space<vmem>>, vector<32x1xf32>
    %cst_53 = arith.constant dense<0.000000e+00> : vector<32x512xf32>
    %75 = tpu.matmul %73, %72, %cst_53 {dimension_numbers = #tpu.dot_dimension_numbers<[1], [0], [0], [1], [0, 0, 1, 1], [], []>} : vector<32x32xf32>, vector<32x512xf32>, vector<32x512xf32> -> vector<32x512xf32>
    %76 = vector.broadcast %74 : vector<32x1xf32> to vector<32x512xf32>
    %77 = arith.addf %75, %76 : vector<32x512xf32>
    %c0_54 = arith.constant 0 : index
    %c187 = arith.constant 187 : index
    %78 = vector.load %arg2[%c0_54, %c187] : memref<32x300xf32, #tpu.memory_space<vmem>>, vector<32x32xf32>
    %c0_55 = arith.constant 0 : index
    %c219 = arith.constant 219 : index
    %79 = vector.load %arg2[%c0_55, %c219] : memref<32x300xf32, #tpu.memory_space<vmem>>, vector<32x15xf32>
    %c0_56 = arith.constant 0 : index
    %c234 = arith.constant 234 : index
    %80 = vector.load %arg2[%c0_56, %c234] : memref<32x300xf32, #tpu.memory_space<vmem>>, vector<32x1xf32>
    %cst_57 = arith.constant dense<0.000000e+00> : vector<32x512xf32>
    %81 = tpu.matmul %78, %77, %cst_57 {dimension_numbers = #tpu.dot_dimension_numbers<[1], [0], [0], [1], [0, 0, 1, 1], [], []>} : vector<32x32xf32>, vector<32x512xf32>, vector<32x512xf32> -> vector<32x512xf32>
    %cst_58 = arith.constant dense<0.000000e+00> : vector<32x512xf32>
    %82 = tpu.matmul %79, %41, %cst_58 {dimension_numbers = #tpu.dot_dimension_numbers<[1], [0], [0], [1], [0, 0, 1, 1], [], []>} : vector<32x15xf32>, vector<15x512xf32>, vector<32x512xf32> -> vector<32x512xf32>
    %83 = arith.addf %81, %82 : vector<32x512xf32>
    %84 = vector.broadcast %80 : vector<32x1xf32> to vector<32x512xf32>
    %85 = arith.addf %83, %84 : vector<32x512xf32>
    %cst_59 = arith.constant 0.000000e+00 : f32
    %86 = vector.broadcast %cst_59 : f32 to vector<32x512xf32>
    %87 = arith.maximumf %85, %86 : vector<32x512xf32>
    %c0_60 = arith.constant 0 : index
    %c235 = arith.constant 235 : index
    %88 = vector.load %arg2[%c0_60, %c235] : memref<32x300xf32, #tpu.memory_space<vmem>>, vector<32x32xf32>
    %c0_61 = arith.constant 0 : index
    %c267 = arith.constant 267 : index
    %89 = vector.load %arg2[%c0_61, %c267] : memref<32x300xf32, #tpu.memory_space<vmem>>, vector<32x32xf32>
    %c0_62 = arith.constant 0 : index
    %c299 = arith.constant 299 : index
    %90 = vector.load %arg2[%c0_62, %c299] : memref<32x300xf32, #tpu.memory_space<vmem>>, vector<32x1xf32>
    %cst_63 = arith.constant dense<0.000000e+00> : vector<32x512xf32>
    %91 = tpu.matmul %88, %87, %cst_63 {dimension_numbers = #tpu.dot_dimension_numbers<[1], [0], [0], [1], [0, 0, 1, 1], [], []>} : vector<32x32xf32>, vector<32x512xf32>, vector<32x512xf32> -> vector<32x512xf32>
    %cst_64 = arith.constant dense<0.000000e+00> : vector<32x512xf32>
    %92 = tpu.matmul %89, %77, %cst_64 {dimension_numbers = #tpu.dot_dimension_numbers<[1], [0], [0], [1], [0, 0, 1, 1], [], []>} : vector<32x32xf32>, vector<32x512xf32>, vector<32x512xf32> -> vector<32x512xf32>
    %93 = arith.addf %91, %92 : vector<32x512xf32>
    %94 = vector.broadcast %90 : vector<32x1xf32> to vector<32x512xf32>
    %95 = arith.addf %93, %94 : vector<32x512xf32>
    %96 = vector.extract_strided_slice %95 {offsets = [0, 0], sizes = [4, 512], strides = [1, 1]} : vector<32x512xf32> to vector<4x512xf32>
    %97 = arith.negf %96 : vector<4x512xf32>
    %98 = math.exp %97 : vector<4x512xf32>
    %cst_65 = arith.constant 1.000000e+00 : f32
    %99 = vector.broadcast %cst_65 : f32 to vector<4x512xf32>
    %100 = arith.addf %99, %98 : vector<4x512xf32>
    %101 = arith.divf %99, %100 : vector<4x512xf32>
    %c0_66 = arith.constant 0 : index
    %c0_67 = arith.constant 0 : index
    %102 = vector.load %arg3[%c0_66, %c0_67] : memref<4x512xf32, #tpu.memory_space<vmem>>, vector<4x512xf32>
    tpu.vector_store %arg3[%c0_66, %c0_67], %101 {strides = array<i32>} : memref<4x512xf32, #tpu.memory_space<vmem>>, vector<4x512xf32>,
    return
  }
  func.func @transform_0(%arg0: i32) -> (i32, i32) {
    %c0_i32 = arith.constant 0 : i32
    %c0_i32_0 = arith.constant 0 : i32
    return %c0_i32, %arg0 : i32, i32
  }
  func.func @transform_1(%arg0: i32) -> (i32, i32) {
    %c0_i32 = arith.constant 0 : i32
    %c0_i32_0 = arith.constant 0 : i32
    %c0_i32_1 = arith.constant 0 : i32
    return %c0_i32, %c0_i32_0 : i32, i32
  }
  func.func @transform_2(%arg0: i32) -> (i32, i32) {
    %c0_i32 = arith.constant 0 : i32
    %c0_i32_0 = arith.constant 0 : i32
    return %c0_i32, %arg0 : i32, i32
  }
}

</mosaic_0001>

<llo_original>
// kernel: nerf_forward.1
$region0: #{nerf_forward.1}
  #allocation0 [shape = 'u32[]', space=smem, size = 0x4, offset = 0x4, fixed_abs, tag = 'smem constant byte address 0x4 - core index']
  #allocation1 [shape = 'u32[72,128]{1,0:T(1,128)}', space=vmem, size = 0x9000, scoped, tag = 'internal scratch']
  #allocation2 [shape = 'f32[27,512]{1,0:T(8,128)}', space=vmem, size = 0x10000, scoped, tag = 'scratch operand']
  #allocation3 [shape = 'f32[15,512]{1,0:T(8,128)}', space=vmem, size = 0x8000, scoped, tag = 'scratch operand']
  %s0 = inlined_call_operand.hbm [shape: f32[6,4096], index: 0, kind: input, shape index: {}]
  %s1 = inlined_call_operand.hbm [shape: f32[32,300], index: 1, kind: input, shape index: {}]
  %s2 = inlined_call_operand.hbm [shape: f32[4,4096], index: 2, kind: output, shape index: {}]
  %s3 = sld [smem:[#allocation0]]
  $region49: #{nerf_forward.1} parent=0
    _
  %s5 = ssub.s32 1, %s3
  %s6 = scalar_select 0, %s5, %s3
  $region1: #{nerf_forward.1} parent=0
    #allocation4 [shape = 'u8[32768]{0}', space=vmem, size = 0x8000, scoped, tag = 'input window, operand 0']
    #allocation5 [shape = 's32[2]{0}', space=sflag, size = 0x8, scoped, tag = 'scoped memory for nerf_forward.1']
    #allocation6 [shape = 's32[2]{0}', space=sflag, size = 0x8, scoped, tag = 'scoped memory for nerf_forward.1']
    #allocation7 [shape = 'u8[49152]{0}', space=vmem, size = 0xc000, scoped, tag = 'input window, operand 1, single buffered']
    #allocation8 [shape = 's32[1]{0}', space=sflag, size = 0x4, scoped, tag = 'scoped memory for nerf_forward.1']
    #allocation9 [shape = 'u8[16384]{0}', space=vmem, size = 0x4000, scoped, tag = 'output window, operand 0']
    %7 = vsyncpa [#allocation5], 0
    %s8 = scalar_lea.sflag [#allocation5], 1
    %9 = vsyncpa %s8, 0
    %10 = vsyncpa [#allocation8], 0
    %11 = vsyncpa [#allocation6], 0
    %s12 = scalar_lea.sflag [#allocation6], 1
    %13 = vsyncpa %s12, 0
    loop: start=0, step=1, limit=10
    $region2: #{nerf_forward.1} parent=1 // loop_pre_header
      _
    $region3: #{nerf_forward.1} parent=1 // loop_header
      %s15 = sphi 0, %s19
      %p16 = scmp.ge.s32.totalorder %s15, 10
      %s25 = sphi 0, %s27
      %s28 = sphi 0, %s25
      %s29 = sphi 0, %s28
      %s45 = sphi 0, %s29
      %s49 = sphi 0, %s49
      %s51 = sphi 0, %s49
      %s52 = sphi 0, %s51
      %s66 = sphi 0, %s52
      %s72 = sphi 0, %s74
      %s75 = sphi 0, %s72
      %s76 = sphi 0, %s75
      %s92 = sphi 0, %s76
    $region4: #{nerf_forward.1} parent=1 // loop_header_branch
      %18 = sbr.rel (%p16) target = $region8
    $region5: #{nerf_forward.1} parent=1 // loop_body
      %s20 = ssub.s32 %s15, 1
      %s21 = ssub.s32 %s15, 2
      %s22 = sadd.s32 %s15, 1
      %s23 = ssub.s32 %s15, %s22
      %p24 = scmp.eq.s32.totalorder %s23, 0
      %s26 = sadd.s32 %s25, 1
      %s27 = scalar_select %p24, %s25, %s26
      %p30 = pneg %p24
      %p31 = scmp.eq.s32.totalorder %s15, 7
      %p32 = por %p30, %p31
      %p33 = scmp.ne.s32.totalorder %s25, %s28
      %p34 = scmp.eq.s32.totalorder %s15, 0
      %p35 = por %p33, %p34
      %p36 = scmp.ne.s32.totalorder %s25, %s28
      %p37 = scmp.eq.s32.totalorder %s20, 7
      %p38 = por %p36, %p37
      %p39 = scmp.ne.s32.totalorder %s28, %s29
      %p40 = scmp.eq.s32.totalorder %s20, 0
      %p41 = por %p39, %p40
      %p42 = scmp.ne.s32.totalorder %s28, %s29
      %p43 = scmp.eq.s32.totalorder %s21, 7
      %p44 = por %p42, %p43
      %p46 = scmp.ne.s32.totalorder %s29, %s45
      %p47 = scmp.eq.s32.totalorder %s21, 0
      %p48 = por %p46, %p47
      %s50 = sadd.s32 %s49, 1
      %p53 = scmp.eq.s32.totalorder %s15, 7
      %p54 = scmp.ne.s32.totalorder %s49, %s51
      %p55 = scmp.eq.s32.totalorder %s15, 0
      %p56 = por %p54, %p55
      %p57 = scmp.ne.s32.totalorder %s49, %s51
      %p58 = scmp.eq.s32.totalorder %s20, 7
      %p59 = por %p57, %p58
      %p60 = scmp.ne.s32.totalorder %s51, %s52
      %p61 = scmp.eq.s32.totalorder %s20, 0
      %p62 = por %p60, %p61
      %p63 = scmp.ne.s32.totalorder %s51, %s52
      %p64 = scmp.eq.s32.totalorder %s21, 7
      %p65 = por %p63, %p64
      %p67 = scmp.ne.s32.totalorder %s52, %s66
      %p68 = scmp.eq.s32.totalorder %s21, 0
      %p69 = por %p67, %p68
      %s70 = ssub.s32 %s15, %s22
      %p71 = scmp.eq.s32.totalorder %s70, 0
      %s73 = sadd.s32 %s72, 1
      %s74 = scalar_select %p71, %s72, %s73
      %p77 = pneg %p71
      %p78 = scmp.eq.s32.totalorder %s15, 7
      %p79 = por %p77, %p78
      %p80 = scmp.ne.s32.totalorder %s72, %s75
      %p81 = scmp.eq.s32.totalorder %s15, 0
      %p82 = por %p80, %p81
      %p83 = scmp.ne.s32.totalorder %s72, %s75
      %p84 = scmp.eq.s32.totalorder %s20, 7
      %p85 = por %p83, %p84
      %p86 = scmp.ne.s32.totalorder %s75, %s76
      %p87 = scmp.eq.s32.totalorder %s20, 0
      %p88 = por %p86, %p87
      %p89 = scmp.ne.s32.totalorder %s75, %s76
      %p90 = scmp.eq.s32.totalorder %s21, 7
      %p91 = por %p89, %p90
      %p93 = scmp.ne.s32.totalorder %s76, %s92
      %p94 = scmp.eq.s32.totalorder %s21, 0
      %p95 = por %p93, %p94
      %p96 = scmp.le.s32.totalorder 1, %s15
      %p97 = scmp.lt.s32.totalorder %s15, 9
      %p98 = pnand %p96, %p97
      %p99 = pneg %p98
      // Predicated region
      $region9: #{nerf_forward.1} parent=5 // pred_check
        _
      $region10: #{nerf_forward.1} parent=5 // pred_check_branch
        %101 = sbr.rel (%p98) target = $region12
      $region11: #{nerf_forward.1} parent=5 // pred_region
        %s102 = ssub.s32 %s15, 1
        // Predicated region
        $region13: #{nerf_forward.1} parent=11 // pred_check
          %p103 = pneg %p62
        $region14: #{nerf_forward.1} parent=11 // pred_check_branch
          %105 = sbr.rel (%p103) target = $region16
        $region15: #{nerf_forward.1} parent=11 // pred_region
          %107 = vsyncadd [#allocation8], 0
          %s108 = sshll.u32 %s1, 4
          %s109 = int_to_ptr.hbm [resolvable:$true] %s108
          %s110 = sshll.u32 [#allocation7], 4
          %s111 = int_to_ptr.vmem [resolvable:$true] %s110
          %116 = dma.hbm_to_vmem [thread:$0]  %s109, 1536, %s111, [#allocation8], 384, 384, 24
        $region16: #{nerf_forward.1} parent=11 // pred_fallthru
          _
      $region12: #{nerf_forward.1} parent=5 // pred_fallthru
        _
      %p117 = scmp.lt.s32.totalorder %s15, 8
      // Predicated region
      $region17: #{nerf_forward.1} parent=5 // pred_check
        %p118 = pneg %p117
      $region18: #{nerf_forward.1} parent=5 // pred_check_branch
        %120 = sbr.rel (%p118) target = $region20
      $region19: #{nerf_forward.1} parent=5 // pred_region
        // Predicated region
        $region21: #{nerf_forward.1} parent=19 // pred_check
          %p121 = pneg %p35
        $region22: #{nerf_forward.1} parent=19 // pred_check_branch
          %123 = sbr.rel (%p121) target = $region24
        $region23: #{nerf_forward.1} parent=19 // pred_region
          %s124 = sand.u32 %s25, 1
          %s125 = scalar_lea.sflag [#allocation5], %s124
          %s126 = sand.u32 %s25, 1
          %s127 = smul.addr %s126, 32
          %s128 = scalar_lea.vmem [#allocation4], %s127
          %s129 = smul.u32 4, %s15
          %131 = vsyncadd %s125, 0
          %s132 = smul.addr %s129, 8
          %s133 = scalar_lea.hbm %s0, %s132
          %s135 = sshll.u32 %s133, 4
          %s136 = int_to_ptr.hbm [resolvable:$true] %s135
          %s137 = sshll.u32 %s128, 4
          %s138 = int_to_ptr.vmem [resolvable:$true] %s137
          %140 = dma.hbm_to_vmem [thread:$0]  %s136, 512, %s138, %s125
        $region24: #{nerf_forward.1} parent=19 // pred_fallthru
          _
      $region20: #{nerf_forward.1} parent=5 // pred_fallthru
        _
      %p141 = scmp.le.s32.totalorder 1, %s15
      %p142 = scmp.lt.s32.totalorder %s15, 9
      %p143 = pnand %p141, %p142
      %p144 = pneg %p143
      // Predicated region
      $region25: #{nerf_forward.1} parent=5 // pred_check
        _
      $region26: #{nerf_forward.1} parent=5 // pred_check_branch
        %146 = sbr.rel (%p143) target = $region28
      $region27: #{nerf_forward.1} parent=5 // pred_region
        %s147 = ssub.s32 %s15, 1
        %s148 = sand.u32 %s28, 1
        %s149 = scalar_lea.sflag [#allocation5], %s148
        %s150 = sand.u32 %s28, 1
        %s151 = smul.addr %s150, 32
        %s152 = scalar_lea.vmem [#allocation4], %s151
        // Predicated region
        $region29: #{nerf_forward.1} parent=27 // pred_check
          %p153 = pneg %p41
        $region30: #{nerf_forward.1} parent=27 // pred_check_branch
          %155 = sbr.rel (%p153) target = $region32
        $region31: #{nerf_forward.1} parent=27 // pred_region
          %157 = dma.done %s149, 512
        $region32: #{nerf_forward.1} parent=27 // pred_fallthru
          _
        // Predicated region
        $region33: #{nerf_forward.1} parent=27 // pred_check
          %p158 = pneg %p62
        $region34: #{nerf_forward.1} parent=27 // pred_check_branch
          %160 = sbr.rel (%p158) target = $region36
        $region35: #{nerf_forward.1} parent=27 // pred_region
          %162 = dma.done [#allocation8], 1536
        $region36: #{nerf_forward.1} parent=27 // pred_fallthru
          _
        %s163 = sand.u32 %s28, 1
        %s164 = scalar_lea.sflag [#allocation5], %s163
        %s165 = sand.u32 %s28, 1
        %s166 = smul.addr %s165, 32
        %s167 = scalar_lea.vmem [#allocation4], %s166
        %p168 = pneg %p41
        %p169 = pneg %p38
        %p170 = pneg %p62
        %p171 = pneg %p59
        %p172 = pneg %p88
        %p173 = pneg %p85
        %s174 = sand.u32 %s75, 1
        %s175 = scalar_lea.sflag [#allocation6], %s174
        %s176 = sand.u32 %s75, 1
        %s177 = smul.addr %s176, 16
        %s178 = scalar_lea.vmem [#allocation9], %s177
        %s179 = smul.u32 4, %s20
        %s180 = smul.u32 4, %s20
        %v181 = vld [vmem:[%s152] sm:$0x7]
        %v182 = vld [vmem:[%s152 + $0x8] sm:$0x7]
        %v183 = vld [vmem:[%s152 + $0x10] sm:$0x7]
        %v184 = vld [vmem:[%s152 + $0x18] sm:$0x7]
        %v185 = vld [vmem:[%s152] sm:$0x38]
        %v186 = vld [vmem:[%s152 + $0x8] sm:$0x38]
        %v187 = vld [vmem:[%s152 + $0x10] sm:$0x38]
        %v188 = vld [vmem:[%s152 + $0x18] sm:$0x38]
        %189 = vst [vmem:[#allocation2] sm:$0x7] %v181
        %190 = vst [vmem:[#allocation2 + $0x8] sm:$0x7] %v182
        %191 = vst [vmem:[#allocation2 + $0x10] sm:$0x7] %v183
        %192 = vst [vmem:[#allocation2 + $0x18] sm:$0x7] %v184
        %v193 = vand.u32 2147483647, %v181
        %vm194 = vcmp.le.f32.partialorder %v193, 0.7853982
        %vm195 = vcmp.lt.s32.totalorder %v181, 0
        %v196 = vand.u32 %v181, 2139095040
        %v197 = vshrl.u32 %v196, 23
        %v198 = vsub.s32 %v197, 127
        %v199 = vand.u32 2147483647, %v181
        %v200 = vand.u32 %v199, 8388607
        %v201 = vor.u32 %v200, 8388608
        %v202 = vsub.s32 0, %v201
        %v203 = vadd.s32 %v198, 1
        %vm204 = vcmp.gt.s32.totalorder %v203, 0
        %v205 = vsel %vm204, %v203, 0
        %v206 = vshrl.u32 %v205, 5
        %v207 = vand.u32 %v205, 31
        %v208 = vsub.s32 32, %v207
        %v209 = vshrl.u32 683565275, %v208
        %v210 = vshll.u32 683565275, %v207
        %v211 = vshrl.u32 2475754826, %v208
        %v212 = vor.u32 %v210, %v211
        %v213 = vshll.u32 2475754826, %v207
        %v214 = vshrl.u32 2131351028, %v208
        %v215 = vor.u32 %v213, %v214
        %v216 = vshll.u32 2131351028, %v207
        %v217 = vshrl.u32 2102212464, %v208
        %v218 = vor.u32 %v216, %v217
        %v219 = vshll.u32 2102212464, %v207
        %v220 = vshrl.u32 920167782, %v208
        %v221 = vor.u32 %v219, %v220
        %v222 = vshll.u32 920167782, %v207
        %v223 = vshrl.u32 1326507024, %v208
        %v224 = vor.u32 %v222, %v223
        %vm225 = vcmp.lt.s32.totalorder %v206, 1
        %vm226 = vcmp.lt.s32.totalorder %v206, 2
        %vm227 = vcmp.lt.s32.totalorder %v206, 3
        %vm228 = vcmp.lt.s32.totalorder %v206, 4
        %v229 = vsel %vm225, %v209, %v212
        %v230 = vsel %vm228, %v218, 2102212464
        %v231 = vsel %vm227, %v215, %v230
        %v232 = vsel %vm226, %v229, %v231
        %v233 = vsel %vm225, %v212, %v215
        %v234 = vsel %vm228, %v221, 920167782
        %v235 = vsel %vm227, %v218, %v234
        %v236 = vsel %vm226, %v233, %v235
        %v237 = vsel %vm225, %v215, %v218
        %v238 = vsel %vm228, %v224, 1326507024
        %v239 = vsel %vm227, %v221, %v238
        %v240 = vsel %vm226, %v237, %v239
        %v241 = vshll.u32 %v201, 8
        %v242 = vand.u32 %v241, 65535
        %v243 = vshrl.u32 %v241, 16
        %v244 = vand.u32 %v240, 65535
        %v245 = vshrl.u32 %v240, 16
        %v246 = vmul.u32 %v242, %v244
        %v247 = vmul.u32 %v242, %v245
        %v248 = vmul.u32 %v243, %v244
        %v249 = vmul.u32 %v243, %v245
        %v250 = vshll.u32 %v247, 16
        %v251 = vshrl.u32 %v247, 16
        %v252 = vshll.u32 %v248, 16
        %v253 = vshrl.u32 %v248, 16
        %vm254 = vc.u32 %v246, %v250
        %v255 = vsel %vm254, 1, 0
        %v256 = vadd.s32 %v246, %v250
        %v257 = vadd.s32 %v249, %v255
        %vm258 = vc.u32 %v256, %v252
        %v259 = vsel %vm258, 1, 0
        %v260 = vadd.s32 %v256, %v252
        %v261 = vadd.s32 %v257, %v259
        %v262 = vadd.s32 %v261, %v251
        %v263 = vadd.s32 %v262, %v253
        %v264 = vand.u32 %v241, 65535
        %v265 = vshrl.u32 %v241, 16
        %v266 = vand.u32 %v236, 65535
        %v267 = vshrl.u32 %v236, 16
        %v268 = vmul.u32 %v264, %v266
        %v269 = vmul.u32 %v264, %v267
        %v270 = vmul.u32 %v265, %v266
        %v271 = vmul.u32 %v265, %v267
        %v272 = vshll.u32 %v269, 16
        %v273 = vshrl.u32 %v269, 16
        %v274 = vshll.u32 %v270, 16
        %v275 = vshrl.u32 %v270, 16
        %vm276 = vc.u32 %v268, %v272
        %v277 = vsel %vm276, 1, 0
        %v278 = vadd.s32 %v268, %v272
        %v279 = vadd.s32 %v271, %v277
        %vm280 = vc.u32 %v278, %v274
        %v281 = vsel %vm280, 1, 0
        %v282 = vadd.s32 %v278, %v274
        %v283 = vadd.s32 %v279, %v281
        %v284 = vadd.s32 %v283, %v273
        %v285 = vadd.s32 %v284, %v275
        %v286 = vmul.u32 %v241, %v232
        %v287 = vadd.s32 %v263, %v282
        %vm288 = vc.u32 %v263, %v282
        %v289 = vadd.s32 %v285, 1
        %v290 = vsel %vm288, %v289, %v285
        %v291 = vadd.s32 %v286, %v290
        %v292 = vadd.s32 %v291, 536870912
        %v293 = vshrl.u32 %v292, 30
        %v294 = vshll.u32 %v293, 30
        %v295 = vsub.s32 %v291, %v294
        %vm296 = vcmp.lt.s32.totalorder %v295, 0
        %v297 = vsub.s32 0, %v295
        %v298 = vsel %vm296, %v297, %v295
        %v299 = vclz %v298
        %v300 = vsub.s32 %v299, 2
        %vm301 = vcmp.gt.s32.totalorder 0, %v300
        %v302 = vsel %vm301, 0, %v300
        %v303 = vsub.s32 32, %v302
        %v304 = vshll.u32 %v295, %v302
        %v305 = vshrl.u32 %v287, %v303
        %v306 = vor.u32 %v304, %v305
        %v307 = vsub.s32 4294967266, %v302
        %v308 = vadd.s32 %v307, 127
        %v309 = vshll.u32 %v308, 23
        %v310 = vor.u32 4788187, %v309
        %v311 = vand.u32 2147483647, %v310
        %v313 = vcvt.s32.f32 %v306
        %v314 = vmul.f32 %v313, %v311
        %v315 = vxor.u32 %v314, 2147483648
        %v316 = vsel %vm195, %v315, %v314
        %v317 = vsub.s32 4, %v293
        %v318 = vsel %vm195, %v317, %v293
        %v319 = vsel %vm194, %v181, %v316
        %v320 = vsel %vm194, 0, %v318
        %v321 = vmul.f32 %v319, %v319
        %v322 = vmul.f32 %v321, -0.001358992
        %v323 = vadd.f32 %v322, 0.041655596
        %v324 = vmul.f32 %v321, %v323
        %v325 = vadd.f32 %v324, -0.4999988
        %v326 = vmul.f32 %v321, %v325
        %v327 = vadd.f32 1.0, %v326
        %v328 = vmul.f32 %v319, %v319
        %v329 = vmul.f32 %v328, -0.00019511016
        %v330 = vadd.f32 %v329, 0.008332121
        %v331 = vmul.f32 %v328, %v330
        %v332 = vadd.f32 %v331, -0.16666654
        %v333 = vmul.f32 %v328, %v332
        %v334 = vadd.f32 %v333, 1.0
        %v335 = vmul.f32 %v334, %v319
        %vm336 = vweird.f32 %v181
        %v337 = vadd.s32 %v320, 3
        %v338 = vand.u32 %v337, 3
        %vm339 = vcmp.lt.s32.totalorder %v338, 2
        %vm340 = vcmp.eq.s32.totalorder %v338, 0
        %v341 = vxor.u32 %v335, 2147483648
        %v342 = vsel %vm340, %v327, %v341
        %vm343 = vcmp.eq.s32.totalorder %v338, 2
        %v344 = vxor.u32 %v327, 2147483648
        %v345 = vsel %vm343, %v344, %v335
        %v346 = vsel %vm339, %v342, %v345
        %v347 = vsel %vm336, nan, %v346
        %v348 = vand.u32 2147483647, %v182
        %vm349 = vcmp.le.f32.partialorder %v348, 0.7853982
        %vm350 = vcmp.lt.s32.totalorder %v182, 0
        %v351 = vand.u32 %v182, 2139095040
        %v352 = vshrl.u32 %v351, 23
        %v353 = vsub.s32 %v352, 127
        %v354 = vand.u32 2147483647, %v182
        %v355 = vand.u32 %v354, 8388607
        %v356 = vor.u32 %v355, 8388608
        %v357 = vsub.s32 0, %v356
        %v358 = vadd.s32 %v353, 1
        %vm359 = vcmp.gt.s32.totalorder %v358, 0
        %v360 = vsel %vm359, %v358, 0
        %v361 = vshrl.u32 %v360, 5
        %v362 = vand.u32 %v360, 31
        %v363 = vsub.s32 32, %v362
        %v364 = vshrl.u32 683565275, %v363
        %v365 = vshll.u32 683565275, %v362
        %v366 = vshrl.u32 2475754826, %v363
        %v367 = vor.u32 %v365, %v366
        %v368 = vshll.u32 2475754826, %v362
        %v369 = vshrl.u32 2131351028, %v363
        %v370 = vor.u32 %v368, %v369
        %v371 = vshll.u32 2131351028, %v362
        %v372 = vshrl.u32 2102212464, %v363
        %v373 = vor.u32 %v371, %v372
        %v374 = vshll.u32 2102212464, %v362
        %v375 = vshrl.u32 920167782, %v363
        %v376 = vor.u32 %v374, %v375
        %v377 = vshll.u32 920167782, %v362
        %v378 = vshrl.u32 1326507024, %v363
        %v379 = vor.u32 %v377, %v378
        %vm380 = vcmp.lt.s32.totalorder %v361, 1
        %vm381 = vcmp.lt.s32.totalorder %v361, 2
        %vm382 = vcmp.lt.s32.totalorder %v361, 3
        %vm383 = vcmp.lt.s32.totalorder %v361, 4
        %v384 = vsel %vm380, %v364, %v367
        %v385 = vsel %vm383, %v373, 2102212464
        %v386 = vsel %vm382, %v370, %v385
        %v387 = vsel %vm381, %v384, %v386
        %v388 = vsel %vm380, %v367, %v370
        %v389 = vsel %vm383, %v376, 920167782
        %v390 = vsel %vm382, %v373, %v389
        %v391 = vsel %vm381, %v388, %v390
        %v392 = vsel %vm380, %v370, %v373
        %v393 = vsel %vm383, %v379, 1326507024
        %v394 = vsel %vm382, %v376, %v393
        %v395 = vsel %vm381, %v392, %v394
        %v396 = vshll.u32 %v356, 8
        %v397 = vand.u32 %v396, 65535
        %v398 = vshrl.u32 %v396, 16
        %v399 = vand.u32 %v395, 65535
        %v400 = vshrl.u32 %v395, 16
        %v401 = vmul.u32 %v397, %v399
        %v402 = vmul.u32 %v397, %v400
        %v403 = vmul.u32 %v398, %v399
        %v404 = vmul.u32 %v398, %v400
        %v405 = vshll.u32 %v402, 16
        %v406 = vshrl.u32 %v402, 16
        %v407 = vshll.u32 %v403, 16
        %v408 = vshrl.u32 %v403, 16
        %vm409 = vc.u32 %v401, %v405
        %v410 = vsel %vm409, 1, 0
        %v411 = vadd.s32 %v401, %v405
        %v412 = vadd.s32 %v404, %v410
        %vm413 = vc.u32 %v411, %v407
        %v414 = vsel %vm413, 1, 0
        %v415 = vadd.s32 %v411, %v407
        %v416 = vadd.s32 %v412, %v414
        %v417 = vadd.s32 %v416, %v406
        %v418 = vadd.s32 %v417, %v408
        %v419 = vand.u32 %v396, 65535
        %v420 = vshrl.u32 %v396, 16
        %v421 = vand.u32 %v391, 65535
        %v422 = vshrl.u32 %v391, 16
        %v423 = vmul.u32 %v419, %v421
        %v424 = vmul.u32 %v419, %v422
        %v425 = vmul.u32 %v420, %v421
        %v426 = vmul.u32 %v420, %v422
        %v427 = vshll.u32 %v424, 16
        %v428 = vshrl.u32 %v424, 16
        %v429 = vshll.u32 %v425, 16
        %v430 = vshrl.u32 %v425, 16
        %vm431 = vc.u32 %v423, %v427
        %v432 = vsel %vm431, 1, 0
        %v433 = vadd.s32 %v423, %v427
        %v434 = vadd.s32 %v426, %v432
        %vm435 = vc.u32 %v433, %v429
        %v436 = vsel %vm435, 1, 0
        %v437 = vadd.s32 %v433, %v429
        %v438 = vadd.s32 %v434, %v436
        %v439 = vadd.s32 %v438, %v428
        %v440 = vadd.s32 %v439, %v430
        %v441 = vmul.u32 %v396, %v387
        %v442 = vadd.s32 %v418, %v437
        %vm443 = vc.u32 %v418, %v437
        %v444 = vadd.s32 %v440, 1
        %v445 = vsel %vm443, %v444, %v440
        %v446 = vadd.s32 %v441, %v445
        %v447 = vadd.s32 %v446, 536870912
        %v448 = vshrl.u32 %v447, 30
        %v449 = vshll.u32 %v448, 30
        %v450 = vsub.s32 %v446, %v449
        %vm451 = vcmp.lt.s32.totalorder %v450, 0
        %v452 = vsub.s32 0, %v450
        %v453 = vsel %vm451, %v452, %v450
        %v454 = vclz %v453
        %v455 = vsub.s32 %v454, 2
        %vm456 = vcmp.gt.s32.totalorder 0, %v455
        %v457 = vsel %vm456, 0, %v455
        %v458 = vsub.s32 32, %v457
        %v459 = vshll.u32 %v450, %v457
        %v460 = vshrl.u32 %v442, %v458
        %v461 = vor.u32 %v459, %v460
        %v462 = vsub.s32 4294967266, %v457
        %v463 = vadd.s32 %v462, 127
        %v464 = vshll.u32 %v463, 23
        %v465 = vor.u32 4788187, %v464
        %v466 = vand.u32 2147483647, %v465
        %v468 = vcvt.s32.f32 %v461
        %v469 = vmul.f32 %v468, %v466
        %v470 = vxor.u32 %v469, 2147483648
        %v471 = vsel %vm350, %v470, %v469
        %v472 = vsub.s32 4, %v448
        %v473 = vsel %vm350, %v472, %v448
        %v474 = vsel %vm349, %v182, %v471
        %v475 = vsel %vm349, 0, %v473
        %v476 = vmul.f32 %v474, %v474
        %v477 = vmul.f32 %v476, -0.001358992
        %v478 = vadd.f32 %v477, 0.041655596
        %v479 = vmul.f32 %v476, %v478
        %v480 = vadd.f32 %v479, -0.4999988
        %v481 = vmul.f32 %v476, %v480
        %v482 = vadd.f32 1.0, %v481
        %v483 = vmul.f32 %v474, %v474
        %v484 = vmul.f32 %v483, -0.00019511016
        %v485 = vadd.f32 %v484, 0.008332121
        %v486 = vmul.f32 %v483, %v485
        %v487 = vadd.f32 %v486, -0.16666654
        %v488 = vmul.f32 %v483, %v487
        %v489 = vadd.f32 %v488, 1.0
        %v490 = vmul.f32 %v489, %v474
        %vm491 = vweird.f32 %v182
        %v492 = vadd.s32 %v475, 3
        %v493 = vand.u32 %v492, 3
        %vm494 = vcmp.lt.s32.totalorder %v493, 2
        %vm495 = vcmp.eq.s32.totalorder %v493, 0
        %v496 = vxor.u32 %v490, 2147483648
        %v497 = vsel %vm495, %v482, %v496
        %vm498 = vcmp.eq.s32.totalorder %v493, 2
        %v499 = vxor.u32 %v482, 2147483648
        %v500 = vsel %vm498, %v499, %v490
        %v501 = vsel %vm494, %v497, %v500
        %v502 = vsel %vm491, nan, %v501
        %v503 = vand.u32 2147483647, %v183
        %vm504 = vcmp.le.f32.partialorder %v503, 0.7853982
        %vm505 = vcmp.lt.s32.totalorder %v183, 0
        %v506 = vand.u32 %v183, 2139095040
        %v507 = vshrl.u32 %v506, 23
        %v508 = vsub.s32 %v507, 127
        %v509 = vand.u32 2147483647, %v183
        %v510 = vand.u32 %v509, 8388607
        %v511 = vor.u32 %v510, 8388608
        %v512 = vsub.s32 0, %v511
        %v513 = vadd.s32 %v508, 1
        %vm514 = vcmp.gt.s32.totalorder %v513, 0
        %v515 = vsel %vm514, %v513, 0
        %v516 = vshrl.u32 %v515, 5
        %v517 = vand.u32 %v515, 31
        %v518 = vsub.s32 32, %v517
        %v519 = vshrl.u32 683565275, %v518
        %v520 = vshll.u32 683565275, %v517
        %v521 = vshrl.u32 2475754826, %v518
        %v522 = vor.u32 %v520, %v521
        %v523 = vshll.u32 2475754826, %v517
        %v524 = vshrl.u32 2131351028, %v518
        %v525 = vor.u32 %v523, %v524
        %v526 = vshll.u32 2131351028, %v517
        %v527 = vshrl.u32 2102212464, %v518
        %v528 = vor.u32 %v526, %v527
        %v529 = vshll.u32 2102212464, %v517
        %v530 = vshrl.u32 920167782, %v518
        %v531 = vor.u32 %v529, %v530
        %v532 = vshll.u32 920167782, %v517
        %v533 = vshrl.u32 1326507024, %v518
        %v534 = vor.u32 %v532, %v533
        %vm535 = vcmp.lt.s32.totalorder %v516, 1
        %vm536 = vcmp.lt.s32.totalorder %v516, 2
        %vm537 = vcmp.lt.s32.totalorder %v516, 3
        %vm538 = vcmp.lt.s32.totalorder %v516, 4
        %v539 = vsel %vm535, %v519, %v522
        %v540 = vsel %vm538, %v528, 2102212464
        %v541 = vsel %vm537, %v525, %v540
        %v542 = vsel %vm536, %v539, %v541
        %v543 = vsel %vm535, %v522, %v525
        %v544 = vsel %vm538, %v531, 920167782
        %v545 = vsel %vm537, %v528, %v544
        %v546 = vsel %vm536, %v543, %v545
        %v547 = vsel %vm535, %v525, %v528
        %v548 = vsel %vm538, %v534, 1326507024
        %v549 = vsel %vm537, %v531, %v548
        %v550 = vsel %vm536, %v547, %v549
        %v551 = vshll.u32 %v511, 8
        %v552 = vand.u32 %v551, 65535
        %v553 = vshrl.u32 %v551, 16
        %v554 = vand.u32 %v550, 65535
        %v555 = vshrl.u32 %v550, 16
        %v556 = vmul.u32 %v552, %v554
        %v557 = vmul.u32 %v552, %v555
        %v558 = vmul.u32 %v553, %v554
        %v559 = vmul.u32 %v553, %v555
        %v560 = vshll.u32 %v557, 16
        %v561 = vshrl.u32 %v557, 16
        %v562 = vshll.u32 %v558, 16
        %v563 = vshrl.u32 %v558, 16
        %vm564 = vc.u32 %v556, %v560
        %v565 = vsel %vm564, 1, 0
        %v566 = vadd.s32 %v556, %v560
        %v567 = vadd.s32 %v559, %v565
        %vm568 = vc.u32 %v566, %v562
        %v569 = vsel %vm568, 1, 0
        %v570 = vadd.s32 %v566, %v562
        %v571 = vadd.s32 %v567, %v569
        %v572 = vadd.s32 %v571, %v561
        %v573 = vadd.s32 %v572, %v563
        %v574 = vand.u32 %v551, 65535
        %v575 = vshrl.u32 %v551, 16
        %v576 = vand.u32 %v546, 65535
        %v577 = vshrl.u32 %v546, 16
        %v578 = vmul.u32 %v574, %v576
        %v579 = vmul.u32 %v574, %v577
        %v580 = vmul.u32 %v575, %v576
        %v581 = vmul.u32 %v575, %v577
        %v582 = vshll.u32 %v579, 16
        %v583 = vshrl.u32 %v579, 16
        %v584 = vshll.u32 %v580, 16
        %v585 = vshrl.u32 %v580, 16
        %vm586 = vc.u32 %v578, %v582
        %v587 = vsel %vm586, 1, 0
        %v588 = vadd.s32 %v578, %v582
        %v589 = vadd.s32 %v581, %v587
        %vm590 = vc.u32 %v588, %v584
        %v591 = vsel %vm590, 1, 0
        %v592 = vadd.s32 %v588, %v584
        %v593 = vadd.s32 %v589, %v591
        %v594 = vadd.s32 %v593, %v583
        %v595 = vadd.s32 %v594, %v585
        %v596 = vmul.u32 %v551, %v542
        %v597 = vadd.s32 %v573, %v592
        %vm598 = vc.u32 %v573, %v592
        %v599 = vadd.s32 %v595, 1
        %v600 = vsel %vm598, %v599, %v595
        %v601 = vadd.s32 %v596, %v600
        %v602 = vadd.s32 %v601, 536870912
        %v603 = vshrl.u32 %v602, 30
        %v604 = vshll.u32 %v603, 30
        %v605 = vsub.s32 %v601, %v604
        %vm606 = vcmp.lt.s32.totalorder %v605, 0
        %v607 = vsub.s32 0, %v605
        %v608 = vsel %vm606, %v607, %v605
        %v609 = vclz %v608
        %v610 = vsub.s32 %v609, 2
        %vm611 = vcmp.gt.s32.totalorder 0, %v610
        %v612 = vsel %vm611, 0, %v610
        %v613 = vsub.s32 32, %v612
        %v614 = vshll.u32 %v605, %v612
        %v615 = vshrl.u32 %v597, %v613
        %v616 = vor.u32 %v614, %v615
        %v617 = vsub.s32 4294967266, %v612
        %v618 = vadd.s32 %v617, 127
        %v619 = vshll.u32 %v618, 23
        %v620 = vor.u32 4788187, %v619
        %v621 = vand.u32 2147483647, %v620
        %v623 = vcvt.s32.f32 %v616
        %v624 = vmul.f32 %v623, %v621
        %v625 = vxor.u32 %v624, 2147483648
        %v626 = vsel %vm505, %v625, %v624
        %v627 = vsub.s32 4, %v603
        %v628 = vsel %vm505, %v627, %v603
        %v629 = vsel %vm504, %v183, %v626
        %v630 = vsel %vm504, 0, %v628
        %v631 = vmul.f32 %v629, %v629
        %v632 = vmul.f32 %v631, -0.001358992
        %v633 = vadd.f32 %v632, 0.041655596
        %v634 = vmul.f32 %v631, %v633
        %v635 = vadd.f32 %v634, -0.4999988
        %v636 = vmul.f32 %v631, %v635
        %v637 = vadd.f32 1.0, %v636
        %v638 = vmul.f32 %v629, %v629
        %v639 = vmul.f32 %v638, -0.00019511016
        %v640 = vadd.f32 %v639, 0.008332121
        %v641 = vmul.f32 %v638, %v640
        %v642 = vadd.f32 %v641, -0.16666654
        %v643 = vmul.f32 %v638, %v642
        %v644 = vadd.f32 %v643, 1.0
        %v645 = vmul.f32 %v644, %v629
        %vm646 = vweird.f32 %v183
        %v647 = vadd.s32 %v630, 3
        %v648 = vand.u32 %v647, 3
        %vm649 = vcmp.lt.s32.totalorder %v648, 2
        %vm650 = vcmp.eq.s32.totalorder %v648, 0
        %v651 = vxor.u32 %v645, 2147483648
        %v652 = vsel %vm650, %v637, %v651
        %vm653 = vcmp.eq.s32.totalorder %v648, 2
        %v654 = vxor.u32 %v637, 2147483648
        %v655 = vsel %vm653, %v654, %v645
        %v656 = vsel %vm649, %v652, %v655
        %v657 = vsel %vm646, nan, %v656
        %v658 = vand.u32 2147483647, %v184
        %vm659 = vcmp.le.f32.partialorder %v658, 0.7853982
        %vm660 = vcmp.lt.s32.totalorder %v184, 0
        %v661 = vand.u32 %v184, 2139095040
        %v662 = vshrl.u32 %v661, 23
        %v663 = vsub.s32 %v662, 127
        %v664 = vand.u32 2147483647, %v184
        %v665 = vand.u32 %v664, 8388607
        %v666 = vor.u32 %v665, 8388608
        %v667 = vsub.s32 0, %v666
        %v668 = vadd.s32 %v663, 1
        %vm669 = vcmp.gt.s32.totalorder %v668, 0
        %v670 = vsel %vm669, %v668, 0
        %v671 = vshrl.u32 %v670, 5
        %v672 = vand.u32 %v670, 31
        %v673 = vsub.s32 32, %v672
        %v674 = vshrl.u32 683565275, %v673
        %v675 = vshll.u32 683565275, %v672
        %v676 = vshrl.u32 2475754826, %v673
        %v677 = vor.u32 %v675, %v676
        %v678 = vshll.u32 2475754826, %v672
        %v679 = vshrl.u32 2131351028, %v673
        %v680 = vor.u32 %v678, %v679
        %v681 = vshll.u32 2131351028, %v672
        %v682 = vshrl.u32 2102212464, %v673
        %v683 = vor.u32 %v681, %v682
        %v684 = vshll.u32 2102212464, %v672
        %v685 = vshrl.u32 920167782, %v673
        %v686 = vor.u32 %v684, %v685
        %v687 = vshll.u32 920167782, %v672
        %v688 = vshrl.u32 1326507024, %v673
        %v689 = vor.u32 %v687, %v688
        %vm690 = vcmp.lt.s32.totalorder %v671, 1
        %vm691 = vcmp.lt.s32.totalorder %v671, 2
        %vm692 = vcmp.lt.s32.totalorder %v671, 3
        %vm693 = vcmp.lt.s32.totalorder %v671, 4
        %v694 = vsel %vm690, %v674, %v677
        %v695 = vsel %vm693, %v683, 2102212464
        %v696 = vsel %vm692, %v680, %v695
        %v697 = vsel %vm691, %v694, %v696
        %v698 = vsel %vm690, %v677, %v680
        %v699 = vsel %vm693, %v686, 920167782
        %v700 = vsel %vm692, %v683, %v699
        %v701 = vsel %vm691, %v698, %v700
        %v702 = vsel %vm690, %v680, %v683
        %v703 = vsel %vm693, %v689, 1326507024
        %v704 = vsel %vm692, %v686, %v703
        %v705 = vsel %vm691, %v702, %v704
        %v706 = vshll.u32 %v666, 8
        %v707 = vand.u32 %v706, 65535
        %v708 = vshrl.u32 %v706, 16
        %v709 = vand.u32 %v705, 65535
        %v710 = vshrl.u32 %v705, 16
        %v711 = vmul.u32 %v707, %v709
        %v712 = vmul.u32 %v707, %v710
        %v713 = vmul.u32 %v708, %v709
        %v714 = vmul.u32 %v708, %v710
        %v715 = vshll.u32 %v712, 16
        %v716 = vshrl.u32 %v712, 16
        %v717 = vshll.u32 %v713, 16
        %v718 = vshrl.u32 %v713, 16
        %vm719 = vc.u32 %v711, %v715
        %v720 = vsel %vm719, 1, 0
        %v721 = vadd.s32 %v711, %v715
        %v722 = vadd.s32 %v714, %v720
        %vm723 = vc.u32 %v721, %v717
        %v724 = vsel %vm723, 1, 0
        %v725 = vadd.s32 %v721, %v717
        %v726 = vadd.s32 %v722, %v724
        %v727 = vadd.s32 %v726, %v716
        %v728 = vadd.s32 %v727, %v718
        %v729 = vand.u32 %v706, 65535
        %v730 = vshrl.u32 %v706, 16
        %v731 = vand.u32 %v701, 65535
        %v732 = vshrl.u32 %v701, 16
        %v733 = vmul.u32 %v729, %v731
        %v734 = vmul.u32 %v729, %v732
        %v735 = vmul.u32 %v730, %v731
        %v736 = vmul.u32 %v730, %v732
        %v737 = vshll.u32 %v734, 16
        %v738 = vshrl.u32 %v734, 16
        %v739 = vshll.u32 %v735, 16
        %v740 = vshrl.u32 %v735, 16
        %vm741 = vc.u32 %v733, %v737
        %v742 = vsel %vm741, 1, 0
        %v743 = vadd.s32 %v733, %v737
        %v744 = vadd.s32 %v736, %v742
        %vm745 = vc.u32 %v743, %v739
        %v746 = vsel %vm745, 1, 0
        %v747 = vadd.s32 %v743, %v739
        %v748 = vadd.s32 %v744, %v746
        %v749 = vadd.s32 %v748, %v738
        %v750 = vadd.s32 %v749, %v740
        %v751 = vmul.u32 %v706, %v697
        %v752 = vadd.s32 %v728, %v747
        %vm753 = vc.u32 %v728, %v747
        %v754 = vadd.s32 %v750, 1
        %v755 = vsel %vm753, %v754, %v750
        %v756 = vadd.s32 %v751, %v755
        %v757 = vadd.s32 %v756, 536870912
        %v758 = vshrl.u32 %v757, 30
        %v759 = vshll.u32 %v758, 30
        %v760 = vsub.s32 %v756, %v759
        %vm761 = vcmp.lt.s32.totalorder %v760, 0
        %v762 = vsub.s32 0, %v760
        %v763 = vsel %vm761, %v762, %v760
        %v764 = vclz %v763
        %v765 = vsub.s32 %v764, 2
        %vm766 = vcmp.gt.s32.totalorder 0, %v765
        %v767 = vsel %vm766, 0, %v765
        %v768 = vsub.s32 32, %v767
        %v769 = vshll.u32 %v760, %v767
        %v770 = vshrl.u32 %v752, %v768
        %v771 = vor.u32 %v769, %v770
        %v772 = vsub.s32 4294967266, %v767
        %v773 = vadd.s32 %v772, 127
        %v774 = vshll.u32 %v773, 23
        %v775 = vor.u32 4788187, %v774
        %v776 = vand.u32 2147483647, %v775
        %v778 = vcvt.s32.f32 %v771
        %v779 = vmul.f32 %v778, %v776
        %v780 = vxor.u32 %v779, 2147483648
        %v781 = vsel %vm660, %v780, %v779
        %v782 = vsub.s32 4, %v758
        %v783 = vsel %vm660, %v782, %v758
        %v784 = vsel %vm659, %v184, %v781
        %v785 = vsel %vm659, 0, %v783
        %v786 = vmul.f32 %v784, %v784
        %v787 = vmul.f32 %v786, -0.001358992
        %v788 = vadd.f32 %v787, 0.041655596
        %v789 = vmul.f32 %v786, %v788
        %v790 = vadd.f32 %v789, -0.4999988
        %v791 = vmul.f32 %v786, %v790
        %v792 = vadd.f32 1.0, %v791
        %v793 = vmul.f32 %v784, %v784
        %v794 = vmul.f32 %v793, -0.00019511016
        %v795 = vadd.f32 %v794, 0.008332121
        %v796 = vmul.f32 %v793, %v795
        %v797 = vadd.f32 %v796, -0.16666654
        %v798 = vmul.f32 %v793, %v797
        %v799 = vadd.f32 %v798, 1.0
        %v800 = vmul.f32 %v799, %v784
        %vm801 = vweird.f32 %v184
        %v802 = vadd.s32 %v785, 3
        %v803 = vand.u32 %v802, 3
        %vm804 = vcmp.lt.s32.totalorder %v803, 2
        %vm805 = vcmp.eq.s32.totalorder %v803, 0
        %v806 = vxor.u32 %v800, 2147483648
        %v807 = vsel %vm805, %v792, %v806
        %vm808 = vcmp.eq.s32.totalorder %v803, 2
        %v809 = vxor.u32 %v792, 2147483648
        %v810 = vsel %vm808, %v809, %v800
        %v811 = vsel %vm804, %v807, %v810
        %v812 = vsel %vm801, nan, %v811
        %v817 = vrot.slane %v347, 5
        %v818 = vrot.slane %v502, 5
        %v819 = vrot.slane %v657, 5
        %v820 = vrot.slane %v812, 5
        %825 = vst [vmem:[#allocation2] sm:$0x38] %v817
        %826 = vst [vmem:[#allocation2 + $0x8] sm:$0x38] %v818
        %827 = vst [vmem:[#allocation2 + $0x10] sm:$0x38] %v819
        %828 = vst [vmem:[#allocation2 + $0x18] sm:$0x38] %v820
        %v829 = vand.u32 2147483647, %v181
        %vm830 = vcmp.le.f32.partialorder %v829, 0.7853982
        %vm831 = vcmp.lt.s32.totalorder %v181, 0
        %v832 = vand.u32 %v181, 2139095040
        %v833 = vshrl.u32 %v832, 23
        %v834 = vsub.s32 %v833, 127
        %v835 = vand.u32 2147483647, %v181
        %v836 = vand.u32 %v835, 8388607
        %v837 = vor.u32 %v836, 8388608
        %v838 = vsub.s32 0, %v837
        %v839 = vadd.s32 %v834, 1
        %vm840 = vcmp.gt.s32.totalorder %v839, 0
        %v841 = vsel %vm840, %v839, 0
        %v842 = vshrl.u32 %v841, 5
        %v843 = vand.u32 %v841, 31
        %v844 = vsub.s32 32, %v843
        %v845 = vshrl.u32 683565275, %v844
        %v846 = vshll.u32 683565275, %v843
        %v847 = vshrl.u32 2475754826, %v844
        %v848 = vor.u32 %v846, %v847
        %v849 = vshll.u32 2475754826, %v843
        %v850 = vshrl.u32 2131351028, %v844
        %v851 = vor.u32 %v849, %v850
        %v852 = vshll.u32 2131351028, %v843
        %v853 = vshrl.u32 2102212464, %v844
        %v854 = vor.u32 %v852, %v853
        %v855 = vshll.u32 2102212464, %v843
        %v856 = vshrl.u32 920167782, %v844
        %v857 = vor.u32 %v855, %v856
        %v858 = vshll.u32 920167782, %v843
        %v859 = vshrl.u32 1326507024, %v844
        %v860 = vor.u32 %v858, %v859
        %vm861 = vcmp.lt.s32.totalorder %v842, 1
        %vm862 = vcmp.lt.s32.totalorder %v842, 2
        %vm863 = vcmp.lt.s32.totalorder %v842, 3
        %vm864 = vcmp.lt.s32.totalorder %v842, 4
        %v865 = vsel %vm861, %v845, %v848
        %v866 = vsel %vm864, %v854, 2102212464
        %v867 = vsel %vm863, %v851, %v866
        %v868 = vsel %vm862, %v865, %v867
        %v869 = vsel %vm861, %v848, %v851
        %v870 = vsel %vm864, %v857, 920167782
        %v871 = vsel %vm863, %v854, %v870
        %v872 = vsel %vm862, %v869, %v871
        %v873 = vsel %vm861, %v851, %v854
        %v874 = vsel %vm864, %v860, 1326507024
        %v875 = vsel %vm863, %v857, %v874
        %v876 = vsel %vm862, %v873, %v875
        %v877 = vshll.u32 %v837, 8
        %v878 = vand.u32 %v877, 65535
        %v879 = vshrl.u32 %v877, 16
        %v880 = vand.u32 %v876, 65535
        %v881 = vshrl.u32 %v876, 16
        %v882 = vmul.u32 %v878, %v880
        %v883 = vmul.u32 %v878, %v881
        %v884 = vmul.u32 %v879, %v880
        %v885 = vmul.u32 %v879, %v881
        %v886 = vshll.u32 %v883, 16
        %v887 = vshrl.u32 %v883, 16
        %v888 = vshll.u32 %v884, 16
        %v889 = vshrl.u32 %v884, 16
        %vm890 = vc.u32 %v882, %v886
        %v891 = vsel %vm890, 1, 0
        %v892 = vadd.s32 %v882, %v886
        %v893 = vadd.s32 %v885, %v891
        %vm894 = vc.u32 %v892, %v888
        %v895 = vsel %vm894, 1, 0
        %v896 = vadd.s32 %v892, %v888
        %v897 = vadd.s32 %v893, %v895
        %v898 = vadd.s32 %v897, %v887
        %v899 = vadd.s32 %v898, %v889
        %v900 = vand.u32 %v877, 65535
        %v901 = vshrl.u32 %v877, 16
        %v902 = vand.u32 %v872, 65535
        %v903 = vshrl.u32 %v872, 16
        %v904 = vmul.u32 %v900, %v902
        %v905 = vmul.u32 %v900, %v903
        %v906 = vmul.u32 %v901, %v902
        %v907 = vmul.u32 %v901, %v903
        %v908 = vshll.u32 %v905, 16
        %v909 = vshrl.u32 %v905, 16
        %v910 = vshll.u32 %v906, 16
        %v911 = vshrl.u32 %v906, 16
        %vm912 = vc.u32 %v904, %v908
        %v913 = vsel %vm912, 1, 0
        %v914 = vadd.s32 %v904, %v908
        %v915 = vadd.s32 %v907, %v913
        %vm916 = vc.u32 %v914, %v910
        %v917 = vsel %vm916, 1, 0
        %v918 = vadd.s32 %v914, %v910
        %v919 = vadd.s32 %v915, %v917
        %v920 = vadd.s32 %v919, %v909
        %v921 = vadd.s32 %v920, %v911
        %v922 = vmul.u32 %v877, %v868
        %v923 = vadd.s32 %v899, %v918
        %vm924 = vc.u32 %v899, %v918
        %v925 = vadd.s32 %v921, 1
        %v926 = vsel %vm924, %v925, %v921
        %v927 = vadd.s32 %v922, %v926
        %v928 = vadd.s32 %v927, 536870912
        %v929 = vshrl.u32 %v928, 30
        %v930 = vshll.u32 %v929, 30
        %v931 = vsub.s32 %v927, %v930
        %vm932 = vcmp.lt.s32.totalorder %v931, 0
        %v933 = vsub.s32 0, %v931
        %v934 = vsel %vm932, %v933, %v931
        %v935 = vclz %v934
        %v936 = vsub.s32 %v935, 2
        %vm937 = vcmp.gt.s32.totalorder 0, %v936
        %v938 = vsel %vm937, 0, %v936
        %v939 = vsub.s32 32, %v938
        %v940 = vshll.u32 %v931, %v938
        %v941 = vshrl.u32 %v923, %v939
        %v942 = vor.u32 %v940, %v941
        %v943 = vsub.s32 4294967266, %v938
        %v944 = vadd.s32 %v943, 127
        %v945 = vshll.u32 %v944, 23
        %v946 = vor.u32 4788187, %v945
        %v947 = vand.u32 2147483647, %v946
        %v949 = vcvt.s32.f32 %v942
        %v950 = vmul.f32 %v949, %v947
        %v951 = vxor.u32 %v950, 2147483648
        %v952 = vsel %vm831, %v951, %v950
        %v953 = vsub.s32 4, %v929
        %v954 = vsel %vm831, %v953, %v929
        %v955 = vsel %vm830, %v181, %v952
        %v956 = vsel %vm830, 0, %v954
        %v957 = vmul.f32 %v955, %v955
        %v958 = vmul.f32 %v957, -0.001358992
        %v959 = vadd.f32 %v958, 0.041655596
        %v960 = vmul.f32 %v957, %v959
        %v961 = vadd.f32 %v960, -0.4999988
        %v962 = vmul.f32 %v957, %v961
        %v963 = vadd.f32 1.0, %v962
        %v964 = vmul.f32 %v955, %v955
        %v965 = vmul.f32 %v964, -0.00019511016
        %v966 = vadd.f32 %v965, 0.008332121
        %v967 = vmul.f32 %v964, %v966
        %v968 = vadd.f32 %v967, -0.16666654
        %v969 = vmul.f32 %v964, %v968
        %v970 = vadd.f32 %v969, 1.0
        %v971 = vmul.f32 %v970, %v955
        %vm972 = vweird.f32 %v181
        %v973 = vand.u32 %v956, 3
        %vm974 = vcmp.lt.s32.totalorder %v973, 2
        %vm975 = vcmp.eq.s32.totalorder %v973, 0
        %v976 = vxor.u32 %v971, 2147483648
        %v977 = vsel %vm975, %v963, %v976
        %vm978 = vcmp.eq.s32.totalorder %v973, 2
        %v979 = vxor.u32 %v963, 2147483648
        %v980 = vsel %vm978, %v979, %v971
        %v981 = vsel %vm974, %v977, %v980
        %v982 = vsel %vm972, nan, %v981
        %v983 = vand.u32 2147483647, %v182
        %vm984 = vcmp.le.f32.partialorder %v983, 0.7853982
        %vm985 = vcmp.lt.s32.totalorder %v182, 0
        %v986 = vand.u32 %v182, 2139095040
        %v987 = vshrl.u32 %v986, 23
        %v988 = vsub.s32 %v987, 127
        %v989 = vand.u32 2147483647, %v182
        %v990 = vand.u32 %v989, 8388607
        %v991 = vor.u32 %v990, 8388608
        %v992 = vsub.s32 0, %v991
        %v993 = vadd.s32 %v988, 1
        %vm994 = vcmp.gt.s32.totalorder %v993, 0
        %v995 = vsel %vm994, %v993, 0
        %v996 = vshrl.u32 %v995, 5
        %v997 = vand.u32 %v995, 31
        %v998 = vsub.s32 32, %v997
        %v999 = vshrl.u32 683565275, %v998
        %v1000 = vshll.u32 683565275, %v997
        %v1001 = vshrl.u32 2475754826, %v998
        %v1002 = vor.u32 %v1000, %v1001
        %v1003 = vshll.u32 2475754826, %v997
        %v1004 = vshrl.u32 2131351028, %v998
        %v1005 = vor.u32 %v1003, %v1004
        %v1006 = vshll.u32 2131351028, %v997
        %v1007 = vshrl.u32 2102212464, %v998
        %v1008 = vor.u32 %v1006, %v1007
        %v1009 = vshll.u32 2102212464, %v997
        %v1010 = vshrl.u32 920167782, %v998
        %v1011 = vor.u32 %v1009, %v1010
        %v1012 = vshll.u32 920167782, %v997
        %v1013 = vshrl.u32 1326507024, %v998
        %v1014 = vor.u32 %v1012, %v1013
        %vm1015 = vcmp.lt.s32.totalorder %v996, 1
        %vm1016 = vcmp.lt.s32.totalorder %v996, 2
        %vm1017 = vcmp.lt.s32.totalorder %v996, 3
        %vm1018 = vcmp.lt.s32.totalorder %v996, 4
        %v1019 = vsel %vm1015, %v999, %v1002
        %v1020 = vsel %vm1018, %v1008, 2102212464
        %v1021 = vsel %vm1017, %v1005, %v1020
        %v1022 = vsel %vm1016, %v1019, %v1021
        %v1023 = vsel %vm1015, %v1002, %v1005
        %v1024 = vsel %vm1018, %v1011, 920167782
        %v1025 = vsel %vm1017, %v1008, %v1024
        %v1026 = vsel %vm1016, %v1023, %v1025
        %v1027 = vsel %vm1015, %v1005, %v1008
        %v1028 = vsel %vm1018, %v1014, 1326507024
        %v1029 = vsel %vm1017, %v1011, %v1028
        %v1030 = vsel %vm1016, %v1027, %v1029
        %v1031 = vshll.u32 %v991, 8
        %v1032 = vand.u32 %v1031, 65535
        %v1033 = vshrl.u32 %v1031, 16
        %v1034 = vand.u32 %v1030, 65535
        %v1035 = vshrl.u32 %v1030, 16
        %v1036 = vmul.u32 %v1032, %v1034
        %v1037 = vmul.u32 %v1032, %v1035
        %v1038 = vmul.u32 %v1033, %v1034
        %v1039 = vmul.u32 %v1033, %v1035
        %v1040 = vshll.u32 %v1037, 16
        %v1041 = vshrl.u32 %v1037, 16
        %v1042 = vshll.u32 %v1038, 16
        %v1043 = vshrl.u32 %v1038, 16
        %vm1044 = vc.u32 %v1036, %v1040
        %v1045 = vsel %vm1044, 1, 0
        %v1046 = vadd.s32 %v1036, %v1040
        %v1047 = vadd.s32 %v1039, %v1045
        %vm1048 = vc.u32 %v1046, %v1042
        %v1049 = vsel %vm1048, 1, 0
        %v1050 = vadd.s32 %v1046, %v1042
        %v1051 = vadd.s32 %v1047, %v1049
        %v1052 = vadd.s32 %v1051, %v1041
        %v1053 = vadd.s32 %v1052, %v1043
        %v1054 = vand.u32 %v1031, 65535
        %v1055 = vshrl.u32 %v1031, 16
        %v1056 = vand.u32 %v1026, 65535
        %v1057 = vshrl.u32 %v1026, 16
        %v1058 = vmul.u32 %v1054, %v1056
        %v1059 = vmul.u32 %v1054, %v1057
        %v1060 = vmul.u32 %v1055, %v1056
        %v1061 = vmul.u32 %v1055, %v1057
        %v1062 = vshll.u32 %v1059, 16
        %v1063 = vshrl.u32 %v1059, 16
        %v1064 = vshll.u32 %v1060, 16
        %v1065 = vshrl.u32 %v1060, 16
        %vm1066 = vc.u32 %v1058, %v1062
        %v1067 = vsel %vm1066, 1, 0
        %v1068 = vadd.s32 %v1058, %v1062
        %v1069 = vadd.s32 %v1061, %v1067
        %vm1070 = vc.u32 %v1068, %v1064
        %v1071 = vsel %vm1070, 1, 0
        %v1072 = vadd.s32 %v1068, %v1064
        %v1073 = vadd.s32 %v1069, %v1071
        %v1074 = vadd.s32 %v1073, %v1063
        %v1075 = vadd.s32 %v1074, %v1065
        %v1076 = vmul.u32 %v1031, %v1022
        %v1077 = vadd.s32 %v1053, %v1072
        %vm1078 = vc.u32 %v1053, %v1072
        %v1079 = vadd.s32 %v1075, 1
        %v1080 = vsel %vm1078, %v1079, %v1075
        %v1081 = vadd.s32 %v1076, %v1080
        %v1082 = vadd.s32 %v1081, 536870912
        %v1083 = vshrl.u32 %v1082, 30
        %v1084 = vshll.u32 %v1083, 30
        %v1085 = vsub.s32 %v1081, %v1084
        %vm1086 = vcmp.lt.s32.totalorder %v1085, 0
        %v1087 = vsub.s32 0, %v1085
        %v1088 = vsel %vm1086, %v1087, %v1085
        %v1089 = vclz %v1088
        %v1090 = vsub.s32 %v1089, 2
        %vm1091 = vcmp.gt.s32.totalorder 0, %v1090
        %v1092 = vsel %vm1091, 0, %v1090
        %v1093 = vsub.s32 32, %v1092
        %v1094 = vshll.u32 %v1085, %v1092
        %v1095 = vshrl.u32 %v1077, %v1093
        %v1096 = vor.u32 %v1094, %v1095
        %v1097 = vsub.s32 4294967266, %v1092
        %v1098 = vadd.s32 %v1097, 127
        %v1099 = vshll.u32 %v1098, 23
        %v1100 = vor.u32 4788187, %v1099
        %v1101 = vand.u32 2147483647, %v1100
        %v1103 = vcvt.s32.f32 %v1096
        %v1104 = vmul.f32 %v1103, %v1101
        %v1105 = vxor.u32 %v1104, 2147483648
        %v1106 = vsel %vm985, %v1105, %v1104
        %v1107 = vsub.s32 4, %v1083
        %v1108 = vsel %vm985, %v1107, %v1083
        %v1109 = vsel %vm984, %v182, %v1106
        %v1110 = vsel %vm984, 0, %v1108
        %v1111 = vmul.f32 %v1109, %v1109
        %v1112 = vmul.f32 %v1111, -0.001358992
        %v1113 = vadd.f32 %v1112, 0.041655596
        %v1114 = vmul.f32 %v1111, %v1113
        %v1115 = vadd.f32 %v1114, -0.4999988
        %v1116 = vmul.f32 %v1111, %v1115
        %v1117 = vadd.f32 1.0, %v1116
        %v1118 = vmul.f32 %v1109, %v1109
        %v1119 = vmul.f32 %v1118, -0.00019511016
        %v1120 = vadd.f32 %v1119, 0.008332121
        %v1121 = vmul.f32 %v1118, %v1120
        %v1122 = vadd.f32 %v1121, -0.16666654
        %v1123 = vmul.f32 %v1118, %v1122
        %v1124 = vadd.f32 %v1123, 1.0
        %v1125 = vmul.f32 %v1124, %v1109
        %vm1126 = vweird.f32 %v182
        %v1127 = vand.u32 %v1110, 3
        %vm1128 = vcmp.lt.s32.totalorder %v1127, 2
        %vm1129 = vcmp.eq.s32.totalorder %v1127, 0
        %v1130 = vxor.u32 %v1125, 2147483648
        %v1131 = vsel %vm1129, %v1117, %v1130
        %vm1132 = vcmp.eq.s32.totalorder %v1127, 2
        %v1133 = vxor.u32 %v1117, 2147483648
        %v1134 = vsel %vm1132, %v1133, %v1125
        %v1135 = vsel %vm1128, %v1131, %v1134
        %v1136 = vsel %vm1126, nan, %v1135
        %v1137 = vand.u32 2147483647, %v183
        %vm1138 = vcmp.le.f32.partialorder %v1137, 0.7853982
        %vm1139 = vcmp.lt.s32.totalorder %v183, 0
        %v1140 = vand.u32 %v183, 2139095040
        %v1141 = vshrl.u32 %v1140, 23
        %v1142 = vsub.s32 %v1141, 127
        %v1143 = vand.u32 2147483647, %v183
        %v1144 = vand.u32 %v1143, 8388607
        %v1145 = vor.u32 %v1144, 8388608
        %v1146 = vsub.s32 0, %v1145
        %v1147 = vadd.s32 %v1142, 1
        %vm1148 = vcmp.gt.s32.totalorder %v1147, 0
        %v1149 = vsel %vm1148, %v1147, 0
        %v1150 = vshrl.u32 %v1149, 5
        %v1151 = vand.u32 %v1149, 31
        %v1152 = vsub.s32 32, %v1151
        %v1153 = vshrl.u32 683565275, %v1152
        %v1154 = vshll.u32 683565275, %v1151
        %v1155 = vshrl.u32 2475754826, %v1152
        %v1156 = vor.u32 %v1154, %v1155
        %v1157 = vshll.u32 2475754826, %v1151
        %v1158 = vshrl.u32 2131351028, %v1152
        %v1159 = vor.u32 %v1157, %v1158
        %v1160 = vshll.u32 2131351028, %v1151
        %v1161 = vshrl.u32 2102212464, %v1152
        %v1162 = vor.u32 %v1160, %v1161
        %v1163 = vshll.u32 2102212464, %v1151
        %v1164 = vshrl.u32 920167782, %v1152
        %v1165 = vor.u32 %v1163, %v1164
        %v1166 = vshll.u32 920167782, %v1151
        %v1167 = vshrl.u32 1326507024, %v1152
        %v1168 = vor.u32 %v1166, %v1167
        %vm1169 = vcmp.lt.s32.totalorder %v1150, 1
        %vm1170 = vcmp.lt.s32.totalorder %v1150, 2
        %vm1171 = vcmp.lt.s32.totalorder %v1150, 3
        %vm1172 = vcmp.lt.s32.totalorder %v1150, 4
        %v1173 = vsel %vm1169, %v1153, %v1156
        %v1174 = vsel %vm1172, %v1162, 2102212464
        %v1175 = vsel %vm1171, %v1159, %v1174
        %v1176 = vsel %vm1170, %v1173, %v1175
        %v1177 = vsel %vm1169, %v1156, %v1159
        %v1178 = vsel %vm1172, %v1165, 920167782
        %v1179 = vsel %vm1171, %v1162, %v1178
        %v1180 = vsel %vm1170, %v1177, %v1179
        %v1181 = vsel %vm1169, %v1159, %v1162
        %v1182 = vsel %vm1172, %v1168, 1326507024
        %v1183 = vsel %vm1171, %v1165, %v1182
        %v1184 = vsel %vm1170, %v1181, %v1183
        %v1185 = vshll.u32 %v1145, 8
        %v1186 = vand.u32 %v1185, 65535
        %v1187 = vshrl.u32 %v1185, 16
        %v1188 = vand.u32 %v1184, 65535
        %v1189 = vshrl.u32 %v1184, 16
        %v1190 = vmul.u32 %v1186, %v1188
        %v1191 = vmul.u32 %v1186, %v1189
        %v1192 = vmul.u32 %v1187, %v1188
        %v1193 = vmul.u32 %v1187, %v1189
        %v1194 = vshll.u32 %v1191, 16
        %v1195 = vshrl.u32 %v1191, 16
        %v1196 = vshll.u32 %v1192, 16
        %v1197 = vshrl.u32 %v1192, 16
        %vm1198 = vc.u32 %v1190, %v1194
        %v1199 = vsel %vm1198, 1, 0
        %v1200 = vadd.s32 %v1190, %v1194
        %v1201 = vadd.s32 %v1193, %v1199
        %vm1202 = vc.u32 %v1200, %v1196
        %v1203 = vsel %vm1202, 1, 0
        %v1204 = vadd.s32 %v1200, %v1196
        %v1205 = vadd.s32 %v1201, %v1203
        %v1206 = vadd.s32 %v1205, %v1195
        %v1207 = vadd.s32 %v1206, %v1197
        %v1208 = vand.u32 %v1185, 65535
        %v1209 = vshrl.u32 %v1185, 16
        %v1210 = vand.u32 %v1180, 65535
        %v1211 = vshrl.u32 %v1180, 16
        %v1212 = vmul.u32 %v1208, %v1210
        %v1213 = vmul.u32 %v1208, %v1211
        %v1214 = vmul.u32 %v1209, %v1210
        %v1215 = vmul.u32 %v1209, %v1211
        %v1216 = vshll.u32 %v1213, 16
        %v1217 = vshrl.u32 %v1213, 16
        %v1218 = vshll.u32 %v1214, 16
        %v1219 = vshrl.u32 %v1214, 16
        %vm1220 = vc.u32 %v1212, %v1216
        %v1221 = vsel %vm1220, 1, 0
        %v1222 = vadd.s32 %v1212, %v1216
        %v1223 = vadd.s32 %v1215, %v1221
        %vm1224 = vc.u32 %v1222, %v1218
        %v1225 = vsel %vm1224, 1, 0
        %v1226 = vadd.s32 %v1222, %v1218
        %v1227 = vadd.s32 %v1223, %v1225
        %v1228 = vadd.s32 %v1227, %v1217
        %v1229 = vadd.s32 %v1228, %v1219
        %v1230 = vmul.u32 %v1185, %v1176
        %v1231 = vadd.s32 %v1207, %v1226
        %vm1232 = vc.u32 %v1207, %v1226
        %v1233 = vadd.s32 %v1229, 1
        %v1234 = vsel %vm1232, %v1233, %v1229
        %v1235 = vadd.s32 %v1230, %v1234
        %v1236 = vadd.s32 %v1235, 536870912
        %v1237 = vshrl.u32 %v1236, 30
        %v1238 = vshll.u32 %v1237, 30
        %v1239 = vsub.s32 %v1235, %v1238
        %vm1240 = vcmp.lt.s32.totalorder %v1239, 0
        %v1241 = vsub.s32 0, %v1239
        %v1242 = vsel %vm1240, %v1241, %v1239
        %v1243 = vclz %v1242
        %v1244 = vsub.s32 %v1243, 2
        %vm1245 = vcmp.gt.s32.totalorder 0, %v1244
        %v1246 = vsel %vm1245, 0, %v1244
        %v1247 = vsub.s32 32, %v1246
        %v1248 = vshll.u32 %v1239, %v1246
        %v1249 = vshrl.u32 %v1231, %v1247
        %v1250 = vor.u32 %v1248, %v1249
        %v1251 = vsub.s32 4294967266, %v1246
        %v1252 = vadd.s32 %v1251, 127
        %v1253 = vshll.u32 %v1252, 23
        %v1254 = vor.u32 4788187, %v1253
        %v1255 = vand.u32 2147483647, %v1254
        %v1257 = vcvt.s32.f32 %v1250
        %v1258 = vmul.f32 %v1257, %v1255
        %v1259 = vxor.u32 %v1258, 2147483648
        %v1260 = vsel %vm1139, %v1259, %v1258
        %v1261 = vsub.s32 4, %v1237
        %v1262 = vsel %vm1139, %v1261, %v1237
        %v1263 = vsel %vm1138, %v183, %v1260
        %v1264 = vsel %vm1138, 0, %v1262
        %v1265 = vmul.f32 %v1263, %v1263
        %v1266 = vmul.f32 %v1265, -0.001358992
        %v1267 = vadd.f32 %v1266, 0.041655596
        %v1268 = vmul.f32 %v1265, %v1267
        %v1269 = vadd.f32 %v1268, -0.4999988
        %v1270 = vmul.f32 %v1265, %v1269
        %v1271 = vadd.f32 1.0, %v1270
        %v1272 = vmul.f32 %v1263, %v1263
        %v1273 = vmul.f32 %v1272, -0.00019511016
        %v1274 = vadd.f32 %v1273, 0.008332121
        %v1275 = vmul.f32 %v1272, %v1274
        %v1276 = vadd.f32 %v1275, -0.16666654
        %v1277 = vmul.f32 %v1272, %v1276
        %v1278 = vadd.f32 %v1277, 1.0
        %v1279 = vmul.f32 %v1278, %v1263
        %vm1280 = vweird.f32 %v183
        %v1281 = vand.u32 %v1264, 3
        %vm1282 = vcmp.lt.s32.totalorder %v1281, 2
        %vm1283 = vcmp.eq.s32.totalorder %v1281, 0
        %v1284 = vxor.u32 %v1279, 2147483648
        %v1285 = vsel %vm1283, %v1271, %v1284
        %vm1286 = vcmp.eq.s32.totalorder %v1281, 2
        %v1287 = vxor.u32 %v1271, 2147483648
        %v1288 = vsel %vm1286, %v1287, %v1279
        %v1289 = vsel %vm1282, %v1285, %v1288
        %v1290 = vsel %vm1280, nan, %v1289
        %v1291 = vand.u32 2147483647, %v184
        %vm1292 = vcmp.le.f32.partialorder %v1291, 0.7853982
        %vm1293 = vcmp.lt.s32.totalorder %v184, 0
        %v1294 = vand.u32 %v184, 2139095040
        %v1295 = vshrl.u32 %v1294, 23
        %v1296 = vsub.s32 %v1295, 127
        %v1297 = vand.u32 2147483647, %v184
        %v1298 = vand.u32 %v1297, 8388607
        %v1299 = vor.u32 %v1298, 8388608
        %v1300 = vsub.s32 0, %v1299
        %v1301 = vadd.s32 %v1296, 1
        %vm1302 = vcmp.gt.s32.totalorder %v1301, 0
        %v1303 = vsel %vm1302, %v1301, 0
        %v1304 = vshrl.u32 %v1303, 5
        %v1305 = vand.u32 %v1303, 31
        %v1306 = vsub.s32 32, %v1305
        %v1307 = vshrl.u32 683565275, %v1306
        %v1308 = vshll.u32 683565275, %v1305
        %v1309 = vshrl.u32 2475754826, %v1306
        %v1310 = vor.u32 %v1308, %v1309
        %v1311 = vshll.u32 2475754826, %v1305
        %v1312 = vshrl.u32 2131351028, %v1306
        %v1313 = vor.u32 %v1311, %v1312
        %v1314 = vshll.u32 2131351028, %v1305
        %v1315 = vshrl.u32 2102212464, %v1306
        %v1316 = vor.u32 %v1314, %v1315
        %v1317 = vshll.u32 2102212464, %v1305
        %v1318 = vshrl.u32 920167782, %v1306
        %v1319 = vor.u32 %v1317, %v1318
        %v1320 = vshll.u32 920167782, %v1305
        %v1321 = vshrl.u32 1326507024, %v1306
        %v1322 = vor.u32 %v1320, %v1321
        %vm1323 = vcmp.lt.s32.totalorder %v1304, 1
        %vm1324 = vcmp.lt.s32.totalorder %v1304, 2
        %vm1325 = vcmp.lt.s32.totalorder %v1304, 3
        %vm1326 = vcmp.lt.s32.totalorder %v1304, 4
        %v1327 = vsel %vm1323, %v1307, %v1310
        %v1328 = vsel %vm1326, %v1316, 2102212464
        %v1329 = vsel %vm1325, %v1313, %v1328
        %v1330 = vsel %vm1324, %v1327, %v1329
        %v1331 = vsel %vm1323, %v1310, %v1313
        %v1332 = vsel %vm1326, %v1319, 920167782
        %v1333 = vsel %vm1325, %v1316, %v1332
        %v1334 = vsel %vm1324, %v1331, %v1333
        %v1335 = vsel %vm1323, %v1313, %v1316
        %v1336 = vsel %vm1326, %v1322, 1326507024
        %v1337 = vsel %vm1325, %v1319, %v1336
        %v1338 = vsel %vm1324, %v1335, %v1337
        %v1339 = vshll.u32 %v1299, 8
        %v1340 = vand.u32 %v1339, 65535
        %v1341 = vshrl.u32 %v1339, 16
        %v1342 = vand.u32 %v1338, 65535
        %v1343 = vshrl.u32 %v1338, 16
        %v1344 = vmul.u32 %v1340, %v1342
        %v1345 = vmul.u32 %v1340, %v1343
        %v1346 = vmul.u32 %v1341, %v1342
        %v1347 = vmul.u32 %v1341, %v1343
        %v1348 = vshll.u32 %v1345, 16
        %v1349 = vshrl.u32 %v1345, 16
        %v1350 = vshll.u32 %v1346, 16
        %v1351 = vshrl.u32 %v1346, 16
        %vm1352 = vc.u32 %v1344, %v1348
        %v1353 = vsel %vm1352, 1, 0
        %v1354 = vadd.s32 %v1344, %v1348
        %v1355 = vadd.s32 %v1347, %v1353
        %vm1356 = vc.u32 %v1354, %v1350
        %v1357 = vsel %vm1356, 1, 0
        %v1358 = vadd.s32 %v1354, %v1350
        %v1359 = vadd.s32 %v1355, %v1357
        %v1360 = vadd.s32 %v1359, %v1349
        %v1361 = vadd.s32 %v1360, %v1351
        %v1362 = vand.u32 %v1339, 65535
        %v1363 = vshrl.u32 %v1339, 16
        %v1364 = vand.u32 %v1334, 65535
        %v1365 = vshrl.u32 %v1334, 16
        %v1366 = vmul.u32 %v1362, %v1364
        %v1367 = vmul.u32 %v1362, %v1365
        %v1368 = vmul.u32 %v1363, %v1364
        %v1369 = vmul.u32 %v1363, %v1365
        %v1370 = vshll.u32 %v1367, 16
        %v1371 = vshrl.u32 %v1367, 16
        %v1372 = vshll.u32 %v1368, 16
        %v1373 = vshrl.u32 %v1368, 16
        %vm1374 = vc.u32 %v1366, %v1370
        %v1375 = vsel %vm1374, 1, 0
        %v1376 = vadd.s32 %v1366, %v1370
        %v1377 = vadd.s32 %v1369, %v1375
        %vm1378 = vc.u32 %v1376, %v1372
        %v1379 = vsel %vm1378, 1, 0
        %v1380 = vadd.s32 %v1376, %v1372
        %v1381 = vadd.s32 %v1377, %v1379
        %v1382 = vadd.s32 %v1381, %v1371
        %v1383 = vadd.s32 %v1382, %v1373
        %v1384 = vmul.u32 %v1339, %v1330
        %v1385 = vadd.s32 %v1361, %v1380
        %vm1386 = vc.u32 %v1361, %v1380
        %v1387 = vadd.s32 %v1383, 1
        %v1388 = vsel %vm1386, %v1387, %v1383
        %v1389 = vadd.s32 %v1384, %v1388
        %v1390 = vadd.s32 %v1389, 536870912
        %v1391 = vshrl.u32 %v1390, 30
        %v1392 = vshll.u32 %v1391, 30
        %v1393 = vsub.s32 %v1389, %v1392
        %vm1394 = vcmp.lt.s32.totalorder %v1393, 0
        %v1395 = vsub.s32 0, %v1393
        %v1396 = vsel %vm1394, %v1395, %v1393
        %v1397 = vclz %v1396
        %v1398 = vsub.s32 %v1397, 2
        %vm1399 = vcmp.gt.s32.totalorder 0, %v1398
        %v1400 = vsel %vm1399, 0, %v1398
        %v1401 = vsub.s32 32, %v1400
        %v1402 = vshll.u32 %v1393, %v1400
        %v1403 = vshrl.u32 %v1385, %v1401
        %v1404 = vor.u32 %v1402, %v1403
        %v1405 = vsub.s32 4294967266, %v1400
        %v1406 = vadd.s32 %v1405, 127
        %v1407 = vshll.u32 %v1406, 23
        %v1408 = vor.u32 4788187, %v1407
        %v1409 = vand.u32 2147483647, %v1408
        %v1411 = vcvt.s32.f32 %v1404
        %v1412 = vmul.f32 %v1411, %v1409
        %v1413 = vxor.u32 %v1412, 2147483648
        %v1414 = vsel %vm1293, %v1413, %v1412
        %v1415 = vsub.s32 4, %v1391
        %v1416 = vsel %vm1293, %v1415, %v1391
        %v1417 = vsel %vm1292, %v184, %v1414
        %v1418 = vsel %vm1292, 0, %v1416
        %v1419 = vmul.f32 %v1417, %v1417
        %v1420 = vmul.f32 %v1419, -0.001358992
        %v1421 = vadd.f32 %v1420, 0.041655596
        %v1422 = vmul.f32 %v1419, %v1421
        %v1423 = vadd.f32 %v1422, -0.4999988
        %v1424 = vmul.f32 %v1419, %v1423
        %v1425 = vadd.f32 1.0, %v1424
        %v1426 = vmul.f32 %v1417, %v1417
        %v1427 = vmul.f32 %v1426, -0.00019511016
        %v1428 = vadd.f32 %v1427, 0.008332121
        %v1429 = vmul.f32 %v1426, %v1428
        %v1430 = vadd.f32 %v1429, -0.16666654
        %v1431 = vmul.f32 %v1426, %v1430
        %v1432 = vadd.f32 %v1431, 1.0
        %v1433 = vmul.f32 %v1432, %v1417
        %vm1434 = vweird.f32 %v184
        %v1435 = vand.u32 %v1418, 3
        %vm1436 = vcmp.lt.s32.totalorder %v1435, 2
        %vm1437 = vcmp.eq.s32.totalorder %v1435, 0
        %v1438 = vxor.u32 %v1433, 2147483648
        %v1439 = vsel %vm1437, %v1425, %v1438
        %vm1440 = vcmp.eq.s32.totalorder %v1435, 2
        %v1441 = vxor.u32 %v1425, 2147483648
        %v1442 = vsel %vm1440, %v1441, %v1433
        %v1443 = vsel %vm1436, %v1439, %v1442
        %v1444 = vsel %vm1434, nan, %v1443
        %v1449 = vrot.slane %v982, 1
        %v1450 = vrot.slane %v1136, 1
        %v1451 = vrot.slane %v1290, 1
        %v1452 = vrot.slane %v1444, 1
        %1457 = vst [vmem:[#allocation2 + $0x20] sm:$0x80] %v1449
        %1458 = vst [vmem:[#allocation2 + $0x28] sm:$0x80] %v1450
        %1459 = vst [vmem:[#allocation2 + $0x30] sm:$0x80] %v1451
        %1460 = vst [vmem:[#allocation2 + $0x38] sm:$0x80] %v1452
        %1461 = vst [vmem:[#allocation2 + $0x40] sm:$0x3] %v1449
        %1462 = vst [vmem:[#allocation2 + $0x48] sm:$0x3] %v1450
        %1463 = vst [vmem:[#allocation2 + $0x50] sm:$0x3] %v1451
        %1464 = vst [vmem:[#allocation2 + $0x58] sm:$0x3] %v1452
        %v1465 = vmul.f32 %v181, 2.0
        %v1466 = vmul.f32 %v182, 2.0
        %v1467 = vmul.f32 %v183, 2.0
        %v1468 = vmul.f32 %v184, 2.0
        %v1469 = vand.u32 2147483647, %v1465
        %vm1470 = vcmp.le.f32.partialorder %v1469, 0.7853982
        %vm1471 = vcmp.lt.s32.totalorder %v1465, 0
        %v1472 = vand.u32 %v1465, 2139095040
        %v1473 = vshrl.u32 %v1472, 23
        %v1474 = vsub.s32 %v1473, 127
        %v1475 = vand.u32 2147483647, %v1465
        %v1476 = vand.u32 %v1475, 8388607
        %v1477 = vor.u32 %v1476, 8388608
        %v1478 = vsub.s32 0, %v1477
        %v1479 = vadd.s32 %v1474, 1
        %vm1480 = vcmp.gt.s32.totalorder %v1479, 0
        %v1481 = vsel %vm1480, %v1479, 0
        %v1482 = vshrl.u32 %v1481, 5
        %v1483 = vand.u32 %v1481, 31
        %v1484 = vsub.s32 32, %v1483
        %v1485 = vshrl.u32 683565275, %v1484
        %v1486 = vshll.u32 683565275, %v1483
        %v1487 = vshrl.u32 2475754826, %v1484
        %v1488 = vor.u32 %v1486, %v1487
        %v1489 = vshll.u32 2475754826, %v1483
        %v1490 = vshrl.u32 2131351028, %v1484
        %v1491 = vor.u32 %v1489, %v1490
        %v1492 = vshll.u32 2131351028, %v1483
        %v1493 = vshrl.u32 2102212464, %v1484
        %v1494 = vor.u32 %v1492, %v1493
        %v1495 = vshll.u32 2102212464, %v1483
        %v1496 = vshrl.u32 920167782, %v1484
        %v1497 = vor.u32 %v1495, %v1496
        %v1498 = vshll.u32 920167782, %v1483
        %v1499 = vshrl.u32 1326507024, %v1484
        %v1500 = vor.u32 %v1498, %v1499
        %vm1501 = vcmp.lt.s32.totalorder %v1482, 1
        %vm1502 = vcmp.lt.s32.totalorder %v1482, 2
        %vm1503 = vcmp.lt.s32.totalorder %v1482, 3
        %vm1504 = vcmp.lt.s32.totalorder %v1482, 4
        %v1505 = vsel %vm1501, %v1485, %v1488
        %v1506 = vsel %vm1504, %v1494, 2102212464
        %v1507 = vsel %vm1503, %v1491, %v1506
        %v1508 = vsel %vm1502, %v1505, %v1507
        %v1509 = vsel %vm1501, %v1488, %v1491
        %v1510 = vsel %vm1504, %v1497, 920167782
        %v1511 = vsel %vm1503, %v1494, %v1510
        %v1512 = vsel %vm1502, %v1509, %v1511
        %v1513 = vsel %vm1501, %v1491, %v1494
        %v1514 = vsel %vm1504, %v1500, 1326507024
        %v1515 = vsel %vm1503, %v1497, %v1514
        %v1516 = vsel %vm1502, %v1513, %v1515
        %v1517 = vshll.u32 %v1477, 8
        %v1518 = vand.u32 %v1517, 65535
        %v1519 = vshrl.u32 %v1517, 16
        %v1520 = vand.u32 %v1516, 65535
        %v1521 = vshrl.u32 %v1516, 16
        %v1522 = vmul.u32 %v1518, %v1520
        %v1523 = vmul.u32 %v1518, %v1521
        %v1524 = vmul.u32 %v1519, %v1520
        %v1525 = vmul.u32 %v1519, %v1521
        %v1526 = vshll.u32 %v1523, 16
        %v1527 = vshrl.u32 %v1523, 16
        %v1528 = vshll.u32 %v1524, 16
        %v1529 = vshrl.u32 %v1524, 16
        %vm1530 = vc.u32 %v1522, %v1526
        %v1531 = vsel %vm1530, 1, 0
        %v1532 = vadd.s32 %v1522, %v1526
        %v1533 = vadd.s32 %v1525, %v1531
        %vm1534 = vc.u32 %v1532, %v1528
        %v1535 = vsel %vm1534, 1, 0
        %v1536 = vadd.s32 %v1532, %v1528
        %v1537 = vadd.s32 %v1533, %v1535
        %v1538 = vadd.s32 %v1537, %v1527
        %v1539 = vadd.s32 %v1538, %v1529
        %v1540 = vand.u32 %v1517, 65535
        %v1541 = vshrl.u32 %v1517, 16
        %v1542 = vand.u32 %v1512, 65535
        %v1543 = vshrl.u32 %v1512, 16
        %v1544 = vmul.u32 %v1540, %v1542
        %v1545 = vmul.u32 %v1540, %v1543
        %v1546 = vmul.u32 %v1541, %v1542
        %v1547 = vmul.u32 %v1541, %v1543
        %v1548 = vshll.u32 %v1545, 16
        %v1549 = vshrl.u32 %v1545, 16
        %v1550 = vshll.u32 %v1546, 16
        %v1551 = vshrl.u32 %v1546, 16
        %vm1552 = vc.u32 %v1544, %v1548
        %v1553 = vsel %vm1552, 1, 0
        %v1554 = vadd.s32 %v1544, %v1548
        %v1555 = vadd.s32 %v1547, %v1553
        %vm1556 = vc.u32 %v1554, %v1550
        %v1557 = vsel %vm1556, 1, 0
        %v1558 = vadd.s32 %v1554, %v1550
        %v1559 = vadd.s32 %v1555, %v1557
        %v1560 = vadd.s32 %v1559, %v1549
        %v1561 = vadd.s32 %v1560, %v1551
        %v1562 = vmul.u32 %v1517, %v1508
        %v1563 = vadd.s32 %v1539, %v1558
        %vm1564 = vc.u32 %v1539, %v1558
        %v1565 = vadd.s32 %v1561, 1
        %v1566 = vsel %vm1564, %v1565, %v1561
        %v1567 = vadd.s32 %v1562, %v1566
        %v1568 = vadd.s32 %v1567, 536870912
        %v1569 = vshrl.u32 %v1568, 30
        %v1570 = vshll.u32 %v1569, 30
        %v1571 = vsub.s32 %v1567, %v1570
        %vm1572 = vcmp.lt.s32.totalorder %v1571, 0
        %v1573 = vsub.s32 0, %v1571
        %v1574 = vsel %vm1572, %v1573, %v1571
        %v1575 = vclz %v1574
        %v1576 = vsub.s32 %v1575, 2
        %vm1577 = vcmp.gt.s32.totalorder 0, %v1576
        %v1578 = vsel %vm1577, 0, %v1576
        %v1579 = vsub.s32 32, %v1578
        %v1580 = vshll.u32 %v1571, %v1578
        %v1581 = vshrl.u32 %v1563, %v1579
        %v1582 = vor.u32 %v1580, %v1581
        %v1583 = vsub.s32 4294967266, %v1578
        %v1584 = vadd.s32 %v1583, 127
        %v1585 = vshll.u32 %v1584, 23
        %v1586 = vor.u32 4788187, %v1585
        %v1587 = vand.u32 2147483647, %v1586
        %v1589 = vcvt.s32.f32 %v1582
        %v1590 = vmul.f32 %v1589, %v1587
        %v1591 = vxor.u32 %v1590, 2147483648
        %v1592 = vsel %vm1471, %v1591, %v1590
        %v1593 = vsub.s32 4, %v1569
        %v1594 = vsel %vm1471, %v1593, %v1569
        %v1595 = vsel %vm1470, %v1465, %v1592
        %v1596 = vsel %vm1470, 0, %v1594
        %v1597 = vmul.f32 %v1595, %v1595
        %v1598 = vmul.f32 %v1597, -0.001358992
        %v1599 = vadd.f32 %v1598, 0.041655596
        %v1600 = vmul.f32 %v1597, %v1599
        %v1601 = vadd.f32 %v1600, -0.4999988
        %v1602 = vmul.f32 %v1597, %v1601
        %v1603 = vadd.f32 1.0, %v1602
        %v1604 = vmul.f32 %v1595, %v1595
        %v1605 = vmul.f32 %v1604, -0.00019511016
        %v1606 = vadd.f32 %v1605, 0.008332121
        %v1607 = vmul.f32 %v1604, %v1606
        %v1608 = vadd.f32 %v1607, -0.16666654
        %v1609 = vmul.f32 %v1604, %v1608
        %v1610 = vadd.f32 %v1609, 1.0
        %v1611 = vmul.f32 %v1610, %v1595
        %vm1612 = vweird.f32 %v1465
        %v1613 = vadd.s32 %v1596, 3
        %v1614 = vand.u32 %v1613, 3
        %vm1615 = vcmp.lt.s32.totalorder %v1614, 2
        %vm1616 = vcmp.eq.s32.totalorder %v1614, 0
        %v1617 = vxor.u32 %v1611, 2147483648
        %v1618 = vsel %vm1616, %v1603, %v1617
        %vm1619 = vcmp.eq.s32.totalorder %v1614, 2
        %v1620 = vxor.u32 %v1603, 2147483648
        %v1621 = vsel %vm1619, %v1620, %v1611
        %v1622 = vsel %vm1615, %v1618, %v1621
        %v1623 = vsel %vm1612, nan, %v1622
        %v1624 = vand.u32 2147483647, %v1466
        %vm1625 = vcmp.le.f32.partialorder %v1624, 0.7853982
        %vm1626 = vcmp.lt.s32.totalorder %v1466, 0
        %v1627 = vand.u32 %v1466, 2139095040
        %v1628 = vshrl.u32 %v1627, 23
        %v1629 = vsub.s32 %v1628, 127
        %v1630 = vand.u32 2147483647, %v1466
        %v1631 = vand.u32 %v1630, 8388607
        %v1632 = vor.u32 %v1631, 8388608
        %v1633 = vsub.s32 0, %v1632
        %v1634 = vadd.s32 %v1629, 1
        %vm1635 = vcmp.gt.s32.totalorder %v1634, 0
        %v1636 = vsel %vm1635, %v1634, 0
        %v1637 = vshrl.u32 %v1636, 5
        %v1638 = vand.u32 %v1636, 31
        %v1639 = vsub.s32 32, %v1638
        %v1640 = vshrl.u32 683565275, %v1639
        %v1641 = vshll.u32 683565275, %v1638
        %v1642 = vshrl.u32 2475754826, %v1639
        %v1643 = vor.u32 %v1641, %v1642
        %v1644 = vshll.u32 2475754826, %v1638
        %v1645 = vshrl.u32 2131351028, %v1639
        %v1646 = vor.u32 %v1644, %v1645
        %v1647 = vshll.u32 2131351028, %v1638
        %v1648 = vshrl.u32 2102212464, %v1639
        %v1649 = vor.u32 %v1647, %v1648
        %v1650 = vshll.u32 2102212464, %v1638
        %v1651 = vshrl.u32 920167782, %v1639
        %v1652 = vor.u32 %v1650, %v1651
        %v1653 = vshll.u32 920167782, %v1638
        %v1654 = vshrl.u32 1326507024, %v1639
        %v1655 = vor.u32 %v1653, %v1654
        %vm1656 = vcmp.lt.s32.totalorder %v1637, 1
        %vm1657 = vcmp.lt.s32.totalorder %v1637, 2
        %vm1658 = vcmp.lt.s32.totalorder %v1637, 3
        %vm1659 = vcmp.lt.s32.totalorder %v1637, 4
        %v1660 = vsel %vm1656, %v1640, %v1643
        %v1661 = vsel %vm1659, %v1649, 2102212464
        %v1662 = vsel %vm1658, %v1646, %v1661
        %v1663 = vsel %vm1657, %v1660, %v1662
        %v1664 = vsel %vm1656, %v1643, %v1646
        %v1665 = vsel %vm1659, %v1652, 920167782
        %v1666 = vsel %vm1658, %v1649, %v1665
        %v1667 = vsel %vm1657, %v1664, %v1666
        %v1668 = vsel %vm1656, %v1646, %v1649
        %v1669 = vsel %vm1659, %v1655, 1326507024
        %v1670 = vsel %vm1658, %v1652, %v1669
        %v1671 = vsel %vm1657, %v1668, %v1670
        %v1672 = vshll.u32 %v1632, 8
        %v1673 = vand.u32 %v1672, 65535
        %v1674 = vshrl.u32 %v1672, 16
        %v1675 = vand.u32 %v1671, 65535
        %v1676 = vshrl.u32 %v1671, 16
        %v1677 = vmul.u32 %v1673, %v1675
        %v1678 = vmul.u32 %v1673, %v1676
        %v1679 = vmul.u32 %v1674, %v1675
        %v1680 = vmul.u32 %v1674, %v1676
        %v1681 = vshll.u32 %v1678, 16
        %v1682 = vshrl.u32 %v1678, 16
        %v1683 = vshll.u32 %v1679, 16
        %v1684 = vshrl.u32 %v1679, 16
        %vm1685 = vc.u32 %v1677, %v1681
        %v1686 = vsel %vm1685, 1, 0
        %v1687 = vadd.s32 %v1677, %v1681
        %v1688 = vadd.s32 %v1680, %v1686
        %vm1689 = vc.u32 %v1687, %v1683
        %v1690 = vsel %vm1689, 1, 0
        %v1691 = vadd.s32 %v1687, %v1683
        %v1692 = vadd.s32 %v1688, %v1690
        %v1693 = vadd.s32 %v1692, %v1682
        %v1694 = vadd.s32 %v1693, %v1684
        %v1695 = vand.u32 %v1672, 65535
        %v1696 = vshrl.u32 %v1672, 16
        %v1697 = vand.u32 %v1667, 65535
        %v1698 = vshrl.u32 %v1667, 16
        %v1699 = vmul.u32 %v1695, %v1697
        %v1700 = vmul.u32 %v1695, %v1698
        %v1701 = vmul.u32 %v1696, %v1697
        %v1702 = vmul.u32 %v1696, %v1698
        %v1703 = vshll.u32 %v1700, 16
        %v1704 = vshrl.u32 %v1700, 16
        %v1705 = vshll.u32 %v1701, 16
        %v1706 = vshrl.u32 %v1701, 16
        %vm1707 = vc.u32 %v1699, %v1703
        %v1708 = vsel %vm1707, 1, 0
        %v1709 = vadd.s32 %v1699, %v1703
        %v1710 = vadd.s32 %v1702, %v1708
        %vm1711 = vc.u32 %v1709, %v1705
        %v1712 = vsel %vm1711, 1, 0
        %v1713 = vadd.s32 %v1709, %v1705
        %v1714 = vadd.s32 %v1710, %v1712
        %v1715 = vadd.s32 %v1714, %v1704
        %v1716 = vadd.s32 %v1715, %v1706
        %v1717 = vmul.u32 %v1672, %v1663
        %v1718 = vadd.s32 %v1694, %v1713
        %vm1719 = vc.u32 %v1694, %v1713
        %v1720 = vadd.s32 %v1716, 1
        %v1721 = vsel %vm1719, %v1720, %v1716
        %v1722 = vadd.s32 %v1717, %v1721
        %v1723 = vadd.s32 %v1722, 536870912
        %v1724 = vshrl.u32 %v1723, 30
        %v1725 = vshll.u32 %v1724, 30
        %v1726 = vsub.s32 %v1722, %v1725
        %vm1727 = vcmp.lt.s32.totalorder %v1726, 0
        %v1728 = vsub.s32 0, %v1726
        %v1729 = vsel %vm1727, %v1728, %v1726
        %v1730 = vclz %v1729
        %v1731 = vsub.s32 %v1730, 2
        %vm1732 = vcmp.gt.s32.totalorder 0, %v1731
        %v1733 = vsel %vm1732, 0, %v1731
        %v1734 = vsub.s32 32, %v1733
        %v1735 = vshll.u32 %v1726, %v1733
        %v1736 = vshrl.u32 %v1718, %v1734
        %v1737 = vor.u32 %v1735, %v1736
        %v1738 = vsub.s32 4294967266, %v1733
        %v1739 = vadd.s32 %v1738, 127
        %v1740 = vshll.u32 %v1739, 23
        %v1741 = vor.u32 4788187, %v1740
        %v1742 = vand.u32 2147483647, %v1741
        %v1744 = vcvt.s32.f32 %v1737
        %v1745 = vmul.f32 %v1744, %v1742
        %v1746 = vxor.u32 %v1745, 2147483648
        %v1747 = vsel %vm1626, %v1746, %v1745
        %v1748 = vsub.s32 4, %v1724
        %v1749 = vsel %vm1626, %v1748, %v1724
        %v1750 = vsel %vm1625, %v1466, %v1747
        %v1751 = vsel %vm1625, 0, %v1749
        %v1752 = vmul.f32 %v1750, %v1750
        %v1753 = vmul.f32 %v1752, -0.001358992
        %v1754 = vadd.f32 %v1753, 0.041655596
        %v1755 = vmul.f32 %v1752, %v1754
        %v1756 = vadd.f32 %v1755, -0.4999988
        %v1757 = vmul.f32 %v1752, %v1756
        %v1758 = vadd.f32 1.0, %v1757
        %v1759 = vmul.f32 %v1750, %v1750
        %v1760 = vmul.f32 %v1759, -0.00019511016
        %v1761 = vadd.f32 %v1760, 0.008332121
        %v1762 = vmul.f32 %v1759, %v1761
        %v1763 = vadd.f32 %v1762, -0.16666654
        %v1764 = vmul.f32 %v1759, %v1763
        %v1765 = vadd.f32 %v1764, 1.0
        %v1766 = vmul.f32 %v1765, %v1750
        %vm1767 = vweird.f32 %v1466
        %v1768 = vadd.s32 %v1751, 3
        %v1769 = vand.u32 %v1768, 3
        %vm1770 = vcmp.lt.s32.totalorder %v1769, 2
        %vm1771 = vcmp.eq.s32.totalorder %v1769, 0
        %v1772 = vxor.u32 %v1766, 2147483648
        %v1773 = vsel %vm1771, %v1758, %v1772
        %vm1774 = vcmp.eq.s32.totalorder %v1769, 2
        %v1775 = vxor.u32 %v1758, 2147483648
        %v1776 = vsel %vm1774, %v1775, %v1766
        %v1777 = vsel %vm1770, %v1773, %v1776
        %v1778 = vsel %vm1767, nan, %v1777
        %v1779 = vand.u32 2147483647, %v1467
        %vm1780 = vcmp.le.f32.partialorder %v1779, 0.7853982
        %vm1781 = vcmp.lt.s32.totalorder %v1467, 0
        %v1782 = vand.u32 %v1467, 2139095040
        %v1783 = vshrl.u32 %v1782, 23
        %v1784 = vsub.s32 %v1783, 127
        %v1785 = vand.u32 2147483647, %v1467
        %v1786 = vand.u32 %v1785, 8388607
        %v1787 = vor.u32 %v1786, 8388608
        %v1788 = vsub.s32 0, %v1787
        %v1789 = vadd.s32 %v1784, 1
        %vm1790 = vcmp.gt.s32.totalorder %v1789, 0
        %v1791 = vsel %vm1790, %v1789, 0
        %v1792 = vshrl.u32 %v1791, 5
        %v1793 = vand.u32 %v1791, 31
        %v1794 = vsub.s32 32, %v1793
        %v1795 = vshrl.u32 683565275, %v1794
        %v1796 = vshll.u32 683565275, %v1793
        %v1797 = vshrl.u32 2475754826, %v1794
        %v1798 = vor.u32 %v1796, %v1797
        %v1799 = vshll.u32 2475754826, %v1793
        %v1800 = vshrl.u32 2131351028, %v1794
        %v1801 = vor.u32 %v1799, %v1800
        %v1802 = vshll.u32 2131351028, %v1793
        %v1803 = vshrl.u32 2102212464, %v1794
        %v1804 = vor.u32 %v1802, %v1803
        %v1805 = vshll.u32 2102212464, %v1793
        %v1806 = vshrl.u32 920167782, %v1794
        %v1807 = vor.u32 %v1805, %v1806
        %v1808 = vshll.u32 920167782, %v1793
        %v1809 = vshrl.u32 1326507024, %v1794
        %v1810 = vor.u32 %v1808, %v1809
        %vm1811 = vcmp.lt.s32.totalorder %v1792, 1
        %vm1812 = vcmp.lt.s32.totalorder %v1792, 2
        %vm1813 = vcmp.lt.s32.totalorder %v1792, 3
        %vm1814 = vcmp.lt.s32.totalorder %v1792, 4
        %v1815 = vsel %vm1811, %v1795, %v1798
        %v1816 = vsel %vm1814, %v1804, 2102212464
        %v1817 = vsel %vm1813, %v1801, %v1816
        %v1818 = vsel %vm1812, %v1815, %v1817
        %v1819 = vsel %vm1811, %v1798, %v1801
        %v1820 = vsel %vm1814, %v1807, 920167782
        %v1821 = vsel %vm1813, %v1804, %v1820
        %v1822 = vsel %vm1812, %v1819, %v1821
        %v1823 = vsel %vm1811, %v1801, %v1804
        %v1824 = vsel %vm1814, %v1810, 1326507024
        %v1825 = vsel %vm1813, %v1807, %v1824
        %v1826 = vsel %vm1812, %v1823, %v1825
        %v1827 = vshll.u32 %v1787, 8
        %v1828 = vand.u32 %v1827, 65535
        %v1829 = vshrl.u32 %v1827, 16
        %v1830 = vand.u32 %v1826, 65535
        %v1831 = vshrl.u32 %v1826, 16
        %v1832 = vmul.u32 %v1828, %v1830
        %v1833 = vmul.u32 %v1828, %v1831
        %v1834 = vmul.u32 %v1829, %v1830
        %v1835 = vmul.u32 %v1829, %v1831
        %v1836 = vshll.u32 %v1833, 16
        %v1837 = vshrl.u32 %v1833, 16
        %v1838 = vshll.u32 %v1834, 16
        %v1839 = vshrl.u32 %v1834, 16
        %vm1840 = vc.u32 %v1832, %v1836
        %v1841 = vsel %vm1840, 1, 0
        %v1842 = vadd.s32 %v1832, %v1836
        %v1843 = vadd.s32 %v1835, %v1841
        %vm1844 = vc.u32 %v1842, %v1838
        %v1845 = vsel %vm1844, 1, 0
        %v1846 = vadd.s32 %v1842, %v1838
        %v1847 = vadd.s32 %v1843, %v1845
        %v1848 = vadd.s32 %v1847, %v1837
        %v1849 = vadd.s32 %v1848, %v1839
        %v1850 = vand.u32 %v1827, 65535
        %v1851 = vshrl.u32 %v1827, 16
        %v1852 = vand.u32 %v1822, 65535
        %v1853 = vshrl.u32 %v1822, 16
        %v1854 = vmul.u32 %v1850, %v1852
        %v1855 = vmul.u32 %v1850, %v1853
        %v1856 = vmul.u32 %v1851, %v1852
        %v1857 = vmul.u32 %v1851, %v1853
        %v1858 = vshll.u32 %v1855, 16
        %v1859 = vshrl.u32 %v1855, 16
        %v1860 = vshll.u32 %v1856, 16
        %v1861 = vshrl.u32 %v1856, 16
        %vm1862 = vc.u32 %v1854, %v1858
        %v1863 = vsel %vm1862, 1, 0
        %v1864 = vadd.s32 %v1854, %v1858
        %v1865 = vadd.s32 %v1857, %v1863
        %vm1866 = vc.u32 %v1864, %v1860
        %v1867 = vsel %vm1866, 1, 0
        %v1868 = vadd.s32 %v1864, %v1860
        %v1869 = vadd.s32 %v1865, %v1867
        %v1870 = vadd.s32 %v1869, %v1859
        %v1871 = vadd.s32 %v1870, %v1861
        %v1872 = vmul.u32 %v1827, %v1818
        %v1873 = vadd.s32 %v1849, %v1868
        %vm1874 = vc.u32 %v1849, %v1868
        %v1875 = vadd.s32 %v1871, 1
        %v1876 = vsel %vm1874, %v1875, %v1871
        %v1877 = vadd.s32 %v1872, %v1876
        %v1878 = vadd.s32 %v1877, 536870912
        %v1879 = vshrl.u32 %v1878, 30
        %v1880 = vshll.u32 %v1879, 30
        %v1881 = vsub.s32 %v1877, %v1880
        %vm1882 = vcmp.lt.s32.totalorder %v1881, 0
        %v1883 = vsub.s32 0, %v1881
        %v1884 = vsel %vm1882, %v1883, %v1881
        %v1885 = vclz %v1884
        %v1886 = vsub.s32 %v1885, 2
        %vm1887 = vcmp.gt.s32.totalorder 0, %v1886
        %v1888 = vsel %vm1887, 0, %v1886
        %v1889 = vsub.s32 32, %v1888
        %v1890 = vshll.u32 %v1881, %v1888
        %v1891 = vshrl.u32 %v1873, %v1889
        %v1892 = vor.u32 %v1890, %v1891
        %v1893 = vsub.s32 4294967266, %v1888
        %v1894 = vadd.s32 %v1893, 127
        %v1895 = vshll.u32 %v1894, 23
        %v1896 = vor.u32 4788187, %v1895
        %v1897 = vand.u32 2147483647, %v1896
        %v1899 = vcvt.s32.f32 %v1892
        %v1900 = vmul.f32 %v1899, %v1897
        %v1901 = vxor.u32 %v1900, 2147483648
        %v1902 = vsel %vm1781, %v1901, %v1900
        %v1903 = vsub.s32 4, %v1879
        %v1904 = vsel %vm1781, %v1903, %v1879
        %v1905 = vsel %vm1780, %v1467, %v1902
        %v1906 = vsel %vm1780, 0, %v1904
        %v1907 = vmul.f32 %v1905, %v1905
        %v1908 = vmul.f32 %v1907, -0.001358992
        %v1909 = vadd.f32 %v1908, 0.041655596
        %v1910 = vmul.f32 %v1907, %v1909
        %v1911 = vadd.f32 %v1910, -0.4999988
        %v1912 = vmul.f32 %v1907, %v1911
        %v1913 = vadd.f32 1.0, %v1912
        %v1914 = vmul.f32 %v1905, %v1905
        %v1915 = vmul.f32 %v1914, -0.00019511016
        %v1916 = vadd.f32 %v1915, 0.008332121
        %v1917 = vmul.f32 %v1914, %v1916
        %v1918 = vadd.f32 %v1917, -0.16666654
        %v1919 = vmul.f32 %v1914, %v1918
        %v1920 = vadd.f32 %v1919, 1.0
        %v1921 = vmul.f32 %v1920, %v1905
        %vm1922 = vweird.f32 %v1467
        %v1923 = vadd.s32 %v1906, 3
        %v1924 = vand.u32 %v1923, 3
        %vm1925 = vcmp.lt.s32.totalorder %v1924, 2
        %vm1926 = vcmp.eq.s32.totalorder %v1924, 0
        %v1927 = vxor.u32 %v1921, 2147483648
        %v1928 = vsel %vm1926, %v1913, %v1927
        %vm1929 = vcmp.eq.s32.totalorder %v1924, 2
        %v1930 = vxor.u32 %v1913, 2147483648
        %v1931 = vsel %vm1929, %v1930, %v1921
        %v1932 = vsel %vm1925, %v1928, %v1931
        %v1933 = vsel %vm1922, nan, %v1932
        %v1934 = vand.u32 2147483647, %v1468
        %vm1935 = vcmp.le.f32.partialorder %v1934, 0.7853982
        %vm1936 = vcmp.lt.s32.totalorder %v1468, 0
        %v1937 = vand.u32 %v1468, 2139095040
        %v1938 = vshrl.u32 %v1937, 23
        %v1939 = vsub.s32 %v1938, 127
        %v1940 = vand.u32 2147483647, %v1468
        %v1941 = vand.u32 %v1940, 8388607
        %v1942 = vor.u32 %v1941, 8388608
        %v1943 = vsub.s32 0, %v1942
        %v1944 = vadd.s32 %v1939, 1
        %vm1945 = vcmp.gt.s32.totalorder %v1944, 0
        %v1946 = vsel %vm1945, %v1944, 0
        %v1947 = vshrl.u32 %v1946, 5
        %v1948 = vand.u32 %v1946, 31
        %v1949 = vsub.s32 32, %v1948
        %v1950 = vshrl.u32 683565275, %v1949
        %v1951 = vshll.u32 683565275, %v1948
        %v1952 = vshrl.u32 2475754826, %v1949
        %v1953 = vor.u32 %v1951, %v1952
        %v1954 = vshll.u32 2475754826, %v1948
        %v1955 = vshrl.u32 2131351028, %v1949
        %v1956 = vor.u32 %v1954, %v1955
        %v1957 = vshll.u32 2131351028, %v1948
        %v1958 = vshrl.u32 2102212464, %v1949
        %v1959 = vor.u32 %v1957, %v1958
        %v1960 = vshll.u32 2102212464, %v1948
        %v1961 = vshrl.u32 920167782, %v1949
        %v1962 = vor.u32 %v1960, %v1961
        %v1963 = vshll.u32 920167782, %v1948
        %v1964 = vshrl.u32 1326507024, %v1949
        %v1965 = vor.u32 %v1963, %v1964
        %vm1966 = vcmp.lt.s32.totalorder %v1947, 1
        %vm1967 = vcmp.lt.s32.totalorder %v1947, 2
        %vm1968 = vcmp.lt.s32.totalorder %v1947, 3
        %vm1969 = vcmp.lt.s32.totalorder %v1947, 4
        %v1970 = vsel %vm1966, %v1950, %v1953
        %v1971 = vsel %vm1969, %v1959, 2102212464
        %v1972 = vsel %vm1968, %v1956, %v1971
        %v1973 = vsel %vm1967, %v1970, %v1972
        %v1974 = vsel %vm1966, %v1953, %v1956
        %v1975 = vsel %vm1969, %v1962, 920167782
        %v1976 = vsel %vm1968, %v1959, %v1975
        %v1977 = vsel %vm1967, %v1974, %v1976
        %v1978 = vsel %vm1966, %v1956, %v1959
        %v1979 = vsel %vm1969, %v1965, 1326507024
        %v1980 = vsel %vm1968, %v1962, %v1979
        %v1981 = vsel %vm1967, %v1978, %v1980
        %v1982 = vshll.u32 %v1942, 8
        %v1983 = vand.u32 %v1982, 65535
        %v1984 = vshrl.u32 %v1982, 16
        %v1985 = vand.u32 %v1981, 65535
        %v1986 = vshrl.u32 %v1981, 16
        %v1987 = vmul.u32 %v1983, %v1985
        %v1988 = vmul.u32 %v1983, %v1986
        %v1989 = vmul.u32 %v1984, %v1985
        %v1990 = vmul.u32 %v1984, %v1986
        %v1991 = vshll.u32 %v1988, 16
        %v1992 = vshrl.u32 %v1988, 16
        %v1993 = vshll.u32 %v1989, 16
        %v1994 = vshrl.u32 %v1989, 16
        %vm1995 = vc.u32 %v1987, %v1991
        %v1996 = vsel %vm1995, 1, 0
        %v1997 = vadd.s32 %v1987, %v1991
        %v1998 = vadd.s32 %v1990, %v1996
        %vm1999 = vc.u32 %v1997, %v1993
        %v2000 = vsel %vm1999, 1, 0
        %v2001 = vadd.s32 %v1997, %v1993
        %v2002 = vadd.s32 %v1998, %v2000
        %v2003 = vadd.s32 %v2002, %v1992
        %v2004 = vadd.s32 %v2003, %v1994
        %v2005 = vand.u32 %v1982, 65535
        %v2006 = vshrl.u32 %v1982, 16
        %v2007 = vand.u32 %v1977, 65535
        %v2008 = vshrl.u32 %v1977, 16
        %v2009 = vmul.u32 %v2005, %v2007
        %v2010 = vmul.u32 %v2005, %v2008
        %v2011 = vmul.u32 %v2006, %v2007
        %v2012 = vmul.u32 %v2006, %v2008
        %v2013 = vshll.u32 %v2010, 16
        %v2014 = vshrl.u32 %v2010, 16
        %v2015 = vshll.u32 %v2011, 16
        %v2016 = vshrl.u32 %v2011, 16
        %vm2017 = vc.u32 %v2009, %v2013
        %v2018 = vsel %vm2017, 1, 0
        %v2019 = vadd.s32 %v2009, %v2013
        %v2020 = vadd.s32 %v2012, %v2018
        %vm2021 = vc.u32 %v2019, %v2015
        %v2022 = vsel %vm2021, 1, 0
        %v2023 = vadd.s32 %v2019, %v2015
        %v2024 = vadd.s32 %v2020, %v2022
        %v2025 = vadd.s32 %v2024, %v2014
        %v2026 = vadd.s32 %v2025, %v2016
        %v2027 = vmul.u32 %v1982, %v1973
        %v2028 = vadd.s32 %v2004, %v2023
        %vm2029 = vc.u32 %v2004, %v2023
        %v2030 = vadd.s32 %v2026, 1
        %v2031 = vsel %vm2029, %v2030, %v2026
        %v2032 = vadd.s32 %v2027, %v2031
        %v2033 = vadd.s32 %v2032, 536870912
        %v2034 = vshrl.u32 %v2033, 30
        %v2035 = vshll.u32 %v2034, 30
        %v2036 = vsub.s32 %v2032, %v2035
        %vm2037 = vcmp.lt.s32.totalorder %v2036, 0
        %v2038 = vsub.s32 0, %v2036
        %v2039 = vsel %vm2037, %v2038, %v2036
        %v2040 = vclz %v2039
        %v2041 = vsub.s32 %v2040, 2
        %vm2042 = vcmp.gt.s32.totalorder 0, %v2041
        %v2043 = vsel %vm2042, 0, %v2041
        %v2044 = vsub.s32 32, %v2043
        %v2045 = vshll.u32 %v2036, %v2043
        %v2046 = vshrl.u32 %v2028, %v2044
        %v2047 = vor.u32 %v2045, %v2046
        %v2048 = vsub.s32 4294967266, %v2043
        %v2049 = vadd.s32 %v2048, 127
        %v2050 = vshll.u32 %v2049, 23
        %v2051 = vor.u32 4788187, %v2050
        %v2052 = vand.u32 2147483647, %v2051
        %v2054 = vcvt.s32.f32 %v2047
        %v2055 = vmul.f32 %v2054, %v2052
        %v2056 = vxor.u32 %v2055, 2147483648
        %v2057 = vsel %vm1936, %v2056, %v2055
        %v2058 = vsub.s32 4, %v2034
        %v2059 = vsel %vm1936, %v2058, %v2034
        %v2060 = vsel %vm1935, %v1468, %v2057
        %v2061 = vsel %vm1935, 0, %v2059
        %v2062 = vmul.f32 %v2060, %v2060
        %v2063 = vmul.f32 %v2062, -0.001358992
        %v2064 = vadd.f32 %v2063, 0.041655596
        %v2065 = vmul.f32 %v2062, %v2064
        %v2066 = vadd.f32 %v2065, -0.4999988
        %v2067 = vmul.f32 %v2062, %v2066
        %v2068 = vadd.f32 1.0, %v2067
        %v2069 = vmul.f32 %v2060, %v2060
        %v2070 = vmul.f32 %v2069, -0.00019511016
        %v2071 = vadd.f32 %v2070, 0.008332121
        %v2072 = vmul.f32 %v2069, %v2071
        %v2073 = vadd.f32 %v2072, -0.16666654
        %v2074 = vmul.f32 %v2069, %v2073
        %v2075 = vadd.f32 %v2074, 1.0
        %v2076 = vmul.f32 %v2075, %v2060
        %vm2077 = vweird.f32 %v1468
        %v2078 = vadd.s32 %v2061, 3
        %v2079 = vand.u32 %v2078, 3
        %vm2080 = vcmp.lt.s32.totalorder %v2079, 2
        %vm2081 = vcmp.eq.s32.totalorder %v2079, 0
        %v2082 = vxor.u32 %v2076, 2147483648
        %v2083 = vsel %vm2081, %v2068, %v2082
        %vm2084 = vcmp.eq.s32.totalorder %v2079, 2
        %v2085 = vxor.u32 %v2068, 2147483648
        %v2086 = vsel %vm2084, %v2085, %v2076
        %v2087 = vsel %vm2080, %v2083, %v2086
        %v2088 = vsel %vm2077, nan, %v2087
        %v2093 = vrot.slane %v1623, 2
        %v2094 = vrot.slane %v1778, 2
        %v2095 = vrot.slane %v1933, 2
        %v2096 = vrot.slane %v2088, 2
        %2101 = vst [vmem:[#allocation2] sm:$0xc0] %v2093
        %2102 = vst [vmem:[#allocation2 + $0x8] sm:$0xc0] %v2094
        %2103 = vst [vmem:[#allocation2 + $0x10] sm:$0xc0] %v2095
        %2104 = vst [vmem:[#allocation2 + $0x18] sm:$0xc0] %v2096
        %2105 = vst [vmem:[#allocation2 + $0x20] sm:$0x1] %v2093
        %2106 = vst [vmem:[#allocation2 + $0x28] sm:$0x1] %v2094
        %2107 = vst [vmem:[#allocation2 + $0x30] sm:$0x1] %v2095
        %2108 = vst [vmem:[#allocation2 + $0x38] sm:$0x1] %v2096
        %v2109 = vand.u32 2147483647, %v1465
        %vm2110 = vcmp.le.f32.partialorder %v2109, 0.7853982
        %vm2111 = vcmp.lt.s32.totalorder %v1465, 0
        %v2112 = vand.u32 %v1465, 2139095040
        %v2113 = vshrl.u32 %v2112, 23
        %v2114 = vsub.s32 %v2113, 127
        %v2115 = vand.u32 2147483647, %v1465
        %v2116 = vand.u32 %v2115, 8388607
        %v2117 = vor.u32 %v2116, 8388608
        %v2118 = vsub.s32 0, %v2117
        %v2119 = vadd.s32 %v2114, 1
        %vm2120 = vcmp.gt.s32.totalorder %v2119, 0
        %v2121 = vsel %vm2120, %v2119, 0
        %v2122 = vshrl.u32 %v2121, 5
        %v2123 = vand.u32 %v2121, 31
        %v2124 = vsub.s32 32, %v2123
        %v2125 = vshrl.u32 683565275, %v2124
        %v2126 = vshll.u32 683565275, %v2123
        %v2127 = vshrl.u32 2475754826, %v2124
        %v2128 = vor.u32 %v2126, %v2127
        %v2129 = vshll.u32 2475754826, %v2123
        %v2130 = vshrl.u32 2131351028, %v2124
        %v2131 = vor.u32 %v2129, %v2130
        %v2132 = vshll.u32 2131351028, %v2123
        %v2133 = vshrl.u32 2102212464, %v2124
        %v2134 = vor.u32 %v2132, %v2133
        %v2135 = vshll.u32 2102212464, %v2123
        %v2136 = vshrl.u32 920167782, %v2124
        %v2137 = vor.u32 %v2135, %v2136
        %v2138 = vshll.u32 920167782, %v2123
        %v2139 = vshrl.u32 1326507024, %v2124
        %v2140 = vor.u32 %v2138, %v2139
        %vm2141 = vcmp.lt.s32.totalorder %v2122, 1
        %vm2142 = vcmp.lt.s32.totalorder %v2122, 2
        %vm2143 = vcmp.lt.s32.totalorder %v2122, 3
        %vm2144 = vcmp.lt.s32.totalorder %v2122, 4
        %v2145 = vsel %vm2141, %v2125, %v2128
        %v2146 = vsel %vm2144, %v2134, 2102212464
        %v2147 = vsel %vm2143, %v2131, %v2146
        %v2148 = vsel %vm2142, %v2145, %v2147
        %v2149 = vsel %vm2141, %v2128, %v2131
        %v2150 = vsel %vm2144, %v2137, 920167782
        %v2151 = vsel %vm2143, %v2134, %v2150
        %v2152 = vsel %vm2142, %v2149, %v2151
        %v2153 = vsel %vm2141, %v2131, %v2134
        %v2154 = vsel %vm2144, %v2140, 1326507024
        %v2155 = vsel %vm2143, %v2137, %v2154
        %v2156 = vsel %vm2142, %v2153, %v2155
        %v2157 = vshll.u32 %v2117, 8
        %v2158 = vand.u32 %v2157, 65535
        %v2159 = vshrl.u32 %v2157, 16
        %v2160 = vand.u32 %v2156, 65535
        %v2161 = vshrl.u32 %v2156, 16
        %v2162 = vmul.u32 %v2158, %v2160
        %v2163 = vmul.u32 %v2158, %v2161
        %v2164 = vmul.u32 %v2159, %v2160
        %v2165 = vmul.u32 %v2159, %v2161
        %v2166 = vshll.u32 %v2163, 16
        %v2167 = vshrl.u32 %v2163, 16
        %v2168 = vshll.u32 %v2164, 16
        %v2169 = vshrl.u32 %v2164, 16
        %vm2170 = vc.u32 %v2162, %v2166
        %v2171 = vsel %vm2170, 1, 0
        %v2172 = vadd.s32 %v2162, %v2166
        %v2173 = vadd.s32 %v2165, %v2171
        %vm2174 = vc.u32 %v2172, %v2168
        %v2175 = vsel %vm2174, 1, 0
        %v2176 = vadd.s32 %v2172, %v2168
        %v2177 = vadd.s32 %v2173, %v2175
        %v2178 = vadd.s32 %v2177, %v2167
        %v2179 = vadd.s32 %v2178, %v2169
        %v2180 = vand.u32 %v2157, 65535
        %v2181 = vshrl.u32 %v2157, 16
        %v2182 = vand.u32 %v2152, 65535
        %v2183 = vshrl.u32 %v2152, 16
        %v2184 = vmul.u32 %v2180, %v2182
        %v2185 = vmul.u32 %v2180, %v2183
        %v2186 = vmul.u32 %v2181, %v2182
        %v2187 = vmul.u32 %v2181, %v2183
        %v2188 = vshll.u32 %v2185, 16
        %v2189 = vshrl.u32 %v2185, 16
        %v2190 = vshll.u32 %v2186, 16
        %v2191 = vshrl.u32 %v2186, 16
        %vm2192 = vc.u32 %v2184, %v2188
        %v2193 = vsel %vm2192, 1, 0
        %v2194 = vadd.s32 %v2184, %v2188
        %v2195 = vadd.s32 %v2187, %v2193
        %vm2196 = vc.u32 %v2194, %v2190
        %v2197 = vsel %vm2196, 1, 0
        %v2198 = vadd.s32 %v2194, %v2190
        %v2199 = vadd.s32 %v2195, %v2197
        %v2200 = vadd.s32 %v2199, %v2189
        %v2201 = vadd.s32 %v2200, %v2191
        %v2202 = vmul.u32 %v2157, %v2148
        %v2203 = vadd.s32 %v2179, %v2198
        %vm2204 = vc.u32 %v2179, %v2198
        %v2205 = vadd.s32 %v2201, 1
        %v2206 = vsel %vm2204, %v2205, %v2201
        %v2207 = vadd.s32 %v2202, %v2206
        %v2208 = vadd.s32 %v2207, 536870912
        %v2209 = vshrl.u32 %v2208, 30
        %v2210 = vshll.u32 %v2209, 30
        %v2211 = vsub.s32 %v2207, %v2210
        %vm2212 = vcmp.lt.s32.totalorder %v2211, 0
        %v2213 = vsub.s32 0, %v2211
        %v2214 = vsel %vm2212, %v2213, %v2211
        %v2215 = vclz %v2214
        %v2216 = vsub.s32 %v2215, 2
        %vm2217 = vcmp.gt.s32.totalorder 0, %v2216
        %v2218 = vsel %vm2217, 0, %v2216
        %v2219 = vsub.s32 32, %v2218
        %v2220 = vshll.u32 %v2211, %v2218
        %v2221 = vshrl.u32 %v2203, %v2219
        %v2222 = vor.u32 %v2220, %v2221
        %v2223 = vsub.s32 4294967266, %v2218
        %v2224 = vadd.s32 %v2223, 127
        %v2225 = vshll.u32 %v2224, 23
        %v2226 = vor.u32 4788187, %v2225
        %v2227 = vand.u32 2147483647, %v2226
        %v2229 = vcvt.s32.f32 %v2222
        %v2230 = vmul.f32 %v2229, %v2227
        %v2231 = vxor.u32 %v2230, 2147483648
        %v2232 = vsel %vm2111, %v2231, %v2230
        %v2233 = vsub.s32 4, %v2209
        %v2234 = vsel %vm2111, %v2233, %v2209
        %v2235 = vsel %vm2110, %v1465, %v2232
        %v2236 = vsel %vm2110, 0, %v2234
        %v2237 = vmul.f32 %v2235, %v2235
        %v2238 = vmul.f32 %v2237, -0.001358992
        %v2239 = vadd.f32 %v2238, 0.041655596
        %v2240 = vmul.f32 %v2237, %v2239
        %v2241 = vadd.f32 %v2240, -0.4999988
        %v2242 = vmul.f32 %v2237, %v2241
        %v2243 = vadd.f32 1.0, %v2242
        %v2244 = vmul.f32 %v2235, %v2235
        %v2245 = vmul.f32 %v2244, -0.00019511016
        %v2246 = vadd.f32 %v2245, 0.008332121
        %v2247 = vmul.f32 %v2244, %v2246
        %v2248 = vadd.f32 %v2247, -0.16666654
        %v2249 = vmul.f32 %v2244, %v2248
        %v2250 = vadd.f32 %v2249, 1.0
        %v2251 = vmul.f32 %v2250, %v2235
        %vm2252 = vweird.f32 %v1465
        %v2253 = vand.u32 %v2236, 3
        %vm2254 = vcmp.lt.s32.totalorder %v2253, 2
        %vm2255 = vcmp.eq.s32.totalorder %v2253, 0
        %v2256 = vxor.u32 %v2251, 2147483648
        %v2257 = vsel %vm2255, %v2243, %v2256
        %vm2258 = vcmp.eq.s32.totalorder %v2253, 2
        %v2259 = vxor.u32 %v2243, 2147483648
        %v2260 = vsel %vm2258, %v2259, %v2251
        %v2261 = vsel %vm2254, %v2257, %v2260
        %v2262 = vsel %vm2252, nan, %v2261
        %v2263 = vand.u32 2147483647, %v1466
        %vm2264 = vcmp.le.f32.partialorder %v2263, 0.7853982
        %vm2265 = vcmp.lt.s32.totalorder %v1466, 0
        %v2266 = vand.u32 %v1466, 2139095040
        %v2267 = vshrl.u32 %v2266, 23
        %v2268 = vsub.s32 %v2267, 127
        %v2269 = vand.u32 2147483647, %v1466
        %v2270 = vand.u32 %v2269, 8388607
        %v2271 = vor.u32 %v2270, 8388608
        %v2272 = vsub.s32 0, %v2271
        %v2273 = vadd.s32 %v2268, 1
        %vm2274 = vcmp.gt.s32.totalorder %v2273, 0
        %v2275 = vsel %vm2274, %v2273, 0
        %v2276 = vshrl.u32 %v2275, 5
        %v2277 = vand.u32 %v2275, 31
        %v2278 = vsub.s32 32, %v2277
        %v2279 = vshrl.u32 683565275, %v2278
        %v2280 = vshll.u32 683565275, %v2277
        %v2281 = vshrl.u32 2475754826, %v2278
        %v2282 = vor.u32 %v2280, %v2281
        %v2283 = vshll.u32 2475754826, %v2277
        %v2284 = vshrl.u32 2131351028, %v2278
        %v2285 = vor.u32 %v2283, %v2284
        %v2286 = vshll.u32 2131351028, %v2277
        %v2287 = vshrl.u32 2102212464, %v2278
        %v2288 = vor.u32 %v2286, %v2287
        %v2289 = vshll.u32 2102212464, %v2277
        %v2290 = vshrl.u32 920167782, %v2278
        %v2291 = vor.u32 %v2289, %v2290
        %v2292 = vshll.u32 920167782, %v2277
        %v2293 = vshrl.u32 1326507024, %v2278
        %v2294 = vor.u32 %v2292, %v2293
        %vm2295 = vcmp.lt.s32.totalorder %v2276, 1
        %vm2296 = vcmp.lt.s32.totalorder %v2276, 2
        %vm2297 = vcmp.lt.s32.totalorder %v2276, 3
        %vm2298 = vcmp.lt.s32.totalorder %v2276, 4
        %v2299 = vsel %vm2295, %v2279, %v2282
        %v2300 = vsel %vm2298, %v2288, 2102212464
        %v2301 = vsel %vm2297, %v2285, %v2300
        %v2302 = vsel %vm2296, %v2299, %v2301
        %v2303 = vsel %vm2295, %v2282, %v2285
        %v2304 = vsel %vm2298, %v2291, 920167782
        %v2305 = vsel %vm2297, %v2288, %v2304
        %v2306 = vsel %vm2296, %v2303, %v2305
        %v2307 = vsel %vm2295, %v2285, %v2288
        %v2308 = vsel %vm2298, %v2294, 1326507024
        %v2309 = vsel %vm2297, %v2291, %v2308
        %v2310 = vsel %vm2296, %v2307, %v2309
        %v2311 = vshll.u32 %v2271, 8
        %v2312 = vand.u32 %v2311, 65535
        %v2313 = vshrl.u32 %v2311, 16
        %v2314 = vand.u32 %v2310, 65535
        %v2315 = vshrl.u32 %v2310, 16
        %v2316 = vmul.u32 %v2312, %v2314
        %v2317 = vmul.u32 %v2312, %v2315
        %v2318 = vmul.u32 %v2313, %v2314
        %v2319 = vmul.u32 %v2313, %v2315
        %v2320 = vshll.u32 %v2317, 16
        %v2321 = vshrl.u32 %v2317, 16
        %v2322 = vshll.u32 %v2318, 16
        %v2323 = vshrl.u32 %v2318, 16
        %vm2324 = vc.u32 %v2316, %v2320
        %v2325 = vsel %vm2324, 1, 0
        %v2326 = vadd.s32 %v2316, %v2320
        %v2327 = vadd.s32 %v2319, %v2325
        %vm2328 = vc.u32 %v2326, %v2322
        %v2329 = vsel %vm2328, 1, 0
        %v2330 = vadd.s32 %v2326, %v2322
        %v2331 = vadd.s32 %v2327, %v2329
        %v2332 = vadd.s32 %v2331, %v2321
        %v2333 = vadd.s32 %v2332, %v2323
        %v2334 = vand.u32 %v2311, 65535
        %v2335 = vshrl.u32 %v2311, 16
        %v2336 = vand.u32 %v2306, 65535
        %v2337 = vshrl.u32 %v2306, 16
        %v2338 = vmul.u32 %v2334, %v2336
        %v2339 = vmul.u32 %v2334, %v2337
        %v2340 = vmul.u32 %v2335, %v2336
        %v2341 = vmul.u32 %v2335, %v2337
        %v2342 = vshll.u32 %v2339, 16
        %v2343 = vshrl.u32 %v2339, 16
        %v2344 = vshll.u32 %v2340, 16
        %v2345 = vshrl.u32 %v2340, 16
        %vm2346 = vc.u32 %v2338, %v2342
        %v2347 = vsel %vm2346, 1, 0
        %v2348 = vadd.s32 %v2338, %v2342
        %v2349 = vadd.s32 %v2341, %v2347
        %vm2350 = vc.u32 %v2348, %v2344
        %v2351 = vsel %vm2350, 1, 0
        %v2352 = vadd.s32 %v2348, %v2344
        %v2353 = vadd.s32 %v2349, %v2351
        %v2354 = vadd.s32 %v2353, %v2343
        %v2355 = vadd.s32 %v2354, %v2345
        %v2356 = vmul.u32 %v2311, %v2302
        %v2357 = vadd.s32 %v2333, %v2352
        %vm2358 = vc.u32 %v2333, %v2352
        %v2359 = vadd.s32 %v2355, 1
        %v2360 = vsel %vm2358, %v2359, %v2355
        %v2361 = vadd.s32 %v2356, %v2360
        %v2362 = vadd.s32 %v2361, 536870912
        %v2363 = vshrl.u32 %v2362, 30
        %v2364 = vshll.u32 %v2363, 30
        %v2365 = vsub.s32 %v2361, %v2364
        %vm2366 = vcmp.lt.s32.totalorder %v2365, 0
        %v2367 = vsub.s32 0, %v2365
        %v2368 = vsel %vm2366, %v2367, %v2365
        %v2369 = vclz %v2368
        %v2370 = vsub.s32 %v2369, 2
        %vm2371 = vcmp.gt.s32.totalorder 0, %v2370
        %v2372 = vsel %vm2371, 0, %v2370
        %v2373 = vsub.s32 32, %v2372
        %v2374 = vshll.u32 %v2365, %v2372
        %v2375 = vshrl.u32 %v2357, %v2373
        %v2376 = vor.u32 %v2374, %v2375
        %v2377 = vsub.s32 4294967266, %v2372
        %v2378 = vadd.s32 %v2377, 127
        %v2379 = vshll.u32 %v2378, 23
        %v2380 = vor.u32 4788187, %v2379
        %v2381 = vand.u32 2147483647, %v2380
        %v2383 = vcvt.s32.f32 %v2376
        %v2384 = vmul.f32 %v2383, %v2381
        %v2385 = vxor.u32 %v2384, 2147483648
        %v2386 = vsel %vm2265, %v2385, %v2384
        %v2387 = vsub.s32 4, %v2363
        %v2388 = vsel %vm2265, %v2387, %v2363
        %v2389 = vsel %vm2264, %v1466, %v2386
        %v2390 = vsel %vm2264, 0, %v2388
        %v2391 = vmul.f32 %v2389, %v2389
        %v2392 = vmul.f32 %v2391, -0.001358992
        %v2393 = vadd.f32 %v2392, 0.041655596
        %v2394 = vmul.f32 %v2391, %v2393
        %v2395 = vadd.f32 %v2394, -0.4999988
        %v2396 = vmul.f32 %v2391, %v2395
        %v2397 = vadd.f32 1.0, %v2396
        %v2398 = vmul.f32 %v2389, %v2389
        %v2399 = vmul.f32 %v2398, -0.00019511016
        %v2400 = vadd.f32 %v2399, 0.008332121
        %v2401 = vmul.f32 %v2398, %v2400
        %v2402 = vadd.f32 %v2401, -0.16666654
        %v2403 = vmul.f32 %v2398, %v2402
        %v2404 = vadd.f32 %v2403, 1.0
        %v2405 = vmul.f32 %v2404, %v2389
        %vm2406 = vweird.f32 %v1466
        %v2407 = vand.u32 %v2390, 3
        %vm2408 = vcmp.lt.s32.totalorder %v2407, 2
        %vm2409 = vcmp.eq.s32.totalorder %v2407, 0
        %v2410 = vxor.u32 %v2405, 2147483648
        %v2411 = vsel %vm2409, %v2397, %v2410
        %vm2412 = vcmp.eq.s32.totalorder %v2407, 2
        %v2413 = vxor.u32 %v2397, 2147483648
        %v2414 = vsel %vm2412, %v2413, %v2405
        %v2415 = vsel %vm2408, %v2411, %v2414
        %v2416 = vsel %vm2406, nan, %v2415
        %v2417 = vand.u32 2147483647, %v1467
        %vm2418 = vcmp.le.f32.partialorder %v2417, 0.7853982
        %vm2419 = vcmp.lt.s32.totalorder %v1467, 0
        %v2420 = vand.u32 %v1467, 2139095040
        %v2421 = vshrl.u32 %v2420, 23
        %v2422 = vsub.s32 %v2421, 127
        %v2423 = vand.u32 2147483647, %v1467
        %v2424 = vand.u32 %v2423, 8388607
        %v2425 = vor.u32 %v2424, 8388608
        %v2426 = vsub.s32 0, %v2425
        %v2427 = vadd.s32 %v2422, 1
        %vm2428 = vcmp.gt.s32.totalorder %v2427, 0
        %v2429 = vsel %vm2428, %v2427, 0
        %v2430 = vshrl.u32 %v2429, 5
        %v2431 = vand.u32 %v2429, 31
        %v2432 = vsub.s32 32, %v2431
        %v2433 = vshrl.u32 683565275, %v2432
        %v2434 = vshll.u32 683565275, %v2431
        %v2435 = vshrl.u32 2475754826, %v2432
        %v2436 = vor.u32 %v2434, %v2435
        %v2437 = vshll.u32 2475754826, %v2431
        %v2438 = vshrl.u32 2131351028, %v2432
        %v2439 = vor.u32 %v2437, %v2438
        %v2440 = vshll.u32 2131351028, %v2431
        %v2441 = vshrl.u32 2102212464, %v2432
        %v2442 = vor.u32 %v2440, %v2441
        %v2443 = vshll.u32 2102212464, %v2431
        %v2444 = vshrl.u32 920167782, %v2432
        %v2445 = vor.u32 %v2443, %v2444
        %v2446 = vshll.u32 920167782, %v2431
        %v2447 = vshrl.u32 1326507024, %v2432
        %v2448 = vor.u32 %v2446, %v2447
        %vm2449 = vcmp.lt.s32.totalorder %v2430, 1
        %vm2450 = vcmp.lt.s32.totalorder %v2430, 2
        %vm2451 = vcmp.lt.s32.totalorder %v2430, 3
        %vm2452 = vcmp.lt.s32.totalorder %v2430, 4
        %v2453 = vsel %vm2449, %v2433, %v2436
        %v2454 = vsel %vm2452, %v2442, 2102212464
        %v2455 = vsel %vm2451, %v2439, %v2454
        %v2456 = vsel %vm2450, %v2453, %v2455
        %v2457 = vsel %vm2449, %v2436, %v2439
        %v2458 = vsel %vm2452, %v2445, 920167782
        %v2459 = vsel %vm2451, %v2442, %v2458
        %v2460 = vsel %vm2450, %v2457, %v2459
        %v2461 = vsel %vm2449, %v2439, %v2442
        %v2462 = vsel %vm2452, %v2448, 1326507024
        %v2463 = vsel %vm2451, %v2445, %v2462
        %v2464 = vsel %vm2450, %v2461, %v2463
        %v2465 = vshll.u32 %v2425, 8
        %v2466 = vand.u32 %v2465, 65535
        %v2467 = vshrl.u32 %v2465, 16
        %v2468 = vand.u32 %v2464, 65535
        %v2469 = vshrl.u32 %v2464, 16
        %v2470 = vmul.u32 %v2466, %v2468
        %v2471 = vmul.u32 %v2466, %v2469
        %v2472 = vmul.u32 %v2467, %v2468
        %v2473 = vmul.u32 %v2467, %v2469
        %v2474 = vshll.u32 %v2471, 16
        %v2475 = vshrl.u32 %v2471, 16
        %v2476 = vshll.u32 %v2472, 16
        %v2477 = vshrl.u32 %v2472, 16
        %vm2478 = vc.u32 %v2470, %v2474
        %v2479 = vsel %vm2478, 1, 0
        %v2480 = vadd.s32 %v2470, %v2474
        %v2481 = vadd.s32 %v2473, %v2479
        %vm2482 = vc.u32 %v2480, %v2476
        %v2483 = vsel %vm2482, 1, 0
        %v2484 = vadd.s32 %v2480, %v2476
        %v2485 = vadd.s32 %v2481, %v2483
        %v2486 = vadd.s32 %v2485, %v2475
        %v2487 = vadd.s32 %v2486, %v2477
        %v2488 = vand.u32 %v2465, 65535
        %v2489 = vshrl.u32 %v2465, 16
        %v2490 = vand.u32 %v2460, 65535
        %v2491 = vshrl.u32 %v2460, 16
        %v2492 = vmul.u32 %v2488, %v2490
        %v2493 = vmul.u32 %v2488, %v2491
        %v2494 = vmul.u32 %v2489, %v2490
        %v2495 = vmul.u32 %v2489, %v2491
        %v2496 = vshll.u32 %v2493, 16
        %v2497 = vshrl.u32 %v2493, 16
        %v2498 = vshll.u32 %v2494, 16
        %v2499 = vshrl.u32 %v2494, 16
        %vm2500 = vc.u32 %v2492, %v2496
        %v2501 = vsel %vm2500, 1, 0
        %v2502 = vadd.s32 %v2492, %v2496
        %v2503 = vadd.s32 %v2495, %v2501
        %vm2504 = vc.u32 %v2502, %v2498
        %v2505 = vsel %vm2504, 1, 0
        %v2506 = vadd.s32 %v2502, %v2498
        %v2507 = vadd.s32 %v2503, %v2505
        %v2508 = vadd.s32 %v2507, %v2497
        %v2509 = vadd.s32 %v2508, %v2499
        %v2510 = vmul.u32 %v2465, %v2456
        %v2511 = vadd.s32 %v2487, %v2506
        %vm2512 = vc.u32 %v2487, %v2506
        %v2513 = vadd.s32 %v2509, 1
        %v2514 = vsel %vm2512, %v2513, %v2509
        %v2515 = vadd.s32 %v2510, %v2514
        %v2516 = vadd.s32 %v2515, 536870912
        %v2517 = vshrl.u32 %v2516, 30
        %v2518 = vshll.u32 %v2517, 30
        %v2519 = vsub.s32 %v2515, %v2518
        %vm2520 = vcmp.lt.s32.totalorder %v2519, 0
        %v2521 = vsub.s32 0, %v2519
        %v2522 = vsel %vm2520, %v2521, %v2519
        %v2523 = vclz %v2522
        %v2524 = vsub.s32 %v2523, 2
        %vm2525 = vcmp.gt.s32.totalorder 0, %v2524
        %v2526 = vsel %vm2525, 0, %v2524
        %v2527 = vsub.s32 32, %v2526
        %v2528 = vshll.u32 %v2519, %v2526
        %v2529 = vshrl.u32 %v2511, %v2527
        %v2530 = vor.u32 %v2528, %v2529
        %v2531 = vsub.s32 4294967266, %v2526
        %v2532 = vadd.s32 %v2531, 127
        %v2533 = vshll.u32 %v2532, 23
        %v2534 = vor.u32 4788187, %v2533
        %v2535 = vand.u32 2147483647, %v2534
        %v2537 = vcvt.s32.f32 %v2530
        %v2538 = vmul.f32 %v2537, %v2535
        %v2539 = vxor.u32 %v2538, 2147483648
        %v2540 = vsel %vm2419, %v2539, %v2538
        %v2541 = vsub.s32 4, %v2517
        %v2542 = vsel %vm2419, %v2541, %v2517
        %v2543 = vsel %vm2418, %v1467, %v2540
        %v2544 = vsel %vm2418, 0, %v2542
        %v2545 = vmul.f32 %v2543, %v2543
        %v2546 = vmul.f32 %v2545, -0.001358992
        %v2547 = vadd.f32 %v2546, 0.041655596
        %v2548 = vmul.f32 %v2545, %v2547
        %v2549 = vadd.f32 %v2548, -0.4999988
        %v2550 = vmul.f32 %v2545, %v2549
        %v2551 = vadd.f32 1.0, %v2550
        %v2552 = vmul.f32 %v2543, %v2543
        %v2553 = vmul.f32 %v2552, -0.00019511016
        %v2554 = vadd.f32 %v2553, 0.008332121
        %v2555 = vmul.f32 %v2552, %v2554
        %v2556 = vadd.f32 %v2555, -0.16666654
        %v2557 = vmul.f32 %v2552, %v2556
        %v2558 = vadd.f32 %v2557, 1.0
        %v2559 = vmul.f32 %v2558, %v2543
        %vm2560 = vweird.f32 %v1467
        %v2561 = vand.u32 %v2544, 3
        %vm2562 = vcmp.lt.s32.totalorder %v2561, 2
        %vm2563 = vcmp.eq.s32.totalorder %v2561, 0
        %v2564 = vxor.u32 %v2559, 2147483648
        %v2565 = vsel %vm2563, %v2551, %v2564
        %vm2566 = vcmp.eq.s32.totalorder %v2561, 2
        %v2567 = vxor.u32 %v2551, 2147483648
        %v2568 = vsel %vm2566, %v2567, %v2559
        %v2569 = vsel %vm2562, %v2565, %v2568
        %v2570 = vsel %vm2560, nan, %v2569
        %v2571 = vand.u32 2147483647, %v1468
        %vm2572 = vcmp.le.f32.partialorder %v2571, 0.7853982
        %vm2573 = vcmp.lt.s32.totalorder %v1468, 0
        %v2574 = vand.u32 %v1468, 2139095040
        %v2575 = vshrl.u32 %v2574, 23
        %v2576 = vsub.s32 %v2575, 127
        %v2577 = vand.u32 2147483647, %v1468
        %v2578 = vand.u32 %v2577, 8388607
        %v2579 = vor.u32 %v2578, 8388608
        %v2580 = vsub.s32 0, %v2579
        %v2581 = vadd.s32 %v2576, 1
        %vm2582 = vcmp.gt.s32.totalorder %v2581, 0
        %v2583 = vsel %vm2582, %v2581, 0
        %v2584 = vshrl.u32 %v2583, 5
        %v2585 = vand.u32 %v2583, 31
        %v2586 = vsub.s32 32, %v2585
        %v2587 = vshrl.u32 683565275, %v2586
        %v2588 = vshll.u32 683565275, %v2585
        %v2589 = vshrl.u32 2475754826, %v2586
        %v2590 = vor.u32 %v2588, %v2589
        %v2591 = vshll.u32 2475754826, %v2585
        %v2592 = vshrl.u32 2131351028, %v2586
        %v2593 = vor.u32 %v2591, %v2592
        %v2594 = vshll.u32 2131351028, %v2585
        %v2595 = vshrl.u32 2102212464, %v2586
        %v2596 = vor.u32 %v2594, %v2595
        %v2597 = vshll.u32 2102212464, %v2585
        %v2598 = vshrl.u32 920167782, %v2586
        %v2599 = vor.u32 %v2597, %v2598
        %v2600 = vshll.u32 920167782, %v2585
        %v2601 = vshrl.u32 1326507024, %v2586
        %v2602 = vor.u32 %v2600, %v2601
        %vm2603 = vcmp.lt.s32.totalorder %v2584, 1
        %vm2604 = vcmp.lt.s32.totalorder %v2584, 2
        %vm2605 = vcmp.lt.s32.totalorder %v2584, 3
        %vm2606 = vcmp.lt.s32.totalorder %v2584, 4
        %v2607 = vsel %vm2603, %v2587, %v2590
        %v2608 = vsel %vm2606, %v2596, 2102212464
        %v2609 = vsel %vm2605, %v2593, %v2608
        %v2610 = vsel %vm2604, %v2607, %v2609
        %v2611 = vsel %vm2603, %v2590, %v2593
        %v2612 = vsel %vm2606, %v2599, 920167782
        %v2613 = vsel %vm2605, %v2596, %v2612
        %v2614 = vsel %vm2604, %v2611, %v2613
        %v2615 = vsel %vm2603, %v2593, %v2596
        %v2616 = vsel %vm2606, %v2602, 1326507024
        %v2617 = vsel %vm2605, %v2599, %v2616
        %v2618 = vsel %vm2604, %v2615, %v2617
        %v2619 = vshll.u32 %v2579, 8
        %v2620 = vand.u32 %v2619, 65535
        %v2621 = vshrl.u32 %v2619, 16
        %v2622 = vand.u32 %v2618, 65535
        %v2623 = vshrl.u32 %v2618, 16
        %v2624 = vmul.u32 %v2620, %v2622
        %v2625 = vmul.u32 %v2620, %v2623
        %v2626 = vmul.u32 %v2621, %v2622
        %v2627 = vmul.u32 %v2621, %v2623
        %v2628 = vshll.u32 %v2625, 16
        %v2629 = vshrl.u32 %v2625, 16
        %v2630 = vshll.u32 %v2626, 16
        %v2631 = vshrl.u32 %v2626, 16
        %vm2632 = vc.u32 %v2624, %v2628
        %v2633 = vsel %vm2632, 1, 0
        %v2634 = vadd.s32 %v2624, %v2628
        %v2635 = vadd.s32 %v2627, %v2633
        %vm2636 = vc.u32 %v2634, %v2630
        %v2637 = vsel %vm2636, 1, 0
        %v2638 = vadd.s32 %v2634, %v2630
        %v2639 = vadd.s32 %v2635, %v2637
        %v2640 = vadd.s32 %v2639, %v2629
        %v2641 = vadd.s32 %v2640, %v2631
        %v2642 = vand.u32 %v2619, 65535
        %v2643 = vshrl.u32 %v2619, 16
        %v2644 = vand.u32 %v2614, 65535
        %v2645 = vshrl.u32 %v2614, 16
        %v2646 = vmul.u32 %v2642, %v2644
        %v2647 = vmul.u32 %v2642, %v2645
        %v2648 = vmul.u32 %v2643, %v2644
        %v2649 = vmul.u32 %v2643, %v2645
        %v2650 = vshll.u32 %v2647, 16
        %v2651 = vshrl.u32 %v2647, 16
        %v2652 = vshll.u32 %v2648, 16
        %v2653 = vshrl.u32 %v2648, 16
        %vm2654 = vc.u32 %v2646, %v2650
        %v2655 = vsel %vm2654, 1, 0
        %v2656 = vadd.s32 %v2646, %v2650
        %v2657 = vadd.s32 %v2649, %v2655
        %vm2658 = vc.u32 %v2656, %v2652
        %v2659 = vsel %vm2658, 1, 0
        %v2660 = vadd.s32 %v2656, %v2652
        %v2661 = vadd.s32 %v2657, %v2659
        %v2662 = vadd.s32 %v2661, %v2651
        %v2663 = vadd.s32 %v2662, %v2653
        %v2664 = vmul.u32 %v2619, %v2610
        %v2665 = vadd.s32 %v2641, %v2660
        %vm2666 = vc.u32 %v2641, %v2660
        %v2667 = vadd.s32 %v2663, 1
        %v2668 = vsel %vm2666, %v2667, %v2663
        %v2669 = vadd.s32 %v2664, %v2668
        %v2670 = vadd.s32 %v2669, 536870912
        %v2671 = vshrl.u32 %v2670, 30
        %v2672 = vshll.u32 %v2671, 30
        %v2673 = vsub.s32 %v2669, %v2672
        %vm2674 = vcmp.lt.s32.totalorder %v2673, 0
        %v2675 = vsub.s32 0, %v2673
        %v2676 = vsel %vm2674, %v2675, %v2673
        %v2677 = vclz %v2676
        %v2678 = vsub.s32 %v2677, 2
        %vm2679 = vcmp.gt.s32.totalorder 0, %v2678
        %v2680 = vsel %vm2679, 0, %v2678
        %v2681 = vsub.s32 32, %v2680
        %v2682 = vshll.u32 %v2673, %v2680
        %v2683 = vshrl.u32 %v2665, %v2681
        %v2684 = vor.u32 %v2682, %v2683
        %v2685 = vsub.s32 4294967266, %v2680
        %v2686 = vadd.s32 %v2685, 127
        %v2687 = vshll.u32 %v2686, 23
        %v2688 = vor.u32 4788187, %v2687
        %v2689 = vand.u32 2147483647, %v2688
        %v2691 = vcvt.s32.f32 %v2684
        %v2692 = vmul.f32 %v2691, %v2689
        %v2693 = vxor.u32 %v2692, 2147483648
        %v2694 = vsel %vm2573, %v2693, %v2692
        %v2695 = vsub.s32 4, %v2671
        %v2696 = vsel %vm2573, %v2695, %v2671
        %v2697 = vsel %vm2572, %v1468, %v2694
        %v2698 = vsel %vm2572, 0, %v2696
        %v2699 = vmul.f32 %v2697, %v2697
        %v2700 = vmul.f32 %v2699, -0.001358992
        %v2701 = vadd.f32 %v2700, 0.041655596
        %v2702 = vmul.f32 %v2699, %v2701
        %v2703 = vadd.f32 %v2702, -0.4999988
        %v2704 = vmul.f32 %v2699, %v2703
        %v2705 = vadd.f32 1.0, %v2704
        %v2706 = vmul.f32 %v2697, %v2697
        %v2707 = vmul.f32 %v2706, -0.00019511016
        %v2708 = vadd.f32 %v2707, 0.008332121
        %v2709 = vmul.f32 %v2706, %v2708
        %v2710 = vadd.f32 %v2709, -0.16666654
        %v2711 = vmul.f32 %v2706, %v2710
        %v2712 = vadd.f32 %v2711, 1.0
        %v2713 = vmul.f32 %v2712, %v2697
        %vm2714 = vweird.f32 %v1468
        %v2715 = vand.u32 %v2698, 3
        %vm2716 = vcmp.lt.s32.totalorder %v2715, 2
        %vm2717 = vcmp.eq.s32.totalorder %v2715, 0
        %v2718 = vxor.u32 %v2713, 2147483648
        %v2719 = vsel %vm2717, %v2705, %v2718
        %vm2720 = vcmp.eq.s32.totalorder %v2715, 2
        %v2721 = vxor.u32 %v2705, 2147483648
        %v2722 = vsel %vm2720, %v2721, %v2713
        %v2723 = vsel %vm2716, %v2719, %v2722
        %v2724 = vsel %vm2714, nan, %v2723
        %v2729 = vrot.slane %v2262, 6
        %v2730 = vrot.slane %v2416, 6
        %v2731 = vrot.slane %v2570, 6
        %v2732 = vrot.slane %v2724, 6
        %2737 = vst [vmem:[#allocation2 + $0x40] sm:$0x1c] %v2729
        %2738 = vst [vmem:[#allocation2 + $0x48] sm:$0x1c] %v2730
        %2739 = vst [vmem:[#allocation2 + $0x50] sm:$0x1c] %v2731
        %2740 = vst [vmem:[#allocation2 + $0x58] sm:$0x1c] %v2732
        %v2741 = vmul.f32 %v181, 4.0
        %v2742 = vmul.f32 %v182, 4.0
        %v2743 = vmul.f32 %v183, 4.0
        %v2744 = vmul.f32 %v184, 4.0
        %v2745 = vand.u32 2147483647, %v2741
        %vm2746 = vcmp.le.f32.partialorder %v2745, 0.7853982
        %vm2747 = vcmp.lt.s32.totalorder %v2741, 0
        %v2748 = vand.u32 %v2741, 2139095040
        %v2749 = vshrl.u32 %v2748, 23
        %v2750 = vsub.s32 %v2749, 127
        %v2751 = vand.u32 2147483647, %v2741
        %v2752 = vand.u32 %v2751, 8388607
        %v2753 = vor.u32 %v2752, 8388608
        %v2754 = vsub.s32 0, %v2753
        %v2755 = vadd.s32 %v2750, 1
        %vm2756 = vcmp.gt.s32.totalorder %v2755, 0
        %v2757 = vsel %vm2756, %v2755, 0
        %v2758 = vshrl.u32 %v2757, 5
        %v2759 = vand.u32 %v2757, 31
        %v2760 = vsub.s32 32, %v2759
        %v2761 = vshrl.u32 683565275, %v2760
        %v2762 = vshll.u32 683565275, %v2759
        %v2763 = vshrl.u32 2475754826, %v2760
        %v2764 = vor.u32 %v2762, %v2763
        %v2765 = vshll.u32 2475754826, %v2759
        %v2766 = vshrl.u32 2131351028, %v2760
        %v2767 = vor.u32 %v2765, %v2766
        %v2768 = vshll.u32 2131351028, %v2759
        %v2769 = vshrl.u32 2102212464, %v2760
        %v2770 = vor.u32 %v2768, %v2769
        %v2771 = vshll.u32 2102212464, %v2759
        %v2772 = vshrl.u32 920167782, %v2760
        %v2773 = vor.u32 %v2771, %v2772
        %v2774 = vshll.u32 920167782, %v2759
        %v2775 = vshrl.u32 1326507024, %v2760
        %v2776 = vor.u32 %v2774, %v2775
        %vm2777 = vcmp.lt.s32.totalorder %v2758, 1
        %vm2778 = vcmp.lt.s32.totalorder %v2758, 2
        %vm2779 = vcmp.lt.s32.totalorder %v2758, 3
        %vm2780 = vcmp.lt.s32.totalorder %v2758, 4
        %v2781 = vsel %vm2777, %v2761, %v2764
        %v2782 = vsel %vm2780, %v2770, 2102212464
        %v2783 = vsel %vm2779, %v2767, %v2782
        %v2784 = vsel %vm2778, %v2781, %v2783
        %v2785 = vsel %vm2777, %v2764, %v2767
        %v2786 = vsel %vm2780, %v2773, 920167782
        %v2787 = vsel %vm2779, %v2770, %v2786
        %v2788 = vsel %vm2778, %v2785, %v2787
        %v2789 = vsel %vm2777, %v2767, %v2770
        %v2790 = vsel %vm2780, %v2776, 1326507024
        %v2791 = vsel %vm2779, %v2773, %v2790
        %v2792 = vsel %vm2778, %v2789, %v2791
        %v2793 = vshll.u32 %v2753, 8
        %v2794 = vand.u32 %v2793, 65535
        %v2795 = vshrl.u32 %v2793, 16
        %v2796 = vand.u32 %v2792, 65535
        %v2797 = vshrl.u32 %v2792, 16
        %v2798 = vmul.u32 %v2794, %v2796
        %v2799 = vmul.u32 %v2794, %v2797
        %v2800 = vmul.u32 %v2795, %v2796
        %v2801 = vmul.u32 %v2795, %v2797
        %v2802 = vshll.u32 %v2799, 16
        %v2803 = vshrl.u32 %v2799, 16
        %v2804 = vshll.u32 %v2800, 16
        %v2805 = vshrl.u32 %v2800, 16
        %vm2806 = vc.u32 %v2798, %v2802
        %v2807 = vsel %vm2806, 1, 0
        %v2808 = vadd.s32 %v2798, %v2802
        %v2809 = vadd.s32 %v2801, %v2807
        %vm2810 = vc.u32 %v2808, %v2804
        %v2811 = vsel %vm2810, 1, 0
        %v2812 = vadd.s32 %v2808, %v2804
        %v2813 = vadd.s32 %v2809, %v2811
        %v2814 = vadd.s32 %v2813, %v2803
        %v2815 = vadd.s32 %v2814, %v2805
        %v2816 = vand.u32 %v2793, 65535
        %v2817 = vshrl.u32 %v2793, 16
        %v2818 = vand.u32 %v2788, 65535
        %v2819 = vshrl.u32 %v2788, 16
        %v2820 = vmul.u32 %v2816, %v2818
        %v2821 = vmul.u32 %v2816, %v2819
        %v2822 = vmul.u32 %v2817, %v2818
        %v2823 = vmul.u32 %v2817, %v2819
        %v2824 = vshll.u32 %v2821, 16
        %v2825 = vshrl.u32 %v2821, 16
        %v2826 = vshll.u32 %v2822, 16
        %v2827 = vshrl.u32 %v2822, 16
        %vm2828 = vc.u32 %v2820, %v2824
        %v2829 = vsel %vm2828, 1, 0
        %v2830 = vadd.s32 %v2820, %v2824
        %v2831 = vadd.s32 %v2823, %v2829
        %vm2832 = vc.u32 %v2830, %v2826
        %v2833 = vsel %vm2832, 1, 0
        %v2834 = vadd.s32 %v2830, %v2826
        %v2835 = vadd.s32 %v2831, %v2833
        %v2836 = vadd.s32 %v2835, %v2825
        %v2837 = vadd.s32 %v2836, %v2827
        %v2838 = vmul.u32 %v2793, %v2784
        %v2839 = vadd.s32 %v2815, %v2834
        %vm2840 = vc.u32 %v2815, %v2834
        %v2841 = vadd.s32 %v2837, 1
        %v2842 = vsel %vm2840, %v2841, %v2837
        %v2843 = vadd.s32 %v2838, %v2842
        %v2844 = vadd.s32 %v2843, 536870912
        %v2845 = vshrl.u32 %v2844, 30
        %v2846 = vshll.u32 %v2845, 30
        %v2847 = vsub.s32 %v2843, %v2846
        %vm2848 = vcmp.lt.s32.totalorder %v2847, 0
        %v2849 = vsub.s32 0, %v2847
        %v2850 = vsel %vm2848, %v2849, %v2847
        %v2851 = vclz %v2850
        %v2852 = vsub.s32 %v2851, 2
        %vm2853 = vcmp.gt.s32.totalorder 0, %v2852
        %v2854 = vsel %vm2853, 0, %v2852
        %v2855 = vsub.s32 32, %v2854
        %v2856 = vshll.u32 %v2847, %v2854
        %v2857 = vshrl.u32 %v2839, %v2855
        %v2858 = vor.u32 %v2856, %v2857
        %v2859 = vsub.s32 4294967266, %v2854
        %v2860 = vadd.s32 %v2859, 127
        %v2861 = vshll.u32 %v2860, 23
        %v2862 = vor.u32 4788187, %v2861
        %v2863 = vand.u32 2147483647, %v2862
        %v2865 = vcvt.s32.f32 %v2858
        %v2866 = vmul.f32 %v2865, %v2863
        %v2867 = vxor.u32 %v2866, 2147483648
        %v2868 = vsel %vm2747, %v2867, %v2866
        %v2869 = vsub.s32 4, %v2845
        %v2870 = vsel %vm2747, %v2869, %v2845
        %v2871 = vsel %vm2746, %v2741, %v2868
        %v2872 = vsel %vm2746, 0, %v2870
        %v2873 = vmul.f32 %v2871, %v2871
        %v2874 = vmul.f32 %v2873, -0.001358992
        %v2875 = vadd.f32 %v2874, 0.041655596
        %v2876 = vmul.f32 %v2873, %v2875
        %v2877 = vadd.f32 %v2876, -0.4999988
        %v2878 = vmul.f32 %v2873, %v2877
        %v2879 = vadd.f32 1.0, %v2878
        %v2880 = vmul.f32 %v2871, %v2871
        %v2881 = vmul.f32 %v2880, -0.00019511016
        %v2882 = vadd.f32 %v2881, 0.008332121
        %v2883 = vmul.f32 %v2880, %v2882
        %v2884 = vadd.f32 %v2883, -0.16666654
        %v2885 = vmul.f32 %v2880, %v2884
        %v2886 = vadd.f32 %v2885, 1.0
        %v2887 = vmul.f32 %v2886, %v2871
        %vm2888 = vweird.f32 %v2741
        %v2889 = vadd.s32 %v2872, 3
        %v2890 = vand.u32 %v2889, 3
        %vm2891 = vcmp.lt.s32.totalorder %v2890, 2
        %vm2892 = vcmp.eq.s32.totalorder %v2890, 0
        %v2893 = vxor.u32 %v2887, 2147483648
        %v2894 = vsel %vm2892, %v2879, %v2893
        %vm2895 = vcmp.eq.s32.totalorder %v2890, 2
        %v2896 = vxor.u32 %v2879, 2147483648
        %v2897 = vsel %vm2895, %v2896, %v2887
        %v2898 = vsel %vm2891, %v2894, %v2897
        %v2899 = vsel %vm2888, nan, %v2898
        %v2900 = vand.u32 2147483647, %v2742
        %vm2901 = vcmp.le.f32.partialorder %v2900, 0.7853982
        %vm2902 = vcmp.lt.s32.totalorder %v2742, 0
        %v2903 = vand.u32 %v2742, 2139095040
        %v2904 = vshrl.u32 %v2903, 23
        %v2905 = vsub.s32 %v2904, 127
        %v2906 = vand.u32 2147483647, %v2742
        %v2907 = vand.u32 %v2906, 8388607
        %v2908 = vor.u32 %v2907, 8388608
        %v2909 = vsub.s32 0, %v2908
        %v2910 = vadd.s32 %v2905, 1
        %vm2911 = vcmp.gt.s32.totalorder %v2910, 0
        %v2912 = vsel %vm2911, %v2910, 0
        %v2913 = vshrl.u32 %v2912, 5
        %v2914 = vand.u32 %v2912, 31
        %v2915 = vsub.s32 32, %v2914
        %v2916 = vshrl.u32 683565275, %v2915
        %v2917 = vshll.u32 683565275, %v2914
        %v2918 = vshrl.u32 2475754826, %v2915
        %v2919 = vor.u32 %v2917, %v2918
        %v2920 = vshll.u32 2475754826, %v2914
        %v2921 = vshrl.u32 2131351028, %v2915
        %v2922 = vor.u32 %v2920, %v2921
        %v2923 = vshll.u32 2131351028, %v2914
        %v2924 = vshrl.u32 2102212464, %v2915
        %v2925 = vor.u32 %v2923, %v2924
        %v2926 = vshll.u32 2102212464, %v2914
        %v2927 = vshrl.u32 920167782, %v2915
        %v2928 = vor.u32 %v2926, %v2927
        %v2929 = vshll.u32 920167782, %v2914
        %v2930 = vshrl.u32 1326507024, %v2915
        %v2931 = vor.u32 %v2929, %v2930
        %vm2932 = vcmp.lt.s32.totalorder %v2913, 1
        %vm2933 = vcmp.lt.s32.totalorder %v2913, 2
        %vm2934 = vcmp.lt.s32.totalorder %v2913, 3
        %vm2935 = vcmp.lt.s32.totalorder %v2913, 4
        %v2936 = vsel %vm2932, %v2916, %v2919
        %v2937 = vsel %vm2935, %v2925, 2102212464
        %v2938 = vsel %vm2934, %v2922, %v2937
        %v2939 = vsel %vm2933, %v2936, %v2938
        %v2940 = vsel %vm2932, %v2919, %v2922
        %v2941 = vsel %vm2935, %v2928, 920167782
        %v2942 = vsel %vm2934, %v2925, %v2941
        %v2943 = vsel %vm2933, %v2940, %v2942
        %v2944 = vsel %vm2932, %v2922, %v2925
        %v2945 = vsel %vm2935, %v2931, 1326507024
        %v2946 = vsel %vm2934, %v2928, %v2945
        %v2947 = vsel %vm2933, %v2944, %v2946
        %v2948 = vshll.u32 %v2908, 8
        %v2949 = vand.u32 %v2948, 65535
        %v2950 = vshrl.u32 %v2948, 16
        %v2951 = vand.u32 %v2947, 65535
        %v2952 = vshrl.u32 %v2947, 16
        %v2953 = vmul.u32 %v2949, %v2951
        %v2954 = vmul.u32 %v2949, %v2952
        %v2955 = vmul.u32 %v2950, %v2951
        %v2956 = vmul.u32 %v2950, %v2952
        %v2957 = vshll.u32 %v2954, 16
        %v2958 = vshrl.u32 %v2954, 16
        %v2959 = vshll.u32 %v2955, 16
        %v2960 = vshrl.u32 %v2955, 16
        %vm2961 = vc.u32 %v2953, %v2957
        %v2962 = vsel %vm2961, 1, 0
        %v2963 = vadd.s32 %v2953, %v2957
        %v2964 = vadd.s32 %v2956, %v2962
        %vm2965 = vc.u32 %v2963, %v2959
        %v2966 = vsel %vm2965, 1, 0
        %v2967 = vadd.s32 %v2963, %v2959
        %v2968 = vadd.s32 %v2964, %v2966
        %v2969 = vadd.s32 %v2968, %v2958
        %v2970 = vadd.s32 %v2969, %v2960
        %v2971 = vand.u32 %v2948, 65535
        %v2972 = vshrl.u32 %v2948, 16
        %v2973 = vand.u32 %v2943, 65535
        %v2974 = vshrl.u32 %v2943, 16
        %v2975 = vmul.u32 %v2971, %v2973
        %v2976 = vmul.u32 %v2971, %v2974
        %v2977 = vmul.u32 %v2972, %v2973
        %v2978 = vmul.u32 %v2972, %v2974
        %v2979 = vshll.u32 %v2976, 16
        %v2980 = vshrl.u32 %v2976, 16
        %v2981 = vshll.u32 %v2977, 16
        %v2982 = vshrl.u32 %v2977, 16
        %vm2983 = vc.u32 %v2975, %v2979
        %v2984 = vsel %vm2983, 1, 0
        %v2985 = vadd.s32 %v2975, %v2979
        %v2986 = vadd.s32 %v2978, %v2984
        %vm2987 = vc.u32 %v2985, %v2981
        %v2988 = vsel %vm2987, 1, 0
        %v2989 = vadd.s32 %v2985, %v2981
        %v2990 = vadd.s32 %v2986, %v2988
        %v2991 = vadd.s32 %v2990, %v2980
        %v2992 = vadd.s32 %v2991, %v2982
        %v2993 = vmul.u32 %v2948, %v2939
        %v2994 = vadd.s32 %v2970, %v2989
        %vm2995 = vc.u32 %v2970, %v2989
        %v2996 = vadd.s32 %v2992, 1
        %v2997 = vsel %vm2995, %v2996, %v2992
        %v2998 = vadd.s32 %v2993, %v2997
        %v2999 = vadd.s32 %v2998, 536870912
        %v3000 = vshrl.u32 %v2999, 30
        %v3001 = vshll.u32 %v3000, 30
        %v3002 = vsub.s32 %v2998, %v3001
        %vm3003 = vcmp.lt.s32.totalorder %v3002, 0
        %v3004 = vsub.s32 0, %v3002
        %v3005 = vsel %vm3003, %v3004, %v3002
        %v3006 = vclz %v3005
        %v3007 = vsub.s32 %v3006, 2
        %vm3008 = vcmp.gt.s32.totalorder 0, %v3007
        %v3009 = vsel %vm3008, 0, %v3007
        %v3010 = vsub.s32 32, %v3009
        %v3011 = vshll.u32 %v3002, %v3009
        %v3012 = vshrl.u32 %v2994, %v3010
        %v3013 = vor.u32 %v3011, %v3012
        %v3014 = vsub.s32 4294967266, %v3009
        %v3015 = vadd.s32 %v3014, 127
        %v3016 = vshll.u32 %v3015, 23
        %v3017 = vor.u32 4788187, %v3016
        %v3018 = vand.u32 2147483647, %v3017
        %v3020 = vcvt.s32.f32 %v3013
        %v3021 = vmul.f32 %v3020, %v3018
        %v3022 = vxor.u32 %v3021, 2147483648
        %v3023 = vsel %vm2902, %v3022, %v3021
        %v3024 = vsub.s32 4, %v3000
        %v3025 = vsel %vm2902, %v3024, %v3000
        %v3026 = vsel %vm2901, %v2742, %v3023
        %v3027 = vsel %vm2901, 0, %v3025
        %v3028 = vmul.f32 %v3026, %v3026
        %v3029 = vmul.f32 %v3028, -0.001358992
        %v3030 = vadd.f32 %v3029, 0.041655596
        %v3031 = vmul.f32 %v3028, %v3030
        %v3032 = vadd.f32 %v3031, -0.4999988
        %v3033 = vmul.f32 %v3028, %v3032
        %v3034 = vadd.f32 1.0, %v3033
        %v3035 = vmul.f32 %v3026, %v3026
        %v3036 = vmul.f32 %v3035, -0.00019511016
        %v3037 = vadd.f32 %v3036, 0.008332121
        %v3038 = vmul.f32 %v3035, %v3037
        %v3039 = vadd.f32 %v3038, -0.16666654
        %v3040 = vmul.f32 %v3035, %v3039
        %v3041 = vadd.f32 %v3040, 1.0
        %v3042 = vmul.f32 %v3041, %v3026
        %vm3043 = vweird.f32 %v2742
        %v3044 = vadd.s32 %v3027, 3
        %v3045 = vand.u32 %v3044, 3
        %vm3046 = vcmp.lt.s32.totalorder %v3045, 2
        %vm3047 = vcmp.eq.s32.totalorder %v3045, 0
        %v3048 = vxor.u32 %v3042, 2147483648
        %v3049 = vsel %vm3047, %v3034, %v3048
        %vm3050 = vcmp.eq.s32.totalorder %v3045, 2
        %v3051 = vxor.u32 %v3034, 2147483648
        %v3052 = vsel %vm3050, %v3051, %v3042
        %v3053 = vsel %vm3046, %v3049, %v3052
        %v3054 = vsel %vm3043, nan, %v3053
        %v3055 = vand.u32 2147483647, %v2743
        %vm3056 = vcmp.le.f32.partialorder %v3055, 0.7853982
        %vm3057 = vcmp.lt.s32.totalorder %v2743, 0
        %v3058 = vand.u32 %v2743, 2139095040
        %v3059 = vshrl.u32 %v3058, 23
        %v3060 = vsub.s32 %v3059, 127
        %v3061 = vand.u32 2147483647, %v2743
        %v3062 = vand.u32 %v3061, 8388607
        %v3063 = vor.u32 %v3062, 8388608
        %v3064 = vsub.s32 0, %v3063
        %v3065 = vadd.s32 %v3060, 1
        %vm3066 = vcmp.gt.s32.totalorder %v3065, 0
        %v3067 = vsel %vm3066, %v3065, 0
        %v3068 = vshrl.u32 %v3067, 5
        %v3069 = vand.u32 %v3067, 31
        %v3070 = vsub.s32 32, %v3069
        %v3071 = vshrl.u32 683565275, %v3070
        %v3072 = vshll.u32 683565275, %v3069
        %v3073 = vshrl.u32 2475754826, %v3070
        %v3074 = vor.u32 %v3072, %v3073
        %v3075 = vshll.u32 2475754826, %v3069
        %v3076 = vshrl.u32 2131351028, %v3070
        %v3077 = vor.u32 %v3075, %v3076
        %v3078 = vshll.u32 2131351028, %v3069
        %v3079 = vshrl.u32 2102212464, %v3070
        %v3080 = vor.u32 %v3078, %v3079
        %v3081 = vshll.u32 2102212464, %v3069
        %v3082 = vshrl.u32 920167782, %v3070
        %v3083 = vor.u32 %v3081, %v3082
        %v3084 = vshll.u32 920167782, %v3069
        %v3085 = vshrl.u32 1326507024, %v3070
        %v3086 = vor.u32 %v3084, %v3085
        %vm3087 = vcmp.lt.s32.totalorder %v3068, 1
        %vm3088 = vcmp.lt.s32.totalorder %v3068, 2
        %vm3089 = vcmp.lt.s32.totalorder %v3068, 3
        %vm3090 = vcmp.lt.s32.totalorder %v3068, 4
        %v3091 = vsel %vm3087, %v3071, %v3074
        %v3092 = vsel %vm3090, %v3080, 2102212464
        %v3093 = vsel %vm3089, %v3077, %v3092
        %v3094 = vsel %vm3088, %v3091, %v3093
        %v3095 = vsel %vm3087, %v3074, %v3077
        %v3096 = vsel %vm3090, %v3083, 920167782
        %v3097 = vsel %vm3089, %v3080, %v3096
        %v3098 = vsel %vm3088, %v3095, %v3097
        %v3099 = vsel %vm3087, %v3077, %v3080
        %v3100 = vsel %vm3090, %v3086, 1326507024
        %v3101 = vsel %vm3089, %v3083, %v3100
        %v3102 = vsel %vm3088, %v3099, %v3101
        %v3103 = vshll.u32 %v3063, 8
        %v3104 = vand.u32 %v3103, 65535
        %v3105 = vshrl.u32 %v3103, 16
        %v3106 = vand.u32 %v3102, 65535
        %v3107 = vshrl.u32 %v3102, 16
        %v3108 = vmul.u32 %v3104, %v3106
        %v3109 = vmul.u32 %v3104, %v3107
        %v3110 = vmul.u32 %v3105, %v3106
        %v3111 = vmul.u32 %v3105, %v3107
        %v3112 = vshll.u32 %v3109, 16
        %v3113 = vshrl.u32 %v3109, 16
        %v3114 = vshll.u32 %v3110, 16
        %v3115 = vshrl.u32 %v3110, 16
        %vm3116 = vc.u32 %v3108, %v3112
        %v3117 = vsel %vm3116, 1, 0
        %v3118 = vadd.s32 %v3108, %v3112
        %v3119 = vadd.s32 %v3111, %v3117
        %vm3120 = vc.u32 %v3118, %v3114
        %v3121 = vsel %vm3120, 1, 0
        %v3122 = vadd.s32 %v3118, %v3114
        %v3123 = vadd.s32 %v3119, %v3121
        %v3124 = vadd.s32 %v3123, %v3113
        %v3125 = vadd.s32 %v3124, %v3115
        %v3126 = vand.u32 %v3103, 65535
        %v3127 = vshrl.u32 %v3103, 16
        %v3128 = vand.u32 %v3098, 65535
        %v3129 = vshrl.u32 %v3098, 16
        %v3130 = vmul.u32 %v3126, %v3128
        %v3131 = vmul.u32 %v3126, %v3129
        %v3132 = vmul.u32 %v3127, %v3128
        %v3133 = vmul.u32 %v3127, %v3129
        %v3134 = vshll.u32 %v3131, 16
        %v3135 = vshrl.u32 %v3131, 16
        %v3136 = vshll.u32 %v3132, 16
        %v3137 = vshrl.u32 %v3132, 16
        %vm3138 = vc.u32 %v3130, %v3134
        %v3139 = vsel %vm3138, 1, 0
        %v3140 = vadd.s32 %v3130, %v3134
        %v3141 = vadd.s32 %v3133, %v3139
        %vm3142 = vc.u32 %v3140, %v3136
        %v3143 = vsel %vm3142, 1, 0
        %v3144 = vadd.s32 %v3140, %v3136
        %v3145 = vadd.s32 %v3141, %v3143
        %v3146 = vadd.s32 %v3145, %v3135
        %v3147 = vadd.s32 %v3146, %v3137
        %v3148 = vmul.u32 %v3103, %v3094
        %v3149 = vadd.s32 %v3125, %v3144
        %vm3150 = vc.u32 %v3125, %v3144
        %v3151 = vadd.s32 %v3147, 1
        %v3152 = vsel %vm3150, %v3151, %v3147
        %v3153 = vadd.s32 %v3148, %v3152
        %v3154 = vadd.s32 %v3153, 536870912
        %v3155 = vshrl.u32 %v3154, 30
        %v3156 = vshll.u32 %v3155, 30
        %v3157 = vsub.s32 %v3153, %v3156
        %vm3158 = vcmp.lt.s32.totalorder %v3157, 0
        %v3159 = vsub.s32 0, %v3157
        %v3160 = vsel %vm3158, %v3159, %v3157
        %v3161 = vclz %v3160
        %v3162 = vsub.s32 %v3161, 2
        %vm3163 = vcmp.gt.s32.totalorder 0, %v3162
        %v3164 = vsel %vm3163, 0, %v3162
        %v3165 = vsub.s32 32, %v3164
        %v3166 = vshll.u32 %v3157, %v3164
        %v3167 = vshrl.u32 %v3149, %v3165
        %v3168 = vor.u32 %v3166, %v3167
        %v3169 = vsub.s32 4294967266, %v3164
        %v3170 = vadd.s32 %v3169, 127
        %v3171 = vshll.u32 %v3170, 23
        %v3172 = vor.u32 4788187, %v3171
        %v3173 = vand.u32 2147483647, %v3172
        %v3175 = vcvt.s32.f32 %v3168
        %v3176 = vmul.f32 %v3175, %v3173
        %v3177 = vxor.u32 %v3176, 2147483648
        %v3178 = vsel %vm3057, %v3177, %v3176
        %v3179 = vsub.s32 4, %v3155
        %v3180 = vsel %vm3057, %v3179, %v3155
        %v3181 = vsel %vm3056, %v2743, %v3178
        %v3182 = vsel %vm3056, 0, %v3180
        %v3183 = vmul.f32 %v3181, %v3181
        %v3184 = vmul.f32 %v3183, -0.001358992
        %v3185 = vadd.f32 %v3184, 0.041655596
        %v3186 = vmul.f32 %v3183, %v3185
        %v3187 = vadd.f32 %v3186, -0.4999988
        %v3188 = vmul.f32 %v3183, %v3187
        %v3189 = vadd.f32 1.0, %v3188
        %v3190 = vmul.f32 %v3181, %v3181
        %v3191 = vmul.f32 %v3190, -0.00019511016
        %v3192 = vadd.f32 %v3191, 0.008332121
        %v3193 = vmul.f32 %v3190, %v3192
        %v3194 = vadd.f32 %v3193, -0.16666654
        %v3195 = vmul.f32 %v3190, %v3194
        %v3196 = vadd.f32 %v3195, 1.0
        %v3197 = vmul.f32 %v3196, %v3181
        %vm3198 = vweird.f32 %v2743
        %v3199 = vadd.s32 %v3182, 3
        %v3200 = vand.u32 %v3199, 3
        %vm3201 = vcmp.lt.s32.totalorder %v3200, 2
        %vm3202 = vcmp.eq.s32.totalorder %v3200, 0
        %v3203 = vxor.u32 %v3197, 2147483648
        %v3204 = vsel %vm3202, %v3189, %v3203
        %vm3205 = vcmp.eq.s32.totalorder %v3200, 2
        %v3206 = vxor.u32 %v3189, 2147483648
        %v3207 = vsel %vm3205, %v3206, %v3197
        %v3208 = vsel %vm3201, %v3204, %v3207
        %v3209 = vsel %vm3198, nan, %v3208
        %v3210 = vand.u32 2147483647, %v2744
        %vm3211 = vcmp.le.f32.partialorder %v3210, 0.7853982
        %vm3212 = vcmp.lt.s32.totalorder %v2744, 0
        %v3213 = vand.u32 %v2744, 2139095040
        %v3214 = vshrl.u32 %v3213, 23
        %v3215 = vsub.s32 %v3214, 127
        %v3216 = vand.u32 2147483647, %v2744
        %v3217 = vand.u32 %v3216, 8388607
        %v3218 = vor.u32 %v3217, 8388608
        %v3219 = vsub.s32 0, %v3218
        %v3220 = vadd.s32 %v3215, 1
        %vm3221 = vcmp.gt.s32.totalorder %v3220, 0
        %v3222 = vsel %vm3221, %v3220, 0
        %v3223 = vshrl.u32 %v3222, 5
        %v3224 = vand.u32 %v3222, 31
        %v3225 = vsub.s32 32, %v3224
        %v3226 = vshrl.u32 683565275, %v3225
        %v3227 = vshll.u32 683565275, %v3224
        %v3228 = vshrl.u32 2475754826, %v3225
        %v3229 = vor.u32 %v3227, %v3228
        %v3230 = vshll.u32 2475754826, %v3224
        %v3231 = vshrl.u32 2131351028, %v3225
        %v3232 = vor.u32 %v3230, %v3231
        %v3233 = vshll.u32 2131351028, %v3224
        %v3234 = vshrl.u32 2102212464, %v3225
        %v3235 = vor.u32 %v3233, %v3234
        %v3236 = vshll.u32 2102212464, %v3224
        %v3237 = vshrl.u32 920167782, %v3225
        %v3238 = vor.u32 %v3236, %v3237
        %v3239 = vshll.u32 920167782, %v3224
        %v3240 = vshrl.u32 1326507024, %v3225
        %v3241 = vor.u32 %v3239, %v3240
        %vm3242 = vcmp.lt.s32.totalorder %v3223, 1
        %vm3243 = vcmp.lt.s32.totalorder %v3223, 2
        %vm3244 = vcmp.lt.s32.totalorder %v3223, 3
        %vm3245 = vcmp.lt.s32.totalorder %v3223, 4
        %v3246 = vsel %vm3242, %v3226, %v3229
        %v3247 = vsel %vm3245, %v3235, 2102212464
        %v3248 = vsel %vm3244, %v3232, %v3247
        %v3249 = vsel %vm3243, %v3246, %v3248
        %v3250 = vsel %vm3242, %v3229, %v3232
        %v3251 = vsel %vm3245, %v3238, 920167782
        %v3252 = vsel %vm3244, %v3235, %v3251
        %v3253 = vsel %vm3243, %v3250, %v3252
        %v3254 = vsel %vm3242, %v3232, %v3235
        %v3255 = vsel %vm3245, %v3241, 1326507024
        %v3256 = vsel %vm3244, %v3238, %v3255
        %v3257 = vsel %vm3243, %v3254, %v3256
        %v3258 = vshll.u32 %v3218, 8
        %v3259 = vand.u32 %v3258, 65535
        %v3260 = vshrl.u32 %v3258, 16
        %v3261 = vand.u32 %v3257, 65535
        %v3262 = vshrl.u32 %v3257, 16
        %v3263 = vmul.u32 %v3259, %v3261
        %v3264 = vmul.u32 %v3259, %v3262
        %v3265 = vmul.u32 %v3260, %v3261
        %v3266 = vmul.u32 %v3260, %v3262
        %v3267 = vshll.u32 %v3264, 16
        %v3268 = vshrl.u32 %v3264, 16
        %v3269 = vshll.u32 %v3265, 16
        %v3270 = vshrl.u32 %v3265, 16
        %vm3271 = vc.u32 %v3263, %v3267
        %v3272 = vsel %vm3271, 1, 0
        %v3273 = vadd.s32 %v3263, %v3267
        %v3274 = vadd.s32 %v3266, %v3272
        %vm3275 = vc.u32 %v3273, %v3269
        %v3276 = vsel %vm3275, 1, 0
        %v3277 = vadd.s32 %v3273, %v3269
        %v3278 = vadd.s32 %v3274, %v3276
        %v3279 = vadd.s32 %v3278, %v3268
        %v3280 = vadd.s32 %v3279, %v3270
        %v3281 = vand.u32 %v3258, 65535
        %v3282 = vshrl.u32 %v3258, 16
        %v3283 = vand.u32 %v3253, 65535
        %v3284 = vshrl.u32 %v3253, 16
        %v3285 = vmul.u32 %v3281, %v3283
        %v3286 = vmul.u32 %v3281, %v3284
        %v3287 = vmul.u32 %v3282, %v3283
        %v3288 = vmul.u32 %v3282, %v3284
        %v3289 = vshll.u32 %v3286, 16
        %v3290 = vshrl.u32 %v3286, 16
        %v3291 = vshll.u32 %v3287, 16
        %v3292 = vshrl.u32 %v3287, 16
        %vm3293 = vc.u32 %v3285, %v3289
        %v3294 = vsel %vm3293, 1, 0
        %v3295 = vadd.s32 %v3285, %v3289
        %v3296 = vadd.s32 %v3288, %v3294
        %vm3297 = vc.u32 %v3295, %v3291
        %v3298 = vsel %vm3297, 1, 0
        %v3299 = vadd.s32 %v3295, %v3291
        %v3300 = vadd.s32 %v3296, %v3298
        %v3301 = vadd.s32 %v3300, %v3290
        %v3302 = vadd.s32 %v3301, %v3292
        %v3303 = vmul.u32 %v3258, %v3249
        %v3304 = vadd.s32 %v3280, %v3299
        %vm3305 = vc.u32 %v3280, %v3299
        %v3306 = vadd.s32 %v3302, 1
        %v3307 = vsel %vm3305, %v3306, %v3302
        %v3308 = vadd.s32 %v3303, %v3307
        %v3309 = vadd.s32 %v3308, 536870912
        %v3310 = vshrl.u32 %v3309, 30
        %v3311 = vshll.u32 %v3310, 30
        %v3312 = vsub.s32 %v3308, %v3311
        %vm3313 = vcmp.lt.s32.totalorder %v3312, 0
        %v3314 = vsub.s32 0, %v3312
        %v3315 = vsel %vm3313, %v3314, %v3312
        %v3316 = vclz %v3315
        %v3317 = vsub.s32 %v3316, 2
        %vm3318 = vcmp.gt.s32.totalorder 0, %v3317
        %v3319 = vsel %vm3318, 0, %v3317
        %v3320 = vsub.s32 32, %v3319
        %v3321 = vshll.u32 %v3312, %v3319
        %v3322 = vshrl.u32 %v3304, %v3320
        %v3323 = vor.u32 %v3321, %v3322
        %v3324 = vsub.s32 4294967266, %v3319
        %v3325 = vadd.s32 %v3324, 127
        %v3326 = vshll.u32 %v3325, 23
        %v3327 = vor.u32 4788187, %v3326
        %v3328 = vand.u32 2147483647, %v3327
        %v3330 = vcvt.s32.f32 %v3323
        %v3331 = vmul.f32 %v3330, %v3328
        %v3332 = vxor.u32 %v3331, 2147483648
        %v3333 = vsel %vm3212, %v3332, %v3331
        %v3334 = vsub.s32 4, %v3310
        %v3335 = vsel %vm3212, %v3334, %v3310
        %v3336 = vsel %vm3211, %v2744, %v3333
        %v3337 = vsel %vm3211, 0, %v3335
        %v3338 = vmul.f32 %v3336, %v3336
        %v3339 = vmul.f32 %v3338, -0.001358992
        %v3340 = vadd.f32 %v3339, 0.041655596
        %v3341 = vmul.f32 %v3338, %v3340
        %v3342 = vadd.f32 %v3341, -0.4999988
        %v3343 = vmul.f32 %v3338, %v3342
        %v3344 = vadd.f32 1.0, %v3343
        %v3345 = vmul.f32 %v3336, %v3336
        %v3346 = vmul.f32 %v3345, -0.00019511016
        %v3347 = vadd.f32 %v3346, 0.008332121
        %v3348 = vmul.f32 %v3345, %v3347
        %v3349 = vadd.f32 %v3348, -0.16666654
        %v3350 = vmul.f32 %v3345, %v3349
        %v3351 = vadd.f32 %v3350, 1.0
        %v3352 = vmul.f32 %v3351, %v3336
        %vm3353 = vweird.f32 %v2744
        %v3354 = vadd.s32 %v3337, 3
        %v3355 = vand.u32 %v3354, 3
        %vm3356 = vcmp.lt.s32.totalorder %v3355, 2
        %vm3357 = vcmp.eq.s32.totalorder %v3355, 0
        %v3358 = vxor.u32 %v3352, 2147483648
        %v3359 = vsel %vm3357, %v3344, %v3358
        %vm3360 = vcmp.eq.s32.totalorder %v3355, 2
        %v3361 = vxor.u32 %v3344, 2147483648
        %v3362 = vsel %vm3360, %v3361, %v3352
        %v3363 = vsel %vm3356, %v3359, %v3362
        %v3364 = vsel %vm3353, nan, %v3363
        %v3369 = vrot.slane %v2899, 7
        %v3370 = vrot.slane %v3054, 7
        %v3371 = vrot.slane %v3209, 7
        %v3372 = vrot.slane %v3364, 7
        %3377 = vst [vmem:[#allocation2 + $0x20] sm:$0xe] %v3369
        %3378 = vst [vmem:[#allocation2 + $0x28] sm:$0xe] %v3370
        %3379 = vst [vmem:[#allocation2 + $0x30] sm:$0xe] %v3371
        %3380 = vst [vmem:[#allocation2 + $0x38] sm:$0xe] %v3372
        %v3381 = vand.u32 2147483647, %v2741
        %vm3382 = vcmp.le.f32.partialorder %v3381, 0.7853982
        %vm3383 = vcmp.lt.s32.totalorder %v2741, 0
        %v3384 = vand.u32 %v2741, 2139095040
        %v3385 = vshrl.u32 %v3384, 23
        %v3386 = vsub.s32 %v3385, 127
        %v3387 = vand.u32 2147483647, %v2741
        %v3388 = vand.u32 %v3387, 8388607
        %v3389 = vor.u32 %v3388, 8388608
        %v3390 = vsub.s32 0, %v3389
        %v3391 = vadd.s32 %v3386, 1
        %vm3392 = vcmp.gt.s32.totalorder %v3391, 0
        %v3393 = vsel %vm3392, %v3391, 0
        %v3394 = vshrl.u32 %v3393, 5
        %v3395 = vand.u32 %v3393, 31
        %v3396 = vsub.s32 32, %v3395
        %v3397 = vshrl.u32 683565275, %v3396
        %v3398 = vshll.u32 683565275, %v3395
        %v3399 = vshrl.u32 2475754826, %v3396
        %v3400 = vor.u32 %v3398, %v3399
        %v3401 = vshll.u32 2475754826, %v3395
        %v3402 = vshrl.u32 2131351028, %v3396
        %v3403 = vor.u32 %v3401, %v3402
        %v3404 = vshll.u32 2131351028, %v3395
        %v3405 = vshrl.u32 2102212464, %v3396
        %v3406 = vor.u32 %v3404, %v3405
        %v3407 = vshll.u32 2102212464, %v3395
        %v3408 = vshrl.u32 920167782, %v3396
        %v3409 = vor.u32 %v3407, %v3408
        %v3410 = vshll.u32 920167782, %v3395
        %v3411 = vshrl.u32 1326507024, %v3396
        %v3412 = vor.u32 %v3410, %v3411
        %vm3413 = vcmp.lt.s32.totalorder %v3394, 1
        %vm3414 = vcmp.lt.s32.totalorder %v3394, 2
        %vm3415 = vcmp.lt.s32.totalorder %v3394, 3
        %vm3416 = vcmp.lt.s32.totalorder %v3394, 4
        %v3417 = vsel %vm3413, %v3397, %v3400
        %v3418 = vsel %vm3416, %v3406, 2102212464
        %v3419 = vsel %vm3415, %v3403, %v3418
        %v3420 = vsel %vm3414, %v3417, %v3419
        %v3421 = vsel %vm3413, %v3400, %v3403
        %v3422 = vsel %vm3416, %v3409, 920167782
        %v3423 = vsel %vm3415, %v3406, %v3422
        %v3424 = vsel %vm3414, %v3421, %v3423
        %v3425 = vsel %vm3413, %v3403, %v3406
        %v3426 = vsel %vm3416, %v3412, 1326507024
        %v3427 = vsel %vm3415, %v3409, %v3426
        %v3428 = vsel %vm3414, %v3425, %v3427
        %v3429 = vshll.u32 %v3389, 8
        %v3430 = vand.u32 %v3429, 65535
        %v3431 = vshrl.u32 %v3429, 16
        %v3432 = vand.u32 %v3428, 65535
        %v3433 = vshrl.u32 %v3428, 16
        %v3434 = vmul.u32 %v3430, %v3432
        %v3435 = vmul.u32 %v3430, %v3433
        %v3436 = vmul.u32 %v3431, %v3432
        %v3437 = vmul.u32 %v3431, %v3433
        %v3438 = vshll.u32 %v3435, 16
        %v3439 = vshrl.u32 %v3435, 16
        %v3440 = vshll.u32 %v3436, 16
        %v3441 = vshrl.u32 %v3436, 16
        %vm3442 = vc.u32 %v3434, %v3438
        %v3443 = vsel %vm3442, 1, 0
        %v3444 = vadd.s32 %v3434, %v3438
        %v3445 = vadd.s32 %v3437, %v3443
        %vm3446 = vc.u32 %v3444, %v3440
        %v3447 = vsel %vm3446, 1, 0
        %v3448 = vadd.s32 %v3444, %v3440
        %v3449 = vadd.s32 %v3445, %v3447
        %v3450 = vadd.s32 %v3449, %v3439
        %v3451 = vadd.s32 %v3450, %v3441
        %v3452 = vand.u32 %v3429, 65535
        %v3453 = vshrl.u32 %v3429, 16
        %v3454 = vand.u32 %v3424, 65535
        %v3455 = vshrl.u32 %v3424, 16
        %v3456 = vmul.u32 %v3452, %v3454
        %v3457 = vmul.u32 %v3452, %v3455
        %v3458 = vmul.u32 %v3453, %v3454
        %v3459 = vmul.u32 %v3453, %v3455
        %v3460 = vshll.u32 %v3457, 16
        %v3461 = vshrl.u32 %v3457, 16
        %v3462 = vshll.u32 %v3458, 16
        %v3463 = vshrl.u32 %v3458, 16
        %vm3464 = vc.u32 %v3456, %v3460
        %v3465 = vsel %vm3464, 1, 0
        %v3466 = vadd.s32 %v3456, %v3460
        %v3467 = vadd.s32 %v3459, %v3465
        %vm3468 = vc.u32 %v3466, %v3462
        %v3469 = vsel %vm3468, 1, 0
        %v3470 = vadd.s32 %v3466, %v3462
        %v3471 = vadd.s32 %v3467, %v3469
        %v3472 = vadd.s32 %v3471, %v3461
        %v3473 = vadd.s32 %v3472, %v3463
        %v3474 = vmul.u32 %v3429, %v3420
        %v3475 = vadd.s32 %v3451, %v3470
        %vm3476 = vc.u32 %v3451, %v3470
        %v3477 = vadd.s32 %v3473, 1
        %v3478 = vsel %vm3476, %v3477, %v3473
        %v3479 = vadd.s32 %v3474, %v3478
        %v3480 = vadd.s32 %v3479, 536870912
        %v3481 = vshrl.u32 %v3480, 30
        %v3482 = vshll.u32 %v3481, 30
        %v3483 = vsub.s32 %v3479, %v3482
        %vm3484 = vcmp.lt.s32.totalorder %v3483, 0
        %v3485 = vsub.s32 0, %v3483
        %v3486 = vsel %vm3484, %v3485, %v3483
        %v3487 = vclz %v3486
        %v3488 = vsub.s32 %v3487, 2
        %vm3489 = vcmp.gt.s32.totalorder 0, %v3488
        %v3490 = vsel %vm3489, 0, %v3488
        %v3491 = vsub.s32 32, %v3490
        %v3492 = vshll.u32 %v3483, %v3490
        %v3493 = vshrl.u32 %v3475, %v3491
        %v3494 = vor.u32 %v3492, %v3493
        %v3495 = vsub.s32 4294967266, %v3490
        %v3496 = vadd.s32 %v3495, 127
        %v3497 = vshll.u32 %v3496, 23
        %v3498 = vor.u32 4788187, %v3497
        %v3499 = vand.u32 2147483647, %v3498
        %v3501 = vcvt.s32.f32 %v3494
        %v3502 = vmul.f32 %v3501, %v3499
        %v3503 = vxor.u32 %v3502, 2147483648
        %v3504 = vsel %vm3383, %v3503, %v3502
        %v3505 = vsub.s32 4, %v3481
        %v3506 = vsel %vm3383, %v3505, %v3481
        %v3507 = vsel %vm3382, %v2741, %v3504
        %v3508 = vsel %vm3382, 0, %v3506
        %v3509 = vmul.f32 %v3507, %v3507
        %v3510 = vmul.f32 %v3509, -0.001358992
        %v3511 = vadd.f32 %v3510, 0.041655596
        %v3512 = vmul.f32 %v3509, %v3511
        %v3513 = vadd.f32 %v3512, -0.4999988
        %v3514 = vmul.f32 %v3509, %v3513
        %v3515 = vadd.f32 1.0, %v3514
        %v3516 = vmul.f32 %v3507, %v3507
        %v3517 = vmul.f32 %v3516, -0.00019511016
        %v3518 = vadd.f32 %v3517, 0.008332121
        %v3519 = vmul.f32 %v3516, %v3518
        %v3520 = vadd.f32 %v3519, -0.16666654
        %v3521 = vmul.f32 %v3516, %v3520
        %v3522 = vadd.f32 %v3521, 1.0
        %v3523 = vmul.f32 %v3522, %v3507
        %vm3524 = vweird.f32 %v2741
        %v3525 = vand.u32 %v3508, 3
        %vm3526 = vcmp.lt.s32.totalorder %v3525, 2
        %vm3527 = vcmp.eq.s32.totalorder %v3525, 0
        %v3528 = vxor.u32 %v3523, 2147483648
        %v3529 = vsel %vm3527, %v3515, %v3528
        %vm3530 = vcmp.eq.s32.totalorder %v3525, 2
        %v3531 = vxor.u32 %v3515, 2147483648
        %v3532 = vsel %vm3530, %v3531, %v3523
        %v3533 = vsel %vm3526, %v3529, %v3532
        %v3534 = vsel %vm3524, nan, %v3533
        %v3535 = vand.u32 2147483647, %v2742
        %vm3536 = vcmp.le.f32.partialorder %v3535, 0.7853982
        %vm3537 = vcmp.lt.s32.totalorder %v2742, 0
        %v3538 = vand.u32 %v2742, 2139095040
        %v3539 = vshrl.u32 %v3538, 23
        %v3540 = vsub.s32 %v3539, 127
        %v3541 = vand.u32 2147483647, %v2742
        %v3542 = vand.u32 %v3541, 8388607
        %v3543 = vor.u32 %v3542, 8388608
        %v3544 = vsub.s32 0, %v3543
        %v3545 = vadd.s32 %v3540, 1
        %vm3546 = vcmp.gt.s32.totalorder %v3545, 0
        %v3547 = vsel %vm3546, %v3545, 0
        %v3548 = vshrl.u32 %v3547, 5
        %v3549 = vand.u32 %v3547, 31
        %v3550 = vsub.s32 32, %v3549
        %v3551 = vshrl.u32 683565275, %v3550
        %v3552 = vshll.u32 683565275, %v3549
        %v3553 = vshrl.u32 2475754826, %v3550
        %v3554 = vor.u32 %v3552, %v3553
        %v3555 = vshll.u32 2475754826, %v3549
        %v3556 = vshrl.u32 2131351028, %v3550
        %v3557 = vor.u32 %v3555, %v3556
        %v3558 = vshll.u32 2131351028, %v3549
        %v3559 = vshrl.u32 2102212464, %v3550
        %v3560 = vor.u32 %v3558, %v3559
        %v3561 = vshll.u32 2102212464, %v3549
        %v3562 = vshrl.u32 920167782, %v3550
        %v3563 = vor.u32 %v3561, %v3562
        %v3564 = vshll.u32 920167782, %v3549
        %v3565 = vshrl.u32 1326507024, %v3550
        %v3566 = vor.u32 %v3564, %v3565
        %vm3567 = vcmp.lt.s32.totalorder %v3548, 1
        %vm3568 = vcmp.lt.s32.totalorder %v3548, 2
        %vm3569 = vcmp.lt.s32.totalorder %v3548, 3
        %vm3570 = vcmp.lt.s32.totalorder %v3548, 4
        %v3571 = vsel %vm3567, %v3551, %v3554
        %v3572 = vsel %vm3570, %v3560, 2102212464
        %v3573 = vsel %vm3569, %v3557, %v3572
        %v3574 = vsel %vm3568, %v3571, %v3573
        %v3575 = vsel %vm3567, %v3554, %v3557
        %v3576 = vsel %vm3570, %v3563, 920167782
        %v3577 = vsel %vm3569, %v3560, %v3576
        %v3578 = vsel %vm3568, %v3575, %v3577
        %v3579 = vsel %vm3567, %v3557, %v3560
        %v3580 = vsel %vm3570, %v3566, 1326507024
        %v3581 = vsel %vm3569, %v3563, %v3580
        %v3582 = vsel %vm3568, %v3579, %v3581
        %v3583 = vshll.u32 %v3543, 8
        %v3584 = vand.u32 %v3583, 65535
        %v3585 = vshrl.u32 %v3583, 16
        %v3586 = vand.u32 %v3582, 65535
        %v3587 = vshrl.u32 %v3582, 16
        %v3588 = vmul.u32 %v3584, %v3586
        %v3589 = vmul.u32 %v3584, %v3587
        %v3590 = vmul.u32 %v3585, %v3586
        %v3591 = vmul.u32 %v3585, %v3587
        %v3592 = vshll.u32 %v3589, 16
        %v3593 = vshrl.u32 %v3589, 16
        %v3594 = vshll.u32 %v3590, 16
        %v3595 = vshrl.u32 %v3590, 16
        %vm3596 = vc.u32 %v3588, %v3592
        %v3597 = vsel %vm3596, 1, 0
        %v3598 = vadd.s32 %v3588, %v3592
        %v3599 = vadd.s32 %v3591, %v3597
        %vm3600 = vc.u32 %v3598, %v3594
        %v3601 = vsel %vm3600, 1, 0
        %v3602 = vadd.s32 %v3598, %v3594
        %v3603 = vadd.s32 %v3599, %v3601
        %v3604 = vadd.s32 %v3603, %v3593
        %v3605 = vadd.s32 %v3604, %v3595
        %v3606 = vand.u32 %v3583, 65535
        %v3607 = vshrl.u32 %v3583, 16
        %v3608 = vand.u32 %v3578, 65535
        %v3609 = vshrl.u32 %v3578, 16
        %v3610 = vmul.u32 %v3606, %v3608
        %v3611 = vmul.u32 %v3606, %v3609
        %v3612 = vmul.u32 %v3607, %v3608
        %v3613 = vmul.u32 %v3607, %v3609
        %v3614 = vshll.u32 %v3611, 16
        %v3615 = vshrl.u32 %v3611, 16
        %v3616 = vshll.u32 %v3612, 16
        %v3617 = vshrl.u32 %v3612, 16
        %vm3618 = vc.u32 %v3610, %v3614
        %v3619 = vsel %vm3618, 1, 0
        %v3620 = vadd.s32 %v3610, %v3614
        %v3621 = vadd.s32 %v3613, %v3619
        %vm3622 = vc.u32 %v3620, %v3616
        %v3623 = vsel %vm3622, 1, 0
        %v3624 = vadd.s32 %v3620, %v3616
        %v3625 = vadd.s32 %v3621, %v3623
        %v3626 = vadd.s32 %v3625, %v3615
        %v3627 = vadd.s32 %v3626, %v3617
        %v3628 = vmul.u32 %v3583, %v3574
        %v3629 = vadd.s32 %v3605, %v3624
        %vm3630 = vc.u32 %v3605, %v3624
        %v3631 = vadd.s32 %v3627, 1
        %v3632 = vsel %vm3630, %v3631, %v3627
        %v3633 = vadd.s32 %v3628, %v3632
        %v3634 = vadd.s32 %v3633, 536870912
        %v3635 = vshrl.u32 %v3634, 30
        %v3636 = vshll.u32 %v3635, 30
        %v3637 = vsub.s32 %v3633, %v3636
        %vm3638 = vcmp.lt.s32.totalorder %v3637, 0
        %v3639 = vsub.s32 0, %v3637
        %v3640 = vsel %vm3638, %v3639, %v3637
        %v3641 = vclz %v3640
        %v3642 = vsub.s32 %v3641, 2
        %vm3643 = vcmp.gt.s32.totalorder 0, %v3642
        %v3644 = vsel %vm3643, 0, %v3642
        %v3645 = vsub.s32 32, %v3644
        %v3646 = vshll.u32 %v3637, %v3644
        %v3647 = vshrl.u32 %v3629, %v3645
        %v3648 = vor.u32 %v3646, %v3647
        %v3649 = vsub.s32 4294967266, %v3644
        %v3650 = vadd.s32 %v3649, 127
        %v3651 = vshll.u32 %v3650, 23
        %v3652 = vor.u32 4788187, %v3651
        %v3653 = vand.u32 2147483647, %v3652
        %v3655 = vcvt.s32.f32 %v3648
        %v3656 = vmul.f32 %v3655, %v3653
        %v3657 = vxor.u32 %v3656, 2147483648
        %v3658 = vsel %vm3537, %v3657, %v3656
        %v3659 = vsub.s32 4, %v3635
        %v3660 = vsel %vm3537, %v3659, %v3635
        %v3661 = vsel %vm3536, %v2742, %v3658
        %v3662 = vsel %vm3536, 0, %v3660
        %v3663 = vmul.f32 %v3661, %v3661
        %v3664 = vmul.f32 %v3663, -0.001358992
        %v3665 = vadd.f32 %v3664, 0.041655596
        %v3666 = vmul.f32 %v3663, %v3665
        %v3667 = vadd.f32 %v3666, -0.4999988
        %v3668 = vmul.f32 %v3663, %v3667
        %v3669 = vadd.f32 1.0, %v3668
        %v3670 = vmul.f32 %v3661, %v3661
        %v3671 = vmul.f32 %v3670, -0.00019511016
        %v3672 = vadd.f32 %v3671, 0.008332121
        %v3673 = vmul.f32 %v3670, %v3672
        %v3674 = vadd.f32 %v3673, -0.16666654
        %v3675 = vmul.f32 %v3670, %v3674
        %v3676 = vadd.f32 %v3675, 1.0
        %v3677 = vmul.f32 %v3676, %v3661
        %vm3678 = vweird.f32 %v2742
        %v3679 = vand.u32 %v3662, 3
        %vm3680 = vcmp.lt.s32.totalorder %v3679, 2
        %vm3681 = vcmp.eq.s32.totalorder %v3679, 0
        %v3682 = vxor.u32 %v3677, 2147483648
        %v3683 = vsel %vm3681, %v3669, %v3682
        %vm3684 = vcmp.eq.s32.totalorder %v3679, 2
        %v3685 = vxor.u32 %v3669, 2147483648
        %v3686 = vsel %vm3684, %v3685, %v3677
        %v3687 = vsel %vm3680, %v3683, %v3686
        %v3688 = vsel %vm3678, nan, %v3687
        %v3689 = vand.u32 2147483647, %v2743
        %vm3690 = vcmp.le.f32.partialorder %v3689, 0.7853982
        %vm3691 = vcmp.lt.s32.totalorder %v2743, 0
        %v3692 = vand.u32 %v2743, 2139095040
        %v3693 = vshrl.u32 %v3692, 23
        %v3694 = vsub.s32 %v3693, 127
        %v3695 = vand.u32 2147483647, %v2743
        %v3696 = vand.u32 %v3695, 8388607
        %v3697 = vor.u32 %v3696, 8388608
        %v3698 = vsub.s32 0, %v3697
        %v3699 = vadd.s32 %v3694, 1
        %vm3700 = vcmp.gt.s32.totalorder %v3699, 0
        %v3701 = vsel %vm3700, %v3699, 0
        %v3702 = vshrl.u32 %v3701, 5
        %v3703 = vand.u32 %v3701, 31
        %v3704 = vsub.s32 32, %v3703
        %v3705 = vshrl.u32 683565275, %v3704
        %v3706 = vshll.u32 683565275, %v3703
        %v3707 = vshrl.u32 2475754826, %v3704
        %v3708 = vor.u32 %v3706, %v3707
        %v3709 = vshll.u32 2475754826, %v3703
        %v3710 = vshrl.u32 2131351028, %v3704
        %v3711 = vor.u32 %v3709, %v3710
        %v3712 = vshll.u32 2131351028, %v3703
        %v3713 = vshrl.u32 2102212464, %v3704
        %v3714 = vor.u32 %v3712, %v3713
        %v3715 = vshll.u32 2102212464, %v3703
        %v3716 = vshrl.u32 920167782, %v3704
        %v3717 = vor.u32 %v3715, %v3716
        %v3718 = vshll.u32 920167782, %v3703
        %v3719 = vshrl.u32 1326507024, %v3704
        %v3720 = vor.u32 %v3718, %v3719
        %vm3721 = vcmp.lt.s32.totalorder %v3702, 1
        %vm3722 = vcmp.lt.s32.totalorder %v3702, 2
        %vm3723 = vcmp.lt.s32.totalorder %v3702, 3
        %vm3724 = vcmp.lt.s32.totalorder %v3702, 4
        %v3725 = vsel %vm3721, %v3705, %v3708
        %v3726 = vsel %vm3724, %v3714, 2102212464
        %v3727 = vsel %vm3723, %v3711, %v3726
        %v3728 = vsel %vm3722, %v3725, %v3727
        %v3729 = vsel %vm3721, %v3708, %v3711
        %v3730 = vsel %vm3724, %v3717, 920167782
        %v3731 = vsel %vm3723, %v3714, %v3730
        %v3732 = vsel %vm3722, %v3729, %v3731
        %v3733 = vsel %vm3721, %v3711, %v3714
        %v3734 = vsel %vm3724, %v3720, 1326507024
        %v3735 = vsel %vm3723, %v3717, %v3734
        %v3736 = vsel %vm3722, %v3733, %v3735
        %v3737 = vshll.u32 %v3697, 8
        %v3738 = vand.u32 %v3737, 65535
        %v3739 = vshrl.u32 %v3737, 16
        %v3740 = vand.u32 %v3736, 65535
        %v3741 = vshrl.u32 %v3736, 16
        %v3742 = vmul.u32 %v3738, %v3740
        %v3743 = vmul.u32 %v3738, %v3741
        %v3744 = vmul.u32 %v3739, %v3740
        %v3745 = vmul.u32 %v3739, %v3741
        %v3746 = vshll.u32 %v3743, 16
        %v3747 = vshrl.u32 %v3743, 16
        %v3748 = vshll.u32 %v3744, 16
        %v3749 = vshrl.u32 %v3744, 16
        %vm3750 = vc.u32 %v3742, %v3746
        %v3751 = vsel %vm3750, 1, 0
        %v3752 = vadd.s32 %v3742, %v3746
        %v3753 = vadd.s32 %v3745, %v3751
        %vm3754 = vc.u32 %v3752, %v3748
        %v3755 = vsel %vm3754, 1, 0
        %v3756 = vadd.s32 %v3752, %v3748
        %v3757 = vadd.s32 %v3753, %v3755
        %v3758 = vadd.s32 %v3757, %v3747
        %v3759 = vadd.s32 %v3758, %v3749
        %v3760 = vand.u32 %v3737, 65535
        %v3761 = vshrl.u32 %v3737, 16
        %v3762 = vand.u32 %v3732, 65535
        %v3763 = vshrl.u32 %v3732, 16
        %v3764 = vmul.u32 %v3760, %v3762
        %v3765 = vmul.u32 %v3760, %v3763
        %v3766 = vmul.u32 %v3761, %v3762
        %v3767 = vmul.u32 %v3761, %v3763
        %v3768 = vshll.u32 %v3765, 16
        %v3769 = vshrl.u32 %v3765, 16
        %v3770 = vshll.u32 %v3766, 16
        %v3771 = vshrl.u32 %v3766, 16
        %vm3772 = vc.u32 %v3764, %v3768
        %v3773 = vsel %vm3772, 1, 0
        %v3774 = vadd.s32 %v3764, %v3768
        %v3775 = vadd.s32 %v3767, %v3773
        %vm3776 = vc.u32 %v3774, %v3770
        %v3777 = vsel %vm3776, 1, 0
        %v3778 = vadd.s32 %v3774, %v3770
        %v3779 = vadd.s32 %v3775, %v3777
        %v3780 = vadd.s32 %v3779, %v3769
        %v3781 = vadd.s32 %v3780, %v3771
        %v3782 = vmul.u32 %v3737, %v3728
        %v3783 = vadd.s32 %v3759, %v3778
        %vm3784 = vc.u32 %v3759, %v3778
        %v3785 = vadd.s32 %v3781, 1
        %v3786 = vsel %vm3784, %v3785, %v3781
        %v3787 = vadd.s32 %v3782, %v3786
        %v3788 = vadd.s32 %v3787, 536870912
        %v3789 = vshrl.u32 %v3788, 30
        %v3790 = vshll.u32 %v3789, 30
        %v3791 = vsub.s32 %v3787, %v3790
        %vm3792 = vcmp.lt.s32.totalorder %v3791, 0
        %v3793 = vsub.s32 0, %v3791
        %v3794 = vsel %vm3792, %v3793, %v3791
        %v3795 = vclz %v3794
        %v3796 = vsub.s32 %v3795, 2
        %vm3797 = vcmp.gt.s32.totalorder 0, %v3796
        %v3798 = vsel %vm3797, 0, %v3796
        %v3799 = vsub.s32 32, %v3798
        %v3800 = vshll.u32 %v3791, %v3798
        %v3801 = vshrl.u32 %v3783, %v3799
        %v3802 = vor.u32 %v3800, %v3801
        %v3803 = vsub.s32 4294967266, %v3798
        %v3804 = vadd.s32 %v3803, 127
        %v3805 = vshll.u32 %v3804, 23
        %v3806 = vor.u32 4788187, %v3805
        %v3807 = vand.u32 2147483647, %v3806
        %v3809 = vcvt.s32.f32 %v3802
        %v3810 = vmul.f32 %v3809, %v3807
        %v3811 = vxor.u32 %v3810, 2147483648
        %v3812 = vsel %vm3691, %v3811, %v3810
        %v3813 = vsub.s32 4, %v3789
        %v3814 = vsel %vm3691, %v3813, %v3789
        %v3815 = vsel %vm3690, %v2743, %v3812
        %v3816 = vsel %vm3690, 0, %v3814
        %v3817 = vmul.f32 %v3815, %v3815
        %v3818 = vmul.f32 %v3817, -0.001358992
        %v3819 = vadd.f32 %v3818, 0.041655596
        %v3820 = vmul.f32 %v3817, %v3819
        %v3821 = vadd.f32 %v3820, -0.4999988
        %v3822 = vmul.f32 %v3817, %v3821
        %v3823 = vadd.f32 1.0, %v3822
        %v3824 = vmul.f32 %v3815, %v3815
        %v3825 = vmul.f32 %v3824, -0.00019511016
        %v3826 = vadd.f32 %v3825, 0.008332121
        %v3827 = vmul.f32 %v3824, %v3826
        %v3828 = vadd.f32 %v3827, -0.16666654
        %v3829 = vmul.f32 %v3824, %v3828
        %v3830 = vadd.f32 %v3829, 1.0
        %v3831 = vmul.f32 %v3830, %v3815
        %vm3832 = vweird.f32 %v2743
        %v3833 = vand.u32 %v3816, 3
        %vm3834 = vcmp.lt.s32.totalorder %v3833, 2
        %vm3835 = vcmp.eq.s32.totalorder %v3833, 0
        %v3836 = vxor.u32 %v3831, 2147483648
        %v3837 = vsel %vm3835, %v3823, %v3836
        %vm3838 = vcmp.eq.s32.totalorder %v3833, 2
        %v3839 = vxor.u32 %v3823, 2147483648
        %v3840 = vsel %vm3838, %v3839, %v3831
        %v3841 = vsel %vm3834, %v3837, %v3840
        %v3842 = vsel %vm3832, nan, %v3841
        %v3843 = vand.u32 2147483647, %v2744
        %vm3844 = vcmp.le.f32.partialorder %v3843, 0.7853982
        %vm3845 = vcmp.lt.s32.totalorder %v2744, 0
        %v3846 = vand.u32 %v2744, 2139095040
        %v3847 = vshrl.u32 %v3846, 23
        %v3848 = vsub.s32 %v3847, 127
        %v3849 = vand.u32 2147483647, %v2744
        %v3850 = vand.u32 %v3849, 8388607
        %v3851 = vor.u32 %v3850, 8388608
        %v3852 = vsub.s32 0, %v3851
        %v3853 = vadd.s32 %v3848, 1
        %vm3854 = vcmp.gt.s32.totalorder %v3853, 0
        %v3855 = vsel %vm3854, %v3853, 0
        %v3856 = vshrl.u32 %v3855, 5
        %v3857 = vand.u32 %v3855, 31
        %v3858 = vsub.s32 32, %v3857
        %v3859 = vshrl.u32 683565275, %v3858
        %v3860 = vshll.u32 683565275, %v3857
        %v3861 = vshrl.u32 2475754826, %v3858
        %v3862 = vor.u32 %v3860, %v3861
        %v3863 = vshll.u32 2475754826, %v3857
        %v3864 = vshrl.u32 2131351028, %v3858
        %v3865 = vor.u32 %v3863, %v3864
        %v3866 = vshll.u32 2131351028, %v3857
        %v3867 = vshrl.u32 2102212464, %v3858
        %v3868 = vor.u32 %v3866, %v3867
        %v3869 = vshll.u32 2102212464, %v3857
        %v3870 = vshrl.u32 920167782, %v3858
        %v3871 = vor.u32 %v3869, %v3870
        %v3872 = vshll.u32 920167782, %v3857
        %v3873 = vshrl.u32 1326507024, %v3858
        %v3874 = vor.u32 %v3872, %v3873
        %vm3875 = vcmp.lt.s32.totalorder %v3856, 1
        %vm3876 = vcmp.lt.s32.totalorder %v3856, 2
        %vm3877 = vcmp.lt.s32.totalorder %v3856, 3
        %vm3878 = vcmp.lt.s32.totalorder %v3856, 4
        %v3879 = vsel %vm3875, %v3859, %v3862
        %v3880 = vsel %vm3878, %v3868, 2102212464
        %v3881 = vsel %vm3877, %v3865, %v3880
        %v3882 = vsel %vm3876, %v3879, %v3881
        %v3883 = vsel %vm3875, %v3862, %v3865
        %v3884 = vsel %vm3878, %v3871, 920167782
        %v3885 = vsel %vm3877, %v3868, %v3884
        %v3886 = vsel %vm3876, %v3883, %v3885
        %v3887 = vsel %vm3875, %v3865, %v3868
        %v3888 = vsel %vm3878, %v3874, 1326507024
        %v3889 = vsel %vm3877, %v3871, %v3888
        %v3890 = vsel %vm3876, %v3887, %v3889
        %v3891 = vshll.u32 %v3851, 8
        %v3892 = vand.u32 %v3891, 65535
        %v3893 = vshrl.u32 %v3891, 16
        %v3894 = vand.u32 %v3890, 65535
        %v3895 = vshrl.u32 %v3890, 16
        %v3896 = vmul.u32 %v3892, %v3894
        %v3897 = vmul.u32 %v3892, %v3895
        %v3898 = vmul.u32 %v3893, %v3894
        %v3899 = vmul.u32 %v3893, %v3895
        %v3900 = vshll.u32 %v3897, 16
        %v3901 = vshrl.u32 %v3897, 16
        %v3902 = vshll.u32 %v3898, 16
        %v3903 = vshrl.u32 %v3898, 16
        %vm3904 = vc.u32 %v3896, %v3900
        %v3905 = vsel %vm3904, 1, 0
        %v3906 = vadd.s32 %v3896, %v3900
        %v3907 = vadd.s32 %v3899, %v3905
        %vm3908 = vc.u32 %v3906, %v3902
        %v3909 = vsel %vm3908, 1, 0
        %v3910 = vadd.s32 %v3906, %v3902
        %v3911 = vadd.s32 %v3907, %v3909
        %v3912 = vadd.s32 %v3911, %v3901
        %v3913 = vadd.s32 %v3912, %v3903
        %v3914 = vand.u32 %v3891, 65535
        %v3915 = vshrl.u32 %v3891, 16
        %v3916 = vand.u32 %v3886, 65535
        %v3917 = vshrl.u32 %v3886, 16
        %v3918 = vmul.u32 %v3914, %v3916
        %v3919 = vmul.u32 %v3914, %v3917
        %v3920 = vmul.u32 %v3915, %v3916
        %v3921 = vmul.u32 %v3915, %v3917
        %v3922 = vshll.u32 %v3919, 16
        %v3923 = vshrl.u32 %v3919, 16
        %v3924 = vshll.u32 %v3920, 16
        %v3925 = vshrl.u32 %v3920, 16
        %vm3926 = vc.u32 %v3918, %v3922
        %v3927 = vsel %vm3926, 1, 0
        %v3928 = vadd.s32 %v3918, %v3922
        %v3929 = vadd.s32 %v3921, %v3927
        %vm3930 = vc.u32 %v3928, %v3924
        %v3931 = vsel %vm3930, 1, 0
        %v3932 = vadd.s32 %v3928, %v3924
        %v3933 = vadd.s32 %v3929, %v3931
        %v3934 = vadd.s32 %v3933, %v3923
        %v3935 = vadd.s32 %v3934, %v3925
        %v3936 = vmul.u32 %v3891, %v3882
        %v3937 = vadd.s32 %v3913, %v3932
        %vm3938 = vc.u32 %v3913, %v3932
        %v3939 = vadd.s32 %v3935, 1
        %v3940 = vsel %vm3938, %v3939, %v3935
        %v3941 = vadd.s32 %v3936, %v3940
        %v3942 = vadd.s32 %v3941, 536870912
        %v3943 = vshrl.u32 %v3942, 30
        %v3944 = vshll.u32 %v3943, 30
        %v3945 = vsub.s32 %v3941, %v3944
        %vm3946 = vcmp.lt.s32.totalorder %v3945, 0
        %v3947 = vsub.s32 0, %v3945
        %v3948 = vsel %vm3946, %v3947, %v3945
        %v3949 = vclz %v3948
        %v3950 = vsub.s32 %v3949, 2
        %vm3951 = vcmp.gt.s32.totalorder 0, %v3950
        %v3952 = vsel %vm3951, 0, %v3950
        %v3953 = vsub.s32 32, %v3952
        %v3954 = vshll.u32 %v3945, %v3952
        %v3955 = vshrl.u32 %v3937, %v3953
        %v3956 = vor.u32 %v3954, %v3955
        %v3957 = vsub.s32 4294967266, %v3952
        %v3958 = vadd.s32 %v3957, 127
        %v3959 = vshll.u32 %v3958, 23
        %v3960 = vor.u32 4788187, %v3959
        %v3961 = vand.u32 2147483647, %v3960
        %v3963 = vcvt.s32.f32 %v3956
        %v3964 = vmul.f32 %v3963, %v3961
        %v3965 = vxor.u32 %v3964, 2147483648
        %v3966 = vsel %vm3845, %v3965, %v3964
        %v3967 = vsub.s32 4, %v3943
        %v3968 = vsel %vm3845, %v3967, %v3943
        %v3969 = vsel %vm3844, %v2744, %v3966
        %v3970 = vsel %vm3844, 0, %v3968
        %v3971 = vmul.f32 %v3969, %v3969
        %v3972 = vmul.f32 %v3971, -0.001358992
        %v3973 = vadd.f32 %v3972, 0.041655596
        %v3974 = vmul.f32 %v3971, %v3973
        %v3975 = vadd.f32 %v3974, -0.4999988
        %v3976 = vmul.f32 %v3971, %v3975
        %v3977 = vadd.f32 1.0, %v3976
        %v3978 = vmul.f32 %v3969, %v3969
        %v3979 = vmul.f32 %v3978, -0.00019511016
        %v3980 = vadd.f32 %v3979, 0.008332121
        %v3981 = vmul.f32 %v3978, %v3980
        %v3982 = vadd.f32 %v3981, -0.16666654
        %v3983 = vmul.f32 %v3978, %v3982
        %v3984 = vadd.f32 %v3983, 1.0
        %v3985 = vmul.f32 %v3984, %v3969
        %vm3986 = vweird.f32 %v2744
        %v3987 = vand.u32 %v3970, 3
        %vm3988 = vcmp.lt.s32.totalorder %v3987, 2
        %vm3989 = vcmp.eq.s32.totalorder %v3987, 0
        %v3990 = vxor.u32 %v3985, 2147483648
        %v3991 = vsel %vm3989, %v3977, %v3990
        %vm3992 = vcmp.eq.s32.totalorder %v3987, 2
        %v3993 = vxor.u32 %v3977, 2147483648
        %v3994 = vsel %vm3992, %v3993, %v3985
        %v3995 = vsel %vm3988, %v3991, %v3994
        %v3996 = vsel %vm3986, nan, %v3995
        %v4001 = vrot.slane %v3534, 3
        %v4002 = vrot.slane %v3688, 3
        %v4003 = vrot.slane %v3842, 3
        %v4004 = vrot.slane %v3996, 3
        %4009 = vst [vmem:[#allocation2 + $0x40] sm:$0xe0] %v4001
        %4010 = vst [vmem:[#allocation2 + $0x48] sm:$0xe0] %v4002
        %4011 = vst [vmem:[#allocation2 + $0x50] sm:$0xe0] %v4003
        %4012 = vst [vmem:[#allocation2 + $0x58] sm:$0xe0] %v4004
        %v4013 = vmul.f32 %v181, 8.0
        %v4014 = vmul.f32 %v182, 8.0
        %v4015 = vmul.f32 %v183, 8.0
        %v4016 = vmul.f32 %v184, 8.0
        %v4017 = vand.u32 2147483647, %v4013
        %vm4018 = vcmp.le.f32.partialorder %v4017, 0.7853982
        %vm4019 = vcmp.lt.s32.totalorder %v4013, 0
        %v4020 = vand.u32 %v4013, 2139095040
        %v4021 = vshrl.u32 %v4020, 23
        %v4022 = vsub.s32 %v4021, 127
        %v4023 = vand.u32 2147483647, %v4013
        %v4024 = vand.u32 %v4023, 8388607
        %v4025 = vor.u32 %v4024, 8388608
        %v4026 = vsub.s32 0, %v4025
        %v4027 = vadd.s32 %v4022, 1
        %vm4028 = vcmp.gt.s32.totalorder %v4027, 0
        %v4029 = vsel %vm4028, %v4027, 0
        %v4030 = vshrl.u32 %v4029, 5
        %v4031 = vand.u32 %v4029, 31
        %v4032 = vsub.s32 32, %v4031
        %v4033 = vshrl.u32 683565275, %v4032
        %v4034 = vshll.u32 683565275, %v4031
        %v4035 = vshrl.u32 2475754826, %v4032
        %v4036 = vor.u32 %v4034, %v4035
        %v4037 = vshll.u32 2475754826, %v4031
        %v4038 = vshrl.u32 2131351028, %v4032
        %v4039 = vor.u32 %v4037, %v4038
        %v4040 = vshll.u32 2131351028, %v4031
        %v4041 = vshrl.u32 2102212464, %v4032
        %v4042 = vor.u32 %v4040, %v4041
        %v4043 = vshll.u32 2102212464, %v4031
        %v4044 = vshrl.u32 920167782, %v4032
        %v4045 = vor.u32 %v4043, %v4044
        %v4046 = vshll.u32 920167782, %v4031
        %v4047 = vshrl.u32 1326507024, %v4032
        %v4048 = vor.u32 %v4046, %v4047
        %vm4049 = vcmp.lt.s32.totalorder %v4030, 1
        %vm4050 = vcmp.lt.s32.totalorder %v4030, 2
        %vm4051 = vcmp.lt.s32.totalorder %v4030, 3
        %vm4052 = vcmp.lt.s32.totalorder %v4030, 4
        %v4053 = vsel %vm4049, %v4033, %v4036
        %v4054 = vsel %vm4052, %v4042, 2102212464
        %v4055 = vsel %vm4051, %v4039, %v4054
        %v4056 = vsel %vm4050, %v4053, %v4055
        %v4057 = vsel %vm4049, %v4036, %v4039
        %v4058 = vsel %vm4052, %v4045, 920167782
        %v4059 = vsel %vm4051, %v4042, %v4058
        %v4060 = vsel %vm4050, %v4057, %v4059
        %v4061 = vsel %vm4049, %v4039, %v4042
        %v4062 = vsel %vm4052, %v4048, 1326507024
        %v4063 = vsel %vm4051, %v4045, %v4062
        %v4064 = vsel %vm4050, %v4061, %v4063
        %v4065 = vshll.u32 %v4025, 8
        %v4066 = vand.u32 %v4065, 65535
        %v4067 = vshrl.u32 %v4065, 16
        %v4068 = vand.u32 %v4064, 65535
        %v4069 = vshrl.u32 %v4064, 16
        %v4070 = vmul.u32 %v4066, %v4068
        %v4071 = vmul.u32 %v4066, %v4069
        %v4072 = vmul.u32 %v4067, %v4068
        %v4073 = vmul.u32 %v4067, %v4069
        %v4074 = vshll.u32 %v4071, 16
        %v4075 = vshrl.u32 %v4071, 16
        %v4076 = vshll.u32 %v4072, 16
        %v4077 = vshrl.u32 %v4072, 16
        %vm4078 = vc.u32 %v4070, %v4074
        %v4079 = vsel %vm4078, 1, 0
        %v4080 = vadd.s32 %v4070, %v4074
        %v4081 = vadd.s32 %v4073, %v4079
        %vm4082 = vc.u32 %v4080, %v4076
        %v4083 = vsel %vm4082, 1, 0
        %v4084 = vadd.s32 %v4080, %v4076
        %v4085 = vadd.s32 %v4081, %v4083
        %v4086 = vadd.s32 %v4085, %v4075
        %v4087 = vadd.s32 %v4086, %v4077
        %v4088 = vand.u32 %v4065, 65535
        %v4089 = vshrl.u32 %v4065, 16
        %v4090 = vand.u32 %v4060, 65535
        %v4091 = vshrl.u32 %v4060, 16
        %v4092 = vmul.u32 %v4088, %v4090
        %v4093 = vmul.u32 %v4088, %v4091
        %v4094 = vmul.u32 %v4089, %v4090
        %v4095 = vmul.u32 %v4089, %v4091
        %v4096 = vshll.u32 %v4093, 16
        %v4097 = vshrl.u32 %v4093, 16
        %v4098 = vshll.u32 %v4094, 16
        %v4099 = vshrl.u32 %v4094, 16
        %vm4100 = vc.u32 %v4092, %v4096
        %v4101 = vsel %vm4100, 1, 0
        %v4102 = vadd.s32 %v4092, %v4096
        %v4103 = vadd.s32 %v4095, %v4101
        %vm4104 = vc.u32 %v4102, %v4098
        %v4105 = vsel %vm4104, 1, 0
        %v4106 = vadd.s32 %v4102, %v4098
        %v4107 = vadd.s32 %v4103, %v4105
        %v4108 = vadd.s32 %v4107, %v4097
        %v4109 = vadd.s32 %v4108, %v4099
        %v4110 = vmul.u32 %v4065, %v4056
        %v4111 = vadd.s32 %v4087, %v4106
        %vm4112 = vc.u32 %v4087, %v4106
        %v4113 = vadd.s32 %v4109, 1
        %v4114 = vsel %vm4112, %v4113, %v4109
        %v4115 = vadd.s32 %v4110, %v4114
        %v4116 = vadd.s32 %v4115, 536870912
        %v4117 = vshrl.u32 %v4116, 30
        %v4118 = vshll.u32 %v4117, 30
        %v4119 = vsub.s32 %v4115, %v4118
        %vm4120 = vcmp.lt.s32.totalorder %v4119, 0
        %v4121 = vsub.s32 0, %v4119
        %v4122 = vsel %vm4120, %v4121, %v4119
        %v4123 = vclz %v4122
        %v4124 = vsub.s32 %v4123, 2
        %vm4125 = vcmp.gt.s32.totalorder 0, %v4124
        %v4126 = vsel %vm4125, 0, %v4124
        %v4127 = vsub.s32 32, %v4126
        %v4128 = vshll.u32 %v4119, %v4126
        %v4129 = vshrl.u32 %v4111, %v4127
        %v4130 = vor.u32 %v4128, %v4129
        %v4131 = vsub.s32 4294967266, %v4126
        %v4132 = vadd.s32 %v4131, 127
        %v4133 = vshll.u32 %v4132, 23
        %v4134 = vor.u32 4788187, %v4133
        %v4135 = vand.u32 2147483647, %v4134
        %v4137 = vcvt.s32.f32 %v4130
        %v4138 = vmul.f32 %v4137, %v4135
        %v4139 = vxor.u32 %v4138, 2147483648
        %v4140 = vsel %vm4019, %v4139, %v4138
        %v4141 = vsub.s32 4, %v4117
        %v4142 = vsel %vm4019, %v4141, %v4117
        %v4143 = vsel %vm4018, %v4013, %v4140
        %v4144 = vsel %vm4018, 0, %v4142
        %v4145 = vmul.f32 %v4143, %v4143
        %v4146 = vmul.f32 %v4145, -0.001358992
        %v4147 = vadd.f32 %v4146, 0.041655596
        %v4148 = vmul.f32 %v4145, %v4147
        %v4149 = vadd.f32 %v4148, -0.4999988
        %v4150 = vmul.f32 %v4145, %v4149
        %v4151 = vadd.f32 1.0, %v4150
        %v4152 = vmul.f32 %v4143, %v4143
        %v4153 = vmul.f32 %v4152, -0.00019511016
        %v4154 = vadd.f32 %v4153, 0.008332121
        %v4155 = vmul.f32 %v4152, %v4154
        %v4156 = vadd.f32 %v4155, -0.16666654
        %v4157 = vmul.f32 %v4152, %v4156
        %v4158 = vadd.f32 %v4157, 1.0
        %v4159 = vmul.f32 %v4158, %v4143
        %vm4160 = vweird.f32 %v4013
        %v4161 = vadd.s32 %v4144, 3
        %v4162 = vand.u32 %v4161, 3
        %vm4163 = vcmp.lt.s32.totalorder %v4162, 2
        %vm4164 = vcmp.eq.s32.totalorder %v4162, 0
        %v4165 = vxor.u32 %v4159, 2147483648
        %v4166 = vsel %vm4164, %v4151, %v4165
        %vm4167 = vcmp.eq.s32.totalorder %v4162, 2
        %v4168 = vxor.u32 %v4151, 2147483648
        %v4169 = vsel %vm4167, %v4168, %v4159
        %v4170 = vsel %vm4163, %v4166, %v4169
        %v4171 = vsel %vm4160, nan, %v4170
        %v4172 = vand.u32 2147483647, %v4014
        %vm4173 = vcmp.le.f32.partialorder %v4172, 0.7853982
        %vm4174 = vcmp.lt.s32.totalorder %v4014, 0
        %v4175 = vand.u32 %v4014, 2139095040
        %v4176 = vshrl.u32 %v4175, 23
        %v4177 = vsub.s32 %v4176, 127
        %v4178 = vand.u32 2147483647, %v4014
        %v4179 = vand.u32 %v4178, 8388607
        %v4180 = vor.u32 %v4179, 8388608
        %v4181 = vsub.s32 0, %v4180
        %v4182 = vadd.s32 %v4177, 1
        %vm4183 = vcmp.gt.s32.totalorder %v4182, 0
        %v4184 = vsel %vm4183, %v4182, 0
        %v4185 = vshrl.u32 %v4184, 5
        %v4186 = vand.u32 %v4184, 31
        %v4187 = vsub.s32 32, %v4186
        %v4188 = vshrl.u32 683565275, %v4187
        %v4189 = vshll.u32 683565275, %v4186
        %v4190 = vshrl.u32 2475754826, %v4187
        %v4191 = vor.u32 %v4189, %v4190
        %v4192 = vshll.u32 2475754826, %v4186
        %v4193 = vshrl.u32 2131351028, %v4187
        %v4194 = vor.u32 %v4192, %v4193
        %v4195 = vshll.u32 2131351028, %v4186
        %v4196 = vshrl.u32 2102212464, %v4187
        %v4197 = vor.u32 %v4195, %v4196
        %v4198 = vshll.u32 2102212464, %v4186
        %v4199 = vshrl.u32 920167782, %v4187
        %v4200 = vor.u32 %v4198, %v4199
        %v4201 = vshll.u32 920167782, %v4186
        %v4202 = vshrl.u32 1326507024, %v4187
        %v4203 = vor.u32 %v4201, %v4202
        %vm4204 = vcmp.lt.s32.totalorder %v4185, 1
        %vm4205 = vcmp.lt.s32.totalorder %v4185, 2
        %vm4206 = vcmp.lt.s32.totalorder %v4185, 3
        %vm4207 = vcmp.lt.s32.totalorder %v4185, 4
        %v4208 = vsel %vm4204, %v4188, %v4191
        %v4209 = vsel %vm4207, %v4197, 2102212464
        %v4210 = vsel %vm4206, %v4194, %v4209
        %v4211 = vsel %vm4205, %v4208, %v4210
        %v4212 = vsel %vm4204, %v4191, %v4194
        %v4213 = vsel %vm4207, %v4200, 920167782
        %v4214 = vsel %vm4206, %v4197, %v4213
        %v4215 = vsel %vm4205, %v4212, %v4214
        %v4216 = vsel %vm4204, %v4194, %v4197
        %v4217 = vsel %vm4207, %v4203, 1326507024
        %v4218 = vsel %vm4206, %v4200, %v4217
        %v4219 = vsel %vm4205, %v4216, %v4218
        %v4220 = vshll.u32 %v4180, 8
        %v4221 = vand.u32 %v4220, 65535
        %v4222 = vshrl.u32 %v4220, 16
        %v4223 = vand.u32 %v4219, 65535
        %v4224 = vshrl.u32 %v4219, 16
        %v4225 = vmul.u32 %v4221, %v4223
        %v4226 = vmul.u32 %v4221, %v4224
        %v4227 = vmul.u32 %v4222, %v4223
        %v4228 = vmul.u32 %v4222, %v4224
        %v4229 = vshll.u32 %v4226, 16
        %v4230 = vshrl.u32 %v4226, 16
        %v4231 = vshll.u32 %v4227, 16
        %v4232 = vshrl.u32 %v4227, 16
        %vm4233 = vc.u32 %v4225, %v4229
        %v4234 = vsel %vm4233, 1, 0
        %v4235 = vadd.s32 %v4225, %v4229
        %v4236 = vadd.s32 %v4228, %v4234
        %vm4237 = vc.u32 %v4235, %v4231
        %v4238 = vsel %vm4237, 1, 0
        %v4239 = vadd.s32 %v4235, %v4231
        %v4240 = vadd.s32 %v4236, %v4238
        %v4241 = vadd.s32 %v4240, %v4230
        %v4242 = vadd.s32 %v4241, %v4232
        %v4243 = vand.u32 %v4220, 65535
        %v4244 = vshrl.u32 %v4220, 16
        %v4245 = vand.u32 %v4215, 65535
        %v4246 = vshrl.u32 %v4215, 16
        %v4247 = vmul.u32 %v4243, %v4245
        %v4248 = vmul.u32 %v4243, %v4246
        %v4249 = vmul.u32 %v4244, %v4245
        %v4250 = vmul.u32 %v4244, %v4246
        %v4251 = vshll.u32 %v4248, 16
        %v4252 = vshrl.u32 %v4248, 16
        %v4253 = vshll.u32 %v4249, 16
        %v4254 = vshrl.u32 %v4249, 16
        %vm4255 = vc.u32 %v4247, %v4251
        %v4256 = vsel %vm4255, 1, 0
        %v4257 = vadd.s32 %v4247, %v4251
        %v4258 = vadd.s32 %v4250, %v4256
        %vm4259 = vc.u32 %v4257, %v4253
        %v4260 = vsel %vm4259, 1, 0
        %v4261 = vadd.s32 %v4257, %v4253
        %v4262 = vadd.s32 %v4258, %v4260
        %v4263 = vadd.s32 %v4262, %v4252
        %v4264 = vadd.s32 %v4263, %v4254
        %v4265 = vmul.u32 %v4220, %v4211
        %v4266 = vadd.s32 %v4242, %v4261
        %vm4267 = vc.u32 %v4242, %v4261
        %v4268 = vadd.s32 %v4264, 1
        %v4269 = vsel %vm4267, %v4268, %v4264
        %v4270 = vadd.s32 %v4265, %v4269
        %v4271 = vadd.s32 %v4270, 536870912
        %v4272 = vshrl.u32 %v4271, 30
        %v4273 = vshll.u32 %v4272, 30
        %v4274 = vsub.s32 %v4270, %v4273
        %vm4275 = vcmp.lt.s32.totalorder %v4274, 0
        %v4276 = vsub.s32 0, %v4274
        %v4277 = vsel %vm4275, %v4276, %v4274
        %v4278 = vclz %v4277
        %v4279 = vsub.s32 %v4278, 2
        %vm4280 = vcmp.gt.s32.totalorder 0, %v4279
        %v4281 = vsel %vm4280, 0, %v4279
        %v4282 = vsub.s32 32, %v4281
        %v4283 = vshll.u32 %v4274, %v4281
        %v4284 = vshrl.u32 %v4266, %v4282
        %v4285 = vor.u32 %v4283, %v4284
        %v4286 = vsub.s32 4294967266, %v4281
        %v4287 = vadd.s32 %v4286, 127
        %v4288 = vshll.u32 %v4287, 23
        %v4289 = vor.u32 4788187, %v4288
        %v4290 = vand.u32 2147483647, %v4289
        %v4292 = vcvt.s32.f32 %v4285
        %v4293 = vmul.f32 %v4292, %v4290
        %v4294 = vxor.u32 %v4293, 2147483648
        %v4295 = vsel %vm4174, %v4294, %v4293
        %v4296 = vsub.s32 4, %v4272
        %v4297 = vsel %vm4174, %v4296, %v4272
        %v4298 = vsel %vm4173, %v4014, %v4295
        %v4299 = vsel %vm4173, 0, %v4297
        %v4300 = vmul.f32 %v4298, %v4298
        %v4301 = vmul.f32 %v4300, -0.001358992
        %v4302 = vadd.f32 %v4301, 0.041655596
        %v4303 = vmul.f32 %v4300, %v4302
        %v4304 = vadd.f32 %v4303, -0.4999988
        %v4305 = vmul.f32 %v4300, %v4304
        %v4306 = vadd.f32 1.0, %v4305
        %v4307 = vmul.f32 %v4298, %v4298
        %v4308 = vmul.f32 %v4307, -0.00019511016
        %v4309 = vadd.f32 %v4308, 0.008332121
        %v4310 = vmul.f32 %v4307, %v4309
        %v4311 = vadd.f32 %v4310, -0.16666654
        %v4312 = vmul.f32 %v4307, %v4311
        %v4313 = vadd.f32 %v4312, 1.0
        %v4314 = vmul.f32 %v4313, %v4298
        %vm4315 = vweird.f32 %v4014
        %v4316 = vadd.s32 %v4299, 3
        %v4317 = vand.u32 %v4316, 3
        %vm4318 = vcmp.lt.s32.totalorder %v4317, 2
        %vm4319 = vcmp.eq.s32.totalorder %v4317, 0
        %v4320 = vxor.u32 %v4314, 2147483648
        %v4321 = vsel %vm4319, %v4306, %v4320
        %vm4322 = vcmp.eq.s32.totalorder %v4317, 2
        %v4323 = vxor.u32 %v4306, 2147483648
        %v4324 = vsel %vm4322, %v4323, %v4314
        %v4325 = vsel %vm4318, %v4321, %v4324
        %v4326 = vsel %vm4315, nan, %v4325
        %v4327 = vand.u32 2147483647, %v4015
        %vm4328 = vcmp.le.f32.partialorder %v4327, 0.7853982
        %vm4329 = vcmp.lt.s32.totalorder %v4015, 0
        %v4330 = vand.u32 %v4015, 2139095040
        %v4331 = vshrl.u32 %v4330, 23
        %v4332 = vsub.s32 %v4331, 127
        %v4333 = vand.u32 2147483647, %v4015
        %v4334 = vand.u32 %v4333, 8388607
        %v4335 = vor.u32 %v4334, 8388608
        %v4336 = vsub.s32 0, %v4335
        %v4337 = vadd.s32 %v4332, 1
        %vm4338 = vcmp.gt.s32.totalorder %v4337, 0
        %v4339 = vsel %vm4338, %v4337, 0
        %v4340 = vshrl.u32 %v4339, 5
        %v4341 = vand.u32 %v4339, 31
        %v4342 = vsub.s32 32, %v4341
        %v4343 = vshrl.u32 683565275, %v4342
        %v4344 = vshll.u32 683565275, %v4341
        %v4345 = vshrl.u32 2475754826, %v4342
        %v4346 = vor.u32 %v4344, %v4345
        %v4347 = vshll.u32 2475754826, %v4341
        %v4348 = vshrl.u32 2131351028, %v4342
        %v4349 = vor.u32 %v4347, %v4348
        %v4350 = vshll.u32 2131351028, %v4341
        %v4351 = vshrl.u32 2102212464, %v4342
        %v4352 = vor.u32 %v4350, %v4351
        %v4353 = vshll.u32 2102212464, %v4341
        %v4354 = vshrl.u32 920167782, %v4342
        %v4355 = vor.u32 %v4353, %v4354
        %v4356 = vshll.u32 920167782, %v4341
        %v4357 = vshrl.u32 1326507024, %v4342
        %v4358 = vor.u32 %v4356, %v4357
        %vm4359 = vcmp.lt.s32.totalorder %v4340, 1
        %vm4360 = vcmp.lt.s32.totalorder %v4340, 2
        %vm4361 = vcmp.lt.s32.totalorder %v4340, 3
        %vm4362 = vcmp.lt.s32.totalorder %v4340, 4
        %v4363 = vsel %vm4359, %v4343, %v4346
        %v4364 = vsel %vm4362, %v4352, 2102212464
        %v4365 = vsel %vm4361, %v4349, %v4364
        %v4366 = vsel %vm4360, %v4363, %v4365
        %v4367 = vsel %vm4359, %v4346, %v4349
        %v4368 = vsel %vm4362, %v4355, 920167782
        %v4369 = vsel %vm4361, %v4352, %v4368
        %v4370 = vsel %vm4360, %v4367, %v4369
        %v4371 = vsel %vm4359, %v4349, %v4352
        %v4372 = vsel %vm4362, %v4358, 1326507024
        %v4373 = vsel %vm4361, %v4355, %v4372
        %v4374 = vsel %vm4360, %v4371, %v4373
        %v4375 = vshll.u32 %v4335, 8
        %v4376 = vand.u32 %v4375, 65535
        %v4377 = vshrl.u32 %v4375, 16
        %v4378 = vand.u32 %v4374, 65535
        %v4379 = vshrl.u32 %v4374, 16
        %v4380 = vmul.u32 %v4376, %v4378
        %v4381 = vmul.u32 %v4376, %v4379
        %v4382 = vmul.u32 %v4377, %v4378
        %v4383 = vmul.u32 %v4377, %v4379
        %v4384 = vshll.u32 %v4381, 16
        %v4385 = vshrl.u32 %v4381, 16
        %v4386 = vshll.u32 %v4382, 16
        %v4387 = vshrl.u32 %v4382, 16
        %vm4388 = vc.u32 %v4380, %v4384
        %v4389 = vsel %vm4388, 1, 0
        %v4390 = vadd.s32 %v4380, %v4384
        %v4391 = vadd.s32 %v4383, %v4389
        %vm4392 = vc.u32 %v4390, %v4386
        %v4393 = vsel %vm4392, 1, 0
        %v4394 = vadd.s32 %v4390, %v4386
        %v4395 = vadd.s32 %v4391, %v4393
        %v4396 = vadd.s32 %v4395, %v4385
        %v4397 = vadd.s32 %v4396, %v4387
        %v4398 = vand.u32 %v4375, 65535
        %v4399 = vshrl.u32 %v4375, 16
        %v4400 = vand.u32 %v4370, 65535
        %v4401 = vshrl.u32 %v4370, 16
        %v4402 = vmul.u32 %v4398, %v4400
        %v4403 = vmul.u32 %v4398, %v4401
        %v4404 = vmul.u32 %v4399, %v4400
        %v4405 = vmul.u32 %v4399, %v4401
        %v4406 = vshll.u32 %v4403, 16
        %v4407 = vshrl.u32 %v4403, 16
        %v4408 = vshll.u32 %v4404, 16
        %v4409 = vshrl.u32 %v4404, 16
        %vm4410 = vc.u32 %v4402, %v4406
        %v4411 = vsel %vm4410, 1, 0
        %v4412 = vadd.s32 %v4402, %v4406
        %v4413 = vadd.s32 %v4405, %v4411
        %vm4414 = vc.u32 %v4412, %v4408
        %v4415 = vsel %vm4414, 1, 0
        %v4416 = vadd.s32 %v4412, %v4408
        %v4417 = vadd.s32 %v4413, %v4415
        %v4418 = vadd.s32 %v4417, %v4407
        %v4419 = vadd.s32 %v4418, %v4409
        %v4420 = vmul.u32 %v4375, %v4366
        %v4421 = vadd.s32 %v4397, %v4416
        %vm4422 = vc.u32 %v4397, %v4416
        %v4423 = vadd.s32 %v4419, 1
        %v4424 = vsel %vm4422, %v4423, %v4419
        %v4425 = vadd.s32 %v4420, %v4424
        %v4426 = vadd.s32 %v4425, 536870912
        %v4427 = vshrl.u32 %v4426, 30
        %v4428 = vshll.u32 %v4427, 30
        %v4429 = vsub.s32 %v4425, %v4428
        %vm4430 = vcmp.lt.s32.totalorder %v4429, 0
        %v4431 = vsub.s32 0, %v4429
        %v4432 = vsel %vm4430, %v4431, %v4429
        %v4433 = vclz %v4432
        %v4434 = vsub.s32 %v4433, 2
        %vm4435 = vcmp.gt.s32.totalorder 0, %v4434
        %v4436 = vsel %vm4435, 0, %v4434
        %v4437 = vsub.s32 32, %v4436
        %v4438 = vshll.u32 %v4429, %v4436
        %v4439 = vshrl.u32 %v4421, %v4437
        %v4440 = vor.u32 %v4438, %v4439
        %v4441 = vsub.s32 4294967266, %v4436
        %v4442 = vadd.s32 %v4441, 127
        %v4443 = vshll.u32 %v4442, 23
        %v4444 = vor.u32 4788187, %v4443
        %v4445 = vand.u32 2147483647, %v4444
        %v4447 = vcvt.s32.f32 %v4440
        %v4448 = vmul.f32 %v4447, %v4445
        %v4449 = vxor.u32 %v4448, 2147483648
        %v4450 = vsel %vm4329, %v4449, %v4448
        %v4451 = vsub.s32 4, %v4427
        %v4452 = vsel %vm4329, %v4451, %v4427
        %v4453 = vsel %vm4328, %v4015, %v4450
        %v4454 = vsel %vm4328, 0, %v4452
        %v4455 = vmul.f32 %v4453, %v4453
        %v4456 = vmul.f32 %v4455, -0.001358992
        %v4457 = vadd.f32 %v4456, 0.041655596
        %v4458 = vmul.f32 %v4455, %v4457
        %v4459 = vadd.f32 %v4458, -0.4999988
        %v4460 = vmul.f32 %v4455, %v4459
        %v4461 = vadd.f32 1.0, %v4460
        %v4462 = vmul.f32 %v4453, %v4453
        %v4463 = vmul.f32 %v4462, -0.00019511016
        %v4464 = vadd.f32 %v4463, 0.008332121
        %v4465 = vmul.f32 %v4462, %v4464
        %v4466 = vadd.f32 %v4465, -0.16666654
        %v4467 = vmul.f32 %v4462, %v4466
        %v4468 = vadd.f32 %v4467, 1.0
        %v4469 = vmul.f32 %v4468, %v4453
        %vm4470 = vweird.f32 %v4015
        %v4471 = vadd.s32 %v4454, 3
        %v4472 = vand.u32 %v4471, 3
        %vm4473 = vcmp.lt.s32.totalorder %v4472, 2
        %vm4474 = vcmp.eq.s32.totalorder %v4472, 0
        %v4475 = vxor.u32 %v4469, 2147483648
        %v4476 = vsel %vm4474, %v4461, %v4475
        %vm4477 = vcmp.eq.s32.totalorder %v4472, 2
        %v4478 = vxor.u32 %v4461, 2147483648
        %v4479 = vsel %vm4477, %v4478, %v4469
        %v4480 = vsel %vm4473, %v4476, %v4479
        %v4481 = vsel %vm4470, nan, %v4480
        %v4482 = vand.u32 2147483647, %v4016
        %vm4483 = vcmp.le.f32.partialorder %v4482, 0.7853982
        %vm4484 = vcmp.lt.s32.totalorder %v4016, 0
        %v4485 = vand.u32 %v4016, 2139095040
        %v4486 = vshrl.u32 %v4485, 23
        %v4487 = vsub.s32 %v4486, 127
        %v4488 = vand.u32 2147483647, %v4016
        %v4489 = vand.u32 %v4488, 8388607
        %v4490 = vor.u32 %v4489, 8388608
        %v4491 = vsub.s32 0, %v4490
        %v4492 = vadd.s32 %v4487, 1
        %vm4493 = vcmp.gt.s32.totalorder %v4492, 0
        %v4494 = vsel %vm4493, %v4492, 0
        %v4495 = vshrl.u32 %v4494, 5
        %v4496 = vand.u32 %v4494, 31
        %v4497 = vsub.s32 32, %v4496
        %v4498 = vshrl.u32 683565275, %v4497
        %v4499 = vshll.u32 683565275, %v4496
        %v4500 = vshrl.u32 2475754826, %v4497
        %v4501 = vor.u32 %v4499, %v4500
        %v4502 = vshll.u32 2475754826, %v4496
        %v4503 = vshrl.u32 2131351028, %v4497
        %v4504 = vor.u32 %v4502, %v4503
        %v4505 = vshll.u32 2131351028, %v4496
        %v4506 = vshrl.u32 2102212464, %v4497
        %v4507 = vor.u32 %v4505, %v4506
        %v4508 = vshll.u32 2102212464, %v4496
        %v4509 = vshrl.u32 920167782, %v4497
        %v4510 = vor.u32 %v4508, %v4509
        %v4511 = vshll.u32 920167782, %v4496
        %v4512 = vshrl.u32 1326507024, %v4497
        %v4513 = vor.u32 %v4511, %v4512
        %vm4514 = vcmp.lt.s32.totalorder %v4495, 1
        %vm4515 = vcmp.lt.s32.totalorder %v4495, 2
        %vm4516 = vcmp.lt.s32.totalorder %v4495, 3
        %vm4517 = vcmp.lt.s32.totalorder %v4495, 4
        %v4518 = vsel %vm4514, %v4498, %v4501
        %v4519 = vsel %vm4517, %v4507, 2102212464
        %v4520 = vsel %vm4516, %v4504, %v4519
        %v4521 = vsel %vm4515, %v4518, %v4520
        %v4522 = vsel %vm4514, %v4501, %v4504
        %v4523 = vsel %vm4517, %v4510, 920167782
        %v4524 = vsel %vm4516, %v4507, %v4523
        %v4525 = vsel %vm4515, %v4522, %v4524
        %v4526 = vsel %vm4514, %v4504, %v4507
        %v4527 = vsel %vm4517, %v4513, 1326507024
        %v4528 = vsel %vm4516, %v4510, %v4527
        %v4529 = vsel %vm4515, %v4526, %v4528
        %v4530 = vshll.u32 %v4490, 8
        %v4531 = vand.u32 %v4530, 65535
        %v4532 = vshrl.u32 %v4530, 16
        %v4533 = vand.u32 %v4529, 65535
        %v4534 = vshrl.u32 %v4529, 16
        %v4535 = vmul.u32 %v4531, %v4533
        %v4536 = vmul.u32 %v4531, %v4534
        %v4537 = vmul.u32 %v4532, %v4533
        %v4538 = vmul.u32 %v4532, %v4534
        %v4539 = vshll.u32 %v4536, 16
        %v4540 = vshrl.u32 %v4536, 16
        %v4541 = vshll.u32 %v4537, 16
        %v4542 = vshrl.u32 %v4537, 16
        %vm4543 = vc.u32 %v4535, %v4539
        %v4544 = vsel %vm4543, 1, 0
        %v4545 = vadd.s32 %v4535, %v4539
        %v4546 = vadd.s32 %v4538, %v4544
        %vm4547 = vc.u32 %v4545, %v4541
        %v4548 = vsel %vm4547, 1, 0
        %v4549 = vadd.s32 %v4545, %v4541
        %v4550 = vadd.s32 %v4546, %v4548
        %v4551 = vadd.s32 %v4550, %v4540
        %v4552 = vadd.s32 %v4551, %v4542
        %v4553 = vand.u32 %v4530, 65535
        %v4554 = vshrl.u32 %v4530, 16
        %v4555 = vand.u32 %v4525, 65535
        %v4556 = vshrl.u32 %v4525, 16
        %v4557 = vmul.u32 %v4553, %v4555
        %v4558 = vmul.u32 %v4553, %v4556
        %v4559 = vmul.u32 %v4554, %v4555
        %v4560 = vmul.u32 %v4554, %v4556
        %v4561 = vshll.u32 %v4558, 16
        %v4562 = vshrl.u32 %v4558, 16
        %v4563 = vshll.u32 %v4559, 16
        %v4564 = vshrl.u32 %v4559, 16
        %vm4565 = vc.u32 %v4557, %v4561
        %v4566 = vsel %vm4565, 1, 0
        %v4567 = vadd.s32 %v4557, %v4561
        %v4568 = vadd.s32 %v4560, %v4566
        %vm4569 = vc.u32 %v4567, %v4563
        %v4570 = vsel %vm4569, 1, 0
        %v4571 = vadd.s32 %v4567, %v4563
        %v4572 = vadd.s32 %v4568, %v4570
        %v4573 = vadd.s32 %v4572, %v4562
        %v4574 = vadd.s32 %v4573, %v4564
        %v4575 = vmul.u32 %v4530, %v4521
        %v4576 = vadd.s32 %v4552, %v4571
        %vm4577 = vc.u32 %v4552, %v4571
        %v4578 = vadd.s32 %v4574, 1
        %v4579 = vsel %vm4577, %v4578, %v4574
        %v4580 = vadd.s32 %v4575, %v4579
        %v4581 = vadd.s32 %v4580, 536870912
        %v4582 = vshrl.u32 %v4581, 30
        %v4583 = vshll.u32 %v4582, 30
        %v4584 = vsub.s32 %v4580, %v4583
        %vm4585 = vcmp.lt.s32.totalorder %v4584, 0
        %v4586 = vsub.s32 0, %v4584
        %v4587 = vsel %vm4585, %v4586, %v4584
        %v4588 = vclz %v4587
        %v4589 = vsub.s32 %v4588, 2
        %vm4590 = vcmp.gt.s32.totalorder 0, %v4589
        %v4591 = vsel %vm4590, 0, %v4589
        %v4592 = vsub.s32 32, %v4591
        %v4593 = vshll.u32 %v4584, %v4591
        %v4594 = vshrl.u32 %v4576, %v4592
        %v4595 = vor.u32 %v4593, %v4594
        %v4596 = vsub.s32 4294967266, %v4591
        %v4597 = vadd.s32 %v4596, 127
        %v4598 = vshll.u32 %v4597, 23
        %v4599 = vor.u32 4788187, %v4598
        %v4600 = vand.u32 2147483647, %v4599
        %v4602 = vcvt.s32.f32 %v4595
        %v4603 = vmul.f32 %v4602, %v4600
        %v4604 = vxor.u32 %v4603, 2147483648
        %v4605 = vsel %vm4484, %v4604, %v4603
        %v4606 = vsub.s32 4, %v4582
        %v4607 = vsel %vm4484, %v4606, %v4582
        %v4608 = vsel %vm4483, %v4016, %v4605
        %v4609 = vsel %vm4483, 0, %v4607
        %v4610 = vmul.f32 %v4608, %v4608
        %v4611 = vmul.f32 %v4610, -0.001358992
        %v4612 = vadd.f32 %v4611, 0.041655596
        %v4613 = vmul.f32 %v4610, %v4612
        %v4614 = vadd.f32 %v4613, -0.4999988
        %v4615 = vmul.f32 %v4610, %v4614
        %v4616 = vadd.f32 1.0, %v4615
        %v4617 = vmul.f32 %v4608, %v4608
        %v4618 = vmul.f32 %v4617, -0.00019511016
        %v4619 = vadd.f32 %v4618, 0.008332121
        %v4620 = vmul.f32 %v4617, %v4619
        %v4621 = vadd.f32 %v4620, -0.16666654
        %v4622 = vmul.f32 %v4617, %v4621
        %v4623 = vadd.f32 %v4622, 1.0
        %v4624 = vmul.f32 %v4623, %v4608
        %vm4625 = vweird.f32 %v4016
        %v4626 = vadd.s32 %v4609, 3
        %v4627 = vand.u32 %v4626, 3
        %vm4628 = vcmp.lt.s32.totalorder %v4627, 2
        %vm4629 = vcmp.eq.s32.totalorder %v4627, 0
        %v4630 = vxor.u32 %v4624, 2147483648
        %v4631 = vsel %vm4629, %v4616, %v4630
        %vm4632 = vcmp.eq.s32.totalorder %v4627, 2
        %v4633 = vxor.u32 %v4616, 2147483648
        %v4634 = vsel %vm4632, %v4633, %v4624
        %v4635 = vsel %vm4628, %v4631, %v4634
        %v4636 = vsel %vm4625, nan, %v4635
        %v4641 = vrot.slane %v4171, 4
        %v4642 = vrot.slane %v4326, 4
        %v4643 = vrot.slane %v4481, 4
        %v4644 = vrot.slane %v4636, 4
        %4649 = vst [vmem:[#allocation2 + $0x20] sm:$0x70] %v4641
        %4650 = vst [vmem:[#allocation2 + $0x28] sm:$0x70] %v4642
        %4651 = vst [vmem:[#allocation2 + $0x30] sm:$0x70] %v4643
        %4652 = vst [vmem:[#allocation2 + $0x38] sm:$0x70] %v4644
        %v4653 = vand.u32 2147483647, %v4013
        %vm4654 = vcmp.le.f32.partialorder %v4653, 0.7853982
        %vm4655 = vcmp.lt.s32.totalorder %v4013, 0
        %v4656 = vand.u32 %v4013, 2139095040
        %v4657 = vshrl.u32 %v4656, 23
        %v4658 = vsub.s32 %v4657, 127
        %v4659 = vand.u32 2147483647, %v4013
        %v4660 = vand.u32 %v4659, 8388607
        %v4661 = vor.u32 %v4660, 8388608
        %v4662 = vsub.s32 0, %v4661
        %v4663 = vadd.s32 %v4658, 1
        %vm4664 = vcmp.gt.s32.totalorder %v4663, 0
        %v4665 = vsel %vm4664, %v4663, 0
        %v4666 = vshrl.u32 %v4665, 5
        %v4667 = vand.u32 %v4665, 31
        %v4668 = vsub.s32 32, %v4667
        %v4669 = vshrl.u32 683565275, %v4668
        %v4670 = vshll.u32 683565275, %v4667
        %v4671 = vshrl.u32 2475754826, %v4668
        %v4672 = vor.u32 %v4670, %v4671
        %v4673 = vshll.u32 2475754826, %v4667
        %v4674 = vshrl.u32 2131351028, %v4668
        %v4675 = vor.u32 %v4673, %v4674
        %v4676 = vshll.u32 2131351028, %v4667
        %v4677 = vshrl.u32 2102212464, %v4668
        %v4678 = vor.u32 %v4676, %v4677
        %v4679 = vshll.u32 2102212464, %v4667
        %v4680 = vshrl.u32 920167782, %v4668
        %v4681 = vor.u32 %v4679, %v4680
        %v4682 = vshll.u32 920167782, %v4667
        %v4683 = vshrl.u32 1326507024, %v4668
        %v4684 = vor.u32 %v4682, %v4683
        %vm4685 = vcmp.lt.s32.totalorder %v4666, 1
        %vm4686 = vcmp.lt.s32.totalorder %v4666, 2
        %vm4687 = vcmp.lt.s32.totalorder %v4666, 3
        %vm4688 = vcmp.lt.s32.totalorder %v4666, 4
        %v4689 = vsel %vm4685, %v4669, %v4672
        %v4690 = vsel %vm4688, %v4678, 2102212464
        %v4691 = vsel %vm4687, %v4675, %v4690
        %v4692 = vsel %vm4686, %v4689, %v4691
        %v4693 = vsel %vm4685, %v4672, %v4675
        %v4694 = vsel %vm4688, %v4681, 920167782
        %v4695 = vsel %vm4687, %v4678, %v4694
        %v4696 = vsel %vm4686, %v4693, %v4695
        %v4697 = vsel %vm4685, %v4675, %v4678
        %v4698 = vsel %vm4688, %v4684, 1326507024
        %v4699 = vsel %vm4687, %v4681, %v4698
        %v4700 = vsel %vm4686, %v4697, %v4699
        %v4701 = vshll.u32 %v4661, 8
        %v4702 = vand.u32 %v4701, 65535
        %v4703 = vshrl.u32 %v4701, 16
        %v4704 = vand.u32 %v4700, 65535
        %v4705 = vshrl.u32 %v4700, 16
        %v4706 = vmul.u32 %v4702, %v4704
        %v4707 = vmul.u32 %v4702, %v4705
        %v4708 = vmul.u32 %v4703, %v4704
        %v4709 = vmul.u32 %v4703, %v4705
        %v4710 = vshll.u32 %v4707, 16
        %v4711 = vshrl.u32 %v4707, 16
        %v4712 = vshll.u32 %v4708, 16
        %v4713 = vshrl.u32 %v4708, 16
        %vm4714 = vc.u32 %v4706, %v4710
        %v4715 = vsel %vm4714, 1, 0
        %v4716 = vadd.s32 %v4706, %v4710
        %v4717 = vadd.s32 %v4709, %v4715
        %vm4718 = vc.u32 %v4716, %v4712
        %v4719 = vsel %vm4718, 1, 0
        %v4720 = vadd.s32 %v4716, %v4712
        %v4721 = vadd.s32 %v4717, %v4719
        %v4722 = vadd.s32 %v4721, %v4711
        %v4723 = vadd.s32 %v4722, %v4713
        %v4724 = vand.u32 %v4701, 65535
        %v4725 = vshrl.u32 %v4701, 16
        %v4726 = vand.u32 %v4696, 65535
        %v4727 = vshrl.u32 %v4696, 16
        %v4728 = vmul.u32 %v4724, %v4726
        %v4729 = vmul.u32 %v4724, %v4727
        %v4730 = vmul.u32 %v4725, %v4726
        %v4731 = vmul.u32 %v4725, %v4727
        %v4732 = vshll.u32 %v4729, 16
        %v4733 = vshrl.u32 %v4729, 16
        %v4734 = vshll.u32 %v4730, 16
        %v4735 = vshrl.u32 %v4730, 16
        %vm4736 = vc.u32 %v4728, %v4732
        %v4737 = vsel %vm4736, 1, 0
        %v4738 = vadd.s32 %v4728, %v4732
        %v4739 = vadd.s32 %v4731, %v4737
        %vm4740 = vc.u32 %v4738, %v4734
        %v4741 = vsel %vm4740, 1, 0
        %v4742 = vadd.s32 %v4738, %v4734
        %v4743 = vadd.s32 %v4739, %v4741
        %v4744 = vadd.s32 %v4743, %v4733
        %v4745 = vadd.s32 %v4744, %v4735
        %v4746 = vmul.u32 %v4701, %v4692
        %v4747 = vadd.s32 %v4723, %v4742
        %vm4748 = vc.u32 %v4723, %v4742
        %v4749 = vadd.s32 %v4745, 1
        %v4750 = vsel %vm4748, %v4749, %v4745
        %v4751 = vadd.s32 %v4746, %v4750
        %v4752 = vadd.s32 %v4751, 536870912
        %v4753 = vshrl.u32 %v4752, 30
        %v4754 = vshll.u32 %v4753, 30
        %v4755 = vsub.s32 %v4751, %v4754
        %vm4756 = vcmp.lt.s32.totalorder %v4755, 0
        %v4757 = vsub.s32 0, %v4755
        %v4758 = vsel %vm4756, %v4757, %v4755
        %v4759 = vclz %v4758
        %v4760 = vsub.s32 %v4759, 2
        %vm4761 = vcmp.gt.s32.totalorder 0, %v4760
        %v4762 = vsel %vm4761, 0, %v4760
        %v4763 = vsub.s32 32, %v4762
        %v4764 = vshll.u32 %v4755, %v4762
        %v4765 = vshrl.u32 %v4747, %v4763
        %v4766 = vor.u32 %v4764, %v4765
        %v4767 = vsub.s32 4294967266, %v4762
        %v4768 = vadd.s32 %v4767, 127
        %v4769 = vshll.u32 %v4768, 23
        %v4770 = vor.u32 4788187, %v4769
        %v4771 = vand.u32 2147483647, %v4770
        %v4773 = vcvt.s32.f32 %v4766
        %v4774 = vmul.f32 %v4773, %v4771
        %v4775 = vxor.u32 %v4774, 2147483648
        %v4776 = vsel %vm4655, %v4775, %v4774
        %v4777 = vsub.s32 4, %v4753
        %v4778 = vsel %vm4655, %v4777, %v4753
        %v4779 = vsel %vm4654, %v4013, %v4776
        %v4780 = vsel %vm4654, 0, %v4778
        %v4781 = vmul.f32 %v4779, %v4779
        %v4782 = vmul.f32 %v4781, -0.001358992
        %v4783 = vadd.f32 %v4782, 0.041655596
        %v4784 = vmul.f32 %v4781, %v4783
        %v4785 = vadd.f32 %v4784, -0.4999988
        %v4786 = vmul.f32 %v4781, %v4785
        %v4787 = vadd.f32 1.0, %v4786
        %v4788 = vmul.f32 %v4779, %v4779
        %v4789 = vmul.f32 %v4788, -0.00019511016
        %v4790 = vadd.f32 %v4789, 0.008332121
        %v4791 = vmul.f32 %v4788, %v4790
        %v4792 = vadd.f32 %v4791, -0.16666654
        %v4793 = vmul.f32 %v4788, %v4792
        %v4794 = vadd.f32 %v4793, 1.0
        %v4795 = vmul.f32 %v4794, %v4779
        %vm4796 = vweird.f32 %v4013
        %v4797 = vand.u32 %v4780, 3
        %vm4798 = vcmp.lt.s32.totalorder %v4797, 2
        %vm4799 = vcmp.eq.s32.totalorder %v4797, 0
        %v4800 = vxor.u32 %v4795, 2147483648
        %v4801 = vsel %vm4799, %v4787, %v4800
        %vm4802 = vcmp.eq.s32.totalorder %v4797, 2
        %v4803 = vxor.u32 %v4787, 2147483648
        %v4804 = vsel %vm4802, %v4803, %v4795
        %v4805 = vsel %vm4798, %v4801, %v4804
        %v4806 = vsel %vm4796, nan, %v4805
        %v4807 = vand.u32 2147483647, %v4014
        %vm4808 = vcmp.le.f32.partialorder %v4807, 0.7853982
        %vm4809 = vcmp.lt.s32.totalorder %v4014, 0
        %v4810 = vand.u32 %v4014, 2139095040
        %v4811 = vshrl.u32 %v4810, 23
        %v4812 = vsub.s32 %v4811, 127
        %v4813 = vand.u32 2147483647, %v4014
        %v4814 = vand.u32 %v4813, 8388607
        %v4815 = vor.u32 %v4814, 8388608
        %v4816 = vsub.s32 0, %v4815
        %v4817 = vadd.s32 %v4812, 1
        %vm4818 = vcmp.gt.s32.totalorder %v4817, 0
        %v4819 = vsel %vm4818, %v4817, 0
        %v4820 = vshrl.u32 %v4819, 5
        %v4821 = vand.u32 %v4819, 31
        %v4822 = vsub.s32 32, %v4821
        %v4823 = vshrl.u32 683565275, %v4822
        %v4824 = vshll.u32 683565275, %v4821
        %v4825 = vshrl.u32 2475754826, %v4822
        %v4826 = vor.u32 %v4824, %v4825
        %v4827 = vshll.u32 2475754826, %v4821
        %v4828 = vshrl.u32 2131351028, %v4822
        %v4829 = vor.u32 %v4827, %v4828
        %v4830 = vshll.u32 2131351028, %v4821
        %v4831 = vshrl.u32 2102212464, %v4822
        %v4832 = vor.u32 %v4830, %v4831
        %v4833 = vshll.u32 2102212464, %v4821
        %v4834 = vshrl.u32 920167782, %v4822
        %v4835 = vor.u32 %v4833, %v4834
        %v4836 = vshll.u32 920167782, %v4821
        %v4837 = vshrl.u32 1326507024, %v4822
        %v4838 = vor.u32 %v4836, %v4837
        %vm4839 = vcmp.lt.s32.totalorder %v4820, 1
        %vm4840 = vcmp.lt.s32.totalorder %v4820, 2
        %vm4841 = vcmp.lt.s32.totalorder %v4820, 3
        %vm4842 = vcmp.lt.s32.totalorder %v4820, 4
        %v4843 = vsel %vm4839, %v4823, %v4826
        %v4844 = vsel %vm4842, %v4832, 2102212464
        %v4845 = vsel %vm4841, %v4829, %v4844
        %v4846 = vsel %vm4840, %v4843, %v4845
        %v4847 = vsel %vm4839, %v4826, %v4829
        %v4848 = vsel %vm4842, %v4835, 920167782
        %v4849 = vsel %vm4841, %v4832, %v4848
        %v4850 = vsel %vm4840, %v4847, %v4849
        %v4851 = vsel %vm4839, %v4829, %v4832
        %v4852 = vsel %vm4842, %v4838, 1326507024
        %v4853 = vsel %vm4841, %v4835, %v4852
        %v4854 = vsel %vm4840, %v4851, %v4853
        %v4855 = vshll.u32 %v4815, 8
        %v4856 = vand.u32 %v4855, 65535
        %v4857 = vshrl.u32 %v4855, 16
        %v4858 = vand.u32 %v4854, 65535
        %v4859 = vshrl.u32 %v4854, 16
        %v4860 = vmul.u32 %v4856, %v4858
        %v4861 = vmul.u32 %v4856, %v4859
        %v4862 = vmul.u32 %v4857, %v4858
        %v4863 = vmul.u32 %v4857, %v4859
        %v4864 = vshll.u32 %v4861, 16
        %v4865 = vshrl.u32 %v4861, 16
        %v4866 = vshll.u32 %v4862, 16
        %v4867 = vshrl.u32 %v4862, 16
        %vm4868 = vc.u32 %v4860, %v4864
        %v4869 = vsel %vm4868, 1, 0
        %v4870 = vadd.s32 %v4860, %v4864
        %v4871 = vadd.s32 %v4863, %v4869
        %vm4872 = vc.u32 %v4870, %v4866
        %v4873 = vsel %vm4872, 1, 0
        %v4874 = vadd.s32 %v4870, %v4866
        %v4875 = vadd.s32 %v4871, %v4873
        %v4876 = vadd.s32 %v4875, %v4865
        %v4877 = vadd.s32 %v4876, %v4867
        %v4878 = vand.u32 %v4855, 65535
        %v4879 = vshrl.u32 %v4855, 16
        %v4880 = vand.u32 %v4850, 65535
        %v4881 = vshrl.u32 %v4850, 16
        %v4882 = vmul.u32 %v4878, %v4880
        %v4883 = vmul.u32 %v4878, %v4881
        %v4884 = vmul.u32 %v4879, %v4880
        %v4885 = vmul.u32 %v4879, %v4881
        %v4886 = vshll.u32 %v4883, 16
        %v4887 = vshrl.u32 %v4883, 16
        %v4888 = vshll.u32 %v4884, 16
        %v4889 = vshrl.u32 %v4884, 16
        %vm4890 = vc.u32 %v4882, %v4886
        %v4891 = vsel %vm4890, 1, 0
        %v4892 = vadd.s32 %v4882, %v4886
        %v4893 = vadd.s32 %v4885, %v4891
        %vm4894 = vc.u32 %v4892, %v4888
        %v4895 = vsel %vm4894, 1, 0
        %v4896 = vadd.s32 %v4892, %v4888
        %v4897 = vadd.s32 %v4893, %v4895
        %v4898 = vadd.s32 %v4897, %v4887
        %v4899 = vadd.s32 %v4898, %v4889
        %v4900 = vmul.u32 %v4855, %v4846
        %v4901 = vadd.s32 %v4877, %v4896
        %vm4902 = vc.u32 %v4877, %v4896
        %v4903 = vadd.s32 %v4899, 1
        %v4904 = vsel %vm4902, %v4903, %v4899
        %v4905 = vadd.s32 %v4900, %v4904
        %v4906 = vadd.s32 %v4905, 536870912
        %v4907 = vshrl.u32 %v4906, 30
        %v4908 = vshll.u32 %v4907, 30
        %v4909 = vsub.s32 %v4905, %v4908
        %vm4910 = vcmp.lt.s32.totalorder %v4909, 0
        %v4911 = vsub.s32 0, %v4909
        %v4912 = vsel %vm4910, %v4911, %v4909
        %v4913 = vclz %v4912
        %v4914 = vsub.s32 %v4913, 2
        %vm4915 = vcmp.gt.s32.totalorder 0, %v4914
        %v4916 = vsel %vm4915, 0, %v4914
        %v4917 = vsub.s32 32, %v4916
        %v4918 = vshll.u32 %v4909, %v4916
        %v4919 = vshrl.u32 %v4901, %v4917
        %v4920 = vor.u32 %v4918, %v4919
        %v4921 = vsub.s32 4294967266, %v4916
        %v4922 = vadd.s32 %v4921, 127
        %v4923 = vshll.u32 %v4922, 23
        %v4924 = vor.u32 4788187, %v4923
        %v4925 = vand.u32 2147483647, %v4924
        %v4927 = vcvt.s32.f32 %v4920
        %v4928 = vmul.f32 %v4927, %v4925
        %v4929 = vxor.u32 %v4928, 2147483648
        %v4930 = vsel %vm4809, %v4929, %v4928
        %v4931 = vsub.s32 4, %v4907
        %v4932 = vsel %vm4809, %v4931, %v4907
        %v4933 = vsel %vm4808, %v4014, %v4930
        %v4934 = vsel %vm4808, 0, %v4932
        %v4935 = vmul.f32 %v4933, %v4933
        %v4936 = vmul.f32 %v4935, -0.001358992
        %v4937 = vadd.f32 %v4936, 0.041655596
        %v4938 = vmul.f32 %v4935, %v4937
        %v4939 = vadd.f32 %v4938, -0.4999988
        %v4940 = vmul.f32 %v4935, %v4939
        %v4941 = vadd.f32 1.0, %v4940
        %v4942 = vmul.f32 %v4933, %v4933
        %v4943 = vmul.f32 %v4942, -0.00019511016
        %v4944 = vadd.f32 %v4943, 0.008332121
        %v4945 = vmul.f32 %v4942, %v4944
        %v4946 = vadd.f32 %v4945, -0.16666654
        %v4947 = vmul.f32 %v4942, %v4946
        %v4948 = vadd.f32 %v4947, 1.0
        %v4949 = vmul.f32 %v4948, %v4933
        %vm4950 = vweird.f32 %v4014
        %v4951 = vand.u32 %v4934, 3
        %vm4952 = vcmp.lt.s32.totalorder %v4951, 2
        %vm4953 = vcmp.eq.s32.totalorder %v4951, 0
        %v4954 = vxor.u32 %v4949, 2147483648
        %v4955 = vsel %vm4953, %v4941, %v4954
        %vm4956 = vcmp.eq.s32.totalorder %v4951, 2
        %v4957 = vxor.u32 %v4941, 2147483648
        %v4958 = vsel %vm4956, %v4957, %v4949
        %v4959 = vsel %vm4952, %v4955, %v4958
        %v4960 = vsel %vm4950, nan, %v4959
        %v4961 = vand.u32 2147483647, %v4015
        %vm4962 = vcmp.le.f32.partialorder %v4961, 0.7853982
        %vm4963 = vcmp.lt.s32.totalorder %v4015, 0
        %v4964 = vand.u32 %v4015, 2139095040
        %v4965 = vshrl.u32 %v4964, 23
        %v4966 = vsub.s32 %v4965, 127
        %v4967 = vand.u32 2147483647, %v4015
        %v4968 = vand.u32 %v4967, 8388607
        %v4969 = vor.u32 %v4968, 8388608
        %v4970 = vsub.s32 0, %v4969
        %v4971 = vadd.s32 %v4966, 1
        %vm4972 = vcmp.gt.s32.totalorder %v4971, 0
        %v4973 = vsel %vm4972, %v4971, 0
        %v4974 = vshrl.u32 %v4973, 5
        %v4975 = vand.u32 %v4973, 31
        %v4976 = vsub.s32 32, %v4975
        %v4977 = vshrl.u32 683565275, %v4976
        %v4978 = vshll.u32 683565275, %v4975
        %v4979 = vshrl.u32 2475754826, %v4976
        %v4980 = vor.u32 %v4978, %v4979
        %v4981 = vshll.u32 2475754826, %v4975
        %v4982 = vshrl.u32 2131351028, %v4976
        %v4983 = vor.u32 %v4981, %v4982
        %v4984 = vshll.u32 2131351028, %v4975
        %v4985 = vshrl.u32 2102212464, %v4976
        %v4986 = vor.u32 %v4984, %v4985
        %v4987 = vshll.u32 2102212464, %v4975
        %v4988 = vshrl.u32 920167782, %v4976
        %v4989 = vor.u32 %v4987, %v4988
        %v4990 = vshll.u32 920167782, %v4975
        %v4991 = vshrl.u32 1326507024, %v4976
        %v4992 = vor.u32 %v4990, %v4991
        %vm4993 = vcmp.lt.s32.totalorder %v4974, 1
        %vm4994 = vcmp.lt.s32.totalorder %v4974, 2
        %vm4995 = vcmp.lt.s32.totalorder %v4974, 3
        %vm4996 = vcmp.lt.s32.totalorder %v4974, 4
        %v4997 = vsel %vm4993, %v4977, %v4980
        %v4998 = vsel %vm4996, %v4986, 2102212464
        %v4999 = vsel %vm4995, %v4983, %v4998
        %v5000 = vsel %vm4994, %v4997, %v4999
        %v5001 = vsel %vm4993, %v4980, %v4983
        %v5002 = vsel %vm4996, %v4989, 920167782
        %v5003 = vsel %vm4995, %v4986, %v5002
        %v5004 = vsel %vm4994, %v5001, %v5003
        %v5005 = vsel %vm4993, %v4983, %v4986
        %v5006 = vsel %vm4996, %v4992, 1326507024
        %v5007 = vsel %vm4995, %v4989, %v5006
        %v5008 = vsel %vm4994, %v5005, %v5007
        %v5009 = vshll.u32 %v4969, 8
        %v5010 = vand.u32 %v5009, 65535
        %v5011 = vshrl.u32 %v5009, 16
        %v5012 = vand.u32 %v5008, 65535
        %v5013 = vshrl.u32 %v5008, 16
        %v5014 = vmul.u32 %v5010, %v5012
        %v5015 = vmul.u32 %v5010, %v5013
        %v5016 = vmul.u32 %v5011, %v5012
        %v5017 = vmul.u32 %v5011, %v5013
        %v5018 = vshll.u32 %v5015, 16
        %v5019 = vshrl.u32 %v5015, 16
        %v5020 = vshll.u32 %v5016, 16
        %v5021 = vshrl.u32 %v5016, 16
        %vm5022 = vc.u32 %v5014, %v5018
        %v5023 = vsel %vm5022, 1, 0
        %v5024 = vadd.s32 %v5014, %v5018
        %v5025 = vadd.s32 %v5017, %v5023
        %vm5026 = vc.u32 %v5024, %v5020
        %v5027 = vsel %vm5026, 1, 0
        %v5028 = vadd.s32 %v5024, %v5020
        %v5029 = vadd.s32 %v5025, %v5027
        %v5030 = vadd.s32 %v5029, %v5019
        %v5031 = vadd.s32 %v5030, %v5021
        %v5032 = vand.u32 %v5009, 65535
        %v5033 = vshrl.u32 %v5009, 16
        %v5034 = vand.u32 %v5004, 65535
        %v5035 = vshrl.u32 %v5004, 16
        %v5036 = vmul.u32 %v5032, %v5034
        %v5037 = vmul.u32 %v5032, %v5035
        %v5038 = vmul.u32 %v5033, %v5034
        %v5039 = vmul.u32 %v5033, %v5035
        %v5040 = vshll.u32 %v5037, 16
        %v5041 = vshrl.u32 %v5037, 16
        %v5042 = vshll.u32 %v5038, 16
        %v5043 = vshrl.u32 %v5038, 16
        %vm5044 = vc.u32 %v5036, %v5040
        %v5045 = vsel %vm5044, 1, 0
        %v5046 = vadd.s32 %v5036, %v5040
        %v5047 = vadd.s32 %v5039, %v5045
        %vm5048 = vc.u32 %v5046, %v5042
        %v5049 = vsel %vm5048, 1, 0
        %v5050 = vadd.s32 %v5046, %v5042
        %v5051 = vadd.s32 %v5047, %v5049
        %v5052 = vadd.s32 %v5051, %v5041
        %v5053 = vadd.s32 %v5052, %v5043
        %v5054 = vmul.u32 %v5009, %v5000
        %v5055 = vadd.s32 %v5031, %v5050
        %vm5056 = vc.u32 %v5031, %v5050
        %v5057 = vadd.s32 %v5053, 1
        %v5058 = vsel %vm5056, %v5057, %v5053
        %v5059 = vadd.s32 %v5054, %v5058
        %v5060 = vadd.s32 %v5059, 536870912
        %v5061 = vshrl.u32 %v5060, 30
        %v5062 = vshll.u32 %v5061, 30
        %v5063 = vsub.s32 %v5059, %v5062
        %vm5064 = vcmp.lt.s32.totalorder %v5063, 0
        %v5065 = vsub.s32 0, %v5063
        %v5066 = vsel %vm5064, %v5065, %v5063
        %v5067 = vclz %v5066
        %v5068 = vsub.s32 %v5067, 2
        %vm5069 = vcmp.gt.s32.totalorder 0, %v5068
        %v5070 = vsel %vm5069, 0, %v5068
        %v5071 = vsub.s32 32, %v5070
        %v5072 = vshll.u32 %v5063, %v5070
        %v5073 = vshrl.u32 %v5055, %v5071
        %v5074 = vor.u32 %v5072, %v5073
        %v5075 = vsub.s32 4294967266, %v5070
        %v5076 = vadd.s32 %v5075, 127
        %v5077 = vshll.u32 %v5076, 23
        %v5078 = vor.u32 4788187, %v5077
        %v5079 = vand.u32 2147483647, %v5078
        %v5081 = vcvt.s32.f32 %v5074
        %v5082 = vmul.f32 %v5081, %v5079
        %v5083 = vxor.u32 %v5082, 2147483648
        %v5084 = vsel %vm4963, %v5083, %v5082
        %v5085 = vsub.s32 4, %v5061
        %v5086 = vsel %vm4963, %v5085, %v5061
        %v5087 = vsel %vm4962, %v4015, %v5084
        %v5088 = vsel %vm4962, 0, %v5086
        %v5089 = vmul.f32 %v5087, %v5087
        %v5090 = vmul.f32 %v5089, -0.001358992
        %v5091 = vadd.f32 %v5090, 0.041655596
        %v5092 = vmul.f32 %v5089, %v5091
        %v5093 = vadd.f32 %v5092, -0.4999988
        %v5094 = vmul.f32 %v5089, %v5093
        %v5095 = vadd.f32 1.0, %v5094
        %v5096 = vmul.f32 %v5087, %v5087
        %v5097 = vmul.f32 %v5096, -0.00019511016
        %v5098 = vadd.f32 %v5097, 0.008332121
        %v5099 = vmul.f32 %v5096, %v5098
        %v5100 = vadd.f32 %v5099, -0.16666654
        %v5101 = vmul.f32 %v5096, %v5100
        %v5102 = vadd.f32 %v5101, 1.0
        %v5103 = vmul.f32 %v5102, %v5087
        %vm5104 = vweird.f32 %v4015
        %v5105 = vand.u32 %v5088, 3
        %vm5106 = vcmp.lt.s32.totalorder %v5105, 2
        %vm5107 = vcmp.eq.s32.totalorder %v5105, 0
        %v5108 = vxor.u32 %v5103, 2147483648
        %v5109 = vsel %vm5107, %v5095, %v5108
        %vm5110 = vcmp.eq.s32.totalorder %v5105, 2
        %v5111 = vxor.u32 %v5095, 2147483648
        %v5112 = vsel %vm5110, %v5111, %v5103
        %v5113 = vsel %vm5106, %v5109, %v5112
        %v5114 = vsel %vm5104, nan, %v5113
        %v5115 = vand.u32 2147483647, %v4016
        %vm5116 = vcmp.le.f32.partialorder %v5115, 0.7853982
        %vm5117 = vcmp.lt.s32.totalorder %v4016, 0
        %v5118 = vand.u32 %v4016, 2139095040
        %v5119 = vshrl.u32 %v5118, 23
        %v5120 = vsub.s32 %v5119, 127
        %v5121 = vand.u32 2147483647, %v4016
        %v5122 = vand.u32 %v5121, 8388607
        %v5123 = vor.u32 %v5122, 8388608
        %v5124 = vsub.s32 0, %v5123
        %v5125 = vadd.s32 %v5120, 1
        %vm5126 = vcmp.gt.s32.totalorder %v5125, 0
        %v5127 = vsel %vm5126, %v5125, 0
        %v5128 = vshrl.u32 %v5127, 5
        %v5129 = vand.u32 %v5127, 31
        %v5130 = vsub.s32 32, %v5129
        %v5131 = vshrl.u32 683565275, %v5130
        %v5132 = vshll.u32 683565275, %v5129
        %v5133 = vshrl.u32 2475754826, %v5130
        %v5134 = vor.u32 %v5132, %v5133
        %v5135 = vshll.u32 2475754826, %v5129
        %v5136 = vshrl.u32 2131351028, %v5130
        %v5137 = vor.u32 %v5135, %v5136
        %v5138 = vshll.u32 2131351028, %v5129
        %v5139 = vshrl.u32 2102212464, %v5130
        %v5140 = vor.u32 %v5138, %v5139
        %v5141 = vshll.u32 2102212464, %v5129
        %v5142 = vshrl.u32 920167782, %v5130
        %v5143 = vor.u32 %v5141, %v5142
        %v5144 = vshll.u32 920167782, %v5129
        %v5145 = vshrl.u32 1326507024, %v5130
        %v5146 = vor.u32 %v5144, %v5145
        %vm5147 = vcmp.lt.s32.totalorder %v5128, 1
        %vm5148 = vcmp.lt.s32.totalorder %v5128, 2
        %vm5149 = vcmp.lt.s32.totalorder %v5128, 3
        %vm5150 = vcmp.lt.s32.totalorder %v5128, 4
        %v5151 = vsel %vm5147, %v5131, %v5134
        %v5152 = vsel %vm5150, %v5140, 2102212464
        %v5153 = vsel %vm5149, %v5137, %v5152
        %v5154 = vsel %vm5148, %v5151, %v5153
        %v5155 = vsel %vm5147, %v5134, %v5137
        %v5156 = vsel %vm5150, %v5143, 920167782
        %v5157 = vsel %vm5149, %v5140, %v5156
        %v5158 = vsel %vm5148, %v5155, %v5157
        %v5159 = vsel %vm5147, %v5137, %v5140
        %v5160 = vsel %vm5150, %v5146, 1326507024
        %v5161 = vsel %vm5149, %v5143, %v5160
        %v5162 = vsel %vm5148, %v5159, %v5161
        %v5163 = vshll.u32 %v5123, 8
        %v5164 = vand.u32 %v5163, 65535
        %v5165 = vshrl.u32 %v5163, 16
        %v5166 = vand.u32 %v5162, 65535
        %v5167 = vshrl.u32 %v5162, 16
        %v5168 = vmul.u32 %v5164, %v5166
        %v5169 = vmul.u32 %v5164, %v5167
        %v5170 = vmul.u32 %v5165, %v5166
        %v5171 = vmul.u32 %v5165, %v5167
        %v5172 = vshll.u32 %v5169, 16
        %v5173 = vshrl.u32 %v5169, 16
        %v5174 = vshll.u32 %v5170, 16
        %v5175 = vshrl.u32 %v5170, 16
        %vm5176 = vc.u32 %v5168, %v5172
        %v5177 = vsel %vm5176, 1, 0
        %v5178 = vadd.s32 %v5168, %v5172
        %v5179 = vadd.s32 %v5171, %v5177
        %vm5180 = vc.u32 %v5178, %v5174
        %v5181 = vsel %vm5180, 1, 0
        %v5182 = vadd.s32 %v5178, %v5174
        %v5183 = vadd.s32 %v5179, %v5181
        %v5184 = vadd.s32 %v5183, %v5173
        %v5185 = vadd.s32 %v5184, %v5175
        %v5186 = vand.u32 %v5163, 65535
        %v5187 = vshrl.u32 %v5163, 16
        %v5188 = vand.u32 %v5158, 65535
        %v5189 = vshrl.u32 %v5158, 16
        %v5190 = vmul.u32 %v5186, %v5188
        %v5191 = vmul.u32 %v5186, %v5189
        %v5192 = vmul.u32 %v5187, %v5188
        %v5193 = vmul.u32 %v5187, %v5189
        %v5194 = vshll.u32 %v5191, 16
        %v5195 = vshrl.u32 %v5191, 16
        %v5196 = vshll.u32 %v5192, 16
        %v5197 = vshrl.u32 %v5192, 16
        %vm5198 = vc.u32 %v5190, %v5194
        %v5199 = vsel %vm5198, 1, 0
        %v5200 = vadd.s32 %v5190, %v5194
        %v5201 = vadd.s32 %v5193, %v5199
        %vm5202 = vc.u32 %v5200, %v5196
        %v5203 = vsel %vm5202, 1, 0
        %v5204 = vadd.s32 %v5200, %v5196
        %v5205 = vadd.s32 %v5201, %v5203
        %v5206 = vadd.s32 %v5205, %v5195
        %v5207 = vadd.s32 %v5206, %v5197
        %v5208 = vmul.u32 %v5163, %v5154
        %v5209 = vadd.s32 %v5185, %v5204
        %vm5210 = vc.u32 %v5185, %v5204
        %v5211 = vadd.s32 %v5207, 1
        %v5212 = vsel %vm5210, %v5211, %v5207
        %v5213 = vadd.s32 %v5208, %v5212
        %v5214 = vadd.s32 %v5213, 536870912
        %v5215 = vshrl.u32 %v5214, 30
        %v5216 = vshll.u32 %v5215, 30
        %v5217 = vsub.s32 %v5213, %v5216
        %vm5218 = vcmp.lt.s32.totalorder %v5217, 0
        %v5219 = vsub.s32 0, %v5217
        %v5220 = vsel %vm5218, %v5219, %v5217
        %v5221 = vclz %v5220
        %v5222 = vsub.s32 %v5221, 2
        %vm5223 = vcmp.gt.s32.totalorder 0, %v5222
        %v5224 = vsel %vm5223, 0, %v5222
        %v5225 = vsub.s32 32, %v5224
        %v5226 = vshll.u32 %v5217, %v5224
        %v5227 = vshrl.u32 %v5209, %v5225
        %v5228 = vor.u32 %v5226, %v5227
        %v5229 = vsub.s32 4294967266, %v5224
        %v5230 = vadd.s32 %v5229, 127
        %v5231 = vshll.u32 %v5230, 23
        %v5232 = vor.u32 4788187, %v5231
        %v5233 = vand.u32 2147483647, %v5232
        %v5235 = vcvt.s32.f32 %v5228
        %v5236 = vmul.f32 %v5235, %v5233
        %v5237 = vxor.u32 %v5236, 2147483648
        %v5238 = vsel %vm5117, %v5237, %v5236
        %v5239 = vsub.s32 4, %v5215
        %v5240 = vsel %vm5117, %v5239, %v5215
        %v5241 = vsel %vm5116, %v4016, %v5238
        %v5242 = vsel %vm5116, 0, %v5240
        %v5243 = vmul.f32 %v5241, %v5241
        %v5244 = vmul.f32 %v5243, -0.001358992
        %v5245 = vadd.f32 %v5244, 0.041655596
        %v5246 = vmul.f32 %v5243, %v5245
        %v5247 = vadd.f32 %v5246, -0.4999988
        %v5248 = vmul.f32 %v5243, %v5247
        %v5249 = vadd.f32 1.0, %v5248
        %v5250 = vmul.f32 %v5241, %v5241
        %v5251 = vmul.f32 %v5250, -0.00019511016
        %v5252 = vadd.f32 %v5251, 0.008332121
        %v5253 = vmul.f32 %v5250, %v5252
        %v5254 = vadd.f32 %v5253, -0.16666654
        %v5255 = vmul.f32 %v5250, %v5254
        %v5256 = vadd.f32 %v5255, 1.0
        %v5257 = vmul.f32 %v5256, %v5241
        %vm5258 = vweird.f32 %v4016
        %v5259 = vand.u32 %v5242, 3
        %vm5260 = vcmp.lt.s32.totalorder %v5259, 2
        %vm5261 = vcmp.eq.s32.totalorder %v5259, 0
        %v5262 = vxor.u32 %v5257, 2147483648
        %v5263 = vsel %vm5261, %v5249, %v5262
        %vm5264 = vcmp.eq.s32.totalorder %v5259, 2
        %v5265 = vxor.u32 %v5249, 2147483648
        %v5266 = vsel %vm5264, %v5265, %v5257
        %v5267 = vsel %vm5260, %v5263, %v5266
        %v5268 = vsel %vm5258, nan, %v5267
        %5269 = vst [vmem:[#allocation2 + $0x60] sm:$0x7] %v4806
        %5270 = vst [vmem:[#allocation2 + $0x68] sm:$0x7] %v4960
        %5271 = vst [vmem:[#allocation2 + $0x70] sm:$0x7] %v5114
        %5272 = vst [vmem:[#allocation2 + $0x78] sm:$0x7] %v5268
        %v5277 = vrot.slane %v185, 3
        %v5278 = vrot.slane %v186, 3
        %v5279 = vrot.slane %v187, 3
        %v5280 = vrot.slane %v188, 3
        %5285 = vst [vmem:[#allocation3] sm:$0x7] %v5277
        %5286 = vst [vmem:[#allocation3 + $0x8] sm:$0x7] %v5278
        %5287 = vst [vmem:[#allocation3 + $0x10] sm:$0x7] %v5279
        %5288 = vst [vmem:[#allocation3 + $0x18] sm:$0x7] %v5280
        %v5289 = vand.u32 2147483647, %v185
        %vm5290 = vcmp.le.f32.partialorder %v5289, 0.7853982
        %vm5291 = vcmp.lt.s32.totalorder %v185, 0
        %v5292 = vand.u32 %v185, 2139095040
        %v5293 = vshrl.u32 %v5292, 23
        %v5294 = vsub.s32 %v5293, 127
        %v5295 = vand.u32 2147483647, %v185
        %v5296 = vand.u32 %v5295, 8388607
        %v5297 = vor.u32 %v5296, 8388608
        %v5298 = vsub.s32 0, %v5297
        %v5299 = vadd.s32 %v5294, 1
        %vm5300 = vcmp.gt.s32.totalorder %v5299, 0
        %v5301 = vsel %vm5300, %v5299, 0
        %v5302 = vshrl.u32 %v5301, 5
        %v5303 = vand.u32 %v5301, 31
        %v5304 = vsub.s32 32, %v5303
        %v5305 = vshrl.u32 683565275, %v5304
        %v5306 = vshll.u32 683565275, %v5303
        %v5307 = vshrl.u32 2475754826, %v5304
        %v5308 = vor.u32 %v5306, %v5307
        %v5309 = vshll.u32 2475754826, %v5303
        %v5310 = vshrl.u32 2131351028, %v5304
        %v5311 = vor.u32 %v5309, %v5310
        %v5312 = vshll.u32 2131351028, %v5303
        %v5313 = vshrl.u32 2102212464, %v5304
        %v5314 = vor.u32 %v5312, %v5313
        %v5315 = vshll.u32 2102212464, %v5303
        %v5316 = vshrl.u32 920167782, %v5304
        %v5317 = vor.u32 %v5315, %v5316
        %v5318 = vshll.u32 920167782, %v5303
        %v5319 = vshrl.u32 1326507024, %v5304
        %v5320 = vor.u32 %v5318, %v5319
        %vm5321 = vcmp.lt.s32.totalorder %v5302, 1
        %vm5322 = vcmp.lt.s32.totalorder %v5302, 2
        %vm5323 = vcmp.lt.s32.totalorder %v5302, 3
        %vm5324 = vcmp.lt.s32.totalorder %v5302, 4
        %v5325 = vsel %vm5321, %v5305, %v5308
        %v5326 = vsel %vm5324, %v5314, 2102212464
        %v5327 = vsel %vm5323, %v5311, %v5326
        %v5328 = vsel %vm5322, %v5325, %v5327
        %v5329 = vsel %vm5321, %v5308, %v5311
        %v5330 = vsel %vm5324, %v5317, 920167782
        %v5331 = vsel %vm5323, %v5314, %v5330
        %v5332 = vsel %vm5322, %v5329, %v5331
        %v5333 = vsel %vm5321, %v5311, %v5314
        %v5334 = vsel %vm5324, %v5320, 1326507024
        %v5335 = vsel %vm5323, %v5317, %v5334
        %v5336 = vsel %vm5322, %v5333, %v5335
        %v5337 = vshll.u32 %v5297, 8
        %v5338 = vand.u32 %v5337, 65535
        %v5339 = vshrl.u32 %v5337, 16
        %v5340 = vand.u32 %v5336, 65535
        %v5341 = vshrl.u32 %v5336, 16
        %v5342 = vmul.u32 %v5338, %v5340
        %v5343 = vmul.u32 %v5338, %v5341
        %v5344 = vmul.u32 %v5339, %v5340
        %v5345 = vmul.u32 %v5339, %v5341
        %v5346 = vshll.u32 %v5343, 16
        %v5347 = vshrl.u32 %v5343, 16
        %v5348 = vshll.u32 %v5344, 16
        %v5349 = vshrl.u32 %v5344, 16
        %vm5350 = vc.u32 %v5342, %v5346
        %v5351 = vsel %vm5350, 1, 0
        %v5352 = vadd.s32 %v5342, %v5346
        %v5353 = vadd.s32 %v5345, %v5351
        %vm5354 = vc.u32 %v5352, %v5348
        %v5355 = vsel %vm5354, 1, 0
        %v5356 = vadd.s32 %v5352, %v5348
        %v5357 = vadd.s32 %v5353, %v5355
        %v5358 = vadd.s32 %v5357, %v5347
        %v5359 = vadd.s32 %v5358, %v5349
        %v5360 = vand.u32 %v5337, 65535
        %v5361 = vshrl.u32 %v5337, 16
        %v5362 = vand.u32 %v5332, 65535
        %v5363 = vshrl.u32 %v5332, 16
        %v5364 = vmul.u32 %v5360, %v5362
        %v5365 = vmul.u32 %v5360, %v5363
        %v5366 = vmul.u32 %v5361, %v5362
        %v5367 = vmul.u32 %v5361, %v5363
        %v5368 = vshll.u32 %v5365, 16
        %v5369 = vshrl.u32 %v5365, 16
        %v5370 = vshll.u32 %v5366, 16
        %v5371 = vshrl.u32 %v5366, 16
        %vm5372 = vc.u32 %v5364, %v5368
        %v5373 = vsel %vm5372, 1, 0
        %v5374 = vadd.s32 %v5364, %v5368
        %v5375 = vadd.s32 %v5367, %v5373
        %vm5376 = vc.u32 %v5374, %v5370
        %v5377 = vsel %vm5376, 1, 0
        %v5378 = vadd.s32 %v5374, %v5370
        %v5379 = vadd.s32 %v5375, %v5377
        %v5380 = vadd.s32 %v5379, %v5369
        %v5381 = vadd.s32 %v5380, %v5371
        %v5382 = vmul.u32 %v5337, %v5328
        %v5383 = vadd.s32 %v5359, %v5378
        %vm5384 = vc.u32 %v5359, %v5378
        %v5385 = vadd.s32 %v5381, 1
        %v5386 = vsel %vm5384, %v5385, %v5381
        %v5387 = vadd.s32 %v5382, %v5386
        %v5388 = vadd.s32 %v5387, 536870912
        %v5389 = vshrl.u32 %v5388, 30
        %v5390 = vshll.u32 %v5389, 30
        %v5391 = vsub.s32 %v5387, %v5390
        %vm5392 = vcmp.lt.s32.totalorder %v5391, 0
        %v5393 = vsub.s32 0, %v5391
        %v5394 = vsel %vm5392, %v5393, %v5391
        %v5395 = vclz %v5394
        %v5396 = vsub.s32 %v5395, 2
        %vm5397 = vcmp.gt.s32.totalorder 0, %v5396
        %v5398 = vsel %vm5397, 0, %v5396
        %v5399 = vsub.s32 32, %v5398
        %v5400 = vshll.u32 %v5391, %v5398
        %v5401 = vshrl.u32 %v5383, %v5399
        %v5402 = vor.u32 %v5400, %v5401
        %v5403 = vsub.s32 4294967266, %v5398
        %v5404 = vadd.s32 %v5403, 127
        %v5405 = vshll.u32 %v5404, 23
        %v5406 = vor.u32 4788187, %v5405
        %v5407 = vand.u32 2147483647, %v5406
        %v5409 = vcvt.s32.f32 %v5402
        %v5410 = vmul.f32 %v5409, %v5407
        %v5411 = vxor.u32 %v5410, 2147483648
        %v5412 = vsel %vm5291, %v5411, %v5410
        %v5413 = vsub.s32 4, %v5389
        %v5414 = vsel %vm5291, %v5413, %v5389
        %v5415 = vsel %vm5290, %v185, %v5412
        %v5416 = vsel %vm5290, 0, %v5414
        %v5417 = vmul.f32 %v5415, %v5415
        %v5418 = vmul.f32 %v5417, -0.001358992
        %v5419 = vadd.f32 %v5418, 0.041655596
        %v5420 = vmul.f32 %v5417, %v5419
        %v5421 = vadd.f32 %v5420, -0.4999988
        %v5422 = vmul.f32 %v5417, %v5421
        %v5423 = vadd.f32 1.0, %v5422
        %v5424 = vmul.f32 %v5415, %v5415
        %v5425 = vmul.f32 %v5424, -0.00019511016
        %v5426 = vadd.f32 %v5425, 0.008332121
        %v5427 = vmul.f32 %v5424, %v5426
        %v5428 = vadd.f32 %v5427, -0.16666654
        %v5429 = vmul.f32 %v5424, %v5428
        %v5430 = vadd.f32 %v5429, 1.0
        %v5431 = vmul.f32 %v5430, %v5415
        %vm5432 = vweird.f32 %v185
        %v5433 = vadd.s32 %v5416, 3
        %v5434 = vand.u32 %v5433, 3
        %vm5435 = vcmp.lt.s32.totalorder %v5434, 2
        %vm5436 = vcmp.eq.s32.totalorder %v5434, 0
        %v5437 = vxor.u32 %v5431, 2147483648
        %v5438 = vsel %vm5436, %v5423, %v5437
        %vm5439 = vcmp.eq.s32.totalorder %v5434, 2
        %v5440 = vxor.u32 %v5423, 2147483648
        %v5441 = vsel %vm5439, %v5440, %v5431
        %v5442 = vsel %vm5435, %v5438, %v5441
        %v5443 = vsel %vm5432, nan, %v5442
        %v5444 = vand.u32 2147483647, %v186
        %vm5445 = vcmp.le.f32.partialorder %v5444, 0.7853982
        %vm5446 = vcmp.lt.s32.totalorder %v186, 0
        %v5447 = vand.u32 %v186, 2139095040
        %v5448 = vshrl.u32 %v5447, 23
        %v5449 = vsub.s32 %v5448, 127
        %v5450 = vand.u32 2147483647, %v186
        %v5451 = vand.u32 %v5450, 8388607
        %v5452 = vor.u32 %v5451, 8388608
        %v5453 = vsub.s32 0, %v5452
        %v5454 = vadd.s32 %v5449, 1
        %vm5455 = vcmp.gt.s32.totalorder %v5454, 0
        %v5456 = vsel %vm5455, %v5454, 0
        %v5457 = vshrl.u32 %v5456, 5
        %v5458 = vand.u32 %v5456, 31
        %v5459 = vsub.s32 32, %v5458
        %v5460 = vshrl.u32 683565275, %v5459
        %v5461 = vshll.u32 683565275, %v5458
        %v5462 = vshrl.u32 2475754826, %v5459
        %v5463 = vor.u32 %v5461, %v5462
        %v5464 = vshll.u32 2475754826, %v5458
        %v5465 = vshrl.u32 2131351028, %v5459
        %v5466 = vor.u32 %v5464, %v5465
        %v5467 = vshll.u32 2131351028, %v5458
        %v5468 = vshrl.u32 2102212464, %v5459
        %v5469 = vor.u32 %v5467, %v5468
        %v5470 = vshll.u32 2102212464, %v5458
        %v5471 = vshrl.u32 920167782, %v5459
        %v5472 = vor.u32 %v5470, %v5471
        %v5473 = vshll.u32 920167782, %v5458
        %v5474 = vshrl.u32 1326507024, %v5459
        %v5475 = vor.u32 %v5473, %v5474
        %vm5476 = vcmp.lt.s32.totalorder %v5457, 1
        %vm5477 = vcmp.lt.s32.totalorder %v5457, 2
        %vm5478 = vcmp.lt.s32.totalorder %v5457, 3
        %vm5479 = vcmp.lt.s32.totalorder %v5457, 4
        %v5480 = vsel %vm5476, %v5460, %v5463
        %v5481 = vsel %vm5479, %v5469, 2102212464
        %v5482 = vsel %vm5478, %v5466, %v5481
        %v5483 = vsel %vm5477, %v5480, %v5482
        %v5484 = vsel %vm5476, %v5463, %v5466
        %v5485 = vsel %vm5479, %v5472, 920167782
        %v5486 = vsel %vm5478, %v5469, %v5485
        %v5487 = vsel %vm5477, %v5484, %v5486
        %v5488 = vsel %vm5476, %v5466, %v5469
        %v5489 = vsel %vm5479, %v5475, 1326507024
        %v5490 = vsel %vm5478, %v5472, %v5489
        %v5491 = vsel %vm5477, %v5488, %v5490
        %v5492 = vshll.u32 %v5452, 8
        %v5493 = vand.u32 %v5492, 65535
        %v5494 = vshrl.u32 %v5492, 16
        %v5495 = vand.u32 %v5491, 65535
        %v5496 = vshrl.u32 %v5491, 16
        %v5497 = vmul.u32 %v5493, %v5495
        %v5498 = vmul.u32 %v5493, %v5496
        %v5499 = vmul.u32 %v5494, %v5495
        %v5500 = vmul.u32 %v5494, %v5496
        %v5501 = vshll.u32 %v5498, 16
        %v5502 = vshrl.u32 %v5498, 16
        %v5503 = vshll.u32 %v5499, 16
        %v5504 = vshrl.u32 %v5499, 16
        %vm5505 = vc.u32 %v5497, %v5501
        %v5506 = vsel %vm5505, 1, 0
        %v5507 = vadd.s32 %v5497, %v5501
        %v5508 = vadd.s32 %v5500, %v5506
        %vm5509 = vc.u32 %v5507, %v5503
        %v5510 = vsel %vm5509, 1, 0
        %v5511 = vadd.s32 %v5507, %v5503
        %v5512 = vadd.s32 %v5508, %v5510
        %v5513 = vadd.s32 %v5512, %v5502
        %v5514 = vadd.s32 %v5513, %v5504
        %v5515 = vand.u32 %v5492, 65535
        %v5516 = vshrl.u32 %v5492, 16
        %v5517 = vand.u32 %v5487, 65535
        %v5518 = vshrl.u32 %v5487, 16
        %v5519 = vmul.u32 %v5515, %v5517
        %v5520 = vmul.u32 %v5515, %v5518
        %v5521 = vmul.u32 %v5516, %v5517
        %v5522 = vmul.u32 %v5516, %v5518
        %v5523 = vshll.u32 %v5520, 16
        %v5524 = vshrl.u32 %v5520, 16
        %v5525 = vshll.u32 %v5521, 16
        %v5526 = vshrl.u32 %v5521, 16
        %vm5527 = vc.u32 %v5519, %v5523
        %v5528 = vsel %vm5527, 1, 0
        %v5529 = vadd.s32 %v5519, %v5523
        %v5530 = vadd.s32 %v5522, %v5528
        %vm5531 = vc.u32 %v5529, %v5525
        %v5532 = vsel %vm5531, 1, 0
        %v5533 = vadd.s32 %v5529, %v5525
        %v5534 = vadd.s32 %v5530, %v5532
        %v5535 = vadd.s32 %v5534, %v5524
        %v5536 = vadd.s32 %v5535, %v5526
        %v5537 = vmul.u32 %v5492, %v5483
        %v5538 = vadd.s32 %v5514, %v5533
        %vm5539 = vc.u32 %v5514, %v5533
        %v5540 = vadd.s32 %v5536, 1
        %v5541 = vsel %vm5539, %v5540, %v5536
        %v5542 = vadd.s32 %v5537, %v5541
        %v5543 = vadd.s32 %v5542, 536870912
        %v5544 = vshrl.u32 %v5543, 30
        %v5545 = vshll.u32 %v5544, 30
        %v5546 = vsub.s32 %v5542, %v5545
        %vm5547 = vcmp.lt.s32.totalorder %v5546, 0
        %v5548 = vsub.s32 0, %v5546
        %v5549 = vsel %vm5547, %v5548, %v5546
        %v5550 = vclz %v5549
        %v5551 = vsub.s32 %v5550, 2
        %vm5552 = vcmp.gt.s32.totalorder 0, %v5551
        %v5553 = vsel %vm5552, 0, %v5551
        %v5554 = vsub.s32 32, %v5553
        %v5555 = vshll.u32 %v5546, %v5553
        %v5556 = vshrl.u32 %v5538, %v5554
        %v5557 = vor.u32 %v5555, %v5556
        %v5558 = vsub.s32 4294967266, %v5553
        %v5559 = vadd.s32 %v5558, 127
        %v5560 = vshll.u32 %v5559, 23
        %v5561 = vor.u32 4788187, %v5560
        %v5562 = vand.u32 2147483647, %v5561
        %v5564 = vcvt.s32.f32 %v5557
        %v5565 = vmul.f32 %v5564, %v5562
        %v5566 = vxor.u32 %v5565, 2147483648
        %v5567 = vsel %vm5446, %v5566, %v5565
        %v5568 = vsub.s32 4, %v5544
        %v5569 = vsel %vm5446, %v5568, %v5544
        %v5570 = vsel %vm5445, %v186, %v5567
        %v5571 = vsel %vm5445, 0, %v5569
        %v5572 = vmul.f32 %v5570, %v5570
        %v5573 = vmul.f32 %v5572, -0.001358992
        %v5574 = vadd.f32 %v5573, 0.041655596
        %v5575 = vmul.f32 %v5572, %v5574
        %v5576 = vadd.f32 %v5575, -0.4999988
        %v5577 = vmul.f32 %v5572, %v5576
        %v5578 = vadd.f32 1.0, %v5577
        %v5579 = vmul.f32 %v5570, %v5570
        %v5580 = vmul.f32 %v5579, -0.00019511016
        %v5581 = vadd.f32 %v5580, 0.008332121
        %v5582 = vmul.f32 %v5579, %v5581
        %v5583 = vadd.f32 %v5582, -0.16666654
        %v5584 = vmul.f32 %v5579, %v5583
        %v5585 = vadd.f32 %v5584, 1.0
        %v5586 = vmul.f32 %v5585, %v5570
        %vm5587 = vweird.f32 %v186
        %v5588 = vadd.s32 %v5571, 3
        %v5589 = vand.u32 %v5588, 3
        %vm5590 = vcmp.lt.s32.totalorder %v5589, 2
        %vm5591 = vcmp.eq.s32.totalorder %v5589, 0
        %v5592 = vxor.u32 %v5586, 2147483648
        %v5593 = vsel %vm5591, %v5578, %v5592
        %vm5594 = vcmp.eq.s32.totalorder %v5589, 2
        %v5595 = vxor.u32 %v5578, 2147483648
        %v5596 = vsel %vm5594, %v5595, %v5586
        %v5597 = vsel %vm5590, %v5593, %v5596
        %v5598 = vsel %vm5587, nan, %v5597
        %v5599 = vand.u32 2147483647, %v187
        %vm5600 = vcmp.le.f32.partialorder %v5599, 0.7853982
        %vm5601 = vcmp.lt.s32.totalorder %v187, 0
        %v5602 = vand.u32 %v187, 2139095040
        %v5603 = vshrl.u32 %v5602, 23
        %v5604 = vsub.s32 %v5603, 127
        %v5605 = vand.u32 2147483647, %v187
        %v5606 = vand.u32 %v5605, 8388607
        %v5607 = vor.u32 %v5606, 8388608
        %v5608 = vsub.s32 0, %v5607
        %v5609 = vadd.s32 %v5604, 1
        %vm5610 = vcmp.gt.s32.totalorder %v5609, 0
        %v5611 = vsel %vm5610, %v5609, 0
        %v5612 = vshrl.u32 %v5611, 5
        %v5613 = vand.u32 %v5611, 31
        %v5614 = vsub.s32 32, %v5613
        %v5615 = vshrl.u32 683565275, %v5614
        %v5616 = vshll.u32 683565275, %v5613
        %v5617 = vshrl.u32 2475754826, %v5614
        %v5618 = vor.u32 %v5616, %v5617
        %v5619 = vshll.u32 2475754826, %v5613
        %v5620 = vshrl.u32 2131351028, %v5614
        %v5621 = vor.u32 %v5619, %v5620
        %v5622 = vshll.u32 2131351028, %v5613
        %v5623 = vshrl.u32 2102212464, %v5614
        %v5624 = vor.u32 %v5622, %v5623
        %v5625 = vshll.u32 2102212464, %v5613
        %v5626 = vshrl.u32 920167782, %v5614
        %v5627 = vor.u32 %v5625, %v5626
        %v5628 = vshll.u32 920167782, %v5613
        %v5629 = vshrl.u32 1326507024, %v5614
        %v5630 = vor.u32 %v5628, %v5629
        %vm5631 = vcmp.lt.s32.totalorder %v5612, 1
        %vm5632 = vcmp.lt.s32.totalorder %v5612, 2
        %vm5633 = vcmp.lt.s32.totalorder %v5612, 3
        %vm5634 = vcmp.lt.s32.totalorder %v5612, 4
        %v5635 = vsel %vm5631, %v5615, %v5618
        %v5636 = vsel %vm5634, %v5624, 2102212464
        %v5637 = vsel %vm5633, %v5621, %v5636
        %v5638 = vsel %vm5632, %v5635, %v5637
        %v5639 = vsel %vm5631, %v5618, %v5621
        %v5640 = vsel %vm5634, %v5627, 920167782
        %v5641 = vsel %vm5633, %v5624, %v5640
        %v5642 = vsel %vm5632, %v5639, %v5641
        %v5643 = vsel %vm5631, %v5621, %v5624
        %v5644 = vsel %vm5634, %v5630, 1326507024
        %v5645 = vsel %vm5633, %v5627, %v5644
        %v5646 = vsel %vm5632, %v5643, %v5645
        %v5647 = vshll.u32 %v5607, 8
        %v5648 = vand.u32 %v5647, 65535
        %v5649 = vshrl.u32 %v5647, 16
        %v5650 = vand.u32 %v5646, 65535
        %v5651 = vshrl.u32 %v5646, 16
        %v5652 = vmul.u32 %v5648, %v5650
        %v5653 = vmul.u32 %v5648, %v5651
        %v5654 = vmul.u32 %v5649, %v5650
        %v5655 = vmul.u32 %v5649, %v5651
        %v5656 = vshll.u32 %v5653, 16
        %v5657 = vshrl.u32 %v5653, 16
        %v5658 = vshll.u32 %v5654, 16
        %v5659 = vshrl.u32 %v5654, 16
        %vm5660 = vc.u32 %v5652, %v5656
        %v5661 = vsel %vm5660, 1, 0
        %v5662 = vadd.s32 %v5652, %v5656
        %v5663 = vadd.s32 %v5655, %v5661
        %vm5664 = vc.u32 %v5662, %v5658
        %v5665 = vsel %vm5664, 1, 0
        %v5666 = vadd.s32 %v5662, %v5658
        %v5667 = vadd.s32 %v5663, %v5665
        %v5668 = vadd.s32 %v5667, %v5657
        %v5669 = vadd.s32 %v5668, %v5659
        %v5670 = vand.u32 %v5647, 65535
        %v5671 = vshrl.u32 %v5647, 16
        %v5672 = vand.u32 %v5642, 65535
        %v5673 = vshrl.u32 %v5642, 16
        %v5674 = vmul.u32 %v5670, %v5672
        %v5675 = vmul.u32 %v5670, %v5673
        %v5676 = vmul.u32 %v5671, %v5672
        %v5677 = vmul.u32 %v5671, %v5673
        %v5678 = vshll.u32 %v5675, 16
        %v5679 = vshrl.u32 %v5675, 16
        %v5680 = vshll.u32 %v5676, 16
        %v5681 = vshrl.u32 %v5676, 16
        %vm5682 = vc.u32 %v5674, %v5678
        %v5683 = vsel %vm5682, 1, 0
        %v5684 = vadd.s32 %v5674, %v5678
        %v5685 = vadd.s32 %v5677, %v5683
        %vm5686 = vc.u32 %v5684, %v5680
        %v5687 = vsel %vm5686, 1, 0
        %v5688 = vadd.s32 %v5684, %v5680
        %v5689 = vadd.s32 %v5685, %v5687
        %v5690 = vadd.s32 %v5689, %v5679
        %v5691 = vadd.s32 %v5690, %v5681
        %v5692 = vmul.u32 %v5647, %v5638
        %v5693 = vadd.s32 %v5669, %v5688
        %vm5694 = vc.u32 %v5669, %v5688
        %v5695 = vadd.s32 %v5691, 1
        %v5696 = vsel %vm5694, %v5695, %v5691
        %v5697 = vadd.s32 %v5692, %v5696
        %v5698 = vadd.s32 %v5697, 536870912
        %v5699 = vshrl.u32 %v5698, 30
        %v5700 = vshll.u32 %v5699, 30
        %v5701 = vsub.s32 %v5697, %v5700
        %vm5702 = vcmp.lt.s32.totalorder %v5701, 0
        %v5703 = vsub.s32 0, %v5701
        %v5704 = vsel %vm5702, %v5703, %v5701
        %v5705 = vclz %v5704
        %v5706 = vsub.s32 %v5705, 2
        %vm5707 = vcmp.gt.s32.totalorder 0, %v5706
        %v5708 = vsel %vm5707, 0, %v5706
        %v5709 = vsub.s32 32, %v5708
        %v5710 = vshll.u32 %v5701, %v5708
        %v5711 = vshrl.u32 %v5693, %v5709
        %v5712 = vor.u32 %v5710, %v5711
        %v5713 = vsub.s32 4294967266, %v5708
        %v5714 = vadd.s32 %v5713, 127
        %v5715 = vshll.u32 %v5714, 23
        %v5716 = vor.u32 4788187, %v5715
        %v5717 = vand.u32 2147483647, %v5716
        %v5719 = vcvt.s32.f32 %v5712
        %v5720 = vmul.f32 %v5719, %v5717
        %v5721 = vxor.u32 %v5720, 2147483648
        %v5722 = vsel %vm5601, %v5721, %v5720
        %v5723 = vsub.s32 4, %v5699
        %v5724 = vsel %vm5601, %v5723, %v5699
        %v5725 = vsel %vm5600, %v187, %v5722
        %v5726 = vsel %vm5600, 0, %v5724
        %v5727 = vmul.f32 %v5725, %v5725
        %v5728 = vmul.f32 %v5727, -0.001358992
        %v5729 = vadd.f32 %v5728, 0.041655596
        %v5730 = vmul.f32 %v5727, %v5729
        %v5731 = vadd.f32 %v5730, -0.4999988
        %v5732 = vmul.f32 %v5727, %v5731
        %v5733 = vadd.f32 1.0, %v5732
        %v5734 = vmul.f32 %v5725, %v5725
        %v5735 = vmul.f32 %v5734, -0.00019511016
        %v5736 = vadd.f32 %v5735, 0.008332121
        %v5737 = vmul.f32 %v5734, %v5736
        %v5738 = vadd.f32 %v5737, -0.16666654
        %v5739 = vmul.f32 %v5734, %v5738
        %v5740 = vadd.f32 %v5739, 1.0
        %v5741 = vmul.f32 %v5740, %v5725
        %vm5742 = vweird.f32 %v187
        %v5743 = vadd.s32 %v5726, 3
        %v5744 = vand.u32 %v5743, 3
        %vm5745 = vcmp.lt.s32.totalorder %v5744, 2
        %vm5746 = vcmp.eq.s32.totalorder %v5744, 0
        %v5747 = vxor.u32 %v5741, 2147483648
        %v5748 = vsel %vm5746, %v5733, %v5747
        %vm5749 = vcmp.eq.s32.totalorder %v5744, 2
        %v5750 = vxor.u32 %v5733, 2147483648
        %v5751 = vsel %vm5749, %v5750, %v5741
        %v5752 = vsel %vm5745, %v5748, %v5751
        %v5753 = vsel %vm5742, nan, %v5752
        %v5754 = vand.u32 2147483647, %v188
        %vm5755 = vcmp.le.f32.partialorder %v5754, 0.7853982
        %vm5756 = vcmp.lt.s32.totalorder %v188, 0
        %v5757 = vand.u32 %v188, 2139095040
        %v5758 = vshrl.u32 %v5757, 23
        %v5759 = vsub.s32 %v5758, 127
        %v5760 = vand.u32 2147483647, %v188
        %v5761 = vand.u32 %v5760, 8388607
        %v5762 = vor.u32 %v5761, 8388608
        %v5763 = vsub.s32 0, %v5762
        %v5764 = vadd.s32 %v5759, 1
        %vm5765 = vcmp.gt.s32.totalorder %v5764, 0
        %v5766 = vsel %vm5765, %v5764, 0
        %v5767 = vshrl.u32 %v5766, 5
        %v5768 = vand.u32 %v5766, 31
        %v5769 = vsub.s32 32, %v5768
        %v5770 = vshrl.u32 683565275, %v5769
        %v5771 = vshll.u32 683565275, %v5768
        %v5772 = vshrl.u32 2475754826, %v5769
        %v5773 = vor.u32 %v5771, %v5772
        %v5774 = vshll.u32 2475754826, %v5768
        %v5775 = vshrl.u32 2131351028, %v5769
        %v5776 = vor.u32 %v5774, %v5775
        %v5777 = vshll.u32 2131351028, %v5768
        %v5778 = vshrl.u32 2102212464, %v5769
        %v5779 = vor.u32 %v5777, %v5778
        %v5780 = vshll.u32 2102212464, %v5768
        %v5781 = vshrl.u32 920167782, %v5769
        %v5782 = vor.u32 %v5780, %v5781
        %v5783 = vshll.u32 920167782, %v5768
        %v5784 = vshrl.u32 1326507024, %v5769
        %v5785 = vor.u32 %v5783, %v5784
        %vm5786 = vcmp.lt.s32.totalorder %v5767, 1
        %vm5787 = vcmp.lt.s32.totalorder %v5767, 2
        %vm5788 = vcmp.lt.s32.totalorder %v5767, 3
        %vm5789 = vcmp.lt.s32.totalorder %v5767, 4
        %v5790 = vsel %vm5786, %v5770, %v5773
        %v5791 = vsel %vm5789, %v5779, 2102212464
        %v5792 = vsel %vm5788, %v5776, %v5791
        %v5793 = vsel %vm5787, %v5790, %v5792
        %v5794 = vsel %vm5786, %v5773, %v5776
        %v5795 = vsel %vm5789, %v5782, 920167782
        %v5796 = vsel %vm5788, %v5779, %v5795
        %v5797 = vsel %vm5787, %v5794, %v5796
        %v5798 = vsel %vm5786, %v5776, %v5779
        %v5799 = vsel %vm5789, %v5785, 1326507024
        %v5800 = vsel %vm5788, %v5782, %v5799
        %v5801 = vsel %vm5787, %v5798, %v5800
        %v5802 = vshll.u32 %v5762, 8
        %v5803 = vand.u32 %v5802, 65535
        %v5804 = vshrl.u32 %v5802, 16
        %v5805 = vand.u32 %v5801, 65535
        %v5806 = vshrl.u32 %v5801, 16
        %v5807 = vmul.u32 %v5803, %v5805
        %v5808 = vmul.u32 %v5803, %v5806
        %v5809 = vmul.u32 %v5804, %v5805
        %v5810 = vmul.u32 %v5804, %v5806
        %v5811 = vshll.u32 %v5808, 16
        %v5812 = vshrl.u32 %v5808, 16
        %v5813 = vshll.u32 %v5809, 16
        %v5814 = vshrl.u32 %v5809, 16
        %vm5815 = vc.u32 %v5807, %v5811
        %v5816 = vsel %vm5815, 1, 0
        %v5817 = vadd.s32 %v5807, %v5811
        %v5818 = vadd.s32 %v5810, %v5816
        %vm5819 = vc.u32 %v5817, %v5813
        %v5820 = vsel %vm5819, 1, 0
        %v5821 = vadd.s32 %v5817, %v5813
        %v5822 = vadd.s32 %v5818, %v5820
        %v5823 = vadd.s32 %v5822, %v5812
        %v5824 = vadd.s32 %v5823, %v5814
        %v5825 = vand.u32 %v5802, 65535
        %v5826 = vshrl.u32 %v5802, 16
        %v5827 = vand.u32 %v5797, 65535
        %v5828 = vshrl.u32 %v5797, 16
        %v5829 = vmul.u32 %v5825, %v5827
        %v5830 = vmul.u32 %v5825, %v5828
        %v5831 = vmul.u32 %v5826, %v5827
        %v5832 = vmul.u32 %v5826, %v5828
        %v5833 = vshll.u32 %v5830, 16
        %v5834 = vshrl.u32 %v5830, 16
        %v5835 = vshll.u32 %v5831, 16
        %v5836 = vshrl.u32 %v5831, 16
        %vm5837 = vc.u32 %v5829, %v5833
        %v5838 = vsel %vm5837, 1, 0
        %v5839 = vadd.s32 %v5829, %v5833
        %v5840 = vadd.s32 %v5832, %v5838
        %vm5841 = vc.u32 %v5839, %v5835
        %v5842 = vsel %vm5841, 1, 0
        %v5843 = vadd.s32 %v5839, %v5835
        %v5844 = vadd.s32 %v5840, %v5842
        %v5845 = vadd.s32 %v5844, %v5834
        %v5846 = vadd.s32 %v5845, %v5836
        %v5847 = vmul.u32 %v5802, %v5793
        %v5848 = vadd.s32 %v5824, %v5843
        %vm5849 = vc.u32 %v5824, %v5843
        %v5850 = vadd.s32 %v5846, 1
        %v5851 = vsel %vm5849, %v5850, %v5846
        %v5852 = vadd.s32 %v5847, %v5851
        %v5853 = vadd.s32 %v5852, 536870912
        %v5854 = vshrl.u32 %v5853, 30
        %v5855 = vshll.u32 %v5854, 30
        %v5856 = vsub.s32 %v5852, %v5855
        %vm5857 = vcmp.lt.s32.totalorder %v5856, 0
        %v5858 = vsub.s32 0, %v5856
        %v5859 = vsel %vm5857, %v5858, %v5856
        %v5860 = vclz %v5859
        %v5861 = vsub.s32 %v5860, 2
        %vm5862 = vcmp.gt.s32.totalorder 0, %v5861
        %v5863 = vsel %vm5862, 0, %v5861
        %v5864 = vsub.s32 32, %v5863
        %v5865 = vshll.u32 %v5856, %v5863
        %v5866 = vshrl.u32 %v5848, %v5864
        %v5867 = vor.u32 %v5865, %v5866
        %v5868 = vsub.s32 4294967266, %v5863
        %v5869 = vadd.s32 %v5868, 127
        %v5870 = vshll.u32 %v5869, 23
        %v5871 = vor.u32 4788187, %v5870
        %v5872 = vand.u32 2147483647, %v5871
        %v5874 = vcvt.s32.f32 %v5867
        %v5875 = vmul.f32 %v5874, %v5872
        %v5876 = vxor.u32 %v5875, 2147483648
        %v5877 = vsel %vm5756, %v5876, %v5875
        %v5878 = vsub.s32 4, %v5854
        %v5879 = vsel %vm5756, %v5878, %v5854
        %v5880 = vsel %vm5755, %v188, %v5877
        %v5881 = vsel %vm5755, 0, %v5879
        %v5882 = vmul.f32 %v5880, %v5880
        %v5883 = vmul.f32 %v5882, -0.001358992
        %v5884 = vadd.f32 %v5883, 0.041655596
        %v5885 = vmul.f32 %v5882, %v5884
        %v5886 = vadd.f32 %v5885, -0.4999988
        %v5887 = vmul.f32 %v5882, %v5886
        %v5888 = vadd.f32 1.0, %v5887
        %v5889 = vmul.f32 %v5880, %v5880
        %v5890 = vmul.f32 %v5889, -0.00019511016
        %v5891 = vadd.f32 %v5890, 0.008332121
        %v5892 = vmul.f32 %v5889, %v5891
        %v5893 = vadd.f32 %v5892, -0.16666654
        %v5894 = vmul.f32 %v5889, %v5893
        %v5895 = vadd.f32 %v5894, 1.0
        %v5896 = vmul.f32 %v5895, %v5880
        %vm5897 = vweird.f32 %v188
        %v5898 = vadd.s32 %v5881, 3
        %v5899 = vand.u32 %v5898, 3
        %vm5900 = vcmp.lt.s32.totalorder %v5899, 2
        %vm5901 = vcmp.eq.s32.totalorder %v5899, 0
        %v5902 = vxor.u32 %v5896, 2147483648
        %v5903 = vsel %vm5901, %v5888, %v5902
        %vm5904 = vcmp.eq.s32.totalorder %v5899, 2
        %v5905 = vxor.u32 %v5888, 2147483648
        %v5906 = vsel %vm5904, %v5905, %v5896
        %v5907 = vsel %vm5900, %v5903, %v5906
        %v5908 = vsel %vm5897, nan, %v5907
        %5909 = vst [vmem:[#allocation3] sm:$0x38] %v5443
        %5910 = vst [vmem:[#allocation3 + $0x8] sm:$0x38] %v5598
        %5911 = vst [vmem:[#allocation3 + $0x10] sm:$0x38] %v5753
        %5912 = vst [vmem:[#allocation3 + $0x18] sm:$0x38] %v5908
        %v5913 = vand.u32 2147483647, %v185
        %vm5914 = vcmp.le.f32.partialorder %v5913, 0.7853982
        %vm5915 = vcmp.lt.s32.totalorder %v185, 0
        %v5916 = vand.u32 %v185, 2139095040
        %v5917 = vshrl.u32 %v5916, 23
        %v5918 = vsub.s32 %v5917, 127
        %v5919 = vand.u32 2147483647, %v185
        %v5920 = vand.u32 %v5919, 8388607
        %v5921 = vor.u32 %v5920, 8388608
        %v5922 = vsub.s32 0, %v5921
        %v5923 = vadd.s32 %v5918, 1
        %vm5924 = vcmp.gt.s32.totalorder %v5923, 0
        %v5925 = vsel %vm5924, %v5923, 0
        %v5926 = vshrl.u32 %v5925, 5
        %v5927 = vand.u32 %v5925, 31
        %v5928 = vsub.s32 32, %v5927
        %v5929 = vshrl.u32 683565275, %v5928
        %v5930 = vshll.u32 683565275, %v5927
        %v5931 = vshrl.u32 2475754826, %v5928
        %v5932 = vor.u32 %v5930, %v5931
        %v5933 = vshll.u32 2475754826, %v5927
        %v5934 = vshrl.u32 2131351028, %v5928
        %v5935 = vor.u32 %v5933, %v5934
        %v5936 = vshll.u32 2131351028, %v5927
        %v5937 = vshrl.u32 2102212464, %v5928
        %v5938 = vor.u32 %v5936, %v5937
        %v5939 = vshll.u32 2102212464, %v5927
        %v5940 = vshrl.u32 920167782, %v5928
        %v5941 = vor.u32 %v5939, %v5940
        %v5942 = vshll.u32 920167782, %v5927
        %v5943 = vshrl.u32 1326507024, %v5928
        %v5944 = vor.u32 %v5942, %v5943
        %vm5945 = vcmp.lt.s32.totalorder %v5926, 1
        %vm5946 = vcmp.lt.s32.totalorder %v5926, 2
        %vm5947 = vcmp.lt.s32.totalorder %v5926, 3
        %vm5948 = vcmp.lt.s32.totalorder %v5926, 4
        %v5949 = vsel %vm5945, %v5929, %v5932
        %v5950 = vsel %vm5948, %v5938, 2102212464
        %v5951 = vsel %vm5947, %v5935, %v5950
        %v5952 = vsel %vm5946, %v5949, %v5951
        %v5953 = vsel %vm5945, %v5932, %v5935
        %v5954 = vsel %vm5948, %v5941, 920167782
        %v5955 = vsel %vm5947, %v5938, %v5954
        %v5956 = vsel %vm5946, %v5953, %v5955
        %v5957 = vsel %vm5945, %v5935, %v5938
        %v5958 = vsel %vm5948, %v5944, 1326507024
        %v5959 = vsel %vm5947, %v5941, %v5958
        %v5960 = vsel %vm5946, %v5957, %v5959
        %v5961 = vshll.u32 %v5921, 8
        %v5962 = vand.u32 %v5961, 65535
        %v5963 = vshrl.u32 %v5961, 16
        %v5964 = vand.u32 %v5960, 65535
        %v5965 = vshrl.u32 %v5960, 16
        %v5966 = vmul.u32 %v5962, %v5964
        %v5967 = vmul.u32 %v5962, %v5965
        %v5968 = vmul.u32 %v5963, %v5964
        %v5969 = vmul.u32 %v5963, %v5965
        %v5970 = vshll.u32 %v5967, 16
        %v5971 = vshrl.u32 %v5967, 16
        %v5972 = vshll.u32 %v5968, 16
        %v5973 = vshrl.u32 %v5968, 16
        %vm5974 = vc.u32 %v5966, %v5970
        %v5975 = vsel %vm5974, 1, 0
        %v5976 = vadd.s32 %v5966, %v5970
        %v5977 = vadd.s32 %v5969, %v5975
        %vm5978 = vc.u32 %v5976, %v5972
        %v5979 = vsel %vm5978, 1, 0
        %v5980 = vadd.s32 %v5976, %v5972
        %v5981 = vadd.s32 %v5977, %v5979
        %v5982 = vadd.s32 %v5981, %v5971
        %v5983 = vadd.s32 %v5982, %v5973
        %v5984 = vand.u32 %v5961, 65535
        %v5985 = vshrl.u32 %v5961, 16
        %v5986 = vand.u32 %v5956, 65535
        %v5987 = vshrl.u32 %v5956, 16
        %v5988 = vmul.u32 %v5984, %v5986
        %v5989 = vmul.u32 %v5984, %v5987
        %v5990 = vmul.u32 %v5985, %v5986
        %v5991 = vmul.u32 %v5985, %v5987
        %v5992 = vshll.u32 %v5989, 16
        %v5993 = vshrl.u32 %v5989, 16
        %v5994 = vshll.u32 %v5990, 16
        %v5995 = vshrl.u32 %v5990, 16
        %vm5996 = vc.u32 %v5988, %v5992
        %v5997 = vsel %vm5996, 1, 0
        %v5998 = vadd.s32 %v5988, %v5992
        %v5999 = vadd.s32 %v5991, %v5997
        %vm6000 = vc.u32 %v5998, %v5994
        %v6001 = vsel %vm6000, 1, 0
        %v6002 = vadd.s32 %v5998, %v5994
        %v6003 = vadd.s32 %v5999, %v6001
        %v6004 = vadd.s32 %v6003, %v5993
        %v6005 = vadd.s32 %v6004, %v5995
        %v6006 = vmul.u32 %v5961, %v5952
        %v6007 = vadd.s32 %v5983, %v6002
        %vm6008 = vc.u32 %v5983, %v6002
        %v6009 = vadd.s32 %v6005, 1
        %v6010 = vsel %vm6008, %v6009, %v6005
        %v6011 = vadd.s32 %v6006, %v6010
        %v6012 = vadd.s32 %v6011, 536870912
        %v6013 = vshrl.u32 %v6012, 30
        %v6014 = vshll.u32 %v6013, 30
        %v6015 = vsub.s32 %v6011, %v6014
        %vm6016 = vcmp.lt.s32.totalorder %v6015, 0
        %v6017 = vsub.s32 0, %v6015
        %v6018 = vsel %vm6016, %v6017, %v6015
        %v6019 = vclz %v6018
        %v6020 = vsub.s32 %v6019, 2
        %vm6021 = vcmp.gt.s32.totalorder 0, %v6020
        %v6022 = vsel %vm6021, 0, %v6020
        %v6023 = vsub.s32 32, %v6022
        %v6024 = vshll.u32 %v6015, %v6022
        %v6025 = vshrl.u32 %v6007, %v6023
        %v6026 = vor.u32 %v6024, %v6025
        %v6027 = vsub.s32 4294967266, %v6022
        %v6028 = vadd.s32 %v6027, 127
        %v6029 = vshll.u32 %v6028, 23
        %v6030 = vor.u32 4788187, %v6029
        %v6031 = vand.u32 2147483647, %v6030
        %v6033 = vcvt.s32.f32 %v6026
        %v6034 = vmul.f32 %v6033, %v6031
        %v6035 = vxor.u32 %v6034, 2147483648
        %v6036 = vsel %vm5915, %v6035, %v6034
        %v6037 = vsub.s32 4, %v6013
        %v6038 = vsel %vm5915, %v6037, %v6013
        %v6039 = vsel %vm5914, %v185, %v6036
        %v6040 = vsel %vm5914, 0, %v6038
        %v6041 = vmul.f32 %v6039, %v6039
        %v6042 = vmul.f32 %v6041, -0.001358992
        %v6043 = vadd.f32 %v6042, 0.041655596
        %v6044 = vmul.f32 %v6041, %v6043
        %v6045 = vadd.f32 %v6044, -0.4999988
        %v6046 = vmul.f32 %v6041, %v6045
        %v6047 = vadd.f32 1.0, %v6046
        %v6048 = vmul.f32 %v6039, %v6039
        %v6049 = vmul.f32 %v6048, -0.00019511016
        %v6050 = vadd.f32 %v6049, 0.008332121
        %v6051 = vmul.f32 %v6048, %v6050
        %v6052 = vadd.f32 %v6051, -0.16666654
        %v6053 = vmul.f32 %v6048, %v6052
        %v6054 = vadd.f32 %v6053, 1.0
        %v6055 = vmul.f32 %v6054, %v6039
        %vm6056 = vweird.f32 %v185
        %v6057 = vand.u32 %v6040, 3
        %vm6058 = vcmp.lt.s32.totalorder %v6057, 2
        %vm6059 = vcmp.eq.s32.totalorder %v6057, 0
        %v6060 = vxor.u32 %v6055, 2147483648
        %v6061 = vsel %vm6059, %v6047, %v6060
        %vm6062 = vcmp.eq.s32.totalorder %v6057, 2
        %v6063 = vxor.u32 %v6047, 2147483648
        %v6064 = vsel %vm6062, %v6063, %v6055
        %v6065 = vsel %vm6058, %v6061, %v6064
        %v6066 = vsel %vm6056, nan, %v6065
        %v6067 = vand.u32 2147483647, %v186
        %vm6068 = vcmp.le.f32.partialorder %v6067, 0.7853982
        %vm6069 = vcmp.lt.s32.totalorder %v186, 0
        %v6070 = vand.u32 %v186, 2139095040
        %v6071 = vshrl.u32 %v6070, 23
        %v6072 = vsub.s32 %v6071, 127
        %v6073 = vand.u32 2147483647, %v186
        %v6074 = vand.u32 %v6073, 8388607
        %v6075 = vor.u32 %v6074, 8388608
        %v6076 = vsub.s32 0, %v6075
        %v6077 = vadd.s32 %v6072, 1
        %vm6078 = vcmp.gt.s32.totalorder %v6077, 0
        %v6079 = vsel %vm6078, %v6077, 0
        %v6080 = vshrl.u32 %v6079, 5
        %v6081 = vand.u32 %v6079, 31
        %v6082 = vsub.s32 32, %v6081
        %v6083 = vshrl.u32 683565275, %v6082
        %v6084 = vshll.u32 683565275, %v6081
        %v6085 = vshrl.u32 2475754826, %v6082
        %v6086 = vor.u32 %v6084, %v6085
        %v6087 = vshll.u32 2475754826, %v6081
        %v6088 = vshrl.u32 2131351028, %v6082
        %v6089 = vor.u32 %v6087, %v6088
        %v6090 = vshll.u32 2131351028, %v6081
        %v6091 = vshrl.u32 2102212464, %v6082
        %v6092 = vor.u32 %v6090, %v6091
        %v6093 = vshll.u32 2102212464, %v6081
        %v6094 = vshrl.u32 920167782, %v6082
        %v6095 = vor.u32 %v6093, %v6094
        %v6096 = vshll.u32 920167782, %v6081
        %v6097 = vshrl.u32 1326507024, %v6082
        %v6098 = vor.u32 %v6096, %v6097
        %vm6099 = vcmp.lt.s32.totalorder %v6080, 1
        %vm6100 = vcmp.lt.s32.totalorder %v6080, 2
        %vm6101 = vcmp.lt.s32.totalorder %v6080, 3
        %vm6102 = vcmp.lt.s32.totalorder %v6080, 4
        %v6103 = vsel %vm6099, %v6083, %v6086
        %v6104 = vsel %vm6102, %v6092, 2102212464
        %v6105 = vsel %vm6101, %v6089, %v6104
        %v6106 = vsel %vm6100, %v6103, %v6105
        %v6107 = vsel %vm6099, %v6086, %v6089
        %v6108 = vsel %vm6102, %v6095, 920167782
        %v6109 = vsel %vm6101, %v6092, %v6108
        %v6110 = vsel %vm6100, %v6107, %v6109
        %v6111 = vsel %vm6099, %v6089, %v6092
        %v6112 = vsel %vm6102, %v6098, 1326507024
        %v6113 = vsel %vm6101, %v6095, %v6112
        %v6114 = vsel %vm6100, %v6111, %v6113
        %v6115 = vshll.u32 %v6075, 8
        %v6116 = vand.u32 %v6115, 65535
        %v6117 = vshrl.u32 %v6115, 16
        %v6118 = vand.u32 %v6114, 65535
        %v6119 = vshrl.u32 %v6114, 16
        %v6120 = vmul.u32 %v6116, %v6118
        %v6121 = vmul.u32 %v6116, %v6119
        %v6122 = vmul.u32 %v6117, %v6118
        %v6123 = vmul.u32 %v6117, %v6119
        %v6124 = vshll.u32 %v6121, 16
        %v6125 = vshrl.u32 %v6121, 16
        %v6126 = vshll.u32 %v6122, 16
        %v6127 = vshrl.u32 %v6122, 16
        %vm6128 = vc.u32 %v6120, %v6124
        %v6129 = vsel %vm6128, 1, 0
        %v6130 = vadd.s32 %v6120, %v6124
        %v6131 = vadd.s32 %v6123, %v6129
        %vm6132 = vc.u32 %v6130, %v6126
        %v6133 = vsel %vm6132, 1, 0
        %v6134 = vadd.s32 %v6130, %v6126
        %v6135 = vadd.s32 %v6131, %v6133
        %v6136 = vadd.s32 %v6135, %v6125
        %v6137 = vadd.s32 %v6136, %v6127
        %v6138 = vand.u32 %v6115, 65535
        %v6139 = vshrl.u32 %v6115, 16
        %v6140 = vand.u32 %v6110, 65535
        %v6141 = vshrl.u32 %v6110, 16
        %v6142 = vmul.u32 %v6138, %v6140
        %v6143 = vmul.u32 %v6138, %v6141
        %v6144 = vmul.u32 %v6139, %v6140
        %v6145 = vmul.u32 %v6139, %v6141
        %v6146 = vshll.u32 %v6143, 16
        %v6147 = vshrl.u32 %v6143, 16
        %v6148 = vshll.u32 %v6144, 16
        %v6149 = vshrl.u32 %v6144, 16
        %vm6150 = vc.u32 %v6142, %v6146
        %v6151 = vsel %vm6150, 1, 0
        %v6152 = vadd.s32 %v6142, %v6146
        %v6153 = vadd.s32 %v6145, %v6151
        %vm6154 = vc.u32 %v6152, %v6148
        %v6155 = vsel %vm6154, 1, 0
        %v6156 = vadd.s32 %v6152, %v6148
        %v6157 = vadd.s32 %v6153, %v6155
        %v6158 = vadd.s32 %v6157, %v6147
        %v6159 = vadd.s32 %v6158, %v6149
        %v6160 = vmul.u32 %v6115, %v6106
        %v6161 = vadd.s32 %v6137, %v6156
        %vm6162 = vc.u32 %v6137, %v6156
        %v6163 = vadd.s32 %v6159, 1
        %v6164 = vsel %vm6162, %v6163, %v6159
        %v6165 = vadd.s32 %v6160, %v6164
        %v6166 = vadd.s32 %v6165, 536870912
        %v6167 = vshrl.u32 %v6166, 30
        %v6168 = vshll.u32 %v6167, 30
        %v6169 = vsub.s32 %v6165, %v6168
        %vm6170 = vcmp.lt.s32.totalorder %v6169, 0
        %v6171 = vsub.s32 0, %v6169
        %v6172 = vsel %vm6170, %v6171, %v6169
        %v6173 = vclz %v6172
        %v6174 = vsub.s32 %v6173, 2
        %vm6175 = vcmp.gt.s32.totalorder 0, %v6174
        %v6176 = vsel %vm6175, 0, %v6174
        %v6177 = vsub.s32 32, %v6176
        %v6178 = vshll.u32 %v6169, %v6176
        %v6179 = vshrl.u32 %v6161, %v6177
        %v6180 = vor.u32 %v6178, %v6179
        %v6181 = vsub.s32 4294967266, %v6176
        %v6182 = vadd.s32 %v6181, 127
        %v6183 = vshll.u32 %v6182, 23
        %v6184 = vor.u32 4788187, %v6183
        %v6185 = vand.u32 2147483647, %v6184
        %v6187 = vcvt.s32.f32 %v6180
        %v6188 = vmul.f32 %v6187, %v6185
        %v6189 = vxor.u32 %v6188, 2147483648
        %v6190 = vsel %vm6069, %v6189, %v6188
        %v6191 = vsub.s32 4, %v6167
        %v6192 = vsel %vm6069, %v6191, %v6167
        %v6193 = vsel %vm6068, %v186, %v6190
        %v6194 = vsel %vm6068, 0, %v6192
        %v6195 = vmul.f32 %v6193, %v6193
        %v6196 = vmul.f32 %v6195, -0.001358992
        %v6197 = vadd.f32 %v6196, 0.041655596
        %v6198 = vmul.f32 %v6195, %v6197
        %v6199 = vadd.f32 %v6198, -0.4999988
        %v6200 = vmul.f32 %v6195, %v6199
        %v6201 = vadd.f32 1.0, %v6200
        %v6202 = vmul.f32 %v6193, %v6193
        %v6203 = vmul.f32 %v6202, -0.00019511016
        %v6204 = vadd.f32 %v6203, 0.008332121
        %v6205 = vmul.f32 %v6202, %v6204
        %v6206 = vadd.f32 %v6205, -0.16666654
        %v6207 = vmul.f32 %v6202, %v6206
        %v6208 = vadd.f32 %v6207, 1.0
        %v6209 = vmul.f32 %v6208, %v6193
        %vm6210 = vweird.f32 %v186
        %v6211 = vand.u32 %v6194, 3
        %vm6212 = vcmp.lt.s32.totalorder %v6211, 2
        %vm6213 = vcmp.eq.s32.totalorder %v6211, 0
        %v6214 = vxor.u32 %v6209, 2147483648
        %v6215 = vsel %vm6213, %v6201, %v6214
        %vm6216 = vcmp.eq.s32.totalorder %v6211, 2
        %v6217 = vxor.u32 %v6201, 2147483648
        %v6218 = vsel %vm6216, %v6217, %v6209
        %v6219 = vsel %vm6212, %v6215, %v6218
        %v6220 = vsel %vm6210, nan, %v6219
        %v6221 = vand.u32 2147483647, %v187
        %vm6222 = vcmp.le.f32.partialorder %v6221, 0.7853982
        %vm6223 = vcmp.lt.s32.totalorder %v187, 0
        %v6224 = vand.u32 %v187, 2139095040
        %v6225 = vshrl.u32 %v6224, 23
        %v6226 = vsub.s32 %v6225, 127
        %v6227 = vand.u32 2147483647, %v187
        %v6228 = vand.u32 %v6227, 8388607
        %v6229 = vor.u32 %v6228, 8388608
        %v6230 = vsub.s32 0, %v6229
        %v6231 = vadd.s32 %v6226, 1
        %vm6232 = vcmp.gt.s32.totalorder %v6231, 0
        %v6233 = vsel %vm6232, %v6231, 0
        %v6234 = vshrl.u32 %v6233, 5
        %v6235 = vand.u32 %v6233, 31
        %v6236 = vsub.s32 32, %v6235
        %v6237 = vshrl.u32 683565275, %v6236
        %v6238 = vshll.u32 683565275, %v6235
        %v6239 = vshrl.u32 2475754826, %v6236
        %v6240 = vor.u32 %v6238, %v6239
        %v6241 = vshll.u32 2475754826, %v6235
        %v6242 = vshrl.u32 2131351028, %v6236
        %v6243 = vor.u32 %v6241, %v6242
        %v6244 = vshll.u32 2131351028, %v6235
        %v6245 = vshrl.u32 2102212464, %v6236
        %v6246 = vor.u32 %v6244, %v6245
        %v6247 = vshll.u32 2102212464, %v6235
        %v6248 = vshrl.u32 920167782, %v6236
        %v6249 = vor.u32 %v6247, %v6248
        %v6250 = vshll.u32 920167782, %v6235
        %v6251 = vshrl.u32 1326507024, %v6236
        %v6252 = vor.u32 %v6250, %v6251
        %vm6253 = vcmp.lt.s32.totalorder %v6234, 1
        %vm6254 = vcmp.lt.s32.totalorder %v6234, 2
        %vm6255 = vcmp.lt.s32.totalorder %v6234, 3
        %vm6256 = vcmp.lt.s32.totalorder %v6234, 4
        %v6257 = vsel %vm6253, %v6237, %v6240
        %v6258 = vsel %vm6256, %v6246, 2102212464
        %v6259 = vsel %vm6255, %v6243, %v6258
        %v6260 = vsel %vm6254, %v6257, %v6259
        %v6261 = vsel %vm6253, %v6240, %v6243
        %v6262 = vsel %vm6256, %v6249, 920167782
        %v6263 = vsel %vm6255, %v6246, %v6262
        %v6264 = vsel %vm6254, %v6261, %v6263
        %v6265 = vsel %vm6253, %v6243, %v6246
        %v6266 = vsel %vm6256, %v6252, 1326507024
        %v6267 = vsel %vm6255, %v6249, %v6266
        %v6268 = vsel %vm6254, %v6265, %v6267
        %v6269 = vshll.u32 %v6229, 8
        %v6270 = vand.u32 %v6269, 65535
        %v6271 = vshrl.u32 %v6269, 16
        %v6272 = vand.u32 %v6268, 65535
        %v6273 = vshrl.u32 %v6268, 16
        %v6274 = vmul.u32 %v6270, %v6272
        %v6275 = vmul.u32 %v6270, %v6273
        %v6276 = vmul.u32 %v6271, %v6272
        %v6277 = vmul.u32 %v6271, %v6273
        %v6278 = vshll.u32 %v6275, 16
        %v6279 = vshrl.u32 %v6275, 16
        %v6280 = vshll.u32 %v6276, 16
        %v6281 = vshrl.u32 %v6276, 16
        %vm6282 = vc.u32 %v6274, %v6278
        %v6283 = vsel %vm6282, 1, 0
        %v6284 = vadd.s32 %v6274, %v6278
        %v6285 = vadd.s32 %v6277, %v6283
        %vm6286 = vc.u32 %v6284, %v6280
        %v6287 = vsel %vm6286, 1, 0
        %v6288 = vadd.s32 %v6284, %v6280
        %v6289 = vadd.s32 %v6285, %v6287
        %v6290 = vadd.s32 %v6289, %v6279
        %v6291 = vadd.s32 %v6290, %v6281
        %v6292 = vand.u32 %v6269, 65535
        %v6293 = vshrl.u32 %v6269, 16
        %v6294 = vand.u32 %v6264, 65535
        %v6295 = vshrl.u32 %v6264, 16
        %v6296 = vmul.u32 %v6292, %v6294
        %v6297 = vmul.u32 %v6292, %v6295
        %v6298 = vmul.u32 %v6293, %v6294
        %v6299 = vmul.u32 %v6293, %v6295
        %v6300 = vshll.u32 %v6297, 16
        %v6301 = vshrl.u32 %v6297, 16
        %v6302 = vshll.u32 %v6298, 16
        %v6303 = vshrl.u32 %v6298, 16
        %vm6304 = vc.u32 %v6296, %v6300
        %v6305 = vsel %vm6304, 1, 0
        %v6306 = vadd.s32 %v6296, %v6300
        %v6307 = vadd.s32 %v6299, %v6305
        %vm6308 = vc.u32 %v6306, %v6302
        %v6309 = vsel %vm6308, 1, 0
        %v6310 = vadd.s32 %v6306, %v6302
        %v6311 = vadd.s32 %v6307, %v6309
        %v6312 = vadd.s32 %v6311, %v6301
        %v6313 = vadd.s32 %v6312, %v6303
        %v6314 = vmul.u32 %v6269, %v6260
        %v6315 = vadd.s32 %v6291, %v6310
        %vm6316 = vc.u32 %v6291, %v6310
        %v6317 = vadd.s32 %v6313, 1
        %v6318 = vsel %vm6316, %v6317, %v6313
        %v6319 = vadd.s32 %v6314, %v6318
        %v6320 = vadd.s32 %v6319, 536870912
        %v6321 = vshrl.u32 %v6320, 30
        %v6322 = vshll.u32 %v6321, 30
        %v6323 = vsub.s32 %v6319, %v6322
        %vm6324 = vcmp.lt.s32.totalorder %v6323, 0
        %v6325 = vsub.s32 0, %v6323
        %v6326 = vsel %vm6324, %v6325, %v6323
        %v6327 = vclz %v6326
        %v6328 = vsub.s32 %v6327, 2
        %vm6329 = vcmp.gt.s32.totalorder 0, %v6328
        %v6330 = vsel %vm6329, 0, %v6328
        %v6331 = vsub.s32 32, %v6330
        %v6332 = vshll.u32 %v6323, %v6330
        %v6333 = vshrl.u32 %v6315, %v6331
        %v6334 = vor.u32 %v6332, %v6333
        %v6335 = vsub.s32 4294967266, %v6330
        %v6336 = vadd.s32 %v6335, 127
        %v6337 = vshll.u32 %v6336, 23
        %v6338 = vor.u32 4788187, %v6337
        %v6339 = vand.u32 2147483647, %v6338
        %v6341 = vcvt.s32.f32 %v6334
        %v6342 = vmul.f32 %v6341, %v6339
        %v6343 = vxor.u32 %v6342, 2147483648
        %v6344 = vsel %vm6223, %v6343, %v6342
        %v6345 = vsub.s32 4, %v6321
        %v6346 = vsel %vm6223, %v6345, %v6321
        %v6347 = vsel %vm6222, %v187, %v6344
        %v6348 = vsel %vm6222, 0, %v6346
        %v6349 = vmul.f32 %v6347, %v6347
        %v6350 = vmul.f32 %v6349, -0.001358992
        %v6351 = vadd.f32 %v6350, 0.041655596
        %v6352 = vmul.f32 %v6349, %v6351
        %v6353 = vadd.f32 %v6352, -0.4999988
        %v6354 = vmul.f32 %v6349, %v6353
        %v6355 = vadd.f32 1.0, %v6354
        %v6356 = vmul.f32 %v6347, %v6347
        %v6357 = vmul.f32 %v6356, -0.00019511016
        %v6358 = vadd.f32 %v6357, 0.008332121
        %v6359 = vmul.f32 %v6356, %v6358
        %v6360 = vadd.f32 %v6359, -0.16666654
        %v6361 = vmul.f32 %v6356, %v6360
        %v6362 = vadd.f32 %v6361, 1.0
        %v6363 = vmul.f32 %v6362, %v6347
        %vm6364 = vweird.f32 %v187
        %v6365 = vand.u32 %v6348, 3
        %vm6366 = vcmp.lt.s32.totalorder %v6365, 2
        %vm6367 = vcmp.eq.s32.totalorder %v6365, 0
        %v6368 = vxor.u32 %v6363, 2147483648
        %v6369 = vsel %vm6367, %v6355, %v6368
        %vm6370 = vcmp.eq.s32.totalorder %v6365, 2
        %v6371 = vxor.u32 %v6355, 2147483648
        %v6372 = vsel %vm6370, %v6371, %v6363
        %v6373 = vsel %vm6366, %v6369, %v6372
        %v6374 = vsel %vm6364, nan, %v6373
        %v6375 = vand.u32 2147483647, %v188
        %vm6376 = vcmp.le.f32.partialorder %v6375, 0.7853982
        %vm6377 = vcmp.lt.s32.totalorder %v188, 0
        %v6378 = vand.u32 %v188, 2139095040
        %v6379 = vshrl.u32 %v6378, 23
        %v6380 = vsub.s32 %v6379, 127
        %v6381 = vand.u32 2147483647, %v188
        %v6382 = vand.u32 %v6381, 8388607
        %v6383 = vor.u32 %v6382, 8388608
        %v6384 = vsub.s32 0, %v6383
        %v6385 = vadd.s32 %v6380, 1
        %vm6386 = vcmp.gt.s32.totalorder %v6385, 0
        %v6387 = vsel %vm6386, %v6385, 0
        %v6388 = vshrl.u32 %v6387, 5
        %v6389 = vand.u32 %v6387, 31
        %v6390 = vsub.s32 32, %v6389
        %v6391 = vshrl.u32 683565275, %v6390
        %v6392 = vshll.u32 683565275, %v6389
        %v6393 = vshrl.u32 2475754826, %v6390
        %v6394 = vor.u32 %v6392, %v6393
        %v6395 = vshll.u32 2475754826, %v6389
        %v6396 = vshrl.u32 2131351028, %v6390
        %v6397 = vor.u32 %v6395, %v6396
        %v6398 = vshll.u32 2131351028, %v6389
        %v6399 = vshrl.u32 2102212464, %v6390
        %v6400 = vor.u32 %v6398, %v6399
        %v6401 = vshll.u32 2102212464, %v6389
        %v6402 = vshrl.u32 920167782, %v6390
        %v6403 = vor.u32 %v6401, %v6402
        %v6404 = vshll.u32 920167782, %v6389
        %v6405 = vshrl.u32 1326507024, %v6390
        %v6406 = vor.u32 %v6404, %v6405
        %vm6407 = vcmp.lt.s32.totalorder %v6388, 1
        %vm6408 = vcmp.lt.s32.totalorder %v6388, 2
        %vm6409 = vcmp.lt.s32.totalorder %v6388, 3
        %vm6410 = vcmp.lt.s32.totalorder %v6388, 4
        %v6411 = vsel %vm6407, %v6391, %v6394
        %v6412 = vsel %vm6410, %v6400, 2102212464
        %v6413 = vsel %vm6409, %v6397, %v6412
        %v6414 = vsel %vm6408, %v6411, %v6413
        %v6415 = vsel %vm6407, %v6394, %v6397
        %v6416 = vsel %vm6410, %v6403, 920167782
        %v6417 = vsel %vm6409, %v6400, %v6416
        %v6418 = vsel %vm6408, %v6415, %v6417
        %v6419 = vsel %vm6407, %v6397, %v6400
        %v6420 = vsel %vm6410, %v6406, 1326507024
        %v6421 = vsel %vm6409, %v6403, %v6420
        %v6422 = vsel %vm6408, %v6419, %v6421
        %v6423 = vshll.u32 %v6383, 8
        %v6424 = vand.u32 %v6423, 65535
        %v6425 = vshrl.u32 %v6423, 16
        %v6426 = vand.u32 %v6422, 65535
        %v6427 = vshrl.u32 %v6422, 16
        %v6428 = vmul.u32 %v6424, %v6426
        %v6429 = vmul.u32 %v6424, %v6427
        %v6430 = vmul.u32 %v6425, %v6426
        %v6431 = vmul.u32 %v6425, %v6427
        %v6432 = vshll.u32 %v6429, 16
        %v6433 = vshrl.u32 %v6429, 16
        %v6434 = vshll.u32 %v6430, 16
        %v6435 = vshrl.u32 %v6430, 16
        %vm6436 = vc.u32 %v6428, %v6432
        %v6437 = vsel %vm6436, 1, 0
        %v6438 = vadd.s32 %v6428, %v6432
        %v6439 = vadd.s32 %v6431, %v6437
        %vm6440 = vc.u32 %v6438, %v6434
        %v6441 = vsel %vm6440, 1, 0
        %v6442 = vadd.s32 %v6438, %v6434
        %v6443 = vadd.s32 %v6439, %v6441
        %v6444 = vadd.s32 %v6443, %v6433
        %v6445 = vadd.s32 %v6444, %v6435
        %v6446 = vand.u32 %v6423, 65535
        %v6447 = vshrl.u32 %v6423, 16
        %v6448 = vand.u32 %v6418, 65535
        %v6449 = vshrl.u32 %v6418, 16
        %v6450 = vmul.u32 %v6446, %v6448
        %v6451 = vmul.u32 %v6446, %v6449
        %v6452 = vmul.u32 %v6447, %v6448
        %v6453 = vmul.u32 %v6447, %v6449
        %v6454 = vshll.u32 %v6451, 16
        %v6455 = vshrl.u32 %v6451, 16
        %v6456 = vshll.u32 %v6452, 16
        %v6457 = vshrl.u32 %v6452, 16
        %vm6458 = vc.u32 %v6450, %v6454
        %v6459 = vsel %vm6458, 1, 0
        %v6460 = vadd.s32 %v6450, %v6454
        %v6461 = vadd.s32 %v6453, %v6459
        %vm6462 = vc.u32 %v6460, %v6456
        %v6463 = vsel %vm6462, 1, 0
        %v6464 = vadd.s32 %v6460, %v6456
        %v6465 = vadd.s32 %v6461, %v6463
        %v6466 = vadd.s32 %v6465, %v6455
        %v6467 = vadd.s32 %v6466, %v6457
        %v6468 = vmul.u32 %v6423, %v6414
        %v6469 = vadd.s32 %v6445, %v6464
        %vm6470 = vc.u32 %v6445, %v6464
        %v6471 = vadd.s32 %v6467, 1
        %v6472 = vsel %vm6470, %v6471, %v6467
        %v6473 = vadd.s32 %v6468, %v6472
        %v6474 = vadd.s32 %v6473, 536870912
        %v6475 = vshrl.u32 %v6474, 30
        %v6476 = vshll.u32 %v6475, 30
        %v6477 = vsub.s32 %v6473, %v6476
        %vm6478 = vcmp.lt.s32.totalorder %v6477, 0
        %v6479 = vsub.s32 0, %v6477
        %v6480 = vsel %vm6478, %v6479, %v6477
        %v6481 = vclz %v6480
        %v6482 = vsub.s32 %v6481, 2
        %vm6483 = vcmp.gt.s32.totalorder 0, %v6482
        %v6484 = vsel %vm6483, 0, %v6482
        %v6485 = vsub.s32 32, %v6484
        %v6486 = vshll.u32 %v6477, %v6484
        %v6487 = vshrl.u32 %v6469, %v6485
        %v6488 = vor.u32 %v6486, %v6487
        %v6489 = vsub.s32 4294967266, %v6484
        %v6490 = vadd.s32 %v6489, 127
        %v6491 = vshll.u32 %v6490, 23
        %v6492 = vor.u32 4788187, %v6491
        %v6493 = vand.u32 2147483647, %v6492
        %v6495 = vcvt.s32.f32 %v6488
        %v6496 = vmul.f32 %v6495, %v6493
        %v6497 = vxor.u32 %v6496, 2147483648
        %v6498 = vsel %vm6377, %v6497, %v6496
        %v6499 = vsub.s32 4, %v6475
        %v6500 = vsel %vm6377, %v6499, %v6475
        %v6501 = vsel %vm6376, %v188, %v6498
        %v6502 = vsel %vm6376, 0, %v6500
        %v6503 = vmul.f32 %v6501, %v6501
        %v6504 = vmul.f32 %v6503, -0.001358992
        %v6505 = vadd.f32 %v6504, 0.041655596
        %v6506 = vmul.f32 %v6503, %v6505
        %v6507 = vadd.f32 %v6506, -0.4999988
        %v6508 = vmul.f32 %v6503, %v6507
        %v6509 = vadd.f32 1.0, %v6508
        %v6510 = vmul.f32 %v6501, %v6501
        %v6511 = vmul.f32 %v6510, -0.00019511016
        %v6512 = vadd.f32 %v6511, 0.008332121
        %v6513 = vmul.f32 %v6510, %v6512
        %v6514 = vadd.f32 %v6513, -0.16666654
        %v6515 = vmul.f32 %v6510, %v6514
        %v6516 = vadd.f32 %v6515, 1.0
        %v6517 = vmul.f32 %v6516, %v6501
        %vm6518 = vweird.f32 %v188
        %v6519 = vand.u32 %v6502, 3
        %vm6520 = vcmp.lt.s32.totalorder %v6519, 2
        %vm6521 = vcmp.eq.s32.totalorder %v6519, 0
        %v6522 = vxor.u32 %v6517, 2147483648
        %v6523 = vsel %vm6521, %v6509, %v6522
        %vm6524 = vcmp.eq.s32.totalorder %v6519, 2
        %v6525 = vxor.u32 %v6509, 2147483648
        %v6526 = vsel %vm6524, %v6525, %v6517
        %v6527 = vsel %vm6520, %v6523, %v6526
        %v6528 = vsel %vm6518, nan, %v6527
        %v6533 = vrot.slane %v6066, 2
        %v6534 = vrot.slane %v6220, 2
        %v6535 = vrot.slane %v6374, 2
        %v6536 = vrot.slane %v6528, 2
        %6541 = vst [vmem:[#allocation3 + $0x20] sm:$0xe] %v6533
        %6542 = vst [vmem:[#allocation3 + $0x28] sm:$0xe] %v6534
        %6543 = vst [vmem:[#allocation3 + $0x30] sm:$0xe] %v6535
        %6544 = vst [vmem:[#allocation3 + $0x38] sm:$0xe] %v6536
        %v6545 = vmul.f32 %v185, 2.0
        %v6546 = vmul.f32 %v186, 2.0
        %v6547 = vmul.f32 %v187, 2.0
        %v6548 = vmul.f32 %v188, 2.0
        %v6549 = vand.u32 2147483647, %v6545
        %vm6550 = vcmp.le.f32.partialorder %v6549, 0.7853982
        %vm6551 = vcmp.lt.s32.totalorder %v6545, 0
        %v6552 = vand.u32 %v6545, 2139095040
        %v6553 = vshrl.u32 %v6552, 23
        %v6554 = vsub.s32 %v6553, 127
        %v6555 = vand.u32 2147483647, %v6545
        %v6556 = vand.u32 %v6555, 8388607
        %v6557 = vor.u32 %v6556, 8388608
        %v6558 = vsub.s32 0, %v6557
        %v6559 = vadd.s32 %v6554, 1
        %vm6560 = vcmp.gt.s32.totalorder %v6559, 0
        %v6561 = vsel %vm6560, %v6559, 0
        %v6562 = vshrl.u32 %v6561, 5
        %v6563 = vand.u32 %v6561, 31
        %v6564 = vsub.s32 32, %v6563
        %v6565 = vshrl.u32 683565275, %v6564
        %v6566 = vshll.u32 683565275, %v6563
        %v6567 = vshrl.u32 2475754826, %v6564
        %v6568 = vor.u32 %v6566, %v6567
        %v6569 = vshll.u32 2475754826, %v6563
        %v6570 = vshrl.u32 2131351028, %v6564
        %v6571 = vor.u32 %v6569, %v6570
        %v6572 = vshll.u32 2131351028, %v6563
        %v6573 = vshrl.u32 2102212464, %v6564
        %v6574 = vor.u32 %v6572, %v6573
        %v6575 = vshll.u32 2102212464, %v6563
        %v6576 = vshrl.u32 920167782, %v6564
        %v6577 = vor.u32 %v6575, %v6576
        %v6578 = vshll.u32 920167782, %v6563
        %v6579 = vshrl.u32 1326507024, %v6564
        %v6580 = vor.u32 %v6578, %v6579
        %vm6581 = vcmp.lt.s32.totalorder %v6562, 1
        %vm6582 = vcmp.lt.s32.totalorder %v6562, 2
        %vm6583 = vcmp.lt.s32.totalorder %v6562, 3
        %vm6584 = vcmp.lt.s32.totalorder %v6562, 4
        %v6585 = vsel %vm6581, %v6565, %v6568
        %v6586 = vsel %vm6584, %v6574, 2102212464
        %v6587 = vsel %vm6583, %v6571, %v6586
        %v6588 = vsel %vm6582, %v6585, %v6587
        %v6589 = vsel %vm6581, %v6568, %v6571
        %v6590 = vsel %vm6584, %v6577, 920167782
        %v6591 = vsel %vm6583, %v6574, %v6590
        %v6592 = vsel %vm6582, %v6589, %v6591
        %v6593 = vsel %vm6581, %v6571, %v6574
        %v6594 = vsel %vm6584, %v6580, 1326507024
        %v6595 = vsel %vm6583, %v6577, %v6594
        %v6596 = vsel %vm6582, %v6593, %v6595
        %v6597 = vshll.u32 %v6557, 8
        %v6598 = vand.u32 %v6597, 65535
        %v6599 = vshrl.u32 %v6597, 16
        %v6600 = vand.u32 %v6596, 65535
        %v6601 = vshrl.u32 %v6596, 16
        %v6602 = vmul.u32 %v6598, %v6600
        %v6603 = vmul.u32 %v6598, %v6601
        %v6604 = vmul.u32 %v6599, %v6600
        %v6605 = vmul.u32 %v6599, %v6601
        %v6606 = vshll.u32 %v6603, 16
        %v6607 = vshrl.u32 %v6603, 16
        %v6608 = vshll.u32 %v6604, 16
        %v6609 = vshrl.u32 %v6604, 16
        %vm6610 = vc.u32 %v6602, %v6606
        %v6611 = vsel %vm6610, 1, 0
        %v6612 = vadd.s32 %v6602, %v6606
        %v6613 = vadd.s32 %v6605, %v6611
        %vm6614 = vc.u32 %v6612, %v6608
        %v6615 = vsel %vm6614, 1, 0
        %v6616 = vadd.s32 %v6612, %v6608
        %v6617 = vadd.s32 %v6613, %v6615
        %v6618 = vadd.s32 %v6617, %v6607
        %v6619 = vadd.s32 %v6618, %v6609
        %v6620 = vand.u32 %v6597, 65535
        %v6621 = vshrl.u32 %v6597, 16
        %v6622 = vand.u32 %v6592, 65535
        %v6623 = vshrl.u32 %v6592, 16
        %v6624 = vmul.u32 %v6620, %v6622
        %v6625 = vmul.u32 %v6620, %v6623
        %v6626 = vmul.u32 %v6621, %v6622
        %v6627 = vmul.u32 %v6621, %v6623
        %v6628 = vshll.u32 %v6625, 16
        %v6629 = vshrl.u32 %v6625, 16
        %v6630 = vshll.u32 %v6626, 16
        %v6631 = vshrl.u32 %v6626, 16
        %vm6632 = vc.u32 %v6624, %v6628
        %v6633 = vsel %vm6632, 1, 0
        %v6634 = vadd.s32 %v6624, %v6628
        %v6635 = vadd.s32 %v6627, %v6633
        %vm6636 = vc.u32 %v6634, %v6630
        %v6637 = vsel %vm6636, 1, 0
        %v6638 = vadd.s32 %v6634, %v6630
        %v6639 = vadd.s32 %v6635, %v6637
        %v6640 = vadd.s32 %v6639, %v6629
        %v6641 = vadd.s32 %v6640, %v6631
        %v6642 = vmul.u32 %v6597, %v6588
        %v6643 = vadd.s32 %v6619, %v6638
        %vm6644 = vc.u32 %v6619, %v6638
        %v6645 = vadd.s32 %v6641, 1
        %v6646 = vsel %vm6644, %v6645, %v6641
        %v6647 = vadd.s32 %v6642, %v6646
        %v6648 = vadd.s32 %v6647, 536870912
        %v6649 = vshrl.u32 %v6648, 30
        %v6650 = vshll.u32 %v6649, 30
        %v6651 = vsub.s32 %v6647, %v6650
        %vm6652 = vcmp.lt.s32.totalorder %v6651, 0
        %v6653 = vsub.s32 0, %v6651
        %v6654 = vsel %vm6652, %v6653, %v6651
        %v6655 = vclz %v6654
        %v6656 = vsub.s32 %v6655, 2
        %vm6657 = vcmp.gt.s32.totalorder 0, %v6656
        %v6658 = vsel %vm6657, 0, %v6656
        %v6659 = vsub.s32 32, %v6658
        %v6660 = vshll.u32 %v6651, %v6658
        %v6661 = vshrl.u32 %v6643, %v6659
        %v6662 = vor.u32 %v6660, %v6661
        %v6663 = vsub.s32 4294967266, %v6658
        %v6664 = vadd.s32 %v6663, 127
        %v6665 = vshll.u32 %v6664, 23
        %v6666 = vor.u32 4788187, %v6665
        %v6667 = vand.u32 2147483647, %v6666
        %v6669 = vcvt.s32.f32 %v6662
        %v6670 = vmul.f32 %v6669, %v6667
        %v6671 = vxor.u32 %v6670, 2147483648
        %v6672 = vsel %vm6551, %v6671, %v6670
        %v6673 = vsub.s32 4, %v6649
        %v6674 = vsel %vm6551, %v6673, %v6649
        %v6675 = vsel %vm6550, %v6545, %v6672
        %v6676 = vsel %vm6550, 0, %v6674
        %v6677 = vmul.f32 %v6675, %v6675
        %v6678 = vmul.f32 %v6677, -0.001358992
        %v6679 = vadd.f32 %v6678, 0.041655596
        %v6680 = vmul.f32 %v6677, %v6679
        %v6681 = vadd.f32 %v6680, -0.4999988
        %v6682 = vmul.f32 %v6677, %v6681
        %v6683 = vadd.f32 1.0, %v6682
        %v6684 = vmul.f32 %v6675, %v6675
        %v6685 = vmul.f32 %v6684, -0.00019511016
        %v6686 = vadd.f32 %v6685, 0.008332121
        %v6687 = vmul.f32 %v6684, %v6686
        %v6688 = vadd.f32 %v6687, -0.16666654
        %v6689 = vmul.f32 %v6684, %v6688
        %v6690 = vadd.f32 %v6689, 1.0
        %v6691 = vmul.f32 %v6690, %v6675
        %vm6692 = vweird.f32 %v6545
        %v6693 = vadd.s32 %v6676, 3
        %v6694 = vand.u32 %v6693, 3
        %vm6695 = vcmp.lt.s32.totalorder %v6694, 2
        %vm6696 = vcmp.eq.s32.totalorder %v6694, 0
        %v6697 = vxor.u32 %v6691, 2147483648
        %v6698 = vsel %vm6696, %v6683, %v6697
        %vm6699 = vcmp.eq.s32.totalorder %v6694, 2
        %v6700 = vxor.u32 %v6683, 2147483648
        %v6701 = vsel %vm6699, %v6700, %v6691
        %v6702 = vsel %vm6695, %v6698, %v6701
        %v6703 = vsel %vm6692, nan, %v6702
        %v6704 = vand.u32 2147483647, %v6546
        %vm6705 = vcmp.le.f32.partialorder %v6704, 0.7853982
        %vm6706 = vcmp.lt.s32.totalorder %v6546, 0
        %v6707 = vand.u32 %v6546, 2139095040
        %v6708 = vshrl.u32 %v6707, 23
        %v6709 = vsub.s32 %v6708, 127
        %v6710 = vand.u32 2147483647, %v6546
        %v6711 = vand.u32 %v6710, 8388607
        %v6712 = vor.u32 %v6711, 8388608
        %v6713 = vsub.s32 0, %v6712
        %v6714 = vadd.s32 %v6709, 1
        %vm6715 = vcmp.gt.s32.totalorder %v6714, 0
        %v6716 = vsel %vm6715, %v6714, 0
        %v6717 = vshrl.u32 %v6716, 5
        %v6718 = vand.u32 %v6716, 31
        %v6719 = vsub.s32 32, %v6718
        %v6720 = vshrl.u32 683565275, %v6719
        %v6721 = vshll.u32 683565275, %v6718
        %v6722 = vshrl.u32 2475754826, %v6719
        %v6723 = vor.u32 %v6721, %v6722
        %v6724 = vshll.u32 2475754826, %v6718
        %v6725 = vshrl.u32 2131351028, %v6719
        %v6726 = vor.u32 %v6724, %v6725
        %v6727 = vshll.u32 2131351028, %v6718
        %v6728 = vshrl.u32 2102212464, %v6719
        %v6729 = vor.u32 %v6727, %v6728
        %v6730 = vshll.u32 2102212464, %v6718
        %v6731 = vshrl.u32 920167782, %v6719
        %v6732 = vor.u32 %v6730, %v6731
        %v6733 = vshll.u32 920167782, %v6718
        %v6734 = vshrl.u32 1326507024, %v6719
        %v6735 = vor.u32 %v6733, %v6734
        %vm6736 = vcmp.lt.s32.totalorder %v6717, 1
        %vm6737 = vcmp.lt.s32.totalorder %v6717, 2
        %vm6738 = vcmp.lt.s32.totalorder %v6717, 3
        %vm6739 = vcmp.lt.s32.totalorder %v6717, 4
        %v6740 = vsel %vm6736, %v6720, %v6723
        %v6741 = vsel %vm6739, %v6729, 2102212464
        %v6742 = vsel %vm6738, %v6726, %v6741
        %v6743 = vsel %vm6737, %v6740, %v6742
        %v6744 = vsel %vm6736, %v6723, %v6726
        %v6745 = vsel %vm6739, %v6732, 920167782
        %v6746 = vsel %vm6738, %v6729, %v6745
        %v6747 = vsel %vm6737, %v6744, %v6746
        %v6748 = vsel %vm6736, %v6726, %v6729
        %v6749 = vsel %vm6739, %v6735, 1326507024
        %v6750 = vsel %vm6738, %v6732, %v6749
        %v6751 = vsel %vm6737, %v6748, %v6750
        %v6752 = vshll.u32 %v6712, 8
        %v6753 = vand.u32 %v6752, 65535
        %v6754 = vshrl.u32 %v6752, 16
        %v6755 = vand.u32 %v6751, 65535
        %v6756 = vshrl.u32 %v6751, 16
        %v6757 = vmul.u32 %v6753, %v6755
        %v6758 = vmul.u32 %v6753, %v6756
        %v6759 = vmul.u32 %v6754, %v6755
        %v6760 = vmul.u32 %v6754, %v6756
        %v6761 = vshll.u32 %v6758, 16
        %v6762 = vshrl.u32 %v6758, 16
        %v6763 = vshll.u32 %v6759, 16
        %v6764 = vshrl.u32 %v6759, 16
        %vm6765 = vc.u32 %v6757, %v6761
        %v6766 = vsel %vm6765, 1, 0
        %v6767 = vadd.s32 %v6757, %v6761
        %v6768 = vadd.s32 %v6760, %v6766
        %vm6769 = vc.u32 %v6767, %v6763
        %v6770 = vsel %vm6769, 1, 0
        %v6771 = vadd.s32 %v6767, %v6763
        %v6772 = vadd.s32 %v6768, %v6770
        %v6773 = vadd.s32 %v6772, %v6762
        %v6774 = vadd.s32 %v6773, %v6764
        %v6775 = vand.u32 %v6752, 65535
        %v6776 = vshrl.u32 %v6752, 16
        %v6777 = vand.u32 %v6747, 65535
        %v6778 = vshrl.u32 %v6747, 16
        %v6779 = vmul.u32 %v6775, %v6777
        %v6780 = vmul.u32 %v6775, %v6778
        %v6781 = vmul.u32 %v6776, %v6777
        %v6782 = vmul.u32 %v6776, %v6778
        %v6783 = vshll.u32 %v6780, 16
        %v6784 = vshrl.u32 %v6780, 16
        %v6785 = vshll.u32 %v6781, 16
        %v6786 = vshrl.u32 %v6781, 16
        %vm6787 = vc.u32 %v6779, %v6783
        %v6788 = vsel %vm6787, 1, 0
        %v6789 = vadd.s32 %v6779, %v6783
        %v6790 = vadd.s32 %v6782, %v6788
        %vm6791 = vc.u32 %v6789, %v6785
        %v6792 = vsel %vm6791, 1, 0
        %v6793 = vadd.s32 %v6789, %v6785
        %v6794 = vadd.s32 %v6790, %v6792
        %v6795 = vadd.s32 %v6794, %v6784
        %v6796 = vadd.s32 %v6795, %v6786
        %v6797 = vmul.u32 %v6752, %v6743
        %v6798 = vadd.s32 %v6774, %v6793
        %vm6799 = vc.u32 %v6774, %v6793
        %v6800 = vadd.s32 %v6796, 1
        %v6801 = vsel %vm6799, %v6800, %v6796
        %v6802 = vadd.s32 %v6797, %v6801
        %v6803 = vadd.s32 %v6802, 536870912
        %v6804 = vshrl.u32 %v6803, 30
        %v6805 = vshll.u32 %v6804, 30
        %v6806 = vsub.s32 %v6802, %v6805
        %vm6807 = vcmp.lt.s32.totalorder %v6806, 0
        %v6808 = vsub.s32 0, %v6806
        %v6809 = vsel %vm6807, %v6808, %v6806
        %v6810 = vclz %v6809
        %v6811 = vsub.s32 %v6810, 2
        %vm6812 = vcmp.gt.s32.totalorder 0, %v6811
        %v6813 = vsel %vm6812, 0, %v6811
        %v6814 = vsub.s32 32, %v6813
        %v6815 = vshll.u32 %v6806, %v6813
        %v6816 = vshrl.u32 %v6798, %v6814
        %v6817 = vor.u32 %v6815, %v6816
        %v6818 = vsub.s32 4294967266, %v6813
        %v6819 = vadd.s32 %v6818, 127
        %v6820 = vshll.u32 %v6819, 23
        %v6821 = vor.u32 4788187, %v6820
        %v6822 = vand.u32 2147483647, %v6821
        %v6824 = vcvt.s32.f32 %v6817
        %v6825 = vmul.f32 %v6824, %v6822
        %v6826 = vxor.u32 %v6825, 2147483648
        %v6827 = vsel %vm6706, %v6826, %v6825
        %v6828 = vsub.s32 4, %v6804
        %v6829 = vsel %vm6706, %v6828, %v6804
        %v6830 = vsel %vm6705, %v6546, %v6827
        %v6831 = vsel %vm6705, 0, %v6829
        %v6832 = vmul.f32 %v6830, %v6830
        %v6833 = vmul.f32 %v6832, -0.001358992
        %v6834 = vadd.f32 %v6833, 0.041655596
        %v6835 = vmul.f32 %v6832, %v6834
        %v6836 = vadd.f32 %v6835, -0.4999988
        %v6837 = vmul.f32 %v6832, %v6836
        %v6838 = vadd.f32 1.0, %v6837
        %v6839 = vmul.f32 %v6830, %v6830
        %v6840 = vmul.f32 %v6839, -0.00019511016
        %v6841 = vadd.f32 %v6840, 0.008332121
        %v6842 = vmul.f32 %v6839, %v6841
        %v6843 = vadd.f32 %v6842, -0.16666654
        %v6844 = vmul.f32 %v6839, %v6843
        %v6845 = vadd.f32 %v6844, 1.0
        %v6846 = vmul.f32 %v6845, %v6830
        %vm6847 = vweird.f32 %v6546
        %v6848 = vadd.s32 %v6831, 3
        %v6849 = vand.u32 %v6848, 3
        %vm6850 = vcmp.lt.s32.totalorder %v6849, 2
        %vm6851 = vcmp.eq.s32.totalorder %v6849, 0
        %v6852 = vxor.u32 %v6846, 2147483648
        %v6853 = vsel %vm6851, %v6838, %v6852
        %vm6854 = vcmp.eq.s32.totalorder %v6849, 2
        %v6855 = vxor.u32 %v6838, 2147483648
        %v6856 = vsel %vm6854, %v6855, %v6846
        %v6857 = vsel %vm6850, %v6853, %v6856
        %v6858 = vsel %vm6847, nan, %v6857
        %v6859 = vand.u32 2147483647, %v6547
        %vm6860 = vcmp.le.f32.partialorder %v6859, 0.7853982
        %vm6861 = vcmp.lt.s32.totalorder %v6547, 0
        %v6862 = vand.u32 %v6547, 2139095040
        %v6863 = vshrl.u32 %v6862, 23
        %v6864 = vsub.s32 %v6863, 127
        %v6865 = vand.u32 2147483647, %v6547
        %v6866 = vand.u32 %v6865, 8388607
        %v6867 = vor.u32 %v6866, 8388608
        %v6868 = vsub.s32 0, %v6867
        %v6869 = vadd.s32 %v6864, 1
        %vm6870 = vcmp.gt.s32.totalorder %v6869, 0
        %v6871 = vsel %vm6870, %v6869, 0
        %v6872 = vshrl.u32 %v6871, 5
        %v6873 = vand.u32 %v6871, 31
        %v6874 = vsub.s32 32, %v6873
        %v6875 = vshrl.u32 683565275, %v6874
        %v6876 = vshll.u32 683565275, %v6873
        %v6877 = vshrl.u32 2475754826, %v6874
        %v6878 = vor.u32 %v6876, %v6877
        %v6879 = vshll.u32 2475754826, %v6873
        %v6880 = vshrl.u32 2131351028, %v6874
        %v6881 = vor.u32 %v6879, %v6880
        %v6882 = vshll.u32 2131351028, %v6873
        %v6883 = vshrl.u32 2102212464, %v6874
        %v6884 = vor.u32 %v6882, %v6883
        %v6885 = vshll.u32 2102212464, %v6873
        %v6886 = vshrl.u32 920167782, %v6874
        %v6887 = vor.u32 %v6885, %v6886
        %v6888 = vshll.u32 920167782, %v6873
        %v6889 = vshrl.u32 1326507024, %v6874
        %v6890 = vor.u32 %v6888, %v6889
        %vm6891 = vcmp.lt.s32.totalorder %v6872, 1
        %vm6892 = vcmp.lt.s32.totalorder %v6872, 2
        %vm6893 = vcmp.lt.s32.totalorder %v6872, 3
        %vm6894 = vcmp.lt.s32.totalorder %v6872, 4
        %v6895 = vsel %vm6891, %v6875, %v6878
        %v6896 = vsel %vm6894, %v6884, 2102212464
        %v6897 = vsel %vm6893, %v6881, %v6896
        %v6898 = vsel %vm6892, %v6895, %v6897
        %v6899 = vsel %vm6891, %v6878, %v6881
        %v6900 = vsel %vm6894, %v6887, 920167782
        %v6901 = vsel %vm6893, %v6884, %v6900
        %v6902 = vsel %vm6892, %v6899, %v6901
        %v6903 = vsel %vm6891, %v6881, %v6884
        %v6904 = vsel %vm6894, %v6890, 1326507024
        %v6905 = vsel %vm6893, %v6887, %v6904
        %v6906 = vsel %vm6892, %v6903, %v6905
        %v6907 = vshll.u32 %v6867, 8
        %v6908 = vand.u32 %v6907, 65535
        %v6909 = vshrl.u32 %v6907, 16
        %v6910 = vand.u32 %v6906, 65535
        %v6911 = vshrl.u32 %v6906, 16
        %v6912 = vmul.u32 %v6908, %v6910
        %v6913 = vmul.u32 %v6908, %v6911
        %v6914 = vmul.u32 %v6909, %v6910
        %v6915 = vmul.u32 %v6909, %v6911
        %v6916 = vshll.u32 %v6913, 16
        %v6917 = vshrl.u32 %v6913, 16
        %v6918 = vshll.u32 %v6914, 16
        %v6919 = vshrl.u32 %v6914, 16
        %vm6920 = vc.u32 %v6912, %v6916
        %v6921 = vsel %vm6920, 1, 0
        %v6922 = vadd.s32 %v6912, %v6916
        %v6923 = vadd.s32 %v6915, %v6921
        %vm6924 = vc.u32 %v6922, %v6918
        %v6925 = vsel %vm6924, 1, 0
        %v6926 = vadd.s32 %v6922, %v6918
        %v6927 = vadd.s32 %v6923, %v6925
        %v6928 = vadd.s32 %v6927, %v6917
        %v6929 = vadd.s32 %v6928, %v6919
        %v6930 = vand.u32 %v6907, 65535
        %v6931 = vshrl.u32 %v6907, 16
        %v6932 = vand.u32 %v6902, 65535
        %v6933 = vshrl.u32 %v6902, 16
        %v6934 = vmul.u32 %v6930, %v6932
        %v6935 = vmul.u32 %v6930, %v6933
        %v6936 = vmul.u32 %v6931, %v6932
        %v6937 = vmul.u32 %v6931, %v6933
        %v6938 = vshll.u32 %v6935, 16
        %v6939 = vshrl.u32 %v6935, 16
        %v6940 = vshll.u32 %v6936, 16
        %v6941 = vshrl.u32 %v6936, 16
        %vm6942 = vc.u32 %v6934, %v6938
        %v6943 = vsel %vm6942, 1, 0
        %v6944 = vadd.s32 %v6934, %v6938
        %v6945 = vadd.s32 %v6937, %v6943
        %vm6946 = vc.u32 %v6944, %v6940
        %v6947 = vsel %vm6946, 1, 0
        %v6948 = vadd.s32 %v6944, %v6940
        %v6949 = vadd.s32 %v6945, %v6947
        %v6950 = vadd.s32 %v6949, %v6939
        %v6951 = vadd.s32 %v6950, %v6941
        %v6952 = vmul.u32 %v6907, %v6898
        %v6953 = vadd.s32 %v6929, %v6948
        %vm6954 = vc.u32 %v6929, %v6948
        %v6955 = vadd.s32 %v6951, 1
        %v6956 = vsel %vm6954, %v6955, %v6951
        %v6957 = vadd.s32 %v6952, %v6956
        %v6958 = vadd.s32 %v6957, 536870912
        %v6959 = vshrl.u32 %v6958, 30
        %v6960 = vshll.u32 %v6959, 30
        %v6961 = vsub.s32 %v6957, %v6960
        %vm6962 = vcmp.lt.s32.totalorder %v6961, 0
        %v6963 = vsub.s32 0, %v6961
        %v6964 = vsel %vm6962, %v6963, %v6961
        %v6965 = vclz %v6964
        %v6966 = vsub.s32 %v6965, 2
        %vm6967 = vcmp.gt.s32.totalorder 0, %v6966
        %v6968 = vsel %vm6967, 0, %v6966
        %v6969 = vsub.s32 32, %v6968
        %v6970 = vshll.u32 %v6961, %v6968
        %v6971 = vshrl.u32 %v6953, %v6969
        %v6972 = vor.u32 %v6970, %v6971
        %v6973 = vsub.s32 4294967266, %v6968
        %v6974 = vadd.s32 %v6973, 127
        %v6975 = vshll.u32 %v6974, 23
        %v6976 = vor.u32 4788187, %v6975
        %v6977 = vand.u32 2147483647, %v6976
        %v6979 = vcvt.s32.f32 %v6972
        %v6980 = vmul.f32 %v6979, %v6977
        %v6981 = vxor.u32 %v6980, 2147483648
        %v6982 = vsel %vm6861, %v6981, %v6980
        %v6983 = vsub.s32 4, %v6959
        %v6984 = vsel %vm6861, %v6983, %v6959
        %v6985 = vsel %vm6860, %v6547, %v6982
        %v6986 = vsel %vm6860, 0, %v6984
        %v6987 = vmul.f32 %v6985, %v6985
        %v6988 = vmul.f32 %v6987, -0.001358992
        %v6989 = vadd.f32 %v6988, 0.041655596
        %v6990 = vmul.f32 %v6987, %v6989
        %v6991 = vadd.f32 %v6990, -0.4999988
        %v6992 = vmul.f32 %v6987, %v6991
        %v6993 = vadd.f32 1.0, %v6992
        %v6994 = vmul.f32 %v6985, %v6985
        %v6995 = vmul.f32 %v6994, -0.00019511016
        %v6996 = vadd.f32 %v6995, 0.008332121
        %v6997 = vmul.f32 %v6994, %v6996
        %v6998 = vadd.f32 %v6997, -0.16666654
        %v6999 = vmul.f32 %v6994, %v6998
        %v7000 = vadd.f32 %v6999, 1.0
        %v7001 = vmul.f32 %v7000, %v6985
        %vm7002 = vweird.f32 %v6547
        %v7003 = vadd.s32 %v6986, 3
        %v7004 = vand.u32 %v7003, 3
        %vm7005 = vcmp.lt.s32.totalorder %v7004, 2
        %vm7006 = vcmp.eq.s32.totalorder %v7004, 0
        %v7007 = vxor.u32 %v7001, 2147483648
        %v7008 = vsel %vm7006, %v6993, %v7007
        %vm7009 = vcmp.eq.s32.totalorder %v7004, 2
        %v7010 = vxor.u32 %v6993, 2147483648
        %v7011 = vsel %vm7009, %v7010, %v7001
        %v7012 = vsel %vm7005, %v7008, %v7011
        %v7013 = vsel %vm7002, nan, %v7012
        %v7014 = vand.u32 2147483647, %v6548
        %vm7015 = vcmp.le.f32.partialorder %v7014, 0.7853982
        %vm7016 = vcmp.lt.s32.totalorder %v6548, 0
        %v7017 = vand.u32 %v6548, 2139095040
        %v7018 = vshrl.u32 %v7017, 23
        %v7019 = vsub.s32 %v7018, 127
        %v7020 = vand.u32 2147483647, %v6548
        %v7021 = vand.u32 %v7020, 8388607
        %v7022 = vor.u32 %v7021, 8388608
        %v7023 = vsub.s32 0, %v7022
        %v7024 = vadd.s32 %v7019, 1
        %vm7025 = vcmp.gt.s32.totalorder %v7024, 0
        %v7026 = vsel %vm7025, %v7024, 0
        %v7027 = vshrl.u32 %v7026, 5
        %v7028 = vand.u32 %v7026, 31
        %v7029 = vsub.s32 32, %v7028
        %v7030 = vshrl.u32 683565275, %v7029
        %v7031 = vshll.u32 683565275, %v7028
        %v7032 = vshrl.u32 2475754826, %v7029
        %v7033 = vor.u32 %v7031, %v7032
        %v7034 = vshll.u32 2475754826, %v7028
        %v7035 = vshrl.u32 2131351028, %v7029
        %v7036 = vor.u32 %v7034, %v7035
        %v7037 = vshll.u32 2131351028, %v7028
        %v7038 = vshrl.u32 2102212464, %v7029
        %v7039 = vor.u32 %v7037, %v7038
        %v7040 = vshll.u32 2102212464, %v7028
        %v7041 = vshrl.u32 920167782, %v7029
        %v7042 = vor.u32 %v7040, %v7041
        %v7043 = vshll.u32 920167782, %v7028
        %v7044 = vshrl.u32 1326507024, %v7029
        %v7045 = vor.u32 %v7043, %v7044
        %vm7046 = vcmp.lt.s32.totalorder %v7027, 1
        %vm7047 = vcmp.lt.s32.totalorder %v7027, 2
        %vm7048 = vcmp.lt.s32.totalorder %v7027, 3
        %vm7049 = vcmp.lt.s32.totalorder %v7027, 4
        %v7050 = vsel %vm7046, %v7030, %v7033
        %v7051 = vsel %vm7049, %v7039, 2102212464
        %v7052 = vsel %vm7048, %v7036, %v7051
        %v7053 = vsel %vm7047, %v7050, %v7052
        %v7054 = vsel %vm7046, %v7033, %v7036
        %v7055 = vsel %vm7049, %v7042, 920167782
        %v7056 = vsel %vm7048, %v7039, %v7055
        %v7057 = vsel %vm7047, %v7054, %v7056
        %v7058 = vsel %vm7046, %v7036, %v7039
        %v7059 = vsel %vm7049, %v7045, 1326507024
        %v7060 = vsel %vm7048, %v7042, %v7059
        %v7061 = vsel %vm7047, %v7058, %v7060
        %v7062 = vshll.u32 %v7022, 8
        %v7063 = vand.u32 %v7062, 65535
        %v7064 = vshrl.u32 %v7062, 16
        %v7065 = vand.u32 %v7061, 65535
        %v7066 = vshrl.u32 %v7061, 16
        %v7067 = vmul.u32 %v7063, %v7065
        %v7068 = vmul.u32 %v7063, %v7066
        %v7069 = vmul.u32 %v7064, %v7065
        %v7070 = vmul.u32 %v7064, %v7066
        %v7071 = vshll.u32 %v7068, 16
        %v7072 = vshrl.u32 %v7068, 16
        %v7073 = vshll.u32 %v7069, 16
        %v7074 = vshrl.u32 %v7069, 16
        %vm7075 = vc.u32 %v7067, %v7071
        %v7076 = vsel %vm7075, 1, 0
        %v7077 = vadd.s32 %v7067, %v7071
        %v7078 = vadd.s32 %v7070, %v7076
        %vm7079 = vc.u32 %v7077, %v7073
        %v7080 = vsel %vm7079, 1, 0
        %v7081 = vadd.s32 %v7077, %v7073
        %v7082 = vadd.s32 %v7078, %v7080
        %v7083 = vadd.s32 %v7082, %v7072
        %v7084 = vadd.s32 %v7083, %v7074
        %v7085 = vand.u32 %v7062, 65535
        %v7086 = vshrl.u32 %v7062, 16
        %v7087 = vand.u32 %v7057, 65535
        %v7088 = vshrl.u32 %v7057, 16
        %v7089 = vmul.u32 %v7085, %v7087
        %v7090 = vmul.u32 %v7085, %v7088
        %v7091 = vmul.u32 %v7086, %v7087
        %v7092 = vmul.u32 %v7086, %v7088
        %v7093 = vshll.u32 %v7090, 16
        %v7094 = vshrl.u32 %v7090, 16
        %v7095 = vshll.u32 %v7091, 16
        %v7096 = vshrl.u32 %v7091, 16
        %vm7097 = vc.u32 %v7089, %v7093
        %v7098 = vsel %vm7097, 1, 0
        %v7099 = vadd.s32 %v7089, %v7093
        %v7100 = vadd.s32 %v7092, %v7098
        %vm7101 = vc.u32 %v7099, %v7095
        %v7102 = vsel %vm7101, 1, 0
        %v7103 = vadd.s32 %v7099, %v7095
        %v7104 = vadd.s32 %v7100, %v7102
        %v7105 = vadd.s32 %v7104, %v7094
        %v7106 = vadd.s32 %v7105, %v7096
        %v7107 = vmul.u32 %v7062, %v7053
        %v7108 = vadd.s32 %v7084, %v7103
        %vm7109 = vc.u32 %v7084, %v7103
        %v7110 = vadd.s32 %v7106, 1
        %v7111 = vsel %vm7109, %v7110, %v7106
        %v7112 = vadd.s32 %v7107, %v7111
        %v7113 = vadd.s32 %v7112, 536870912
        %v7114 = vshrl.u32 %v7113, 30
        %v7115 = vshll.u32 %v7114, 30
        %v7116 = vsub.s32 %v7112, %v7115
        %vm7117 = vcmp.lt.s32.totalorder %v7116, 0
        %v7118 = vsub.s32 0, %v7116
        %v7119 = vsel %vm7117, %v7118, %v7116
        %v7120 = vclz %v7119
        %v7121 = vsub.s32 %v7120, 2
        %vm7122 = vcmp.gt.s32.totalorder 0, %v7121
        %v7123 = vsel %vm7122, 0, %v7121
        %v7124 = vsub.s32 32, %v7123
        %v7125 = vshll.u32 %v7116, %v7123
        %v7126 = vshrl.u32 %v7108, %v7124
        %v7127 = vor.u32 %v7125, %v7126
        %v7128 = vsub.s32 4294967266, %v7123
        %v7129 = vadd.s32 %v7128, 127
        %v7130 = vshll.u32 %v7129, 23
        %v7131 = vor.u32 4788187, %v7130
        %v7132 = vand.u32 2147483647, %v7131
        %v7134 = vcvt.s32.f32 %v7127
        %v7135 = vmul.f32 %v7134, %v7132
        %v7136 = vxor.u32 %v7135, 2147483648
        %v7137 = vsel %vm7016, %v7136, %v7135
        %v7138 = vsub.s32 4, %v7114
        %v7139 = vsel %vm7016, %v7138, %v7114
        %v7140 = vsel %vm7015, %v6548, %v7137
        %v7141 = vsel %vm7015, 0, %v7139
        %v7142 = vmul.f32 %v7140, %v7140
        %v7143 = vmul.f32 %v7142, -0.001358992
        %v7144 = vadd.f32 %v7143, 0.041655596
        %v7145 = vmul.f32 %v7142, %v7144
        %v7146 = vadd.f32 %v7145, -0.4999988
        %v7147 = vmul.f32 %v7142, %v7146
        %v7148 = vadd.f32 1.0, %v7147
        %v7149 = vmul.f32 %v7140, %v7140
        %v7150 = vmul.f32 %v7149, -0.00019511016
        %v7151 = vadd.f32 %v7150, 0.008332121
        %v7152 = vmul.f32 %v7149, %v7151
        %v7153 = vadd.f32 %v7152, -0.16666654
        %v7154 = vmul.f32 %v7149, %v7153
        %v7155 = vadd.f32 %v7154, 1.0
        %v7156 = vmul.f32 %v7155, %v7140
        %vm7157 = vweird.f32 %v6548
        %v7158 = vadd.s32 %v7141, 3
        %v7159 = vand.u32 %v7158, 3
        %vm7160 = vcmp.lt.s32.totalorder %v7159, 2
        %vm7161 = vcmp.eq.s32.totalorder %v7159, 0
        %v7162 = vxor.u32 %v7156, 2147483648
        %v7163 = vsel %vm7161, %v7148, %v7162
        %vm7164 = vcmp.eq.s32.totalorder %v7159, 2
        %v7165 = vxor.u32 %v7148, 2147483648
        %v7166 = vsel %vm7164, %v7165, %v7156
        %v7167 = vsel %vm7160, %v7163, %v7166
        %v7168 = vsel %vm7157, nan, %v7167
        %v7173 = vrot.slane %v6703, 5
        %v7174 = vrot.slane %v6858, 5
        %v7175 = vrot.slane %v7013, 5
        %v7176 = vrot.slane %v7168, 5
        %7181 = vst [vmem:[#allocation3] sm:$0xc0] %v7173
        %7182 = vst [vmem:[#allocation3 + $0x8] sm:$0xc0] %v7174
        %7183 = vst [vmem:[#allocation3 + $0x10] sm:$0xc0] %v7175
        %7184 = vst [vmem:[#allocation3 + $0x18] sm:$0xc0] %v7176
        %7185 = vst [vmem:[#allocation3 + $0x20] sm:$0x1] %v7173
        %7186 = vst [vmem:[#allocation3 + $0x28] sm:$0x1] %v7174
        %7187 = vst [vmem:[#allocation3 + $0x30] sm:$0x1] %v7175
        %7188 = vst [vmem:[#allocation3 + $0x38] sm:$0x1] %v7176
        %v7189 = vand.u32 2147483647, %v6545
        %vm7190 = vcmp.le.f32.partialorder %v7189, 0.7853982
        %vm7191 = vcmp.lt.s32.totalorder %v6545, 0
        %v7192 = vand.u32 %v6545, 2139095040
        %v7193 = vshrl.u32 %v7192, 23
        %v7194 = vsub.s32 %v7193, 127
        %v7195 = vand.u32 2147483647, %v6545
        %v7196 = vand.u32 %v7195, 8388607
        %v7197 = vor.u32 %v7196, 8388608
        %v7198 = vsub.s32 0, %v7197
        %v7199 = vadd.s32 %v7194, 1
        %vm7200 = vcmp.gt.s32.totalorder %v7199, 0
        %v7201 = vsel %vm7200, %v7199, 0
        %v7202 = vshrl.u32 %v7201, 5
        %v7203 = vand.u32 %v7201, 31
        %v7204 = vsub.s32 32, %v7203
        %v7205 = vshrl.u32 683565275, %v7204
        %v7206 = vshll.u32 683565275, %v7203
        %v7207 = vshrl.u32 2475754826, %v7204
        %v7208 = vor.u32 %v7206, %v7207
        %v7209 = vshll.u32 2475754826, %v7203
        %v7210 = vshrl.u32 2131351028, %v7204
        %v7211 = vor.u32 %v7209, %v7210
        %v7212 = vshll.u32 2131351028, %v7203
        %v7213 = vshrl.u32 2102212464, %v7204
        %v7214 = vor.u32 %v7212, %v7213
        %v7215 = vshll.u32 2102212464, %v7203
        %v7216 = vshrl.u32 920167782, %v7204
        %v7217 = vor.u32 %v7215, %v7216
        %v7218 = vshll.u32 920167782, %v7203
        %v7219 = vshrl.u32 1326507024, %v7204
        %v7220 = vor.u32 %v7218, %v7219
        %vm7221 = vcmp.lt.s32.totalorder %v7202, 1
        %vm7222 = vcmp.lt.s32.totalorder %v7202, 2
        %vm7223 = vcmp.lt.s32.totalorder %v7202, 3
        %vm7224 = vcmp.lt.s32.totalorder %v7202, 4
        %v7225 = vsel %vm7221, %v7205, %v7208
        %v7226 = vsel %vm7224, %v7214, 2102212464
        %v7227 = vsel %vm7223, %v7211, %v7226
        %v7228 = vsel %vm7222, %v7225, %v7227
        %v7229 = vsel %vm7221, %v7208, %v7211
        %v7230 = vsel %vm7224, %v7217, 920167782
        %v7231 = vsel %vm7223, %v7214, %v7230
        %v7232 = vsel %vm7222, %v7229, %v7231
        %v7233 = vsel %vm7221, %v7211, %v7214
        %v7234 = vsel %vm7224, %v7220, 1326507024
        %v7235 = vsel %vm7223, %v7217, %v7234
        %v7236 = vsel %vm7222, %v7233, %v7235
        %v7237 = vshll.u32 %v7197, 8
        %v7238 = vand.u32 %v7237, 65535
        %v7239 = vshrl.u32 %v7237, 16
        %v7240 = vand.u32 %v7236, 65535
        %v7241 = vshrl.u32 %v7236, 16
        %v7242 = vmul.u32 %v7238, %v7240
        %v7243 = vmul.u32 %v7238, %v7241
        %v7244 = vmul.u32 %v7239, %v7240
        %v7245 = vmul.u32 %v7239, %v7241
        %v7246 = vshll.u32 %v7243, 16
        %v7247 = vshrl.u32 %v7243, 16
        %v7248 = vshll.u32 %v7244, 16
        %v7249 = vshrl.u32 %v7244, 16
        %vm7250 = vc.u32 %v7242, %v7246
        %v7251 = vsel %vm7250, 1, 0
        %v7252 = vadd.s32 %v7242, %v7246
        %v7253 = vadd.s32 %v7245, %v7251
        %vm7254 = vc.u32 %v7252, %v7248
        %v7255 = vsel %vm7254, 1, 0
        %v7256 = vadd.s32 %v7252, %v7248
        %v7257 = vadd.s32 %v7253, %v7255
        %v7258 = vadd.s32 %v7257, %v7247
        %v7259 = vadd.s32 %v7258, %v7249
        %v7260 = vand.u32 %v7237, 65535
        %v7261 = vshrl.u32 %v7237, 16
        %v7262 = vand.u32 %v7232, 65535
        %v7263 = vshrl.u32 %v7232, 16
        %v7264 = vmul.u32 %v7260, %v7262
        %v7265 = vmul.u32 %v7260, %v7263
        %v7266 = vmul.u32 %v7261, %v7262
        %v7267 = vmul.u32 %v7261, %v7263
        %v7268 = vshll.u32 %v7265, 16
        %v7269 = vshrl.u32 %v7265, 16
        %v7270 = vshll.u32 %v7266, 16
        %v7271 = vshrl.u32 %v7266, 16
        %vm7272 = vc.u32 %v7264, %v7268
        %v7273 = vsel %vm7272, 1, 0
        %v7274 = vadd.s32 %v7264, %v7268
        %v7275 = vadd.s32 %v7267, %v7273
        %vm7276 = vc.u32 %v7274, %v7270
        %v7277 = vsel %vm7276, 1, 0
        %v7278 = vadd.s32 %v7274, %v7270
        %v7279 = vadd.s32 %v7275, %v7277
        %v7280 = vadd.s32 %v7279, %v7269
        %v7281 = vadd.s32 %v7280, %v7271
        %v7282 = vmul.u32 %v7237, %v7228
        %v7283 = vadd.s32 %v7259, %v7278
        %vm7284 = vc.u32 %v7259, %v7278
        %v7285 = vadd.s32 %v7281, 1
        %v7286 = vsel %vm7284, %v7285, %v7281
        %v7287 = vadd.s32 %v7282, %v7286
        %v7288 = vadd.s32 %v7287, 536870912
        %v7289 = vshrl.u32 %v7288, 30
        %v7290 = vshll.u32 %v7289, 30
        %v7291 = vsub.s32 %v7287, %v7290
        %vm7292 = vcmp.lt.s32.totalorder %v7291, 0
        %v7293 = vsub.s32 0, %v7291
        %v7294 = vsel %vm7292, %v7293, %v7291
        %v7295 = vclz %v7294
        %v7296 = vsub.s32 %v7295, 2
        %vm7297 = vcmp.gt.s32.totalorder 0, %v7296
        %v7298 = vsel %vm7297, 0, %v7296
        %v7299 = vsub.s32 32, %v7298
        %v7300 = vshll.u32 %v7291, %v7298
        %v7301 = vshrl.u32 %v7283, %v7299
        %v7302 = vor.u32 %v7300, %v7301
        %v7303 = vsub.s32 4294967266, %v7298
        %v7304 = vadd.s32 %v7303, 127
        %v7305 = vshll.u32 %v7304, 23
        %v7306 = vor.u32 4788187, %v7305
        %v7307 = vand.u32 2147483647, %v7306
        %v7309 = vcvt.s32.f32 %v7302
        %v7310 = vmul.f32 %v7309, %v7307
        %v7311 = vxor.u32 %v7310, 2147483648
        %v7312 = vsel %vm7191, %v7311, %v7310
        %v7313 = vsub.s32 4, %v7289
        %v7314 = vsel %vm7191, %v7313, %v7289
        %v7315 = vsel %vm7190, %v6545, %v7312
        %v7316 = vsel %vm7190, 0, %v7314
        %v7317 = vmul.f32 %v7315, %v7315
        %v7318 = vmul.f32 %v7317, -0.001358992
        %v7319 = vadd.f32 %v7318, 0.041655596
        %v7320 = vmul.f32 %v7317, %v7319
        %v7321 = vadd.f32 %v7320, -0.4999988
        %v7322 = vmul.f32 %v7317, %v7321
        %v7323 = vadd.f32 1.0, %v7322
        %v7324 = vmul.f32 %v7315, %v7315
        %v7325 = vmul.f32 %v7324, -0.00019511016
        %v7326 = vadd.f32 %v7325, 0.008332121
        %v7327 = vmul.f32 %v7324, %v7326
        %v7328 = vadd.f32 %v7327, -0.16666654
        %v7329 = vmul.f32 %v7324, %v7328
        %v7330 = vadd.f32 %v7329, 1.0
        %v7331 = vmul.f32 %v7330, %v7315
        %vm7332 = vweird.f32 %v6545
        %v7333 = vand.u32 %v7316, 3
        %vm7334 = vcmp.lt.s32.totalorder %v7333, 2
        %vm7335 = vcmp.eq.s32.totalorder %v7333, 0
        %v7336 = vxor.u32 %v7331, 2147483648
        %v7337 = vsel %vm7335, %v7323, %v7336
        %vm7338 = vcmp.eq.s32.totalorder %v7333, 2
        %v7339 = vxor.u32 %v7323, 2147483648
        %v7340 = vsel %vm7338, %v7339, %v7331
        %v7341 = vsel %vm7334, %v7337, %v7340
        %v7342 = vsel %vm7332, nan, %v7341
        %v7343 = vand.u32 2147483647, %v6546
        %vm7344 = vcmp.le.f32.partialorder %v7343, 0.7853982
        %vm7345 = vcmp.lt.s32.totalorder %v6546, 0
        %v7346 = vand.u32 %v6546, 2139095040
        %v7347 = vshrl.u32 %v7346, 23
        %v7348 = vsub.s32 %v7347, 127
        %v7349 = vand.u32 2147483647, %v6546
        %v7350 = vand.u32 %v7349, 8388607
        %v7351 = vor.u32 %v7350, 8388608
        %v7352 = vsub.s32 0, %v7351
        %v7353 = vadd.s32 %v7348, 1
        %vm7354 = vcmp.gt.s32.totalorder %v7353, 0
        %v7355 = vsel %vm7354, %v7353, 0
        %v7356 = vshrl.u32 %v7355, 5
        %v7357 = vand.u32 %v7355, 31
        %v7358 = vsub.s32 32, %v7357
        %v7359 = vshrl.u32 683565275, %v7358
        %v7360 = vshll.u32 683565275, %v7357
        %v7361 = vshrl.u32 2475754826, %v7358
        %v7362 = vor.u32 %v7360, %v7361
        %v7363 = vshll.u32 2475754826, %v7357
        %v7364 = vshrl.u32 2131351028, %v7358
        %v7365 = vor.u32 %v7363, %v7364
        %v7366 = vshll.u32 2131351028, %v7357
        %v7367 = vshrl.u32 2102212464, %v7358
        %v7368 = vor.u32 %v7366, %v7367
        %v7369 = vshll.u32 2102212464, %v7357
        %v7370 = vshrl.u32 920167782, %v7358
        %v7371 = vor.u32 %v7369, %v7370
        %v7372 = vshll.u32 920167782, %v7357
        %v7373 = vshrl.u32 1326507024, %v7358
        %v7374 = vor.u32 %v7372, %v7373
        %vm7375 = vcmp.lt.s32.totalorder %v7356, 1
        %vm7376 = vcmp.lt.s32.totalorder %v7356, 2
        %vm7377 = vcmp.lt.s32.totalorder %v7356, 3
        %vm7378 = vcmp.lt.s32.totalorder %v7356, 4
        %v7379 = vsel %vm7375, %v7359, %v7362
        %v7380 = vsel %vm7378, %v7368, 2102212464
        %v7381 = vsel %vm7377, %v7365, %v7380
        %v7382 = vsel %vm7376, %v7379, %v7381
        %v7383 = vsel %vm7375, %v7362, %v7365
        %v7384 = vsel %vm7378, %v7371, 920167782
        %v7385 = vsel %vm7377, %v7368, %v7384
        %v7386 = vsel %vm7376, %v7383, %v7385
        %v7387 = vsel %vm7375, %v7365, %v7368
        %v7388 = vsel %vm7378, %v7374, 1326507024
        %v7389 = vsel %vm7377, %v7371, %v7388
        %v7390 = vsel %vm7376, %v7387, %v7389
        %v7391 = vshll.u32 %v7351, 8
        %v7392 = vand.u32 %v7391, 65535
        %v7393 = vshrl.u32 %v7391, 16
        %v7394 = vand.u32 %v7390, 65535
        %v7395 = vshrl.u32 %v7390, 16
        %v7396 = vmul.u32 %v7392, %v7394
        %v7397 = vmul.u32 %v7392, %v7395
        %v7398 = vmul.u32 %v7393, %v7394
        %v7399 = vmul.u32 %v7393, %v7395
        %v7400 = vshll.u32 %v7397, 16
        %v7401 = vshrl.u32 %v7397, 16
        %v7402 = vshll.u32 %v7398, 16
        %v7403 = vshrl.u32 %v7398, 16
        %vm7404 = vc.u32 %v7396, %v7400
        %v7405 = vsel %vm7404, 1, 0
        %v7406 = vadd.s32 %v7396, %v7400
        %v7407 = vadd.s32 %v7399, %v7405
        %vm7408 = vc.u32 %v7406, %v7402
        %v7409 = vsel %vm7408, 1, 0
        %v7410 = vadd.s32 %v7406, %v7402
        %v7411 = vadd.s32 %v7407, %v7409
        %v7412 = vadd.s32 %v7411, %v7401
        %v7413 = vadd.s32 %v7412, %v7403
        %v7414 = vand.u32 %v7391, 65535
        %v7415 = vshrl.u32 %v7391, 16
        %v7416 = vand.u32 %v7386, 65535
        %v7417 = vshrl.u32 %v7386, 16
        %v7418 = vmul.u32 %v7414, %v7416
        %v7419 = vmul.u32 %v7414, %v7417
        %v7420 = vmul.u32 %v7415, %v7416
        %v7421 = vmul.u32 %v7415, %v7417
        %v7422 = vshll.u32 %v7419, 16
        %v7423 = vshrl.u32 %v7419, 16
        %v7424 = vshll.u32 %v7420, 16
        %v7425 = vshrl.u32 %v7420, 16
        %vm7426 = vc.u32 %v7418, %v7422
        %v7427 = vsel %vm7426, 1, 0
        %v7428 = vadd.s32 %v7418, %v7422
        %v7429 = vadd.s32 %v7421, %v7427
        %vm7430 = vc.u32 %v7428, %v7424
        %v7431 = vsel %vm7430, 1, 0
        %v7432 = vadd.s32 %v7428, %v7424
        %v7433 = vadd.s32 %v7429, %v7431
        %v7434 = vadd.s32 %v7433, %v7423
        %v7435 = vadd.s32 %v7434, %v7425
        %v7436 = vmul.u32 %v7391, %v7382
        %v7437 = vadd.s32 %v7413, %v7432
        %vm7438 = vc.u32 %v7413, %v7432
        %v7439 = vadd.s32 %v7435, 1
        %v7440 = vsel %vm7438, %v7439, %v7435
        %v7441 = vadd.s32 %v7436, %v7440
        %v7442 = vadd.s32 %v7441, 536870912
        %v7443 = vshrl.u32 %v7442, 30
        %v7444 = vshll.u32 %v7443, 30
        %v7445 = vsub.s32 %v7441, %v7444
        %vm7446 = vcmp.lt.s32.totalorder %v7445, 0
        %v7447 = vsub.s32 0, %v7445
        %v7448 = vsel %vm7446, %v7447, %v7445
        %v7449 = vclz %v7448
        %v7450 = vsub.s32 %v7449, 2
        %vm7451 = vcmp.gt.s32.totalorder 0, %v7450
        %v7452 = vsel %vm7451, 0, %v7450
        %v7453 = vsub.s32 32, %v7452
        %v7454 = vshll.u32 %v7445, %v7452
        %v7455 = vshrl.u32 %v7437, %v7453
        %v7456 = vor.u32 %v7454, %v7455
        %v7457 = vsub.s32 4294967266, %v7452
        %v7458 = vadd.s32 %v7457, 127
        %v7459 = vshll.u32 %v7458, 23
        %v7460 = vor.u32 4788187, %v7459
        %v7461 = vand.u32 2147483647, %v7460
        %v7463 = vcvt.s32.f32 %v7456
        %v7464 = vmul.f32 %v7463, %v7461
        %v7465 = vxor.u32 %v7464, 2147483648
        %v7466 = vsel %vm7345, %v7465, %v7464
        %v7467 = vsub.s32 4, %v7443
        %v7468 = vsel %vm7345, %v7467, %v7443
        %v7469 = vsel %vm7344, %v6546, %v7466
        %v7470 = vsel %vm7344, 0, %v7468
        %v7471 = vmul.f32 %v7469, %v7469
        %v7472 = vmul.f32 %v7471, -0.001358992
        %v7473 = vadd.f32 %v7472, 0.041655596
        %v7474 = vmul.f32 %v7471, %v7473
        %v7475 = vadd.f32 %v7474, -0.4999988
        %v7476 = vmul.f32 %v7471, %v7475
        %v7477 = vadd.f32 1.0, %v7476
        %v7478 = vmul.f32 %v7469, %v7469
        %v7479 = vmul.f32 %v7478, -0.00019511016
        %v7480 = vadd.f32 %v7479, 0.008332121
        %v7481 = vmul.f32 %v7478, %v7480
        %v7482 = vadd.f32 %v7481, -0.16666654
        %v7483 = vmul.f32 %v7478, %v7482
        %v7484 = vadd.f32 %v7483, 1.0
        %v7485 = vmul.f32 %v7484, %v7469
        %vm7486 = vweird.f32 %v6546
        %v7487 = vand.u32 %v7470, 3
        %vm7488 = vcmp.lt.s32.totalorder %v7487, 2
        %vm7489 = vcmp.eq.s32.totalorder %v7487, 0
        %v7490 = vxor.u32 %v7485, 2147483648
        %v7491 = vsel %vm7489, %v7477, %v7490
        %vm7492 = vcmp.eq.s32.totalorder %v7487, 2
        %v7493 = vxor.u32 %v7477, 2147483648
        %v7494 = vsel %vm7492, %v7493, %v7485
        %v7495 = vsel %vm7488, %v7491, %v7494
        %v7496 = vsel %vm7486, nan, %v7495
        %v7497 = vand.u32 2147483647, %v6547
        %vm7498 = vcmp.le.f32.partialorder %v7497, 0.7853982
        %vm7499 = vcmp.lt.s32.totalorder %v6547, 0
        %v7500 = vand.u32 %v6547, 2139095040
        %v7501 = vshrl.u32 %v7500, 23
        %v7502 = vsub.s32 %v7501, 127
        %v7503 = vand.u32 2147483647, %v6547
        %v7504 = vand.u32 %v7503, 8388607
        %v7505 = vor.u32 %v7504, 8388608
        %v7506 = vsub.s32 0, %v7505
        %v7507 = vadd.s32 %v7502, 1
        %vm7508 = vcmp.gt.s32.totalorder %v7507, 0
        %v7509 = vsel %vm7508, %v7507, 0
        %v7510 = vshrl.u32 %v7509, 5
        %v7511 = vand.u32 %v7509, 31
        %v7512 = vsub.s32 32, %v7511
        %v7513 = vshrl.u32 683565275, %v7512
        %v7514 = vshll.u32 683565275, %v7511
        %v7515 = vshrl.u32 2475754826, %v7512
        %v7516 = vor.u32 %v7514, %v7515
        %v7517 = vshll.u32 2475754826, %v7511
        %v7518 = vshrl.u32 2131351028, %v7512
        %v7519 = vor.u32 %v7517, %v7518
        %v7520 = vshll.u32 2131351028, %v7511
        %v7521 = vshrl.u32 2102212464, %v7512
        %v7522 = vor.u32 %v7520, %v7521
        %v7523 = vshll.u32 2102212464, %v7511
        %v7524 = vshrl.u32 920167782, %v7512
        %v7525 = vor.u32 %v7523, %v7524
        %v7526 = vshll.u32 920167782, %v7511
        %v7527 = vshrl.u32 1326507024, %v7512
        %v7528 = vor.u32 %v7526, %v7527
        %vm7529 = vcmp.lt.s32.totalorder %v7510, 1
        %vm7530 = vcmp.lt.s32.totalorder %v7510, 2
        %vm7531 = vcmp.lt.s32.totalorder %v7510, 3
        %vm7532 = vcmp.lt.s32.totalorder %v7510, 4
        %v7533 = vsel %vm7529, %v7513, %v7516
        %v7534 = vsel %vm7532, %v7522, 2102212464
        %v7535 = vsel %vm7531, %v7519, %v7534
        %v7536 = vsel %vm7530, %v7533, %v7535
        %v7537 = vsel %vm7529, %v7516, %v7519
        %v7538 = vsel %vm7532, %v7525, 920167782
        %v7539 = vsel %vm7531, %v7522, %v7538
        %v7540 = vsel %vm7530, %v7537, %v7539
        %v7541 = vsel %vm7529, %v7519, %v7522
        %v7542 = vsel %vm7532, %v7528, 1326507024
        %v7543 = vsel %vm7531, %v7525, %v7542
        %v7544 = vsel %vm7530, %v7541, %v7543
        %v7545 = vshll.u32 %v7505, 8
        %v7546 = vand.u32 %v7545, 65535
        %v7547 = vshrl.u32 %v7545, 16
        %v7548 = vand.u32 %v7544, 65535
        %v7549 = vshrl.u32 %v7544, 16
        %v7550 = vmul.u32 %v7546, %v7548
        %v7551 = vmul.u32 %v7546, %v7549
        %v7552 = vmul.u32 %v7547, %v7548
        %v7553 = vmul.u32 %v7547, %v7549
        %v7554 = vshll.u32 %v7551, 16
        %v7555 = vshrl.u32 %v7551, 16
        %v7556 = vshll.u32 %v7552, 16
        %v7557 = vshrl.u32 %v7552, 16
        %vm7558 = vc.u32 %v7550, %v7554
        %v7559 = vsel %vm7558, 1, 0
        %v7560 = vadd.s32 %v7550, %v7554
        %v7561 = vadd.s32 %v7553, %v7559
        %vm7562 = vc.u32 %v7560, %v7556
        %v7563 = vsel %vm7562, 1, 0
        %v7564 = vadd.s32 %v7560, %v7556
        %v7565 = vadd.s32 %v7561, %v7563
        %v7566 = vadd.s32 %v7565, %v7555
        %v7567 = vadd.s32 %v7566, %v7557
        %v7568 = vand.u32 %v7545, 65535
        %v7569 = vshrl.u32 %v7545, 16
        %v7570 = vand.u32 %v7540, 65535
        %v7571 = vshrl.u32 %v7540, 16
        %v7572 = vmul.u32 %v7568, %v7570
        %v7573 = vmul.u32 %v7568, %v7571
        %v7574 = vmul.u32 %v7569, %v7570
        %v7575 = vmul.u32 %v7569, %v7571
        %v7576 = vshll.u32 %v7573, 16
        %v7577 = vshrl.u32 %v7573, 16
        %v7578 = vshll.u32 %v7574, 16
        %v7579 = vshrl.u32 %v7574, 16
        %vm7580 = vc.u32 %v7572, %v7576
        %v7581 = vsel %vm7580, 1, 0
        %v7582 = vadd.s32 %v7572, %v7576
        %v7583 = vadd.s32 %v7575, %v7581
        %vm7584 = vc.u32 %v7582, %v7578
        %v7585 = vsel %vm7584, 1, 0
        %v7586 = vadd.s32 %v7582, %v7578
        %v7587 = vadd.s32 %v7583, %v7585
        %v7588 = vadd.s32 %v7587, %v7577
        %v7589 = vadd.s32 %v7588, %v7579
        %v7590 = vmul.u32 %v7545, %v7536
        %v7591 = vadd.s32 %v7567, %v7586
        %vm7592 = vc.u32 %v7567, %v7586
        %v7593 = vadd.s32 %v7589, 1
        %v7594 = vsel %vm7592, %v7593, %v7589
        %v7595 = vadd.s32 %v7590, %v7594
        %v7596 = vadd.s32 %v7595, 536870912
        %v7597 = vshrl.u32 %v7596, 30
        %v7598 = vshll.u32 %v7597, 30
        %v7599 = vsub.s32 %v7595, %v7598
        %vm7600 = vcmp.lt.s32.totalorder %v7599, 0
        %v7601 = vsub.s32 0, %v7599
        %v7602 = vsel %vm7600, %v7601, %v7599
        %v7603 = vclz %v7602
        %v7604 = vsub.s32 %v7603, 2
        %vm7605 = vcmp.gt.s32.totalorder 0, %v7604
        %v7606 = vsel %vm7605, 0, %v7604
        %v7607 = vsub.s32 32, %v7606
        %v7608 = vshll.u32 %v7599, %v7606
        %v7609 = vshrl.u32 %v7591, %v7607
        %v7610 = vor.u32 %v7608, %v7609
        %v7611 = vsub.s32 4294967266, %v7606
        %v7612 = vadd.s32 %v7611, 127
        %v7613 = vshll.u32 %v7612, 23
        %v7614 = vor.u32 4788187, %v7613
        %v7615 = vand.u32 2147483647, %v7614
        %v7617 = vcvt.s32.f32 %v7610
        %v7618 = vmul.f32 %v7617, %v7615
        %v7619 = vxor.u32 %v7618, 2147483648
        %v7620 = vsel %vm7499, %v7619, %v7618
        %v7621 = vsub.s32 4, %v7597
        %v7622 = vsel %vm7499, %v7621, %v7597
        %v7623 = vsel %vm7498, %v6547, %v7620
        %v7624 = vsel %vm7498, 0, %v7622
        %v7625 = vmul.f32 %v7623, %v7623
        %v7626 = vmul.f32 %v7625, -0.001358992
        %v7627 = vadd.f32 %v7626, 0.041655596
        %v7628 = vmul.f32 %v7625, %v7627
        %v7629 = vadd.f32 %v7628, -0.4999988
        %v7630 = vmul.f32 %v7625, %v7629
        %v7631 = vadd.f32 1.0, %v7630
        %v7632 = vmul.f32 %v7623, %v7623
        %v7633 = vmul.f32 %v7632, -0.00019511016
        %v7634 = vadd.f32 %v7633, 0.008332121
        %v7635 = vmul.f32 %v7632, %v7634
        %v7636 = vadd.f32 %v7635, -0.16666654
        %v7637 = vmul.f32 %v7632, %v7636
        %v7638 = vadd.f32 %v7637, 1.0
        %v7639 = vmul.f32 %v7638, %v7623
        %vm7640 = vweird.f32 %v6547
        %v7641 = vand.u32 %v7624, 3
        %vm7642 = vcmp.lt.s32.totalorder %v7641, 2
        %vm7643 = vcmp.eq.s32.totalorder %v7641, 0
        %v7644 = vxor.u32 %v7639, 2147483648
        %v7645 = vsel %vm7643, %v7631, %v7644
        %vm7646 = vcmp.eq.s32.totalorder %v7641, 2
        %v7647 = vxor.u32 %v7631, 2147483648
        %v7648 = vsel %vm7646, %v7647, %v7639
        %v7649 = vsel %vm7642, %v7645, %v7648
        %v7650 = vsel %vm7640, nan, %v7649
        %v7651 = vand.u32 2147483647, %v6548
        %vm7652 = vcmp.le.f32.partialorder %v7651, 0.7853982
        %vm7653 = vcmp.lt.s32.totalorder %v6548, 0
        %v7654 = vand.u32 %v6548, 2139095040
        %v7655 = vshrl.u32 %v7654, 23
        %v7656 = vsub.s32 %v7655, 127
        %v7657 = vand.u32 2147483647, %v6548
        %v7658 = vand.u32 %v7657, 8388607
        %v7659 = vor.u32 %v7658, 8388608
        %v7660 = vsub.s32 0, %v7659
        %v7661 = vadd.s32 %v7656, 1
        %vm7662 = vcmp.gt.s32.totalorder %v7661, 0
        %v7663 = vsel %vm7662, %v7661, 0
        %v7664 = vshrl.u32 %v7663, 5
        %v7665 = vand.u32 %v7663, 31
        %v7666 = vsub.s32 32, %v7665
        %v7667 = vshrl.u32 683565275, %v7666
        %v7668 = vshll.u32 683565275, %v7665
        %v7669 = vshrl.u32 2475754826, %v7666
        %v7670 = vor.u32 %v7668, %v7669
        %v7671 = vshll.u32 2475754826, %v7665
        %v7672 = vshrl.u32 2131351028, %v7666
        %v7673 = vor.u32 %v7671, %v7672
        %v7674 = vshll.u32 2131351028, %v7665
        %v7675 = vshrl.u32 2102212464, %v7666
        %v7676 = vor.u32 %v7674, %v7675
        %v7677 = vshll.u32 2102212464, %v7665
        %v7678 = vshrl.u32 920167782, %v7666
        %v7679 = vor.u32 %v7677, %v7678
        %v7680 = vshll.u32 920167782, %v7665
        %v7681 = vshrl.u32 1326507024, %v7666
        %v7682 = vor.u32 %v7680, %v7681
        %vm7683 = vcmp.lt.s32.totalorder %v7664, 1
        %vm7684 = vcmp.lt.s32.totalorder %v7664, 2
        %vm7685 = vcmp.lt.s32.totalorder %v7664, 3
        %vm7686 = vcmp.lt.s32.totalorder %v7664, 4
        %v7687 = vsel %vm7683, %v7667, %v7670
        %v7688 = vsel %vm7686, %v7676, 2102212464
        %v7689 = vsel %vm7685, %v7673, %v7688
        %v7690 = vsel %vm7684, %v7687, %v7689
        %v7691 = vsel %vm7683, %v7670, %v7673
        %v7692 = vsel %vm7686, %v7679, 920167782
        %v7693 = vsel %vm7685, %v7676, %v7692
        %v7694 = vsel %vm7684, %v7691, %v7693
        %v7695 = vsel %vm7683, %v7673, %v7676
        %v7696 = vsel %vm7686, %v7682, 1326507024
        %v7697 = vsel %vm7685, %v7679, %v7696
        %v7698 = vsel %vm7684, %v7695, %v7697
        %v7699 = vshll.u32 %v7659, 8
        %v7700 = vand.u32 %v7699, 65535
        %v7701 = vshrl.u32 %v7699, 16
        %v7702 = vand.u32 %v7698, 65535
        %v7703 = vshrl.u32 %v7698, 16
        %v7704 = vmul.u32 %v7700, %v7702
        %v7705 = vmul.u32 %v7700, %v7703
        %v7706 = vmul.u32 %v7701, %v7702
        %v7707 = vmul.u32 %v7701, %v7703
        %v7708 = vshll.u32 %v7705, 16
        %v7709 = vshrl.u32 %v7705, 16
        %v7710 = vshll.u32 %v7706, 16
        %v7711 = vshrl.u32 %v7706, 16
        %vm7712 = vc.u32 %v7704, %v7708
        %v7713 = vsel %vm7712, 1, 0
        %v7714 = vadd.s32 %v7704, %v7708
        %v7715 = vadd.s32 %v7707, %v7713
        %vm7716 = vc.u32 %v7714, %v7710
        %v7717 = vsel %vm7716, 1, 0
        %v7718 = vadd.s32 %v7714, %v7710
        %v7719 = vadd.s32 %v7715, %v7717
        %v7720 = vadd.s32 %v7719, %v7709
        %v7721 = vadd.s32 %v7720, %v7711
        %v7722 = vand.u32 %v7699, 65535
        %v7723 = vshrl.u32 %v7699, 16
        %v7724 = vand.u32 %v7694, 65535
        %v7725 = vshrl.u32 %v7694, 16
        %v7726 = vmul.u32 %v7722, %v7724
        %v7727 = vmul.u32 %v7722, %v7725
        %v7728 = vmul.u32 %v7723, %v7724
        %v7729 = vmul.u32 %v7723, %v7725
        %v7730 = vshll.u32 %v7727, 16
        %v7731 = vshrl.u32 %v7727, 16
        %v7732 = vshll.u32 %v7728, 16
        %v7733 = vshrl.u32 %v7728, 16
        %vm7734 = vc.u32 %v7726, %v7730
        %v7735 = vsel %vm7734, 1, 0
        %v7736 = vadd.s32 %v7726, %v7730
        %v7737 = vadd.s32 %v7729, %v7735
        %vm7738 = vc.u32 %v7736, %v7732
        %v7739 = vsel %vm7738, 1, 0
        %v7740 = vadd.s32 %v7736, %v7732
        %v7741 = vadd.s32 %v7737, %v7739
        %v7742 = vadd.s32 %v7741, %v7731
        %v7743 = vadd.s32 %v7742, %v7733
        %v7744 = vmul.u32 %v7699, %v7690
        %v7745 = vadd.s32 %v7721, %v7740
        %vm7746 = vc.u32 %v7721, %v7740
        %v7747 = vadd.s32 %v7743, 1
        %v7748 = vsel %vm7746, %v7747, %v7743
        %v7749 = vadd.s32 %v7744, %v7748
        %v7750 = vadd.s32 %v7749, 536870912
        %v7751 = vshrl.u32 %v7750, 30
        %v7752 = vshll.u32 %v7751, 30
        %v7753 = vsub.s32 %v7749, %v7752
        %vm7754 = vcmp.lt.s32.totalorder %v7753, 0
        %v7755 = vsub.s32 0, %v7753
        %v7756 = vsel %vm7754, %v7755, %v7753
        %v7757 = vclz %v7756
        %v7758 = vsub.s32 %v7757, 2
        %vm7759 = vcmp.gt.s32.totalorder 0, %v7758
        %v7760 = vsel %vm7759, 0, %v7758
        %v7761 = vsub.s32 32, %v7760
        %v7762 = vshll.u32 %v7753, %v7760
        %v7763 = vshrl.u32 %v7745, %v7761
        %v7764 = vor.u32 %v7762, %v7763
        %v7765 = vsub.s32 4294967266, %v7760
        %v7766 = vadd.s32 %v7765, 127
        %v7767 = vshll.u32 %v7766, 23
        %v7768 = vor.u32 4788187, %v7767
        %v7769 = vand.u32 2147483647, %v7768
        %v7771 = vcvt.s32.f32 %v7764
        %v7772 = vmul.f32 %v7771, %v7769
        %v7773 = vxor.u32 %v7772, 2147483648
        %v7774 = vsel %vm7653, %v7773, %v7772
        %v7775 = vsub.s32 4, %v7751
        %v7776 = vsel %vm7653, %v7775, %v7751
        %v7777 = vsel %vm7652, %v6548, %v7774
        %v7778 = vsel %vm7652, 0, %v7776
        %v7779 = vmul.f32 %v7777, %v7777
        %v7780 = vmul.f32 %v7779, -0.001358992
        %v7781 = vadd.f32 %v7780, 0.041655596
        %v7782 = vmul.f32 %v7779, %v7781
        %v7783 = vadd.f32 %v7782, -0.4999988
        %v7784 = vmul.f32 %v7779, %v7783
        %v7785 = vadd.f32 1.0, %v7784
        %v7786 = vmul.f32 %v7777, %v7777
        %v7787 = vmul.f32 %v7786, -0.00019511016
        %v7788 = vadd.f32 %v7787, 0.008332121
        %v7789 = vmul.f32 %v7786, %v7788
        %v7790 = vadd.f32 %v7789, -0.16666654
        %v7791 = vmul.f32 %v7786, %v7790
        %v7792 = vadd.f32 %v7791, 1.0
        %v7793 = vmul.f32 %v7792, %v7777
        %vm7794 = vweird.f32 %v6548
        %v7795 = vand.u32 %v7778, 3
        %vm7796 = vcmp.lt.s32.totalorder %v7795, 2
        %vm7797 = vcmp.eq.s32.totalorder %v7795, 0
        %v7798 = vxor.u32 %v7793, 2147483648
        %v7799 = vsel %vm7797, %v7785, %v7798
        %vm7800 = vcmp.eq.s32.totalorder %v7795, 2
        %v7801 = vxor.u32 %v7785, 2147483648
        %v7802 = vsel %vm7800, %v7801, %v7793
        %v7803 = vsel %vm7796, %v7799, %v7802
        %v7804 = vsel %vm7794, nan, %v7803
        %v7809 = vrot.slane %v7342, 7
        %v7810 = vrot.slane %v7496, 7
        %v7811 = vrot.slane %v7650, 7
        %v7812 = vrot.slane %v7804, 7
        %7817 = vst [vmem:[#allocation3 + $0x20] sm:$0x70] %v7809
        %7818 = vst [vmem:[#allocation3 + $0x28] sm:$0x70] %v7810
        %7819 = vst [vmem:[#allocation3 + $0x30] sm:$0x70] %v7811
        %7820 = vst [vmem:[#allocation3 + $0x38] sm:$0x70] %v7812
        %v7821 = vld [vmem:[#allocation2] sm:$0xff]
        %v7822 = vld [vmem:[#allocation2 + $0x8] sm:$0xff]
        %v7823 = vld [vmem:[#allocation2 + $0x10] sm:$0xff]
        %v7824 = vld [vmem:[#allocation2 + $0x18] sm:$0xff]
        %v7825 = vld [vmem:[#allocation2 + $0x20] sm:$0xff]
        %v7826 = vld [vmem:[#allocation2 + $0x28] sm:$0xff]
        %v7827 = vld [vmem:[#allocation2 + $0x30] sm:$0xff]
        %v7828 = vld [vmem:[#allocation2 + $0x38] sm:$0xff]
        %v7829 = vld [vmem:[#allocation2 + $0x40] sm:$0xff]
        %v7830 = vld [vmem:[#allocation2 + $0x48] sm:$0xff]
        %v7831 = vld [vmem:[#allocation2 + $0x50] sm:$0xff]
        %v7832 = vld [vmem:[#allocation2 + $0x58] sm:$0xff]
        %v7833 = vld [vmem:[#allocation2 + $0x60] sm:$0x7]
        %v7834 = vld [vmem:[#allocation2 + $0x68] sm:$0x7]
        %v7835 = vld [vmem:[#allocation2 + $0x70] sm:$0x7]
        %v7836 = vld [vmem:[#allocation2 + $0x78] sm:$0x7]
        %v7837 = vld [vmem:[#allocation3] sm:$0xff]
        %v7838 = vld [vmem:[#allocation3 + $0x8] sm:$0xff]
        %v7839 = vld [vmem:[#allocation3 + $0x10] sm:$0xff]
        %v7840 = vld [vmem:[#allocation3 + $0x18] sm:$0xff]
        %v7841 = vld [vmem:[#allocation3 + $0x20] sm:$0x7f]
        %v7842 = vld [vmem:[#allocation3 + $0x28] sm:$0x7f]
        %v7843 = vld [vmem:[#allocation3 + $0x30] sm:$0x7f]
        %v7844 = vld [vmem:[#allocation3 + $0x38] sm:$0x7f]
        %v7845 = vld [vmem:[#allocation7] sm:$0xff]
        %v7846 = vld [vmem:[#allocation7 + $0x18] sm:$0xff]
        %v7847 = vld [vmem:[#allocation7 + $0x30] sm:$0xff]
        %v7848 = vld [vmem:[#allocation7 + $0x48] sm:$0xff]
        %7850 = vset.pattern.permute.xlu0 27
        %7851 = vperm.xlu0 %7850, %v7845
        %v7852 = vpop.permute.xlu0 %7851
        %7855 = vset.pattern.permute.xlu0 27
        %7856 = vperm.xlu0 %7855, %v7846
        %v7857 = vpop.permute.xlu0 %7856
        %7860 = vset.pattern.permute.xlu0 27
        %7861 = vperm.xlu0 %7860, %v7847
        %v7862 = vpop.permute.xlu0 %7861
        %7865 = vset.pattern.permute.xlu0 27
        %7866 = vperm.xlu0 %7865, %v7848
        %v7867 = vpop.permute.xlu0 %7866
        %vm7869 = vcmask 220160
        %v7870 = vsel %vm7869, %v7845, 0
        %v7872 = vsel %vm7869, %v7846, 0
        %v7874 = vsel %vm7869, %v7847, 0
        %v7876 = vsel %vm7869, %v7848, 0
        %vm7878 = vcmask 1042432
        %v7880 = vsel %vm7878, %v7833, 0
        %v7883 = vsel %vm7878, %v7834, 0
        %v7886 = vsel %vm7878, %v7835, 0
        %v7889 = vsel %vm7878, %v7836, 0
        %7891 = vmatpush.msra.mxu0 0.0
        %7892 = vmatpush.msra.mxu0 0.0
        %7893 = vmatpush.msra.mxu0 0.0
        %7894 = vmatpush.msra.mxu0 0.0
        %7895 = vmatpush.msra.mxu0 0.0
        %7896 = vmatpush.msra.mxu0 0.0
        %7897 = vmatpush.msra.mxu0 0.0
        %7898 = vmatpush.msra.mxu0 0.0
        %7899 = vmatpush.msra.mxu0 0.0
        %7900 = vmatpush.msra.mxu0 0.0
        %7901 = vmatpush.msra.mxu0 0.0
        %7902 = vmatpush.msra.mxu0 0.0
        %7903 = vmatpush.msra.mxu0 %v7880
        %7904 = vmatpush.msra.mxu0 %v7829
        %7905 = vmatpush.msra.mxu0 %v7825
        %7906 = vmatpush.msra.mxu0 %v7821
        %7907 = vmatmul.f32.gmra.mxu0 %v7870
        %v7908 = vpop.f32.mrf.mxu0
        %v7909 = vadd.f32 %v7852, %v7908
        %7910 = vmatmul.f32.gmra.mxu0 %v7872
        %v7911 = vpop.f32.mrf.mxu0
        %v7912 = vadd.f32 %v7857, %v7911
        %7913 = vmatmul.f32.gmra.mxu0 %v7874
        %v7914 = vpop.f32.mrf.mxu0
        %v7915 = vadd.f32 %v7862, %v7914
        %7916 = vmatmul.f32.gmra.mxu0 %v7876
        %v7917 = vpop.f32.mrf.mxu0
        %v7918 = vadd.f32 %v7867, %v7917
        %7919 = vdwg.mxu0
        %7920 = vmatpush.msra.mxu0 0.0
        %7921 = vmatpush.msra.mxu0 0.0
        %7922 = vmatpush.msra.mxu0 0.0
        %7923 = vmatpush.msra.mxu0 0.0
        %7924 = vmatpush.msra.mxu0 0.0
        %7925 = vmatpush.msra.mxu0 0.0
        %7926 = vmatpush.msra.mxu0 0.0
        %7927 = vmatpush.msra.mxu0 0.0
        %7928 = vmatpush.msra.mxu0 0.0
        %7929 = vmatpush.msra.mxu0 0.0
        %7930 = vmatpush.msra.mxu0 0.0
        %7931 = vmatpush.msra.mxu0 0.0
        %7932 = vmatpush.msra.mxu0 %v7883
        %7933 = vmatpush.msra.mxu0 %v7830
        %7934 = vmatpush.msra.mxu0 %v7826
        %7935 = vmatpush.msra.mxu0 %v7822
        %7936 = vmatmul.f32.gmra.mxu0 %v7870
        %v7937 = vpop.f32.mrf.mxu0
        %v7938 = vadd.f32 %v7852, %v7937
        %7939 = vmatmul.f32.gmra.mxu0 %v7872
        %v7940 = vpop.f32.mrf.mxu0
        %v7941 = vadd.f32 %v7857, %v7940
        %7942 = vmatmul.f32.gmra.mxu0 %v7874
        %v7943 = vpop.f32.mrf.mxu0
        %v7944 = vadd.f32 %v7862, %v7943
        %7945 = vmatmul.f32.gmra.mxu0 %v7876
        %v7946 = vpop.f32.mrf.mxu0
        %v7947 = vadd.f32 %v7867, %v7946
        %7948 = vdwg.mxu0
        %7949 = vmatpush.msra.mxu0 0.0
        %7950 = vmatpush.msra.mxu0 0.0
        %7951 = vmatpush.msra.mxu0 0.0
        %7952 = vmatpush.msra.mxu0 0.0
        %7953 = vmatpush.msra.mxu0 0.0
        %7954 = vmatpush.msra.mxu0 0.0
        %7955 = vmatpush.msra.mxu0 0.0
        %7956 = vmatpush.msra.mxu0 0.0
        %7957 = vmatpush.msra.mxu0 0.0
        %7958 = vmatpush.msra.mxu0 0.0
        %7959 = vmatpush.msra.mxu0 0.0
        %7960 = vmatpush.msra.mxu0 0.0
        %7961 = vmatpush.msra.mxu0 %v7886
        %7962 = vmatpush.msra.mxu0 %v7831
        %7963 = vmatpush.msra.mxu0 %v7827
        %7964 = vmatpush.msra.mxu0 %v7823
        %7965 = vmatmul.f32.gmra.mxu0 %v7870
        %v7966 = vpop.f32.mrf.mxu0
        %v7967 = vadd.f32 %v7852, %v7966
        %7968 = vmatmul.f32.gmra.mxu0 %v7872
        %v7969 = vpop.f32.mrf.mxu0
        %v7970 = vadd.f32 %v7857, %v7969
        %7971 = vmatmul.f32.gmra.mxu0 %v7874
        %v7972 = vpop.f32.mrf.mxu0
        %v7973 = vadd.f32 %v7862, %v7972
        %7974 = vmatmul.f32.gmra.mxu0 %v7876
        %v7975 = vpop.f32.mrf.mxu0
        %v7976 = vadd.f32 %v7867, %v7975
        %7977 = vdwg.mxu0
        %7978 = vmatpush.msra.mxu0 0.0
        %7979 = vmatpush.msra.mxu0 0.0
        %7980 = vmatpush.msra.mxu0 0.0
        %7981 = vmatpush.msra.mxu0 0.0
        %7982 = vmatpush.msra.mxu0 0.0
        %7983 = vmatpush.msra.mxu0 0.0
        %7984 = vmatpush.msra.mxu0 0.0
        %7985 = vmatpush.msra.mxu0 0.0
        %7986 = vmatpush.msra.mxu0 0.0
        %7987 = vmatpush.msra.mxu0 0.0
        %7988 = vmatpush.msra.mxu0 0.0
        %7989 = vmatpush.msra.mxu0 0.0
        %7990 = vmatpush.msra.mxu0 %v7889
        %7991 = vmatpush.msra.mxu0 %v7832
        %7992 = vmatpush.msra.mxu0 %v7828
        %7993 = vmatpush.msra.mxu0 %v7824
        %7994 = vmatmul.f32.gmra.mxu0 %v7870
        %v7995 = vpop.f32.mrf.mxu0
        %v7996 = vadd.f32 %v7852, %v7995
        %7997 = vmatmul.f32.gmra.mxu0 %v7872
        %v7998 = vpop.f32.mrf.mxu0
        %v7999 = vadd.f32 %v7857, %v7998
        %8000 = vmatmul.f32.gmra.mxu0 %v7874
        %v8001 = vpop.f32.mrf.mxu0
        %v8002 = vadd.f32 %v7862, %v8001
        %8003 = vmatmul.f32.gmra.mxu0 %v7876
        %v8004 = vpop.f32.mrf.mxu0
        %v8005 = vadd.f32 %v7867, %v8004
        %8006 = vdwg.mxu0
        %v8007 = vmax.f32 %v7909, 0.0
        %v8008 = vmax.f32 %v7938, 0.0
        %v8009 = vmax.f32 %v7967, 0.0
        %v8010 = vmax.f32 %v7996, 0.0
        %v8011 = vmax.f32 %v7912, 0.0
        %v8012 = vmax.f32 %v7941, 0.0
        %v8013 = vmax.f32 %v7970, 0.0
        %v8014 = vmax.f32 %v7999, 0.0
        %v8015 = vmax.f32 %v7915, 0.0
        %v8016 = vmax.f32 %v7944, 0.0
        %v8017 = vmax.f32 %v7973, 0.0
        %v8018 = vmax.f32 %v8002, 0.0
        %v8019 = vmax.f32 %v7918, 0.0
        %v8020 = vmax.f32 %v7947, 0.0
        %v8021 = vmax.f32 %v7976, 0.0
        %v8022 = vmax.f32 %v8005, 0.0
        %8023 = vset.pattern.permute.xlu0 60
        %8024 = vperm.xlu0 %8023, %v7845
        %v8025 = vpop.permute.xlu0 %8024
        %8027 = vset.pattern.permute.xlu0 60
        %8028 = vperm.xlu0 %8027, %v7846
        %v8029 = vpop.permute.xlu0 %8028
        %8031 = vset.pattern.permute.xlu0 60
        %8032 = vperm.xlu0 %8031, %v7847
        %v8033 = vpop.permute.xlu0 %8032
        %8035 = vset.pattern.permute.xlu0 60
        %8036 = vperm.xlu0 %8035, %v7848
        %v8037 = vpop.permute.xlu0 %8036
        %8039 = vrot.lane.b32.xlu0 %v7845, 100
        %v8040 = vpop.permute.xlu0 %8039
        %8041 = vrot.lane.b32.xlu0 %v7846, 100
        %v8042 = vpop.permute.xlu0 %8041
        %8043 = vrot.lane.b32.xlu0 %v7847, 100
        %v8044 = vpop.permute.xlu0 %8043
        %8045 = vrot.lane.b32.xlu0 %v7848, 100
        %v8046 = vpop.permute.xlu0 %8045
        %vm8047 = vcmask 261120
        %v8048 = vsel %vm8047, %v8040, 0
        %v8050 = vsel %vm8047, %v8042, 0
        %v8052 = vsel %vm8047, %v8044, 0
        %v8054 = vsel %vm8047, %v8046, 0
        %8056 = vmatpush.msra.mxu0 0.0
        %8057 = vmatpush.msra.mxu0 0.0
        %8058 = vmatpush.msra.mxu0 0.0
        %8059 = vmatpush.msra.mxu0 0.0
        %8060 = vmatpush.msra.mxu0 0.0
        %8061 = vmatpush.msra.mxu0 0.0
        %8062 = vmatpush.msra.mxu0 0.0
        %8063 = vmatpush.msra.mxu0 0.0
        %8064 = vmatpush.msra.mxu0 0.0
        %8065 = vmatpush.msra.mxu0 0.0
        %8066 = vmatpush.msra.mxu0 0.0
        %8067 = vmatpush.msra.mxu0 0.0
        %8068 = vmatpush.msra.mxu0 %v8019
        %8069 = vmatpush.msra.mxu0 %v8015
        %8070 = vmatpush.msra.mxu0 %v8011
        %8071 = vmatpush.msra.mxu0 %v8007
        %8072 = vmatmul.f32.gmra.mxu0 %v8048
        %v8073 = vpop.f32.mrf.mxu0
        %v8074 = vadd.f32 %v8025, %v8073
        %8075 = vmatmul.f32.gmra.mxu0 %v8050
        %v8076 = vpop.f32.mrf.mxu0
        %v8077 = vadd.f32 %v8029, %v8076
        %8078 = vmatmul.f32.gmra.mxu0 %v8052
        %v8079 = vpop.f32.mrf.mxu0
        %v8080 = vadd.f32 %v8033, %v8079
        %8081 = vmatmul.f32.gmra.mxu0 %v8054
        %v8082 = vpop.f32.mrf.mxu0
        %v8083 = vadd.f32 %v8037, %v8082
        %8084 = vdwg.mxu0
        %8085 = vmatpush.msra.mxu0 0.0
        %8086 = vmatpush.msra.mxu0 0.0
        %8087 = vmatpush.msra.mxu0 0.0
        %8088 = vmatpush.msra.mxu0 0.0
        %8089 = vmatpush.msra.mxu0 0.0
        %8090 = vmatpush.msra.mxu0 0.0
        %8091 = vmatpush.msra.mxu0 0.0
        %8092 = vmatpush.msra.mxu0 0.0
        %8093 = vmatpush.msra.mxu0 0.0
        %8094 = vmatpush.msra.mxu0 0.0
        %8095 = vmatpush.msra.mxu0 0.0
        %8096 = vmatpush.msra.mxu0 0.0
        %8097 = vmatpush.msra.mxu0 %v8020
        %8098 = vmatpush.msra.mxu0 %v8016
        %8099 = vmatpush.msra.mxu0 %v8012
        %8100 = vmatpush.msra.mxu0 %v8008
        %8101 = vmatmul.f32.gmra.mxu0 %v8048
        %v8102 = vpop.f32.mrf.mxu0
        %v8103 = vadd.f32 %v8025, %v8102
        %8104 = vmatmul.f32.gmra.mxu0 %v8050
        %v8105 = vpop.f32.mrf.mxu0
        %v8106 = vadd.f32 %v8029, %v8105
        %8107 = vmatmul.f32.gmra.mxu0 %v8052
        %v8108 = vpop.f32.mrf.mxu0
        %v8109 = vadd.f32 %v8033, %v8108
        %8110 = vmatmul.f32.gmra.mxu0 %v8054
        %v8111 = vpop.f32.mrf.mxu0
        %v8112 = vadd.f32 %v8037, %v8111
        %8113 = vdwg.mxu0
        %8114 = vmatpush.msra.mxu0 0.0
        %8115 = vmatpush.msra.mxu0 0.0
        %8116 = vmatpush.msra.mxu0 0.0
        %8117 = vmatpush.msra.mxu0 0.0
        %8118 = vmatpush.msra.mxu0 0.0
        %8119 = vmatpush.msra.mxu0 0.0
        %8120 = vmatpush.msra.mxu0 0.0
        %8121 = vmatpush.msra.mxu0 0.0
        %8122 = vmatpush.msra.mxu0 0.0
        %8123 = vmatpush.msra.mxu0 0.0
        %8124 = vmatpush.msra.mxu0 0.0
        %8125 = vmatpush.msra.mxu0 0.0
        %8126 = vmatpush.msra.mxu0 %v8021
        %8127 = vmatpush.msra.mxu0 %v8017
        %8128 = vmatpush.msra.mxu0 %v8013
        %8129 = vmatpush.msra.mxu0 %v8009
        %8130 = vmatmul.f32.gmra.mxu0 %v8048
        %v8131 = vpop.f32.mrf.mxu0
        %v8132 = vadd.f32 %v8025, %v8131
        %8133 = vmatmul.f32.gmra.mxu0 %v8050
        %v8134 = vpop.f32.mrf.mxu0
        %v8135 = vadd.f32 %v8029, %v8134
        %8136 = vmatmul.f32.gmra.mxu0 %v8052
        %v8137 = vpop.f32.mrf.mxu0
        %v8138 = vadd.f32 %v8033, %v8137
        %8139 = vmatmul.f32.gmra.mxu0 %v8054
        %v8140 = vpop.f32.mrf.mxu0
        %v8141 = vadd.f32 %v8037, %v8140
        %8142 = vdwg.mxu0
        %8143 = vmatpush.msra.mxu0 0.0
        %8144 = vmatpush.msra.mxu0 0.0
        %8145 = vmatpush.msra.mxu0 0.0
        %8146 = vmatpush.msra.mxu0 0.0
        %8147 = vmatpush.msra.mxu0 0.0
        %8148 = vmatpush.msra.mxu0 0.0
        %8149 = vmatpush.msra.mxu0 0.0
        %8150 = vmatpush.msra.mxu0 0.0
        %8151 = vmatpush.msra.mxu0 0.0
        %8152 = vmatpush.msra.mxu0 0.0
        %8153 = vmatpush.msra.mxu0 0.0
        %8154 = vmatpush.msra.mxu0 0.0
        %8155 = vmatpush.msra.mxu0 %v8022
        %8156 = vmatpush.msra.mxu0 %v8018
        %8157 = vmatpush.msra.mxu0 %v8014
        %8158 = vmatpush.msra.mxu0 %v8010
        %8159 = vmatmul.f32.gmra.mxu0 %v8048
        %v8160 = vpop.f32.mrf.mxu0
        %v8161 = vadd.f32 %v8025, %v8160
        %8162 = vmatmul.f32.gmra.mxu0 %v8050
        %v8163 = vpop.f32.mrf.mxu0
        %v8164 = vadd.f32 %v8029, %v8163
        %8165 = vmatmul.f32.gmra.mxu0 %v8052
        %v8166 = vpop.f32.mrf.mxu0
        %v8167 = vadd.f32 %v8033, %v8166
        %8168 = vmatmul.f32.gmra.mxu0 %v8054
        %v8169 = vpop.f32.mrf.mxu0
        %v8170 = vadd.f32 %v8037, %v8169
        %8171 = vdwg.mxu0
        %v8172 = vmax.f32 %v8074, 0.0
        %v8173 = vmax.f32 %v8103, 0.0
        %v8174 = vmax.f32 %v8132, 0.0
        %v8175 = vmax.f32 %v8161, 0.0
        %v8176 = vmax.f32 %v8077, 0.0
        %v8177 = vmax.f32 %v8106, 0.0
        %v8178 = vmax.f32 %v8135, 0.0
        %v8179 = vmax.f32 %v8164, 0.0
        %v8180 = vmax.f32 %v8080, 0.0
        %v8181 = vmax.f32 %v8109, 0.0
        %v8182 = vmax.f32 %v8138, 0.0
        %v8183 = vmax.f32 %v8167, 0.0
        %v8184 = vmax.f32 %v8083, 0.0
        %v8185 = vmax.f32 %v8112, 0.0
        %v8186 = vmax.f32 %v8141, 0.0
        %v8187 = vmax.f32 %v8170, 0.0
        %8188 = vrot.lane.b32.xlu0 %v7845, 40
        %v8189 = vpop.permute.xlu0 %8188
        %8190 = vrot.lane.b32.xlu0 %v7846, 40
        %v8191 = vpop.permute.xlu0 %8190
        %8192 = vrot.lane.b32.xlu0 %v7847, 40
        %v8193 = vpop.permute.xlu0 %8192
        %8194 = vrot.lane.b32.xlu0 %v7848, 40
        %v8195 = vpop.permute.xlu0 %8194
        %v8196 = vsel %vm8047, %v8189, 0
        %v8198 = vsel %vm8047, %v8191, 0
        %v8200 = vsel %vm8047, %v8193, 0
        %v8202 = vsel %vm8047, %v8195, 0
        %8204 = vmatpush.msra.mxu0 0.0
        %8205 = vmatpush.msra.mxu0 0.0
        %8206 = vmatpush.msra.mxu0 0.0
        %8207 = vmatpush.msra.mxu0 0.0
        %8208 = vmatpush.msra.mxu0 0.0
        %8209 = vmatpush.msra.mxu0 0.0
        %8210 = vmatpush.msra.mxu0 0.0
        %8211 = vmatpush.msra.mxu0 0.0
        %8212 = vmatpush.msra.mxu0 0.0
        %8213 = vmatpush.msra.mxu0 0.0
        %8214 = vmatpush.msra.mxu0 0.0
        %8215 = vmatpush.msra.mxu0 0.0
        %8216 = vmatpush.msra.mxu0 %v8184
        %8217 = vmatpush.msra.mxu0 %v8180
        %8218 = vmatpush.msra.mxu0 %v8176
        %8219 = vmatpush.msra.mxu0 %v8172
        %8220 = vmatmul.f32.gmra.mxu0 %v8196
        %v8221 = vpop.f32.mrf.mxu0
        %v8222 = vadd.f32 0.0, %v8221
        %8223 = vmatmul.f32.gmra.mxu0 %v8198
        %v8224 = vpop.f32.mrf.mxu0
        %v8225 = vadd.f32 0.0, %v8224
        %8226 = vmatmul.f32.gmra.mxu0 %v8200
        %v8227 = vpop.f32.mrf.mxu0
        %v8228 = vadd.f32 0.0, %v8227
        %8229 = vmatmul.f32.gmra.mxu0 %v8202
        %v8230 = vpop.f32.mrf.mxu0
        %v8231 = vadd.f32 0.0, %v8230
        %8232 = vdwg.mxu0
        %8233 = vmatpush.msra.mxu0 0.0
        %8234 = vmatpush.msra.mxu0 0.0
        %8235 = vmatpush.msra.mxu0 0.0
        %8236 = vmatpush.msra.mxu0 0.0
        %8237 = vmatpush.msra.mxu0 0.0
        %8238 = vmatpush.msra.mxu0 0.0
        %8239 = vmatpush.msra.mxu0 0.0
        %8240 = vmatpush.msra.mxu0 0.0
        %8241 = vmatpush.msra.mxu0 0.0
        %8242 = vmatpush.msra.mxu0 0.0
        %8243 = vmatpush.msra.mxu0 0.0
        %8244 = vmatpush.msra.mxu0 0.0
        %8245 = vmatpush.msra.mxu0 %v8185
        %8246 = vmatpush.msra.mxu0 %v8181
        %8247 = vmatpush.msra.mxu0 %v8177
        %8248 = vmatpush.msra.mxu0 %v8173
        %8249 = vmatmul.f32.gmra.mxu0 %v8196
        %v8250 = vpop.f32.mrf.mxu0
        %v8251 = vadd.f32 0.0, %v8250
        %8252 = vmatmul.f32.gmra.mxu0 %v8198
        %v8253 = vpop.f32.mrf.mxu0
        %v8254 = vadd.f32 0.0, %v8253
        %8255 = vmatmul.f32.gmra.mxu0 %v8200
        %v8256 = vpop.f32.mrf.mxu0
        %v8257 = vadd.f32 0.0, %v8256
        %8258 = vmatmul.f32.gmra.mxu0 %v8202
        %v8259 = vpop.f32.mrf.mxu0
        %v8260 = vadd.f32 0.0, %v8259
        %8261 = vdwg.mxu0
        %8262 = vmatpush.msra.mxu0 0.0
        %8263 = vmatpush.msra.mxu0 0.0
        %8264 = vmatpush.msra.mxu0 0.0
        %8265 = vmatpush.msra.mxu0 0.0
        %8266 = vmatpush.msra.mxu0 0.0
        %8267 = vmatpush.msra.mxu0 0.0
        %8268 = vmatpush.msra.mxu0 0.0
        %8269 = vmatpush.msra.mxu0 0.0
        %8270 = vmatpush.msra.mxu0 0.0
        %8271 = vmatpush.msra.mxu0 0.0
        %8272 = vmatpush.msra.mxu0 0.0
        %8273 = vmatpush.msra.mxu0 0.0
        %8274 = vmatpush.msra.mxu0 %v8186
        %8275 = vmatpush.msra.mxu0 %v8182
        %8276 = vmatpush.msra.mxu0 %v8178
        %8277 = vmatpush.msra.mxu0 %v8174
        %8278 = vmatmul.f32.gmra.mxu0 %v8196
        %v8279 = vpop.f32.mrf.mxu0
        %v8280 = vadd.f32 0.0, %v8279
        %8281 = vmatmul.f32.gmra.mxu0 %v8198
        %v8282 = vpop.f32.mrf.mxu0
        %v8283 = vadd.f32 0.0, %v8282
        %8284 = vmatmul.f32.gmra.mxu0 %v8200
        %v8285 = vpop.f32.mrf.mxu0
        %v8286 = vadd.f32 0.0, %v8285
        %8287 = vmatmul.f32.gmra.mxu0 %v8202
        %v8288 = vpop.f32.mrf.mxu0
        %v8289 = vadd.f32 0.0, %v8288
        %8290 = vdwg.mxu0
        %8291 = vmatpush.msra.mxu0 0.0
        %8292 = vmatpush.msra.mxu0 0.0
        %8293 = vmatpush.msra.mxu0 0.0
        %8294 = vmatpush.msra.mxu0 0.0
        %8295 = vmatpush.msra.mxu0 0.0
        %8296 = vmatpush.msra.mxu0 0.0
        %8297 = vmatpush.msra.mxu0 0.0
        %8298 = vmatpush.msra.mxu0 0.0
        %8299 = vmatpush.msra.mxu0 0.0
        %8300 = vmatpush.msra.mxu0 0.0
        %8301 = vmatpush.msra.mxu0 0.0
        %8302 = vmatpush.msra.mxu0 0.0
        %8303 = vmatpush.msra.mxu0 %v8187
        %8304 = vmatpush.msra.mxu0 %v8183
        %8305 = vmatpush.msra.mxu0 %v8179
        %8306 = vmatpush.msra.mxu0 %v8175
        %8307 = vmatmul.f32.gmra.mxu0 %v8196
        %v8308 = vpop.f32.mrf.mxu0
        %v8309 = vadd.f32 0.0, %v8308
        %8310 = vmatmul.f32.gmra.mxu0 %v8198
        %v8311 = vpop.f32.mrf.mxu0
        %v8312 = vadd.f32 0.0, %v8311
        %8313 = vmatmul.f32.gmra.mxu0 %v8200
        %v8314 = vpop.f32.mrf.mxu0
        %v8315 = vadd.f32 0.0, %v8314
        %8316 = vmatmul.f32.gmra.mxu0 %v8202
        %v8317 = vpop.f32.mrf.mxu0
        %v8318 = vadd.f32 0.0, %v8317
        %8319 = vdwg.mxu0
        %8320 = vrot.lane.b32.xlu0 %v7845, 67
        %v8321 = vpop.permute.xlu0 %8320
        %8322 = vrot.lane.b32.xlu0 %v7846, 67
        %v8323 = vpop.permute.xlu0 %8322
        %8324 = vrot.lane.b32.xlu0 %v7847, 67
        %v8325 = vpop.permute.xlu0 %8324
        %8326 = vrot.lane.b32.xlu0 %v7848, 67
        %v8327 = vpop.permute.xlu0 %8326
        %v8328 = vsel %vm7869, %v8321, 0
        %v8330 = vsel %vm7869, %v8323, 0
        %v8332 = vsel %vm7869, %v8325, 0
        %v8334 = vsel %vm7869, %v8327, 0
        %8336 = vmatpush.msra.mxu0 0.0
        %8337 = vmatpush.msra.mxu0 0.0
        %8338 = vmatpush.msra.mxu0 0.0
        %8339 = vmatpush.msra.mxu0 0.0
        %8340 = vmatpush.msra.mxu0 0.0
        %8341 = vmatpush.msra.mxu0 0.0
        %8342 = vmatpush.msra.mxu0 0.0
        %8343 = vmatpush.msra.mxu0 0.0
        %8344 = vmatpush.msra.mxu0 0.0
        %8345 = vmatpush.msra.mxu0 0.0
        %8346 = vmatpush.msra.mxu0 0.0
        %8347 = vmatpush.msra.mxu0 0.0
        %8348 = vmatpush.msra.mxu0 %v7880
        %8349 = vmatpush.msra.mxu0 %v7829
        %8350 = vmatpush.msra.mxu0 %v7825
        %8351 = vmatpush.msra.mxu0 %v7821
        %8352 = vmatmul.f32.gmra.mxu0 %v8328
        %v8353 = vpop.f32.mrf.mxu0
        %v8354 = vadd.f32 %v8222, %v8353
        %8355 = vmatmul.f32.gmra.mxu0 %v8330
        %v8356 = vpop.f32.mrf.mxu0
        %v8357 = vadd.f32 %v8225, %v8356
        %8358 = vmatmul.f32.gmra.mxu0 %v8332
        %v8359 = vpop.f32.mrf.mxu0
        %v8360 = vadd.f32 %v8228, %v8359
        %8361 = vmatmul.f32.gmra.mxu0 %v8334
        %v8362 = vpop.f32.mrf.mxu0
        %v8363 = vadd.f32 %v8231, %v8362
        %8364 = vdwg.mxu0
        %8365 = vmatpush.msra.mxu0 0.0
        %8366 = vmatpush.msra.mxu0 0.0
        %8367 = vmatpush.msra.mxu0 0.0
        %8368 = vmatpush.msra.mxu0 0.0
        %8369 = vmatpush.msra.mxu0 0.0
        %8370 = vmatpush.msra.mxu0 0.0
        %8371 = vmatpush.msra.mxu0 0.0
        %8372 = vmatpush.msra.mxu0 0.0
        %8373 = vmatpush.msra.mxu0 0.0
        %8374 = vmatpush.msra.mxu0 0.0
        %8375 = vmatpush.msra.mxu0 0.0
        %8376 = vmatpush.msra.mxu0 0.0
        %8377 = vmatpush.msra.mxu0 %v7883
        %8378 = vmatpush.msra.mxu0 %v7830
        %8379 = vmatpush.msra.mxu0 %v7826
        %8380 = vmatpush.msra.mxu0 %v7822
        %8381 = vmatmul.f32.gmra.mxu0 %v8328
        %v8382 = vpop.f32.mrf.mxu0
        %v8383 = vadd.f32 %v8251, %v8382
        %8384 = vmatmul.f32.gmra.mxu0 %v8330
        %v8385 = vpop.f32.mrf.mxu0
        %v8386 = vadd.f32 %v8254, %v8385
        %8387 = vmatmul.f32.gmra.mxu0 %v8332
        %v8388 = vpop.f32.mrf.mxu0
        %v8389 = vadd.f32 %v8257, %v8388
        %8390 = vmatmul.f32.gmra.mxu0 %v8334
        %v8391 = vpop.f32.mrf.mxu0
        %v8392 = vadd.f32 %v8260, %v8391
        %8393 = vdwg.mxu0
        %8394 = vmatpush.msra.mxu0 0.0
        %8395 = vmatpush.msra.mxu0 0.0
        %8396 = vmatpush.msra.mxu0 0.0
        %8397 = vmatpush.msra.mxu0 0.0
        %8398 = vmatpush.msra.mxu0 0.0
        %8399 = vmatpush.msra.mxu0 0.0
        %8400 = vmatpush.msra.mxu0 0.0
        %8401 = vmatpush.msra.mxu0 0.0
        %8402 = vmatpush.msra.mxu0 0.0
        %8403 = vmatpush.msra.mxu0 0.0
        %8404 = vmatpush.msra.mxu0 0.0
        %8405 = vmatpush.msra.mxu0 0.0
        %8406 = vmatpush.msra.mxu0 %v7886
        %8407 = vmatpush.msra.mxu0 %v7831
        %8408 = vmatpush.msra.mxu0 %v7827
        %8409 = vmatpush.msra.mxu0 %v7823
        %8410 = vmatmul.f32.gmra.mxu0 %v8328
        %v8411 = vpop.f32.mrf.mxu0
        %v8412 = vadd.f32 %v8280, %v8411
        %8413 = vmatmul.f32.gmra.mxu0 %v8330
        %v8414 = vpop.f32.mrf.mxu0
        %v8415 = vadd.f32 %v8283, %v8414
        %8416 = vmatmul.f32.gmra.mxu0 %v8332
        %v8417 = vpop.f32.mrf.mxu0
        %v8418 = vadd.f32 %v8286, %v8417
        %8419 = vmatmul.f32.gmra.mxu0 %v8334
        %v8420 = vpop.f32.mrf.mxu0
        %v8421 = vadd.f32 %v8289, %v8420
        %8422 = vdwg.mxu0
        %8423 = vmatpush.msra.mxu0 0.0
        %8424 = vmatpush.msra.mxu0 0.0
        %8425 = vmatpush.msra.mxu0 0.0
        %8426 = vmatpush.msra.mxu0 0.0
        %8427 = vmatpush.msra.mxu0 0.0
        %8428 = vmatpush.msra.mxu0 0.0
        %8429 = vmatpush.msra.mxu0 0.0
        %8430 = vmatpush.msra.mxu0 0.0
        %8431 = vmatpush.msra.mxu0 0.0
        %8432 = vmatpush.msra.mxu0 0.0
        %8433 = vmatpush.msra.mxu0 0.0
        %8434 = vmatpush.msra.mxu0 0.0
        %8435 = vmatpush.msra.mxu0 %v7889
        %8436 = vmatpush.msra.mxu0 %v7832
        %8437 = vmatpush.msra.mxu0 %v7828
        %8438 = vmatpush.msra.mxu0 %v7824
        %8439 = vmatmul.f32.gmra.mxu0 %v8328
        %v8440 = vpop.f32.mrf.mxu0
        %v8441 = vadd.f32 %v8309, %v8440
        %8442 = vmatmul.f32.gmra.mxu0 %v8330
        %v8443 = vpop.f32.mrf.mxu0
        %v8444 = vadd.f32 %v8312, %v8443
        %8445 = vmatmul.f32.gmra.mxu0 %v8332
        %v8446 = vpop.f32.mrf.mxu0
        %v8447 = vadd.f32 %v8315, %v8446
        %8448 = vmatmul.f32.gmra.mxu0 %v8334
        %v8449 = vpop.f32.mrf.mxu0
        %v8450 = vadd.f32 %v8318, %v8449
        %8451 = vdwg.mxu0
        %8452 = vset.pattern.permute.xlu0 120
        %8453 = vperm.xlu0 %8452, %v7845
        %v8454 = vpop.permute.xlu0 %8453
        %8456 = vset.pattern.permute.xlu0 120
        %8457 = vperm.xlu0 %8456, %v7846
        %v8458 = vpop.permute.xlu0 %8457
        %8460 = vset.pattern.permute.xlu0 120
        %8461 = vperm.xlu0 %8460, %v7847
        %v8462 = vpop.permute.xlu0 %8461
        %8464 = vset.pattern.permute.xlu0 120
        %8465 = vperm.xlu0 %8464, %v7848
        %v8466 = vpop.permute.xlu0 %8465
        %v8468 = vadd.f32 %v8354, %v8454
        %v8469 = vadd.f32 %v8383, %v8454
        %v8470 = vadd.f32 %v8412, %v8454
        %v8471 = vadd.f32 %v8441, %v8454
        %v8472 = vadd.f32 %v8357, %v8458
        %v8473 = vadd.f32 %v8386, %v8458
        %v8474 = vadd.f32 %v8415, %v8458
        %v8475 = vadd.f32 %v8444, %v8458
        %v8476 = vadd.f32 %v8360, %v8462
        %v8477 = vadd.f32 %v8389, %v8462
        %v8478 = vadd.f32 %v8418, %v8462
        %v8479 = vadd.f32 %v8447, %v8462
        %v8480 = vadd.f32 %v8363, %v8466
        %v8481 = vadd.f32 %v8392, %v8466
        %v8482 = vadd.f32 %v8421, %v8466
        %v8483 = vadd.f32 %v8450, %v8466
        %v8484 = vmax.f32 %v8468, 0.0
        %v8485 = vmax.f32 %v8469, 0.0
        %v8486 = vmax.f32 %v8470, 0.0
        %v8487 = vmax.f32 %v8471, 0.0
        %v8488 = vmax.f32 %v8472, 0.0
        %v8489 = vmax.f32 %v8473, 0.0
        %v8490 = vmax.f32 %v8474, 0.0
        %v8491 = vmax.f32 %v8475, 0.0
        %v8492 = vmax.f32 %v8476, 0.0
        %v8493 = vmax.f32 %v8477, 0.0
        %v8494 = vmax.f32 %v8478, 0.0
        %v8495 = vmax.f32 %v8479, 0.0
        %v8496 = vmax.f32 %v8480, 0.0
        %v8497 = vmax.f32 %v8481, 0.0
        %v8498 = vmax.f32 %v8482, 0.0
        %v8499 = vmax.f32 %v8483, 0.0
        %v8500 = vld [vmem:[#allocation7] sm:$0xff]
        %v8501 = vld [vmem:[#allocation7 + $0x8] sm:$0xff]
        %v8502 = vld [vmem:[#allocation7 + $0x18] sm:$0xff]
        %v8503 = vld [vmem:[#allocation7 + $0x20] sm:$0xff]
        %v8504 = vld [vmem:[#allocation7 + $0x30] sm:$0xff]
        %v8505 = vld [vmem:[#allocation7 + $0x38] sm:$0xff]
        %v8506 = vld [vmem:[#allocation7 + $0x48] sm:$0xff]
        %v8507 = vld [vmem:[#allocation7 + $0x50] sm:$0xff]
        %8509 = vset.pattern.permute.xlu0 25
        %8510 = vperm.xlu0 %8509, %v8501
        %v8511 = vpop.permute.xlu0 %8510
        %8514 = vset.pattern.permute.xlu0 25
        %8515 = vperm.xlu0 %8514, %v8503
        %v8516 = vpop.permute.xlu0 %8515
        %8519 = vset.pattern.permute.xlu0 25
        %8520 = vperm.xlu0 %8519, %v8505
        %v8521 = vpop.permute.xlu0 %8520
        %8524 = vset.pattern.permute.xlu0 25
        %8525 = vperm.xlu0 %8524, %v8507
        %v8526 = vpop.permute.xlu0 %8525
        %8532 = vrot.lane.b32.xlu0 %v8500, 7
        %v8533 = vpop.permute.xlu0 %8532
        %8534 = vrot.lane.b32.xlu0 %v8501, 7
        %v8535 = vpop.permute.xlu0 %8534
        %8536 = vrot.lane.b32.xlu0 %v8502, 7
        %v8537 = vpop.permute.xlu0 %8536
        %8538 = vrot.lane.b32.xlu0 %v8503, 7
        %v8539 = vpop.permute.xlu0 %8538
        %8540 = vrot.lane.b32.xlu0 %v8504, 7
        %v8541 = vpop.permute.xlu0 %8540
        %8542 = vrot.lane.b32.xlu0 %v8505, 7
        %v8543 = vpop.permute.xlu0 %8542
        %8544 = vrot.lane.b32.xlu0 %v8506, 7
        %v8545 = vpop.permute.xlu0 %8544
        %8546 = vrot.lane.b32.xlu0 %v8507, 7
        %v8547 = vpop.permute.xlu0 %8546
        %vm8548 = vcmask 56320
        %v8549 = vsel %vm8548, %v8533, %v8535
        %v8550 = vsel %vm8548, %v8537, %v8539
        %v8551 = vsel %vm8548, %v8541, %v8543
        %v8552 = vsel %vm8548, %v8545, %v8547
        %v8553 = vsel %vm8047, %v8549, 0
        %v8555 = vsel %vm8047, %v8550, 0
        %v8557 = vsel %vm8047, %v8551, 0
        %v8559 = vsel %vm8047, %v8552, 0
        %8561 = vmatpush.msra.mxu0 0.0
        %8562 = vmatpush.msra.mxu0 0.0
        %8563 = vmatpush.msra.mxu0 0.0
        %8564 = vmatpush.msra.mxu0 0.0
        %8565 = vmatpush.msra.mxu0 0.0
        %8566 = vmatpush.msra.mxu0 0.0
        %8567 = vmatpush.msra.mxu0 0.0
        %8568 = vmatpush.msra.mxu0 0.0
        %8569 = vmatpush.msra.mxu0 0.0
        %8570 = vmatpush.msra.mxu0 0.0
        %8571 = vmatpush.msra.mxu0 0.0
        %8572 = vmatpush.msra.mxu0 0.0
        %8573 = vmatpush.msra.mxu0 %v8496
        %8574 = vmatpush.msra.mxu0 %v8492
        %8575 = vmatpush.msra.mxu0 %v8488
        %8576 = vmatpush.msra.mxu0 %v8484
        %8577 = vmatmul.f32.gmra.mxu0 %v8553
        %v8578 = vpop.f32.mrf.mxu0
        %v8579 = vadd.f32 %v8511, %v8578
        %8580 = vmatmul.f32.gmra.mxu0 %v8555
        %v8581 = vpop.f32.mrf.mxu0
        %v8582 = vadd.f32 %v8516, %v8581
        %8583 = vmatmul.f32.gmra.mxu0 %v8557
        %v8584 = vpop.f32.mrf.mxu0
        %v8585 = vadd.f32 %v8521, %v8584
        %8586 = vmatmul.f32.gmra.mxu0 %v8559
        %v8587 = vpop.f32.mrf.mxu0
        %v8588 = vadd.f32 %v8526, %v8587
        %8589 = vdwg.mxu0
        %8590 = vmatpush.msra.mxu0 0.0
        %8591 = vmatpush.msra.mxu0 0.0
        %8592 = vmatpush.msra.mxu0 0.0
        %8593 = vmatpush.msra.mxu0 0.0
        %8594 = vmatpush.msra.mxu0 0.0
        %8595 = vmatpush.msra.mxu0 0.0
        %8596 = vmatpush.msra.mxu0 0.0
        %8597 = vmatpush.msra.mxu0 0.0
        %8598 = vmatpush.msra.mxu0 0.0
        %8599 = vmatpush.msra.mxu0 0.0
        %8600 = vmatpush.msra.mxu0 0.0
        %8601 = vmatpush.msra.mxu0 0.0
        %8602 = vmatpush.msra.mxu0 %v8497
        %8603 = vmatpush.msra.mxu0 %v8493
        %8604 = vmatpush.msra.mxu0 %v8489
        %8605 = vmatpush.msra.mxu0 %v8485
        %8606 = vmatmul.f32.gmra.mxu0 %v8553
        %v8607 = vpop.f32.mrf.mxu0
        %v8608 = vadd.f32 %v8511, %v8607
        %8609 = vmatmul.f32.gmra.mxu0 %v8555
        %v8610 = vpop.f32.mrf.mxu0
        %v8611 = vadd.f32 %v8516, %v8610
        %8612 = vmatmul.f32.gmra.mxu0 %v8557
        %v8613 = vpop.f32.mrf.mxu0
        %v8614 = vadd.f32 %v8521, %v8613
        %8615 = vmatmul.f32.gmra.mxu0 %v8559
        %v8616 = vpop.f32.mrf.mxu0
        %v8617 = vadd.f32 %v8526, %v8616
        %8618 = vdwg.mxu0
        %8619 = vmatpush.msra.mxu0 0.0
        %8620 = vmatpush.msra.mxu0 0.0
        %8621 = vmatpush.msra.mxu0 0.0
        %8622 = vmatpush.msra.mxu0 0.0
        %8623 = vmatpush.msra.mxu0 0.0
        %8624 = vmatpush.msra.mxu0 0.0
        %8625 = vmatpush.msra.mxu0 0.0
        %8626 = vmatpush.msra.mxu0 0.0
        %8627 = vmatpush.msra.mxu0 0.0
        %8628 = vmatpush.msra.mxu0 0.0
        %8629 = vmatpush.msra.mxu0 0.0
        %8630 = vmatpush.msra.mxu0 0.0
        %8631 = vmatpush.msra.mxu0 %v8498
        %8632 = vmatpush.msra.mxu0 %v8494
        %8633 = vmatpush.msra.mxu0 %v8490
        %8634 = vmatpush.msra.mxu0 %v8486
        %8635 = vmatmul.f32.gmra.mxu0 %v8553
        %v8636 = vpop.f32.mrf.mxu0
        %v8637 = vadd.f32 %v8511, %v8636
        %8638 = vmatmul.f32.gmra.mxu0 %v8555
        %v8639 = vpop.f32.mrf.mxu0
        %v8640 = vadd.f32 %v8516, %v8639
        %8641 = vmatmul.f32.gmra.mxu0 %v8557
        %v8642 = vpop.f32.mrf.mxu0
        %v8643 = vadd.f32 %v8521, %v8642
        %8644 = vmatmul.f32.gmra.mxu0 %v8559
        %v8645 = vpop.f32.mrf.mxu0
        %v8646 = vadd.f32 %v8526, %v8645
        %8647 = vdwg.mxu0
        %8648 = vmatpush.msra.mxu0 0.0
        %8649 = vmatpush.msra.mxu0 0.0
        %8650 = vmatpush.msra.mxu0 0.0
        %8651 = vmatpush.msra.mxu0 0.0
        %8652 = vmatpush.msra.mxu0 0.0
        %8653 = vmatpush.msra.mxu0 0.0
        %8654 = vmatpush.msra.mxu0 0.0
        %8655 = vmatpush.msra.mxu0 0.0
        %8656 = vmatpush.msra.mxu0 0.0
        %8657 = vmatpush.msra.mxu0 0.0
        %8658 = vmatpush.msra.mxu0 0.0
        %8659 = vmatpush.msra.mxu0 0.0
        %8660 = vmatpush.msra.mxu0 %v8499
        %8661 = vmatpush.msra.mxu0 %v8495
        %8662 = vmatpush.msra.mxu0 %v8491
        %8663 = vmatpush.msra.mxu0 %v8487
        %8664 = vmatmul.f32.gmra.mxu0 %v8553
        %v8665 = vpop.f32.mrf.mxu0
        %v8666 = vadd.f32 %v8511, %v8665
        %8667 = vmatmul.f32.gmra.mxu0 %v8555
        %v8668 = vpop.f32.mrf.mxu0
        %v8669 = vadd.f32 %v8516, %v8668
        %8670 = vmatmul.f32.gmra.mxu0 %v8557
        %v8671 = vpop.f32.mrf.mxu0
        %v8672 = vadd.f32 %v8521, %v8671
        %8673 = vmatmul.f32.gmra.mxu0 %v8559
        %v8674 = vpop.f32.mrf.mxu0
        %v8675 = vadd.f32 %v8526, %v8674
        %8676 = vdwg.mxu0
        %v8677 = vmax.f32 %v8579, 0.0
        %v8678 = vmax.f32 %v8608, 0.0
        %v8679 = vmax.f32 %v8637, 0.0
        %v8680 = vmax.f32 %v8666, 0.0
        %v8681 = vmax.f32 %v8582, 0.0
        %v8682 = vmax.f32 %v8611, 0.0
        %v8683 = vmax.f32 %v8640, 0.0
        %v8684 = vmax.f32 %v8669, 0.0
        %v8685 = vmax.f32 %v8585, 0.0
        %v8686 = vmax.f32 %v8614, 0.0
        %v8687 = vmax.f32 %v8643, 0.0
        %v8688 = vmax.f32 %v8672, 0.0
        %v8689 = vmax.f32 %v8588, 0.0
        %v8690 = vmax.f32 %v8617, 0.0
        %v8691 = vmax.f32 %v8646, 0.0
        %v8692 = vmax.f32 %v8675, 0.0
        %8693 = vset.pattern.permute.xlu0 58
        %8694 = vperm.xlu0 %8693, %v8501
        %v8695 = vpop.permute.xlu0 %8694
        %8697 = vset.pattern.permute.xlu0 58
        %8698 = vperm.xlu0 %8697, %v8503
        %v8699 = vpop.permute.xlu0 %8698
        %8701 = vset.pattern.permute.xlu0 58
        %8702 = vperm.xlu0 %8701, %v8505
        %v8703 = vpop.permute.xlu0 %8702
        %8705 = vset.pattern.permute.xlu0 58
        %8706 = vperm.xlu0 %8705, %v8507
        %v8707 = vpop.permute.xlu0 %8706
        %8709 = vrot.lane.b32.xlu0 %v8501, 102
        %v8710 = vpop.permute.xlu0 %8709
        %8711 = vrot.lane.b32.xlu0 %v8503, 102
        %v8712 = vpop.permute.xlu0 %8711
        %8713 = vrot.lane.b32.xlu0 %v8505, 102
        %v8714 = vpop.permute.xlu0 %8713
        %8715 = vrot.lane.b32.xlu0 %v8507, 102
        %v8716 = vpop.permute.xlu0 %8715
        %v8717 = vsel %vm8047, %v8710, 0
        %v8719 = vsel %vm8047, %v8712, 0
        %v8721 = vsel %vm8047, %v8714, 0
        %v8723 = vsel %vm8047, %v8716, 0
        %8725 = vmatpush.msra.mxu0 0.0
        %8726 = vmatpush.msra.mxu0 0.0
        %8727 = vmatpush.msra.mxu0 0.0
        %8728 = vmatpush.msra.mxu0 0.0
        %8729 = vmatpush.msra.mxu0 0.0
        %8730 = vmatpush.msra.mxu0 0.0
        %8731 = vmatpush.msra.mxu0 0.0
        %8732 = vmatpush.msra.mxu0 0.0
        %8733 = vmatpush.msra.mxu0 0.0
        %8734 = vmatpush.msra.mxu0 0.0
        %8735 = vmatpush.msra.mxu0 0.0
        %8736 = vmatpush.msra.mxu0 0.0
        %8737 = vmatpush.msra.mxu0 %v8689
        %8738 = vmatpush.msra.mxu0 %v8685
        %8739 = vmatpush.msra.mxu0 %v8681
        %8740 = vmatpush.msra.mxu0 %v8677
        %8741 = vmatmul.f32.gmra.mxu0 %v8717
        %v8742 = vpop.f32.mrf.mxu0
        %v8743 = vadd.f32 %v8695, %v8742
        %8744 = vmatmul.f32.gmra.mxu0 %v8719
        %v8745 = vpop.f32.mrf.mxu0
        %v8746 = vadd.f32 %v8699, %v8745
        %8747 = vmatmul.f32.gmra.mxu0 %v8721
        %v8748 = vpop.f32.mrf.mxu0
        %v8749 = vadd.f32 %v8703, %v8748
        %8750 = vmatmul.f32.gmra.mxu0 %v8723
        %v8751 = vpop.f32.mrf.mxu0
        %v8752 = vadd.f32 %v8707, %v8751
        %8753 = vdwg.mxu0
        %8754 = vmatpush.msra.mxu0 0.0
        %8755 = vmatpush.msra.mxu0 0.0
        %8756 = vmatpush.msra.mxu0 0.0
        %8757 = vmatpush.msra.mxu0 0.0
        %8758 = vmatpush.msra.mxu0 0.0
        %8759 = vmatpush.msra.mxu0 0.0
        %8760 = vmatpush.msra.mxu0 0.0
        %8761 = vmatpush.msra.mxu0 0.0
        %8762 = vmatpush.msra.mxu0 0.0
        %8763 = vmatpush.msra.mxu0 0.0
        %8764 = vmatpush.msra.mxu0 0.0
        %8765 = vmatpush.msra.mxu0 0.0
        %8766 = vmatpush.msra.mxu0 %v8690
        %8767 = vmatpush.msra.mxu0 %v8686
        %8768 = vmatpush.msra.mxu0 %v8682
        %8769 = vmatpush.msra.mxu0 %v8678
        %8770 = vmatmul.f32.gmra.mxu0 %v8717
        %v8771 = vpop.f32.mrf.mxu0
        %v8772 = vadd.f32 %v8695, %v8771
        %8773 = vmatmul.f32.gmra.mxu0 %v8719
        %v8774 = vpop.f32.mrf.mxu0
        %v8775 = vadd.f32 %v8699, %v8774
        %8776 = vmatmul.f32.gmra.mxu0 %v8721
        %v8777 = vpop.f32.mrf.mxu0
        %v8778 = vadd.f32 %v8703, %v8777
        %8779 = vmatmul.f32.gmra.mxu0 %v8723
        %v8780 = vpop.f32.mrf.mxu0
        %v8781 = vadd.f32 %v8707, %v8780
        %8782 = vdwg.mxu0
        %8783 = vmatpush.msra.mxu0 0.0
        %8784 = vmatpush.msra.mxu0 0.0
        %8785 = vmatpush.msra.mxu0 0.0
        %8786 = vmatpush.msra.mxu0 0.0
        %8787 = vmatpush.msra.mxu0 0.0
        %8788 = vmatpush.msra.mxu0 0.0
        %8789 = vmatpush.msra.mxu0 0.0
        %8790 = vmatpush.msra.mxu0 0.0
        %8791 = vmatpush.msra.mxu0 0.0
        %8792 = vmatpush.msra.mxu0 0.0
        %8793 = vmatpush.msra.mxu0 0.0
        %8794 = vmatpush.msra.mxu0 0.0
        %8795 = vmatpush.msra.mxu0 %v8691
        %8796 = vmatpush.msra.mxu0 %v8687
        %8797 = vmatpush.msra.mxu0 %v8683
        %8798 = vmatpush.msra.mxu0 %v8679
        %8799 = vmatmul.f32.gmra.mxu0 %v8717
        %v8800 = vpop.f32.mrf.mxu0
        %v8801 = vadd.f32 %v8695, %v8800
        %8802 = vmatmul.f32.gmra.mxu0 %v8719
        %v8803 = vpop.f32.mrf.mxu0
        %v8804 = vadd.f32 %v8699, %v8803
        %8805 = vmatmul.f32.gmra.mxu0 %v8721
        %v8806 = vpop.f32.mrf.mxu0
        %v8807 = vadd.f32 %v8703, %v8806
        %8808 = vmatmul.f32.gmra.mxu0 %v8723
        %v8809 = vpop.f32.mrf.mxu0
        %v8810 = vadd.f32 %v8707, %v8809
        %8811 = vdwg.mxu0
        %8812 = vmatpush.msra.mxu0 0.0
        %8813 = vmatpush.msra.mxu0 0.0
        %8814 = vmatpush.msra.mxu0 0.0
        %8815 = vmatpush.msra.mxu0 0.0
        %8816 = vmatpush.msra.mxu0 0.0
        %8817 = vmatpush.msra.mxu0 0.0
        %8818 = vmatpush.msra.mxu0 0.0
        %8819 = vmatpush.msra.mxu0 0.0
        %8820 = vmatpush.msra.mxu0 0.0
        %8821 = vmatpush.msra.mxu0 0.0
        %8822 = vmatpush.msra.mxu0 0.0
        %8823 = vmatpush.msra.mxu0 0.0
        %8824 = vmatpush.msra.mxu0 %v8692
        %8825 = vmatpush.msra.mxu0 %v8688
        %8826 = vmatpush.msra.mxu0 %v8684
        %8827 = vmatpush.msra.mxu0 %v8680
        %8828 = vmatmul.f32.gmra.mxu0 %v8717
        %v8829 = vpop.f32.mrf.mxu0
        %v8830 = vadd.f32 %v8695, %v8829
        %8831 = vmatmul.f32.gmra.mxu0 %v8719
        %v8832 = vpop.f32.mrf.mxu0
        %v8833 = vadd.f32 %v8699, %v8832
        %8834 = vmatmul.f32.gmra.mxu0 %v8721
        %v8835 = vpop.f32.mrf.mxu0
        %v8836 = vadd.f32 %v8703, %v8835
        %8837 = vmatmul.f32.gmra.mxu0 %v8723
        %v8838 = vpop.f32.mrf.mxu0
        %v8839 = vadd.f32 %v8707, %v8838
        %8840 = vdwg.mxu0
        %8841 = vrot.lane.b32.xlu0 %v8501, 37
        %v8842 = vpop.permute.xlu0 %8841
        %8843 = vrot.lane.b32.xlu0 %v8503, 37
        %v8844 = vpop.permute.xlu0 %8843
        %8845 = vrot.lane.b32.xlu0 %v8505, 37
        %v8846 = vpop.permute.xlu0 %8845
        %8847 = vrot.lane.b32.xlu0 %v8507, 37
        %v8848 = vpop.permute.xlu0 %8847
        %vm8849 = vcmask 121856
        %v8850 = vsel %vm8849, %v8842, 0
        %v8852 = vsel %vm8849, %v8844, 0
        %v8854 = vsel %vm8849, %v8846, 0
        %v8856 = vsel %vm8849, %v8848, 0
        %vm8858 = vcmask 1046528
        %v8860 = vsel %vm8858, %v7841, 0
        %v8863 = vsel %vm8858, %v7842, 0
        %v8866 = vsel %vm8858, %v7843, 0
        %v8869 = vsel %vm8858, %v7844, 0
        %8871 = vmatpush.msra.mxu0 0.0
        %8872 = vmatpush.msra.mxu0 0.0
        %8873 = vmatpush.msra.mxu0 0.0
        %8874 = vmatpush.msra.mxu0 0.0
        %8875 = vmatpush.msra.mxu0 0.0
        %8876 = vmatpush.msra.mxu0 0.0
        %8877 = vmatpush.msra.mxu0 0.0
        %8878 = vmatpush.msra.mxu0 0.0
        %8879 = vmatpush.msra.mxu0 0.0
        %8880 = vmatpush.msra.mxu0 0.0
        %8881 = vmatpush.msra.mxu0 0.0
        %8882 = vmatpush.msra.mxu0 0.0
        %8883 = vmatpush.msra.mxu0 0.0
        %8884 = vmatpush.msra.mxu0 0.0
        %8885 = vmatpush.msra.mxu0 %v8860
        %8886 = vmatpush.msra.mxu0 %v7837
        %8887 = vmatmul.f32.gmra.mxu0 %v8850
        %v8888 = vpop.f32.mrf.mxu0
        %v8889 = vadd.f32 0.0, %v8888
        %8890 = vmatmul.f32.gmra.mxu0 %v8852
        %v8891 = vpop.f32.mrf.mxu0
        %v8892 = vadd.f32 0.0, %v8891
        %8893 = vmatmul.f32.gmra.mxu0 %v8854
        %v8894 = vpop.f32.mrf.mxu0
        %v8895 = vadd.f32 0.0, %v8894
        %8896 = vmatmul.f32.gmra.mxu0 %v8856
        %v8897 = vpop.f32.mrf.mxu0
        %v8898 = vadd.f32 0.0, %v8897
        %8899 = vdwg.mxu0
        %8900 = vmatpush.msra.mxu0 0.0
        %8901 = vmatpush.msra.mxu0 0.0
        %8902 = vmatpush.msra.mxu0 0.0
        %8903 = vmatpush.msra.mxu0 0.0
        %8904 = vmatpush.msra.mxu0 0.0
        %8905 = vmatpush.msra.mxu0 0.0
        %8906 = vmatpush.msra.mxu0 0.0
        %8907 = vmatpush.msra.mxu0 0.0
        %8908 = vmatpush.msra.mxu0 0.0
        %8909 = vmatpush.msra.mxu0 0.0
        %8910 = vmatpush.msra.mxu0 0.0
        %8911 = vmatpush.msra.mxu0 0.0
        %8912 = vmatpush.msra.mxu0 0.0
        %8913 = vmatpush.msra.mxu0 0.0
        %8914 = vmatpush.msra.mxu0 %v8863
        %8915 = vmatpush.msra.mxu0 %v7838
        %8916 = vmatmul.f32.gmra.mxu0 %v8850
        %v8917 = vpop.f32.mrf.mxu0
        %v8918 = vadd.f32 0.0, %v8917
        %8919 = vmatmul.f32.gmra.mxu0 %v8852
        %v8920 = vpop.f32.mrf.mxu0
        %v8921 = vadd.f32 0.0, %v8920
        %8922 = vmatmul.f32.gmra.mxu0 %v8854
        %v8923 = vpop.f32.mrf.mxu0
        %v8924 = vadd.f32 0.0, %v8923
        %8925 = vmatmul.f32.gmra.mxu0 %v8856
        %v8926 = vpop.f32.mrf.mxu0
        %v8927 = vadd.f32 0.0, %v8926
        %8928 = vdwg.mxu0
        %8929 = vmatpush.msra.mxu0 0.0
        %8930 = vmatpush.msra.mxu0 0.0
        %8931 = vmatpush.msra.mxu0 0.0
        %8932 = vmatpush.msra.mxu0 0.0
        %8933 = vmatpush.msra.mxu0 0.0
        %8934 = vmatpush.msra.mxu0 0.0
        %8935 = vmatpush.msra.mxu0 0.0
        %8936 = vmatpush.msra.mxu0 0.0
        %8937 = vmatpush.msra.mxu0 0.0
        %8938 = vmatpush.msra.mxu0 0.0
        %8939 = vmatpush.msra.mxu0 0.0
        %8940 = vmatpush.msra.mxu0 0.0
        %8941 = vmatpush.msra.mxu0 0.0
        %8942 = vmatpush.msra.mxu0 0.0
        %8943 = vmatpush.msra.mxu0 %v8866
        %8944 = vmatpush.msra.mxu0 %v7839
        %8945 = vmatmul.f32.gmra.mxu0 %v8850
        %v8946 = vpop.f32.mrf.mxu0
        %v8947 = vadd.f32 0.0, %v8946
        %8948 = vmatmul.f32.gmra.mxu0 %v8852
        %v8949 = vpop.f32.mrf.mxu0
        %v8950 = vadd.f32 0.0, %v8949
        %8951 = vmatmul.f32.gmra.mxu0 %v8854
        %v8952 = vpop.f32.mrf.mxu0
        %v8953 = vadd.f32 0.0, %v8952
        %8954 = vmatmul.f32.gmra.mxu0 %v8856
        %v8955 = vpop.f32.mrf.mxu0
        %v8956 = vadd.f32 0.0, %v8955
        %8957 = vdwg.mxu0
        %8958 = vmatpush.msra.mxu0 0.0
        %8959 = vmatpush.msra.mxu0 0.0
        %8960 = vmatpush.msra.mxu0 0.0
        %8961 = vmatpush.msra.mxu0 0.0
        %8962 = vmatpush.msra.mxu0 0.0
        %8963 = vmatpush.msra.mxu0 0.0
        %8964 = vmatpush.msra.mxu0 0.0
        %8965 = vmatpush.msra.mxu0 0.0
        %8966 = vmatpush.msra.mxu0 0.0
        %8967 = vmatpush.msra.mxu0 0.0
        %8968 = vmatpush.msra.mxu0 0.0
        %8969 = vmatpush.msra.mxu0 0.0
        %8970 = vmatpush.msra.mxu0 0.0
        %8971 = vmatpush.msra.mxu0 0.0
        %8972 = vmatpush.msra.mxu0 %v8869
        %8973 = vmatpush.msra.mxu0 %v7840
        %8974 = vmatmul.f32.gmra.mxu0 %v8850
        %v8975 = vpop.f32.mrf.mxu0
        %v8976 = vadd.f32 0.0, %v8975
        %8977 = vmatmul.f32.gmra.mxu0 %v8852
        %v8978 = vpop.f32.mrf.mxu0
        %v8979 = vadd.f32 0.0, %v8978
        %8980 = vmatmul.f32.gmra.mxu0 %v8854
        %v8981 = vpop.f32.mrf.mxu0
        %v8982 = vadd.f32 0.0, %v8981
        %8983 = vmatmul.f32.gmra.mxu0 %v8856
        %v8984 = vpop.f32.mrf.mxu0
        %v8985 = vadd.f32 0.0, %v8984
        %8986 = vdwg.mxu0
        %8987 = vrot.lane.b32.xlu0 %v8501, 69
        %v8988 = vpop.permute.xlu0 %8987
        %8989 = vrot.lane.b32.xlu0 %v8503, 69
        %v8990 = vpop.permute.xlu0 %8989
        %8991 = vrot.lane.b32.xlu0 %v8505, 69
        %v8992 = vpop.permute.xlu0 %8991
        %8993 = vrot.lane.b32.xlu0 %v8507, 69
        %v8994 = vpop.permute.xlu0 %8993
        %v8995 = vsel %vm8047, %v8988, 0
        %v8997 = vsel %vm8047, %v8990, 0
        %v8999 = vsel %vm8047, %v8992, 0
        %v9001 = vsel %vm8047, %v8994, 0
        %9003 = vmatpush.msra.mxu0 0.0
        %9004 = vmatpush.msra.mxu0 0.0
        %9005 = vmatpush.msra.mxu0 0.0
        %9006 = vmatpush.msra.mxu0 0.0
        %9007 = vmatpush.msra.mxu0 0.0
        %9008 = vmatpush.msra.mxu0 0.0
        %9009 = vmatpush.msra.mxu0 0.0
        %9010 = vmatpush.msra.mxu0 0.0
        %9011 = vmatpush.msra.mxu0 0.0
        %9012 = vmatpush.msra.mxu0 0.0
        %9013 = vmatpush.msra.mxu0 0.0
        %9014 = vmatpush.msra.mxu0 0.0
        %9015 = vmatpush.msra.mxu0 %v8752
        %9016 = vmatpush.msra.mxu0 %v8749
        %9017 = vmatpush.msra.mxu0 %v8746
        %9018 = vmatpush.msra.mxu0 %v8743
        %9019 = vmatmul.f32.gmra.mxu0 %v8995
        %v9020 = vpop.f32.mrf.mxu0
        %v9021 = vadd.f32 %v8889, %v9020
        %9022 = vmatmul.f32.gmra.mxu0 %v8997
        %v9023 = vpop.f32.mrf.mxu0
        %v9024 = vadd.f32 %v8892, %v9023
        %9025 = vmatmul.f32.gmra.mxu0 %v8999
        %v9026 = vpop.f32.mrf.mxu0
        %v9027 = vadd.f32 %v8895, %v9026
        %9028 = vmatmul.f32.gmra.mxu0 %v9001
        %v9029 = vpop.f32.mrf.mxu0
        %v9030 = vadd.f32 %v8898, %v9029
        %9031 = vdwg.mxu0
        %9032 = vmatpush.msra.mxu0 0.0
        %9033 = vmatpush.msra.mxu0 0.0
        %9034 = vmatpush.msra.mxu0 0.0
        %9035 = vmatpush.msra.mxu0 0.0
        %9036 = vmatpush.msra.mxu0 0.0
        %9037 = vmatpush.msra.mxu0 0.0
        %9038 = vmatpush.msra.mxu0 0.0
        %9039 = vmatpush.msra.mxu0 0.0
        %9040 = vmatpush.msra.mxu0 0.0
        %9041 = vmatpush.msra.mxu0 0.0
        %9042 = vmatpush.msra.mxu0 0.0
        %9043 = vmatpush.msra.mxu0 0.0
        %9044 = vmatpush.msra.mxu0 %v8781
        %9045 = vmatpush.msra.mxu0 %v8778
        %9046 = vmatpush.msra.mxu0 %v8775
        %9047 = vmatpush.msra.mxu0 %v8772
        %9048 = vmatmul.f32.gmra.mxu0 %v8995
        %v9049 = vpop.f32.mrf.mxu0
        %v9050 = vadd.f32 %v8918, %v9049
        %9051 = vmatmul.f32.gmra.mxu0 %v8997
        %v9052 = vpop.f32.mrf.mxu0
        %v9053 = vadd.f32 %v8921, %v9052
        %9054 = vmatmul.f32.gmra.mxu0 %v8999
        %v9055 = vpop.f32.mrf.mxu0
        %v9056 = vadd.f32 %v8924, %v9055
        %9057 = vmatmul.f32.gmra.mxu0 %v9001
        %v9058 = vpop.f32.mrf.mxu0
        %v9059 = vadd.f32 %v8927, %v9058
        %9060 = vdwg.mxu0
        %9061 = vmatpush.msra.mxu0 0.0
        %9062 = vmatpush.msra.mxu0 0.0
        %9063 = vmatpush.msra.mxu0 0.0
        %9064 = vmatpush.msra.mxu0 0.0
        %9065 = vmatpush.msra.mxu0 0.0
        %9066 = vmatpush.msra.mxu0 0.0
        %9067 = vmatpush.msra.mxu0 0.0
        %9068 = vmatpush.msra.mxu0 0.0
        %9069 = vmatpush.msra.mxu0 0.0
        %9070 = vmatpush.msra.mxu0 0.0
        %9071 = vmatpush.msra.mxu0 0.0
        %9072 = vmatpush.msra.mxu0 0.0
        %9073 = vmatpush.msra.mxu0 %v8810
        %9074 = vmatpush.msra.mxu0 %v8807
        %9075 = vmatpush.msra.mxu0 %v8804
        %9076 = vmatpush.msra.mxu0 %v8801
        %9077 = vmatmul.f32.gmra.mxu0 %v8995
        %v9078 = vpop.f32.mrf.mxu0
        %v9079 = vadd.f32 %v8947, %v9078
        %9080 = vmatmul.f32.gmra.mxu0 %v8997
        %v9081 = vpop.f32.mrf.mxu0
        %v9082 = vadd.f32 %v8950, %v9081
        %9083 = vmatmul.f32.gmra.mxu0 %v8999
        %v9084 = vpop.f32.mrf.mxu0
        %v9085 = vadd.f32 %v8953, %v9084
        %9086 = vmatmul.f32.gmra.mxu0 %v9001
        %v9087 = vpop.f32.mrf.mxu0
        %v9088 = vadd.f32 %v8956, %v9087
        %9089 = vdwg.mxu0
        %9090 = vmatpush.msra.mxu0 0.0
        %9091 = vmatpush.msra.mxu0 0.0
        %9092 = vmatpush.msra.mxu0 0.0
        %9093 = vmatpush.msra.mxu0 0.0
        %9094 = vmatpush.msra.mxu0 0.0
        %9095 = vmatpush.msra.mxu0 0.0
        %9096 = vmatpush.msra.mxu0 0.0
        %9097 = vmatpush.msra.mxu0 0.0
        %9098 = vmatpush.msra.mxu0 0.0
        %9099 = vmatpush.msra.mxu0 0.0
        %9100 = vmatpush.msra.mxu0 0.0
        %9101 = vmatpush.msra.mxu0 0.0
        %9102 = vmatpush.msra.mxu0 %v8839
        %9103 = vmatpush.msra.mxu0 %v8836
        %9104 = vmatpush.msra.mxu0 %v8833
        %9105 = vmatpush.msra.mxu0 %v8830
        %9106 = vmatmul.f32.gmra.mxu0 %v8995
        %v9107 = vpop.f32.mrf.mxu0
        %v9108 = vadd.f32 %v8976, %v9107
        %9109 = vmatmul.f32.gmra.mxu0 %v8997
        %v9110 = vpop.f32.mrf.mxu0
        %v9111 = vadd.f32 %v8979, %v9110
        %9112 = vmatmul.f32.gmra.mxu0 %v8999
        %v9113 = vpop.f32.mrf.mxu0
        %v9114 = vadd.f32 %v8982, %v9113
        %9115 = vmatmul.f32.gmra.mxu0 %v9001
        %v9116 = vpop.f32.mrf.mxu0
        %v9117 = vadd.f32 %v8985, %v9116
        %9118 = vdwg.mxu0
        %9119 = vset.pattern.permute.xlu0 106
        %9120 = vperm.xlu0 %9119, %v8501
        %v9121 = vpop.permute.xlu0 %9120
        %9123 = vset.pattern.permute.xlu0 106
        %9124 = vperm.xlu0 %9123, %v8503
        %v9125 = vpop.permute.xlu0 %9124
        %9127 = vset.pattern.permute.xlu0 106
        %9128 = vperm.xlu0 %9127, %v8505
        %v9129 = vpop.permute.xlu0 %9128
        %9131 = vset.pattern.permute.xlu0 106
        %9132 = vperm.xlu0 %9131, %v8507
        %v9133 = vpop.permute.xlu0 %9132
        %v9135 = vadd.f32 %v9021, %v9121
        %v9136 = vadd.f32 %v9050, %v9121
        %v9137 = vadd.f32 %v9079, %v9121
        %v9138 = vadd.f32 %v9108, %v9121
        %v9139 = vadd.f32 %v9024, %v9125
        %v9140 = vadd.f32 %v9053, %v9125
        %v9141 = vadd.f32 %v9082, %v9125
        %v9142 = vadd.f32 %v9111, %v9125
        %v9143 = vadd.f32 %v9027, %v9129
        %v9144 = vadd.f32 %v9056, %v9129
        %v9145 = vadd.f32 %v9085, %v9129
        %v9146 = vadd.f32 %v9114, %v9129
        %v9147 = vadd.f32 %v9030, %v9133
        %v9148 = vadd.f32 %v9059, %v9133
        %v9149 = vadd.f32 %v9088, %v9133
        %v9150 = vadd.f32 %v9117, %v9133
        %v9151 = vmax.f32 %v9135, 0.0
        %v9152 = vmax.f32 %v9136, 0.0
        %v9153 = vmax.f32 %v9137, 0.0
        %v9154 = vmax.f32 %v9138, 0.0
        %v9155 = vmax.f32 %v9139, 0.0
        %v9156 = vmax.f32 %v9140, 0.0
        %v9157 = vmax.f32 %v9141, 0.0
        %v9158 = vmax.f32 %v9142, 0.0
        %v9159 = vmax.f32 %v9143, 0.0
        %v9160 = vmax.f32 %v9144, 0.0
        %v9161 = vmax.f32 %v9145, 0.0
        %v9162 = vmax.f32 %v9146, 0.0
        %v9163 = vmax.f32 %v9147, 0.0
        %v9164 = vmax.f32 %v9148, 0.0
        %v9165 = vmax.f32 %v9149, 0.0
        %v9166 = vmax.f32 %v9150, 0.0
        %v9167 = vld [vmem:[#allocation7 + $0x8] sm:$0xff]
        %v9168 = vld [vmem:[#allocation7 + $0x10] sm:$0xff]
        %v9169 = vld [vmem:[#allocation7 + $0x20] sm:$0xff]
        %v9170 = vld [vmem:[#allocation7 + $0x28] sm:$0xff]
        %v9171 = vld [vmem:[#allocation7 + $0x38] sm:$0xff]
        %v9172 = vld [vmem:[#allocation7 + $0x40] sm:$0xff]
        %v9173 = vld [vmem:[#allocation7 + $0x50] sm:$0xff]
        %v9174 = vld [vmem:[#allocation7 + $0x58] sm:$0xff]
        %9179 = vrot.lane.b32.xlu0 %v9168, 117
        %v9180 = vpop.permute.xlu0 %9179
        %9181 = vrot.lane.b32.xlu0 %v9170, 117
        %v9182 = vpop.permute.xlu0 %9181
        %9183 = vrot.lane.b32.xlu0 %v9172, 117
        %v9184 = vpop.permute.xlu0 %9183
        %9185 = vrot.lane.b32.xlu0 %v9174, 117
        %v9186 = vpop.permute.xlu0 %9185
        %v9187 = vsel %vm8047, %v9180, 0
        %v9189 = vsel %vm8047, %v9182, 0
        %v9191 = vsel %vm8047, %v9184, 0
        %v9193 = vsel %vm8047, %v9186, 0
        %9195 = vmatpush.msra.mxu0 0.0
        %9196 = vmatpush.msra.mxu0 0.0
        %9197 = vmatpush.msra.mxu0 0.0
        %9198 = vmatpush.msra.mxu0 0.0
        %9199 = vmatpush.msra.mxu0 0.0
        %9200 = vmatpush.msra.mxu0 0.0
        %9201 = vmatpush.msra.mxu0 0.0
        %9202 = vmatpush.msra.mxu0 0.0
        %9203 = vmatpush.msra.mxu0 0.0
        %9204 = vmatpush.msra.mxu0 0.0
        %9205 = vmatpush.msra.mxu0 0.0
        %9206 = vmatpush.msra.mxu0 0.0
        %9207 = vmatpush.msra.mxu0 %v8752
        %9208 = vmatpush.msra.mxu0 %v8749
        %9209 = vmatpush.msra.mxu0 %v8746
        %9210 = vmatpush.msra.mxu0 %v8743
        %9211 = vmatmul.f32.gmra.mxu0 %v9187
        %v9212 = vpop.f32.mrf.mxu0
        %v9213 = vadd.f32 0.0, %v9212
        %9214 = vmatmul.f32.gmra.mxu0 %v9189
        %v9215 = vpop.f32.mrf.mxu0
        %9216 = vmatmul.f32.gmra.mxu0 %v9191
        %v9217 = vpop.f32.mrf.mxu0
        %9218 = vmatmul.f32.gmra.mxu0 %v9193
        %v9219 = vpop.f32.mrf.mxu0
        %9220 = vdwg.mxu0
        %9221 = vmatpush.msra.mxu0 0.0
        %9222 = vmatpush.msra.mxu0 0.0
        %9223 = vmatpush.msra.mxu0 0.0
        %9224 = vmatpush.msra.mxu0 0.0
        %9225 = vmatpush.msra.mxu0 0.0
        %9226 = vmatpush.msra.mxu0 0.0
        %9227 = vmatpush.msra.mxu0 0.0
        %9228 = vmatpush.msra.mxu0 0.0
        %9229 = vmatpush.msra.mxu0 0.0
        %9230 = vmatpush.msra.mxu0 0.0
        %9231 = vmatpush.msra.mxu0 0.0
        %9232 = vmatpush.msra.mxu0 0.0
        %9233 = vmatpush.msra.mxu0 %v8781
        %9234 = vmatpush.msra.mxu0 %v8778
        %9235 = vmatpush.msra.mxu0 %v8775
        %9236 = vmatpush.msra.mxu0 %v8772
        %9237 = vmatmul.f32.gmra.mxu0 %v9187
        %v9238 = vpop.f32.mrf.mxu0
        %v9239 = vadd.f32 0.0, %v9238
        %9240 = vmatmul.f32.gmra.mxu0 %v9189
        %v9241 = vpop.f32.mrf.mxu0
        %9242 = vmatmul.f32.gmra.mxu0 %v9191
        %v9243 = vpop.f32.mrf.mxu0
        %9244 = vmatmul.f32.gmra.mxu0 %v9193
        %v9245 = vpop.f32.mrf.mxu0
        %9246 = vdwg.mxu0
        %9247 = vmatpush.msra.mxu0 0.0
        %9248 = vmatpush.msra.mxu0 0.0
        %9249 = vmatpush.msra.mxu0 0.0
        %9250 = vmatpush.msra.mxu0 0.0
        %9251 = vmatpush.msra.mxu0 0.0
        %9252 = vmatpush.msra.mxu0 0.0
        %9253 = vmatpush.msra.mxu0 0.0
        %9254 = vmatpush.msra.mxu0 0.0
        %9255 = vmatpush.msra.mxu0 0.0
        %9256 = vmatpush.msra.mxu0 0.0
        %9257 = vmatpush.msra.mxu0 0.0
        %9258 = vmatpush.msra.mxu0 0.0
        %9259 = vmatpush.msra.mxu0 %v8810
        %9260 = vmatpush.msra.mxu0 %v8807
        %9261 = vmatpush.msra.mxu0 %v8804
        %9262 = vmatpush.msra.mxu0 %v8801
        %9263 = vmatmul.f32.gmra.mxu0 %v9187
        %v9264 = vpop.f32.mrf.mxu0
        %v9265 = vadd.f32 0.0, %v9264
        %9266 = vmatmul.f32.gmra.mxu0 %v9189
        %v9267 = vpop.f32.mrf.mxu0
        %9268 = vmatmul.f32.gmra.mxu0 %v9191
        %v9269 = vpop.f32.mrf.mxu0
        %9270 = vmatmul.f32.gmra.mxu0 %v9193
        %v9271 = vpop.f32.mrf.mxu0
        %9272 = vdwg.mxu0
        %9273 = vmatpush.msra.mxu0 0.0
        %9274 = vmatpush.msra.mxu0 0.0
        %9275 = vmatpush.msra.mxu0 0.0
        %9276 = vmatpush.msra.mxu0 0.0
        %9277 = vmatpush.msra.mxu0 0.0
        %9278 = vmatpush.msra.mxu0 0.0
        %9279 = vmatpush.msra.mxu0 0.0
        %9280 = vmatpush.msra.mxu0 0.0
        %9281 = vmatpush.msra.mxu0 0.0
        %9282 = vmatpush.msra.mxu0 0.0
        %9283 = vmatpush.msra.mxu0 0.0
        %9284 = vmatpush.msra.mxu0 0.0
        %9285 = vmatpush.msra.mxu0 %v8839
        %9286 = vmatpush.msra.mxu0 %v8836
        %9287 = vmatpush.msra.mxu0 %v8833
        %9288 = vmatpush.msra.mxu0 %v8830
        %9289 = vmatmul.f32.gmra.mxu0 %v9187
        %v9290 = vpop.f32.mrf.mxu0
        %v9291 = vadd.f32 0.0, %v9290
        %9292 = vmatmul.f32.gmra.mxu0 %v9189
        %v9293 = vpop.f32.mrf.mxu0
        %9294 = vmatmul.f32.gmra.mxu0 %v9191
        %v9295 = vpop.f32.mrf.mxu0
        %9296 = vmatmul.f32.gmra.mxu0 %v9193
        %v9297 = vpop.f32.mrf.mxu0
        %9298 = vdwg.mxu0
        %9303 = vrot.lane.b32.xlu0 %v9167, 21
        %v9304 = vpop.permute.xlu0 %9303
        %9305 = vrot.lane.b32.xlu0 %v9168, 21
        %v9306 = vpop.permute.xlu0 %9305
        %9307 = vrot.lane.b32.xlu0 %v9169, 21
        %v9308 = vpop.permute.xlu0 %9307
        %9309 = vrot.lane.b32.xlu0 %v9170, 21
        %v9310 = vpop.permute.xlu0 %9309
        %9311 = vrot.lane.b32.xlu0 %v9171, 21
        %v9312 = vpop.permute.xlu0 %9311
        %9313 = vrot.lane.b32.xlu0 %v9172, 21
        %v9314 = vpop.permute.xlu0 %9313
        %9315 = vrot.lane.b32.xlu0 %v9173, 21
        %v9316 = vpop.permute.xlu0 %9315
        %9317 = vrot.lane.b32.xlu0 %v9174, 21
        %v9318 = vpop.permute.xlu0 %9317
        %vm9319 = vcmask 171008
        %v9320 = vsel %vm9319, %v9304, %v9306
        %v9321 = vsel %vm9319, %v9308, %v9310
        %v9322 = vsel %vm9319, %v9312, %v9314
        %v9323 = vsel %vm9319, %v9316, %v9318
        %v9324 = vsel %vm8047, %v9320, 0
        %v9326 = vsel %vm8047, %v9321, 0
        %v9328 = vsel %vm8047, %v9322, 0
        %v9330 = vsel %vm8047, %v9323, 0
        %9332 = vmatpush.msra.mxu0 0.0
        %9333 = vmatpush.msra.mxu0 0.0
        %9334 = vmatpush.msra.mxu0 0.0
        %9335 = vmatpush.msra.mxu0 0.0
        %9336 = vmatpush.msra.mxu0 0.0
        %9337 = vmatpush.msra.mxu0 0.0
        %9338 = vmatpush.msra.mxu0 0.0
        %9339 = vmatpush.msra.mxu0 0.0
        %9340 = vmatpush.msra.mxu0 0.0
        %9341 = vmatpush.msra.mxu0 0.0
        %9342 = vmatpush.msra.mxu0 0.0
        %9343 = vmatpush.msra.mxu0 0.0
        %9344 = vmatpush.msra.mxu0 %v9163
        %9345 = vmatpush.msra.mxu0 %v9159
        %9346 = vmatpush.msra.mxu0 %v9155
        %9347 = vmatpush.msra.mxu0 %v9151
        %9348 = vmatmul.f32.gmra.mxu0 %v9324
        %v9349 = vpop.f32.mrf.mxu0
        %v9350 = vadd.f32 %v9213, %v9349
        %9351 = vmatmul.f32.gmra.mxu0 %v9326
        %v9352 = vpop.f32.mrf.mxu0
        %9353 = vmatmul.f32.gmra.mxu0 %v9328
        %v9354 = vpop.f32.mrf.mxu0
        %9355 = vmatmul.f32.gmra.mxu0 %v9330
        %v9356 = vpop.f32.mrf.mxu0
        %9357 = vdwg.mxu0
        %9358 = vmatpush.msra.mxu0 0.0
        %9359 = vmatpush.msra.mxu0 0.0
        %9360 = vmatpush.msra.mxu0 0.0
        %9361 = vmatpush.msra.mxu0 0.0
        %9362 = vmatpush.msra.mxu0 0.0
        %9363 = vmatpush.msra.mxu0 0.0
        %9364 = vmatpush.msra.mxu0 0.0
        %9365 = vmatpush.msra.mxu0 0.0
        %9366 = vmatpush.msra.mxu0 0.0
        %9367 = vmatpush.msra.mxu0 0.0
        %9368 = vmatpush.msra.mxu0 0.0
        %9369 = vmatpush.msra.mxu0 0.0
        %9370 = vmatpush.msra.mxu0 %v9164
        %9371 = vmatpush.msra.mxu0 %v9160
        %9372 = vmatpush.msra.mxu0 %v9156
        %9373 = vmatpush.msra.mxu0 %v9152
        %9374 = vmatmul.f32.gmra.mxu0 %v9324
        %v9375 = vpop.f32.mrf.mxu0
        %v9376 = vadd.f32 %v9239, %v9375
        %9377 = vmatmul.f32.gmra.mxu0 %v9326
        %v9378 = vpop.f32.mrf.mxu0
        %9379 = vmatmul.f32.gmra.mxu0 %v9328
        %v9380 = vpop.f32.mrf.mxu0
        %9381 = vmatmul.f32.gmra.mxu0 %v9330
        %v9382 = vpop.f32.mrf.mxu0
        %9383 = vdwg.mxu0
        %9384 = vmatpush.msra.mxu0 0.0
        %9385 = vmatpush.msra.mxu0 0.0
        %9386 = vmatpush.msra.mxu0 0.0
        %9387 = vmatpush.msra.mxu0 0.0
        %9388 = vmatpush.msra.mxu0 0.0
        %9389 = vmatpush.msra.mxu0 0.0
        %9390 = vmatpush.msra.mxu0 0.0
        %9391 = vmatpush.msra.mxu0 0.0
        %9392 = vmatpush.msra.mxu0 0.0
        %9393 = vmatpush.msra.mxu0 0.0
        %9394 = vmatpush.msra.mxu0 0.0
        %9395 = vmatpush.msra.mxu0 0.0
        %9396 = vmatpush.msra.mxu0 %v9165
        %9397 = vmatpush.msra.mxu0 %v9161
        %9398 = vmatpush.msra.mxu0 %v9157
        %9399 = vmatpush.msra.mxu0 %v9153
        %9400 = vmatmul.f32.gmra.mxu0 %v9324
        %v9401 = vpop.f32.mrf.mxu0
        %v9402 = vadd.f32 %v9265, %v9401
        %9403 = vmatmul.f32.gmra.mxu0 %v9326
        %v9404 = vpop.f32.mrf.mxu0
        %9405 = vmatmul.f32.gmra.mxu0 %v9328
        %v9406 = vpop.f32.mrf.mxu0
        %9407 = vmatmul.f32.gmra.mxu0 %v9330
        %v9408 = vpop.f32.mrf.mxu0
        %9409 = vdwg.mxu0
        %9410 = vmatpush.msra.mxu0 0.0
        %9411 = vmatpush.msra.mxu0 0.0
        %9412 = vmatpush.msra.mxu0 0.0
        %9413 = vmatpush.msra.mxu0 0.0
        %9414 = vmatpush.msra.mxu0 0.0
        %9415 = vmatpush.msra.mxu0 0.0
        %9416 = vmatpush.msra.mxu0 0.0
        %9417 = vmatpush.msra.mxu0 0.0
        %9418 = vmatpush.msra.mxu0 0.0
        %9419 = vmatpush.msra.mxu0 0.0
        %9420 = vmatpush.msra.mxu0 0.0
        %9421 = vmatpush.msra.mxu0 0.0
        %9422 = vmatpush.msra.mxu0 %v9166
        %9423 = vmatpush.msra.mxu0 %v9162
        %9424 = vmatpush.msra.mxu0 %v9158
        %9425 = vmatpush.msra.mxu0 %v9154
        %9426 = vmatmul.f32.gmra.mxu0 %v9324
        %v9427 = vpop.f32.mrf.mxu0
        %v9428 = vadd.f32 %v9291, %v9427
        %9429 = vmatmul.f32.gmra.mxu0 %v9326
        %v9430 = vpop.f32.mrf.mxu0
        %9431 = vmatmul.f32.gmra.mxu0 %v9328
        %v9432 = vpop.f32.mrf.mxu0
        %9433 = vmatmul.f32.gmra.mxu0 %v9330
        %v9434 = vpop.f32.mrf.mxu0
        %9435 = vdwg.mxu0
        %9436 = vset.pattern.permute.xlu0 43
        %9437 = vperm.xlu0 %9436, %v9168
        %v9438 = vpop.permute.xlu0 %9437
        %v9440 = vadd.f32 %v9350, %v9438
        %v9441 = vadd.f32 %v9376, %v9438
        %v9442 = vadd.f32 %v9402, %v9438
        %v9443 = vadd.f32 %v9428, %v9438
        %v9444 = vxor.u32 %v9440, 2147483648
        %v9445 = vxor.u32 %v9441, 2147483648
        %v9446 = vxor.u32 %v9442, 2147483648
        %v9447 = vxor.u32 %v9443, 2147483648
        %v9448 = vmul.f32 %v9444, 1.442695
        %v9449 = vpow.pop %v9448
        %v9450 = vmul.f32 %v9445, 1.442695
        %v9451 = vpow.pop %v9450
        %v9452 = vmul.f32 %v9446, 1.442695
        %v9453 = vpow.pop %v9452
        %v9454 = vmul.f32 %v9447, 1.442695
        %v9455 = vpow.pop %v9454
        %v9456 = vadd.f32 %v9449, 1.0
        %v9457 = vadd.f32 %v9451, 1.0
        %v9458 = vadd.f32 %v9453, 1.0
        %v9459 = vadd.f32 %v9455, 1.0
        %v9460 = vrcp.pop %v9456
        %v9461 = vmul.f32 %v9456, %v9460
        %v9462 = vsub.f32 1.0, %v9461
        %v9463 = vmul.f32 %v9460, %v9462
        %v9464 = vadd.f32 %v9460, %v9463
        %vm9465 = vweird.f32 %v9456
        %vm9466 = vweird.f32 %v9460
        %vm9467 = vmor %vm9465, %vm9466
        %v9468 = vsel %vm9467, %v9460, %v9464
        %v9469 = vand.u32 2147483647, %v9456
        %vm9470 = vcmp.eq.f32.partialorder %v9469, 8.507059e+37
        %v9471 = vand.u32 %v9456, 2147483648
        %v9472 = vor.u32 1.1754944e-38, %v9471
        %v9473 = vsel %vm9470, %v9472, %v9468
        %v9474 = vmul.f32 1.0, %v9473
        %v9475 = vrcp.pop %v9457
        %v9476 = vmul.f32 %v9457, %v9475
        %v9477 = vsub.f32 1.0, %v9476
        %v9478 = vmul.f32 %v9475, %v9477
        %v9479 = vadd.f32 %v9475, %v9478
        %vm9480 = vweird.f32 %v9457
        %vm9481 = vweird.f32 %v9475
        %vm9482 = vmor %vm9480, %vm9481
        %v9483 = vsel %vm9482, %v9475, %v9479
        %v9484 = vand.u32 2147483647, %v9457
        %vm9485 = vcmp.eq.f32.partialorder %v9484, 8.507059e+37
        %v9486 = vand.u32 %v9457, 2147483648
        %v9487 = vor.u32 1.1754944e-38, %v9486
        %v9488 = vsel %vm9485, %v9487, %v9483
        %v9489 = vmul.f32 1.0, %v9488
        %v9490 = vrcp.pop %v9458
        %v9491 = vmul.f32 %v9458, %v9490
        %v9492 = vsub.f32 1.0, %v9491
        %v9493 = vmul.f32 %v9490, %v9492
        %v9494 = vadd.f32 %v9490, %v9493
        %vm9495 = vweird.f32 %v9458
        %vm9496 = vweird.f32 %v9490
        %vm9497 = vmor %vm9495, %vm9496
        %v9498 = vsel %vm9497, %v9490, %v9494
        %v9499 = vand.u32 2147483647, %v9458
        %vm9500 = vcmp.eq.f32.partialorder %v9499, 8.507059e+37
        %v9501 = vand.u32 %v9458, 2147483648
        %v9502 = vor.u32 1.1754944e-38, %v9501
        %v9503 = vsel %vm9500, %v9502, %v9498
        %v9504 = vmul.f32 1.0, %v9503
        %v9505 = vrcp.pop %v9459
        %v9506 = vmul.f32 %v9459, %v9505
        %v9507 = vsub.f32 1.0, %v9506
        %v9508 = vmul.f32 %v9505, %v9507
        %v9509 = vadd.f32 %v9505, %v9508
        %vm9510 = vweird.f32 %v9459
        %vm9511 = vweird.f32 %v9505
        %vm9512 = vmor %vm9510, %vm9511
        %v9513 = vsel %vm9512, %v9505, %v9509
        %v9514 = vand.u32 2147483647, %v9459
        %vm9515 = vcmp.eq.f32.partialorder %v9514, 8.507059e+37
        %v9516 = vand.u32 %v9459, 2147483648
        %v9517 = vor.u32 1.1754944e-38, %v9516
        %v9518 = vsel %vm9515, %v9517, %v9513
        %v9519 = vmul.f32 1.0, %v9518
        %v9524 = vrot.slane %v9489, 4
        %v9525 = vrot.slane %v9519, 4
        %vm9526 = vcmask 1043456
        %v9527 = vsel %vm9526, %v9474, %v9524
        %v9528 = vsel %vm9526, %v9504, %v9525
        %9531 = vst [vmem:[%s178] sm:$0xff] %v9527
        %9532 = vst [vmem:[%s178 + $0x8] sm:$0xff] %v9528
        %s9533 = sand.u32 %s75, 1
        %s9534 = scalar_lea.sflag [#allocation6], %s9533
        %s9535 = sand.u32 %s75, 1
        %s9536 = smul.addr %s9535, 16
        %s9537 = scalar_lea.vmem [#allocation9], %s9536
        // Predicated region
        $region37: #{nerf_forward.1} parent=27 // pred_check
          %p9538 = pneg %p85
        $region38: #{nerf_forward.1} parent=27 // pred_check_branch
          %9540 = sbr.rel (%p9538) target = $region40
        $region39: #{nerf_forward.1} parent=27 // pred_region
          %s9541 = smul.u32 4, %s20
          %9543 = vsyncadd %s9534, 0
          %s9544 = smul.addr %s9541, 4
          %s9545 = scalar_lea.hbm %s2, %s9544
          %s9547 = sshll.u32 %s9537, 4
          %s9548 = int_to_ptr.vmem [resolvable:$true] %s9547
          %s9549 = sshll.u32 %s9545, 4
          %s9550 = int_to_ptr.hbm [resolvable:$true] %s9549
          %9552 = dma.vmem_to_hbm [thread:$0]  %s9548, 256, %s9550, %s9534
        $region40: #{nerf_forward.1} parent=27 // pred_fallthru
          _
      $region28: #{nerf_forward.1} parent=5 // pred_fallthru
        _
      %p9553 = scmp.le.s32.totalorder 2, %s15
      // Predicated region
      $region41: #{nerf_forward.1} parent=5 // pred_check
        %p9554 = pneg %p9553
      $region42: #{nerf_forward.1} parent=5 // pred_check_branch
        %9556 = sbr.rel (%p9554) target = $region44
      $region43: #{nerf_forward.1} parent=5 // pred_region
        %s9557 = ssub.s32 %s15, 2
        // Predicated region
        $region45: #{nerf_forward.1} parent=43 // pred_check
          %p9558 = pneg %p91
        $region46: #{nerf_forward.1} parent=43 // pred_check_branch
          %9560 = sbr.rel (%p9558) target = $region48
        $region47: #{nerf_forward.1} parent=43 // pred_region
          %s9561 = sand.u32 %s76, 1
          %s9562 = scalar_lea.sflag [#allocation6], %s9561
          %s9563 = sand.u32 %s76, 1
          %s9564 = smul.addr %s9563, 16
          %s9565 = scalar_lea.vmem [#allocation9], %s9564
          %9567 = dma.done %s9562, 256
        $region48: #{nerf_forward.1} parent=43 // pred_fallthru
          _
      $region44: #{nerf_forward.1} parent=5 // pred_fallthru
        _
    $region6: #{nerf_forward.1} parent=1 // loop_footer
      %s19 = sadd.s32 1, %s15
    $region7: #{nerf_forward.1} parent=1 // loop_footer_branch
      %14 = sbr.rel target = $region3
    $region8: #{nerf_forward.1} parent=1 // loop_exit
      _
    %9568 = vsyncpa [#allocation5], 1
    %s9569 = scalar_lea.sflag [#allocation5], 1
    %9570 = vsyncpa %s9569, 1
    %9571 = vsyncpa [#allocation8], 1
    %9572 = vsyncpa [#allocation6], 1
    %s9573 = scalar_lea.sflag [#allocation6], 1
    %9574 = vsyncpa %s9573, 1

</llo_original>
